<compile_context>
chip_gen: v7x
topology: tpu7x:2x2x1
jax: 0.10.0
libtpu: 0.0.40
codegen_flags: <defaults>
</compile_context>

<pallas_src>
import jax
import jax.numpy as jnp
from jax.experimental import pallas as pl
from jax.experimental.pallas import tpu as pltpu

NUM_CLASSES = 10
CLASS_PAD = 128  # lane-dense head: 10 classes padded to 128 output lanes


def _round_up(x, m):
    return (x + m - 1) // m * m


def _vmem_limit_bytes():
    """~60% of physical VMEM: 64 MiB on v5e/v6e (128 MiB parts), ~38 MiB on v7x."""
    try:
        cap = pltpu.get_tpu_info().vmem_capacity_bytes
    except Exception:
        cap = 64 * 1024 * 1024
    return int(min(64 * 1024 * 1024, max(32 * 1024 * 1024, (cap * 3) // 5)))


def _batch_tile(n, vmem_limit):
    """Batch tile: multiple of 8, always >= 2 grid steps (engages both v7x TCs
    and enables DMA pipelining), larger on 128-MiB-VMEM parts than on v7x."""
    tb_max = 256 if vmem_limit >= 64 * 1024 * 1024 else 128
    n_pad = _round_up(n, 16)
    tb = max(8, min(tb_max, n_pad // 2))
    return tb, _round_up(n_pad, tb)


# ---------------------------------------------------------------------------
# The single fused kernel.
# ---------------------------------------------------------------------------
def _bn_drop_kernel(x_ref, w1_ref, bn1_ref, w2_ref, bn2_ref, w3_ref, bn3_ref,
                    wf_ref, bf_ref, o_ref):
    tb = x_ref.shape[1]  # activations are H-major: (H, tb, W*C)

    def conv_bn_pool(x3, w_ref, bn_ref):
        # x3: (H_in, tb, W_in*Cin) f32.  w_ref: (KH, W_in*Cin, 2*P*Cout) holds
        # pool-folded Toeplitz weights (cols [0:P*Cout] -> even output columns,
        # [P*Cout:] -> odd).  One MXU matmul per H-tap, accumulated in f32;
        # BN affine (conv bias folded) applied before the max == BN -> MaxPool.
        kh, kdim, ncols = w_ref.shape
        out_h = x3.shape[0] - kh + 1
        rows = out_h * tb
        acc = None
        for ki in range(kh):
            lhs = x3[ki:ki + out_h].reshape(rows, kdim).astype(jnp.bfloat16)
            d = jnp.dot(lhs, w_ref[ki], preferred_element_type=jnp.float32)
            acc = d if acc is None else acc + d
        y = acc * bn_ref[0:1, :] + bn_ref[1:2, :]
        half = ncols // 2
        m = jnp.maximum(y[:, :half], y[:, half:])                  # 2x pool (W)
        m = jnp.max(m.reshape(out_h // 2, 2, tb, half), axis=1)    # 2x pool (H)
        return m  # (H_out/2, tb, P*Cout)

    # Stage 1: Conv(1->20,5x5) + BN + MaxPool2x2   -> (12, tb, 12*20)
    p1 = conv_bn_pool(x_ref[...], w1_ref, bn1_ref)
    # Stage 2: Conv(20->50,5x5) + BN + MaxPool2x2  -> (4, tb, 4*50)
    p2 = conv_bn_pool(p1, w2_ref, bn2_ref)

    # Stage 3: Conv(50->500,4x4) has 1x1 output spatial == 4 accumulated
    # matmuls over the remaining H rows; then BN + ReLU.
    acc = None
    for h in range(w3_ref.shape[0]):
        d = jnp.dot(p2[h].astype(jnp.bfloat16), w3_ref[h],
                    preferred_element_type=jnp.float32)
        acc = d if acc is None else acc + d
    hid = jnp.maximum(acc * bn3_ref[0:1, :] + bn3_ref[1:2, :], 0.0)

    # Head: Linear(500->10) padded to 128 lanes, masked softmax over 10 classes.
    # TODO(synk): Dropout(p=0.2) needs RNG masking in train mode; eval-mode
    # forward is the identity, which is what is implemented here.
    logits = jnp.dot(hid.astype(jnp.bfloat16), wf_ref[...],
                     preferred_element_type=jnp.float32) + bf_ref[...]
    col = jax.lax.broadcasted_iota(jnp.int32, logits.shape, 1)
    logits = jnp.where(col < NUM_CLASSES, logits, -1e30)
    mx = jnp.max(logits, axis=-1, keepdims=True)
    e = jnp.exp(logits - mx)
    inv = pl.reciprocal(jnp.sum(e, axis=-1, keepdims=True), approx=True)
    o_ref[...] = (e * inv).astype(o_ref.dtype)


# ---------------------------------------------------------------------------
# Wrapper-side (one-time) parameter folding.
# ---------------------------------------------------------------------------
def _fold_bn(conv_bias, bn, eps=1e-5):
    scale = bn["gamma"] / jnp.sqrt(bn["var"] + eps)
    shift = bn["beta"] + (conv_bias - bn["mean"]) * scale
    return scale, shift


def _toeplitz_pool_weight(w_pt, in_w):
    """PyTorch conv weight (Cout,Cin,KH,KW) -> (KH, in_w*Cin, 2*P*Cout):
    W-direction taps expanded into a Toeplitz matrix with the two max-pool
    column parities side by side (P = (in_w-KW+1)//2 pooled output columns)."""
    cout, cin, kh, kw = w_pt.shape
    p = (in_w - kw + 1) // 2
    w = jnp.transpose(w_pt, (2, 3, 1, 0))                  # (KH, KW, Cin, Cout)
    u = jnp.arange(in_w)[:, None, None]                    # input column
    v = jnp.arange(p)[None, :, None]                       # pooled output column
    b = jnp.arange(2)[None, None, :]                       # pool-window parity
    kj = u - (2 * v + b)
    valid = (kj >= 0) & (kj < kw)
    g = w[:, jnp.clip(kj, 0, kw - 1), :, :]                # (KH, IW, P, 2, Cin, Cout)
    g = jnp.where(valid[None, :, :, :, None, None], g, 0.0)
    g = jnp.transpose(g, (0, 3, 1, 4, 2, 5))               # (KH, 2, IW, Cin, P, Cout)
    g = g.reshape(kh, 2, in_w * cin, p * cout)
    return jnp.concatenate([g[:, 0], g[:, 1]], axis=-1)    # (KH, IW*Cin, 2*P*Cout)


def prepare_params(params):
    """Fold conv bias + BN into per-column scale/shift, expand conv weights into
    pool-folded Toeplitz matrices, pad the classifier to 128 lanes.  Everything
    is small (<3 MB bf16) and stays VMEM-resident inside the kernel."""
    s1, t1 = _fold_bn(params["conv1"]["b"], params["conv1"]["bn"])
    s2, t2 = _fold_bn(params["conv2"]["b"], params["conv2"]["bn"])
    s3, t3 = _fold_bn(params["conv3"]["b"], params["conv3"]["bn"])
    w3 = jnp.transpose(params["conv3"]["w"], (2, 3, 1, 0)).reshape(4, 200, 500)
    wf = params["fc"]["w"].T                               # (500, 10)
    return dict(
        w1=_toeplitz_pool_weight(params["conv1"]["w"], 28).astype(jnp.bfloat16),
        bn1=jnp.stack([jnp.tile(s1, 24), jnp.tile(t1, 24)]),   # (2, 480)
        w2=_toeplitz_pool_weight(params["conv2"]["w"], 12).astype(jnp.bfloat16),
        bn2=jnp.stack([jnp.tile(s2, 8), jnp.tile(t2, 8)]),     # (2, 400)
        w3=w3.astype(jnp.bfloat16),                            # (4, 200, 500)
        bn3=jnp.stack([s3, t3]),                               # (2, 500)
        wf=jnp.pad(wf, ((0, 0), (0, CLASS_PAD - NUM_CLASSES))).astype(jnp.bfloat16),
        bf=jnp.pad(params["fc"]["b"],
                   (0, CLASS_PAD - NUM_CLASSES)).reshape(1, CLASS_PAD),
    )


def bn_drop_forward(x_nchw, prep):
    n = x_nchw.shape[0]
    # Input stream kept f32 (3 KB/img) for layout-safe in-kernel slicing; could
    # be fed bf16 to halve the one remaining HBM input stream.
    x = x_nchw.reshape(n, 28, 28).astype(jnp.float32)
    vmem_limit = _vmem_limit_bytes()
    tb, n_pad = _batch_tile(n, vmem_limit)
    if n_pad != n:
        x = jnp.pad(x, ((0, n_pad - n), (0, 0), (0, 0)))
    x = jnp.transpose(x, (1, 0, 2))        # (28, N_pad, 28): H-major rows
    grid = (n_pad // tb,)

    def resident(arr):
        return pl.BlockSpec(arr.shape, lambda i, nd=arr.ndim: (0,) * nd)

    out = pl.pallas_call(
        _bn_drop_kernel,
        out_shape=jax.ShapeDtypeStruct((n_pad, CLASS_PAD), jnp.float32),
        grid=grid,
        in_specs=[pl.BlockSpec((28, tb, 28), lambda i: (0, i, 0)),
                  resident(prep["w1"]), resident(prep["bn1"]),
                  resident(prep["w2"]), resident(prep["bn2"]),
                  resident(prep["w3"]), resident(prep["bn3"]),
                  resident(prep["wf"]), resident(prep["bf"])],
        out_specs=pl.BlockSpec((tb, CLASS_PAD), lambda i: (i, 0)),
        compiler_params=pltpu.CompilerParams(
            dimension_semantics=("parallel",),
            vmem_limit_bytes=vmem_limit),
    )(x, prep["w1"], prep["bn1"], prep["w2"], prep["bn2"],
      prep["w3"], prep["bn3"], prep["wf"], prep["bf"])
    return out[:n, :NUM_CLASSES]


# ---------------------------------------------------------------------------
# Pure-JAX reference (PyTorch module, eval mode) and example parameters.
# ---------------------------------------------------------------------------
def reference_forward(x_nchw, params, eps=1e-5):
    def conv(x, w, b):
        y = jax.lax.conv_general_dilated(
            x, w, window_strides=(1, 1), padding="VALID",
            dimension_numbers=("NCHW", "OIHW", "NCHW"))
        return y + b[None, :, None, None]

    def bn(x, p):
        s = p["gamma"] / jnp.sqrt(p["var"] + eps)
        return (x - p["mean"][None, :, None, None]) * s[None, :, None, None] \
            + p["beta"][None, :, None, None]

    def pool(x):
        return jax.lax.reduce_window(x, -jnp.inf, jax.lax.max,
                                     (1, 1, 2, 2), (1, 1, 2, 2), "VALID")

    h = pool(bn(conv(x_nchw, params["conv1"]["w"], params["conv1"]["b"]),
                params["conv1"]["bn"]))
    h = pool(bn(conv(h, params["conv2"]["w"], params["conv2"]["b"]),
                params["conv2"]["bn"]))
    h = jnp.maximum(bn(conv(h, params["conv3"]["w"], params["conv3"]["b"]),
                       params["conv3"]["bn"]), 0.0)
    h = h.reshape(h.shape[0], -1)
    logits = h @ params["fc"]["w"].T + params["fc"]["b"]
    return jax.nn.softmax(logits, axis=1)   # Dropout(p=0.2) is eval identity


def init_params(key):
    keys = iter(jax.random.split(key, 32))

    def nrm(shape, scale=0.1):
        return scale * jax.random.normal(next(keys), shape, jnp.float32)

    def bn(c):
        return dict(
            gamma=1.0 + nrm((c,)),
            beta=nrm((c,)),
            mean=nrm((c,)),
            var=jax.random.uniform(next(keys), (c,), jnp.float32, 0.5, 1.5),
        )

    return dict(
        conv1=dict(w=nrm((20, 1, 5, 5)), b=nrm((20,)), bn=bn(20)),
        conv2=dict(w=nrm((50, 20, 5, 5), 0.05), b=nrm((50,)), bn=bn(50)),
        conv3=dict(w=nrm((500, 50, 4, 4), 0.05), b=nrm((500,)), bn=bn(500)),
        fc=dict(w=nrm((10, 500), 0.05), b=nrm((10,))),
    )


if __name__ == "__main__":
    key = jax.random.PRNGKey(0)
    kx, kp = jax.random.split(key)
    # MNIST-shaped input implied by the architecture (28x28 -> 500-dim feature).
    x = jax.random.normal(kx, (2, 1, 28, 28), jnp.float32)
    params = init_params(kp)
    prep = prepare_params(params)

    out = jax.jit(bn_drop_forward)(x, prep)
    out = jax.block_until_ready(out)

    assert out.shape == (2, 10)
    assert bool(jnp.all(jnp.isfinite(out)))
    assert bool(jnp.allclose(jnp.sum(out, axis=1), 1.0, atol=1e-2))
    # Cross-check against the pure-JAX reference (bf16 MXU feeds + approx
    # reciprocal => loose tolerance on the softmax probabilities).
    ref = reference_forward(x, params)
    assert float(jnp.max(jnp.abs(out - ref))) < 5e-2, "mismatch vs reference"
    print("KERNEL_OK")
</pallas_src>

<mosaic_0001>
module attributes {stable_mosaic.version = 11 : i64} {
  func.func @_bn_drop_kernel(%arg0: i32, %arg1: memref<28x8x28xf32, #tpu.memory_space<vmem>>, %arg2: memref<5x28x480xbf16, #tpu.memory_space<vmem>>, %arg3: memref<2x480xf32, #tpu.memory_space<vmem>>, %arg4: memref<5x240x400xbf16, #tpu.memory_space<vmem>>, %arg5: memref<2x400xf32, #tpu.memory_space<vmem>>, %arg6: memref<4x200x500xbf16, #tpu.memory_space<vmem>>, %arg7: memref<2x500xf32, #tpu.memory_space<vmem>>, %arg8: memref<500x128xbf16, #tpu.memory_space<vmem>>, %arg9: memref<1x128xf32, #tpu.memory_space<vmem>>, %arg10: memref<8x128xf32, #tpu.memory_space<vmem>>) attributes {dimension_semantics = [#tpu.dimension_semantics<parallel>], iteration_bounds = array<i64: 2>, scalar_prefetch = 0 : i64, scratch_operands = 0 : i64, tpu.core_type = #tpu.core_type<tc>, window_params = [{transform_indices = @transform_0, window_bounds = array<i64: 28, 8, 28>}, {pipeline_mode = #tpu.pipeline_mode<synchronous>, transform_indices = @transform_1, window_bounds = array<i64: 5, 28, 480>}, {pipeline_mode = #tpu.pipeline_mode<synchronous>, transform_indices = @transform_2, window_bounds = array<i64: 2, 480>}, {pipeline_mode = #tpu.pipeline_mode<synchronous>, transform_indices = @transform_3, window_bounds = array<i64: 5, 240, 400>}, {pipeline_mode = #tpu.pipeline_mode<synchronous>, transform_indices = @transform_4, window_bounds = array<i64: 2, 400>}, {pipeline_mode = #tpu.pipeline_mode<synchronous>, transform_indices = @transform_5, window_bounds = array<i64: 4, 200, 500>}, {pipeline_mode = #tpu.pipeline_mode<synchronous>, transform_indices = @transform_6, window_bounds = array<i64: 2, 500>}, {pipeline_mode = #tpu.pipeline_mode<synchronous>, transform_indices = @transform_7, window_bounds = array<i64: 500, 128>}, {pipeline_mode = #tpu.pipeline_mode<synchronous>, transform_indices = @transform_8, window_bounds = array<i64: 1, 128>}, {transform_indices = @transform_9, window_bounds = array<i64: 8, 128>}]} {
    %c0 = arith.constant 0 : index
    %c0_0 = arith.constant 0 : index
    %c0_1 = arith.constant 0 : index
    %0 = vector.load %arg1[%c0, %c0_0, %c0_1] : memref<28x8x28xf32, #tpu.memory_space<vmem>>, vector<28x8x28xf32>
    %1 = vector.extract_strided_slice %0 {offsets = [0, 0, 0], sizes = [24, 8, 28], strides = [1, 1, 1]} : vector<28x8x28xf32> to vector<24x8x28xf32>
    %2 = vector.shape_cast %1 : vector<24x8x28xf32> to vector<192x28xf32>
    %3 = arith.truncf %2 : vector<192x28xf32> to vector<192x28xbf16>
    %c0_2 = arith.constant 0 : index
    %c0_3 = arith.constant 0 : index
    %c0_4 = arith.constant 0 : index
    %4 = vector.load %arg2[%c0_2, %c0_3, %c0_4] : memref<5x28x480xbf16, #tpu.memory_space<vmem>>, vector<1x28x480xbf16>
    %5 = vector.shape_cast %4 : vector<1x28x480xbf16> to vector<28x480xbf16>
    %cst = arith.constant dense<0.000000e+00> : vector<192x480xf32>
    %6 = tpu.matmul %3, %5, %cst {dimension_numbers = #tpu.dot_dimension_numbers<[1], [0], [0], [1], [0, 0, 1, 1], [], []>} : vector<192x28xbf16>, vector<28x480xbf16>, vector<192x480xf32> -> vector<192x480xf32>
    %7 = vector.extract_strided_slice %0 {offsets = [1, 0, 0], sizes = [24, 8, 28], strides = [1, 1, 1]} : vector<28x8x28xf32> to vector<24x8x28xf32>
    %8 = vector.shape_cast %7 : vector<24x8x28xf32> to vector<192x28xf32>
    %9 = arith.truncf %8 : vector<192x28xf32> to vector<192x28xbf16>
    %c1 = arith.constant 1 : index
    %c0_5 = arith.constant 0 : index
    %c0_6 = arith.constant 0 : index
    %10 = vector.load %arg2[%c1, %c0_5, %c0_6] : memref<5x28x480xbf16, #tpu.memory_space<vmem>>, vector<1x28x480xbf16>
    %11 = vector.shape_cast %10 : vector<1x28x480xbf16> to vector<28x480xbf16>
    %cst_7 = arith.constant dense<0.000000e+00> : vector<192x480xf32>
    %12 = tpu.matmul %9, %11, %cst_7 {dimension_numbers = #tpu.dot_dimension_numbers<[1], [0], [0], [1], [0, 0, 1, 1], [], []>} : vector<192x28xbf16>, vector<28x480xbf16>, vector<192x480xf32> -> vector<192x480xf32>
    %13 = arith.addf %6, %12 : vector<192x480xf32>
    %14 = vector.extract_strided_slice %0 {offsets = [2, 0, 0], sizes = [24, 8, 28], strides = [1, 1, 1]} : vector<28x8x28xf32> to vector<24x8x28xf32>
    %15 = vector.shape_cast %14 : vector<24x8x28xf32> to vector<192x28xf32>
    %16 = arith.truncf %15 : vector<192x28xf32> to vector<192x28xbf16>
    %c2 = arith.constant 2 : index
    %c0_8 = arith.constant 0 : index
    %c0_9 = arith.constant 0 : index
    %17 = vector.load %arg2[%c2, %c0_8, %c0_9] : memref<5x28x480xbf16, #tpu.memory_space<vmem>>, vector<1x28x480xbf16>
    %18 = vector.shape_cast %17 : vector<1x28x480xbf16> to vector<28x480xbf16>
    %cst_10 = arith.constant dense<0.000000e+00> : vector<192x480xf32>
    %19 = tpu.matmul %16, %18, %cst_10 {dimension_numbers = #tpu.dot_dimension_numbers<[1], [0], [0], [1], [0, 0, 1, 1], [], []>} : vector<192x28xbf16>, vector<28x480xbf16>, vector<192x480xf32> -> vector<192x480xf32>
    %20 = arith.addf %13, %19 : vector<192x480xf32>
    %21 = vector.extract_strided_slice %0 {offsets = [3, 0, 0], sizes = [24, 8, 28], strides = [1, 1, 1]} : vector<28x8x28xf32> to vector<24x8x28xf32>
    %22 = vector.shape_cast %21 : vector<24x8x28xf32> to vector<192x28xf32>
    %23 = arith.truncf %22 : vector<192x28xf32> to vector<192x28xbf16>
    %c3 = arith.constant 3 : index
    %c0_11 = arith.constant 0 : index
    %c0_12 = arith.constant 0 : index
    %24 = vector.load %arg2[%c3, %c0_11, %c0_12] : memref<5x28x480xbf16, #tpu.memory_space<vmem>>, vector<1x28x480xbf16>
    %25 = vector.shape_cast %24 : vector<1x28x480xbf16> to vector<28x480xbf16>
    %cst_13 = arith.constant dense<0.000000e+00> : vector<192x480xf32>
    %26 = tpu.matmul %23, %25, %cst_13 {dimension_numbers = #tpu.dot_dimension_numbers<[1], [0], [0], [1], [0, 0, 1, 1], [], []>} : vector<192x28xbf16>, vector<28x480xbf16>, vector<192x480xf32> -> vector<192x480xf32>
    %27 = arith.addf %20, %26 : vector<192x480xf32>
    %28 = vector.extract_strided_slice %0 {offsets = [4, 0, 0], sizes = [24, 8, 28], strides = [1, 1, 1]} : vector<28x8x28xf32> to vector<24x8x28xf32>
    %29 = vector.shape_cast %28 : vector<24x8x28xf32> to vector<192x28xf32>
    %30 = arith.truncf %29 : vector<192x28xf32> to vector<192x28xbf16>
    %c4 = arith.constant 4 : index
    %c0_14 = arith.constant 0 : index
    %c0_15 = arith.constant 0 : index
    %31 = vector.load %arg2[%c4, %c0_14, %c0_15] : memref<5x28x480xbf16, #tpu.memory_space<vmem>>, vector<1x28x480xbf16>
    %32 = vector.shape_cast %31 : vector<1x28x480xbf16> to vector<28x480xbf16>
    %cst_16 = arith.constant dense<0.000000e+00> : vector<192x480xf32>
    %33 = tpu.matmul %30, %32, %cst_16 {dimension_numbers = #tpu.dot_dimension_numbers<[1], [0], [0], [1], [0, 0, 1, 1], [], []>} : vector<192x28xbf16>, vector<28x480xbf16>, vector<192x480xf32> -> vector<192x480xf32>
    %34 = arith.addf %27, %33 : vector<192x480xf32>
    %c0_17 = arith.constant 0 : index
    %c0_18 = arith.constant 0 : index
    %35 = vector.load %arg3[%c0_17, %c0_18] : memref<2x480xf32, #tpu.memory_space<vmem>>, vector<1x480xf32>
    %36 = vector.broadcast %35 : vector<1x480xf32> to vector<192x480xf32>
    %37 = arith.mulf %34, %36 : vector<192x480xf32>
    %c1_19 = arith.constant 1 : index
    %c0_20 = arith.constant 0 : index
    %38 = vector.load %arg3[%c1_19, %c0_20] : memref<2x480xf32, #tpu.memory_space<vmem>>, vector<1x480xf32>
    %39 = vector.broadcast %38 : vector<1x480xf32> to vector<192x480xf32>
    %40 = arith.addf %37, %39 : vector<192x480xf32>
    %41 = vector.extract_strided_slice %40 {offsets = [0, 0], sizes = [192, 240], strides = [1, 1]} : vector<192x480xf32> to vector<192x240xf32>
    %42 = vector.extract_strided_slice %40 {offsets = [0, 240], sizes = [192, 240], strides = [1, 1]} : vector<192x480xf32> to vector<192x240xf32>
    %43 = arith.maximumf %41, %42 : vector<192x240xf32>
    %44 = vector.shape_cast %43 : vector<192x240xf32> to vector<12x2x8x240xf32>
    %cst_21 = arith.constant dense<0xFF800000> : vector<12x8x240xf32>
    %45 = vector.multi_reduction <maximumf>, %44, %cst_21 [1] : vector<12x2x8x240xf32> to vector<12x8x240xf32>
    %46 = vector.extract_strided_slice %45 {offsets = [0, 0, 0], sizes = [8, 8, 240], strides = [1, 1, 1]} : vector<12x8x240xf32> to vector<8x8x240xf32>
    %47 = vector.shape_cast %46 : vector<8x8x240xf32> to vector<64x240xf32>
    %48 = arith.truncf %47 : vector<64x240xf32> to vector<64x240xbf16>
    %c0_22 = arith.constant 0 : index
    %c0_23 = arith.constant 0 : index
    %c0_24 = arith.constant 0 : index
    %49 = vector.load %arg4[%c0_22, %c0_23, %c0_24] : memref<5x240x400xbf16, #tpu.memory_space<vmem>>, vector<1x240x400xbf16>
    %50 = vector.shape_cast %49 : vector<1x240x400xbf16> to vector<240x400xbf16>
    %cst_25 = arith.constant dense<0.000000e+00> : vector<64x400xf32>
    %51 = tpu.matmul %48, %50, %cst_25 {dimension_numbers = #tpu.dot_dimension_numbers<[1], [0], [0], [1], [0, 0, 1, 1], [], []>} : vector<64x240xbf16>, vector<240x400xbf16>, vector<64x400xf32> -> vector<64x400xf32>
    %52 = vector.extract_strided_slice %45 {offsets = [1, 0, 0], sizes = [8, 8, 240], strides = [1, 1, 1]} : vector<12x8x240xf32> to vector<8x8x240xf32>
    %53 = vector.shape_cast %52 : vector<8x8x240xf32> to vector<64x240xf32>
    %54 = arith.truncf %53 : vector<64x240xf32> to vector<64x240xbf16>
    %c1_26 = arith.constant 1 : index
    %c0_27 = arith.constant 0 : index
    %c0_28 = arith.constant 0 : index
    %55 = vector.load %arg4[%c1_26, %c0_27, %c0_28] : memref<5x240x400xbf16, #tpu.memory_space<vmem>>, vector<1x240x400xbf16>
    %56 = vector.shape_cast %55 : vector<1x240x400xbf16> to vector<240x400xbf16>
    %cst_29 = arith.constant dense<0.000000e+00> : vector<64x400xf32>
    %57 = tpu.matmul %54, %56, %cst_29 {dimension_numbers = #tpu.dot_dimension_numbers<[1], [0], [0], [1], [0, 0, 1, 1], [], []>} : vector<64x240xbf16>, vector<240x400xbf16>, vector<64x400xf32> -> vector<64x400xf32>
    %58 = arith.addf %51, %57 : vector<64x400xf32>
    %59 = vector.extract_strided_slice %45 {offsets = [2, 0, 0], sizes = [8, 8, 240], strides = [1, 1, 1]} : vector<12x8x240xf32> to vector<8x8x240xf32>
    %60 = vector.shape_cast %59 : vector<8x8x240xf32> to vector<64x240xf32>
    %61 = arith.truncf %60 : vector<64x240xf32> to vector<64x240xbf16>
    %c2_30 = arith.constant 2 : index
    %c0_31 = arith.constant 0 : index
    %c0_32 = arith.constant 0 : index
    %62 = vector.load %arg4[%c2_30, %c0_31, %c0_32] : memref<5x240x400xbf16, #tpu.memory_space<vmem>>, vector<1x240x400xbf16>
    %63 = vector.shape_cast %62 : vector<1x240x400xbf16> to vector<240x400xbf16>
    %cst_33 = arith.constant dense<0.000000e+00> : vector<64x400xf32>
    %64 = tpu.matmul %61, %63, %cst_33 {dimension_numbers = #tpu.dot_dimension_numbers<[1], [0], [0], [1], [0, 0, 1, 1], [], []>} : vector<64x240xbf16>, vector<240x400xbf16>, vector<64x400xf32> -> vector<64x400xf32>
    %65 = arith.addf %58, %64 : vector<64x400xf32>
    %66 = vector.extract_strided_slice %45 {offsets = [3, 0, 0], sizes = [8, 8, 240], strides = [1, 1, 1]} : vector<12x8x240xf32> to vector<8x8x240xf32>
    %67 = vector.shape_cast %66 : vector<8x8x240xf32> to vector<64x240xf32>
    %68 = arith.truncf %67 : vector<64x240xf32> to vector<64x240xbf16>
    %c3_34 = arith.constant 3 : index
    %c0_35 = arith.constant 0 : index
    %c0_36 = arith.constant 0 : index
    %69 = vector.load %arg4[%c3_34, %c0_35, %c0_36] : memref<5x240x400xbf16, #tpu.memory_space<vmem>>, vector<1x240x400xbf16>
    %70 = vector.shape_cast %69 : vector<1x240x400xbf16> to vector<240x400xbf16>
    %cst_37 = arith.constant dense<0.000000e+00> : vector<64x400xf32>
    %71 = tpu.matmul %68, %70, %cst_37 {dimension_numbers = #tpu.dot_dimension_numbers<[1], [0], [0], [1], [0, 0, 1, 1], [], []>} : vector<64x240xbf16>, vector<240x400xbf16>, vector<64x400xf32> -> vector<64x400xf32>
    %72 = arith.addf %65, %71 : vector<64x400xf32>
    %73 = vector.extract_strided_slice %45 {offsets = [4, 0, 0], sizes = [8, 8, 240], strides = [1, 1, 1]} : vector<12x8x240xf32> to vector<8x8x240xf32>
    %74 = vector.shape_cast %73 : vector<8x8x240xf32> to vector<64x240xf32>
    %75 = arith.truncf %74 : vector<64x240xf32> to vector<64x240xbf16>
    %c4_38 = arith.constant 4 : index
    %c0_39 = arith.constant 0 : index
    %c0_40 = arith.constant 0 : index
    %76 = vector.load %arg4[%c4_38, %c0_39, %c0_40] : memref<5x240x400xbf16, #tpu.memory_space<vmem>>, vector<1x240x400xbf16>
    %77 = vector.shape_cast %76 : vector<1x240x400xbf16> to vector<240x400xbf16>
    %cst_41 = arith.constant dense<0.000000e+00> : vector<64x400xf32>
    %78 = tpu.matmul %75, %77, %cst_41 {dimension_numbers = #tpu.dot_dimension_numbers<[1], [0], [0], [1], [0, 0, 1, 1], [], []>} : vector<64x240xbf16>, vector<240x400xbf16>, vector<64x400xf32> -> vector<64x400xf32>
    %79 = arith.addf %72, %78 : vector<64x400xf32>
    %c0_42 = arith.constant 0 : index
    %c0_43 = arith.constant 0 : index
    %80 = vector.load %arg5[%c0_42, %c0_43] : memref<2x400xf32, #tpu.memory_space<vmem>>, vector<1x400xf32>
    %81 = vector.broadcast %80 : vector<1x400xf32> to vector<64x400xf32>
    %82 = arith.mulf %79, %81 : vector<64x400xf32>
    %c1_44 = arith.constant 1 : index
    %c0_45 = arith.constant 0 : index
    %83 = vector.load %arg5[%c1_44, %c0_45] : memref<2x400xf32, #tpu.memory_space<vmem>>, vector<1x400xf32>
    %84 = vector.broadcast %83 : vector<1x400xf32> to vector<64x400xf32>
    %85 = arith.addf %82, %84 : vector<64x400xf32>
    %86 = vector.extract_strided_slice %85 {offsets = [0, 0], sizes = [64, 200], strides = [1, 1]} : vector<64x400xf32> to vector<64x200xf32>
    %87 = vector.extract_strided_slice %85 {offsets = [0, 200], sizes = [64, 200], strides = [1, 1]} : vector<64x400xf32> to vector<64x200xf32>
    %88 = arith.maximumf %86, %87 : vector<64x200xf32>
    %89 = vector.shape_cast %88 : vector<64x200xf32> to vector<4x2x8x200xf32>
    %cst_46 = arith.constant dense<0xFF800000> : vector<4x8x200xf32>
    %90 = vector.multi_reduction <maximumf>, %89, %cst_46 [1] : vector<4x2x8x200xf32> to vector<4x8x200xf32>
    %91 = vector.extract_strided_slice %90 {offsets = [0, 0, 0], sizes = [1, 8, 200], strides = [1, 1, 1]} : vector<4x8x200xf32> to vector<1x8x200xf32>
    %92 = vector.shape_cast %91 : vector<1x8x200xf32> to vector<8x200xf32>
    %93 = arith.truncf %92 : vector<8x200xf32> to vector<8x200xbf16>
    %c0_47 = arith.constant 0 : index
    %c0_48 = arith.constant 0 : index
    %c0_49 = arith.constant 0 : index
    %94 = vector.load %arg6[%c0_47, %c0_48, %c0_49] : memref<4x200x500xbf16, #tpu.memory_space<vmem>>, vector<1x200x500xbf16>
    %95 = vector.shape_cast %94 : vector<1x200x500xbf16> to vector<200x500xbf16>
    %cst_50 = arith.constant dense<0.000000e+00> : vector<8x500xf32>
    %96 = tpu.matmul %93, %95, %cst_50 {dimension_numbers = #tpu.dot_dimension_numbers<[1], [0], [0], [1], [0, 0, 1, 1], [], []>} : vector<8x200xbf16>, vector<200x500xbf16>, vector<8x500xf32> -> vector<8x500xf32>
    %97 = vector.extract_strided_slice %90 {offsets = [1, 0, 0], sizes = [1, 8, 200], strides = [1, 1, 1]} : vector<4x8x200xf32> to vector<1x8x200xf32>
    %98 = vector.shape_cast %97 : vector<1x8x200xf32> to vector<8x200xf32>
    %99 = arith.truncf %98 : vector<8x200xf32> to vector<8x200xbf16>
    %c1_51 = arith.constant 1 : index
    %c0_52 = arith.constant 0 : index
    %c0_53 = arith.constant 0 : index
    %100 = vector.load %arg6[%c1_51, %c0_52, %c0_53] : memref<4x200x500xbf16, #tpu.memory_space<vmem>>, vector<1x200x500xbf16>
    %101 = vector.shape_cast %100 : vector<1x200x500xbf16> to vector<200x500xbf16>
    %cst_54 = arith.constant dense<0.000000e+00> : vector<8x500xf32>
    %102 = tpu.matmul %99, %101, %cst_54 {dimension_numbers = #tpu.dot_dimension_numbers<[1], [0], [0], [1], [0, 0, 1, 1], [], []>} : vector<8x200xbf16>, vector<200x500xbf16>, vector<8x500xf32> -> vector<8x500xf32>
    %103 = arith.addf %96, %102 : vector<8x500xf32>
    %104 = vector.extract_strided_slice %90 {offsets = [2, 0, 0], sizes = [1, 8, 200], strides = [1, 1, 1]} : vector<4x8x200xf32> to vector<1x8x200xf32>
    %105 = vector.shape_cast %104 : vector<1x8x200xf32> to vector<8x200xf32>
    %106 = arith.truncf %105 : vector<8x200xf32> to vector<8x200xbf16>
    %c2_55 = arith.constant 2 : index
    %c0_56 = arith.constant 0 : index
    %c0_57 = arith.constant 0 : index
    %107 = vector.load %arg6[%c2_55, %c0_56, %c0_57] : memref<4x200x500xbf16, #tpu.memory_space<vmem>>, vector<1x200x500xbf16>
    %108 = vector.shape_cast %107 : vector<1x200x500xbf16> to vector<200x500xbf16>
    %cst_58 = arith.constant dense<0.000000e+00> : vector<8x500xf32>
    %109 = tpu.matmul %106, %108, %cst_58 {dimension_numbers = #tpu.dot_dimension_numbers<[1], [0], [0], [1], [0, 0, 1, 1], [], []>} : vector<8x200xbf16>, vector<200x500xbf16>, vector<8x500xf32> -> vector<8x500xf32>
    %110 = arith.addf %103, %109 : vector<8x500xf32>
    %111 = vector.extract_strided_slice %90 {offsets = [3, 0, 0], sizes = [1, 8, 200], strides = [1, 1, 1]} : vector<4x8x200xf32> to vector<1x8x200xf32>
    %112 = vector.shape_cast %111 : vector<1x8x200xf32> to vector<8x200xf32>
    %113 = arith.truncf %112 : vector<8x200xf32> to vector<8x200xbf16>
    %c3_59 = arith.constant 3 : index
    %c0_60 = arith.constant 0 : index
    %c0_61 = arith.constant 0 : index
    %114 = vector.load %arg6[%c3_59, %c0_60, %c0_61] : memref<4x200x500xbf16, #tpu.memory_space<vmem>>, vector<1x200x500xbf16>
    %115 = vector.shape_cast %114 : vector<1x200x500xbf16> to vector<200x500xbf16>
    %cst_62 = arith.constant dense<0.000000e+00> : vector<8x500xf32>
    %116 = tpu.matmul %113, %115, %cst_62 {dimension_numbers = #tpu.dot_dimension_numbers<[1], [0], [0], [1], [0, 0, 1, 1], [], []>} : vector<8x200xbf16>, vector<200x500xbf16>, vector<8x500xf32> -> vector<8x500xf32>
    %117 = arith.addf %110, %116 : vector<8x500xf32>
    %c0_63 = arith.constant 0 : index
    %c0_64 = arith.constant 0 : index
    %118 = vector.load %arg7[%c0_63, %c0_64] : memref<2x500xf32, #tpu.memory_space<vmem>>, vector<1x500xf32>
    %119 = vector.broadcast %118 : vector<1x500xf32> to vector<8x500xf32>
    %120 = arith.mulf %117, %119 : vector<8x500xf32>
    %c1_65 = arith.constant 1 : index
    %c0_66 = arith.constant 0 : index
    %121 = vector.load %arg7[%c1_65, %c0_66] : memref<2x500xf32, #tpu.memory_space<vmem>>, vector<1x500xf32>
    %122 = vector.broadcast %121 : vector<1x500xf32> to vector<8x500xf32>
    %123 = arith.addf %120, %122 : vector<8x500xf32>
    %cst_67 = arith.constant 0.000000e+00 : f32
    %124 = vector.broadcast %cst_67 : f32 to vector<8x500xf32>
    %125 = arith.maximumf %123, %124 : vector<8x500xf32>
    %126 = arith.truncf %125 : vector<8x500xf32> to vector<8x500xbf16>
    %c0_68 = arith.constant 0 : index
    %c0_69 = arith.constant 0 : index
    %127 = vector.load %arg8[%c0_68, %c0_69] : memref<500x128xbf16, #tpu.memory_space<vmem>>, vector<500x128xbf16>
    %cst_70 = arith.constant dense<0.000000e+00> : vector<8x128xf32>
    %128 = tpu.matmul %126, %127, %cst_70 {dimension_numbers = #tpu.dot_dimension_numbers<[1], [0], [0], [1], [0, 0, 1, 1], [], []>} : vector<8x500xbf16>, vector<500x128xbf16>, vector<8x128xf32> -> vector<8x128xf32>
    %c0_71 = arith.constant 0 : index
    %c0_72 = arith.constant 0 : index
    %129 = vector.load %arg9[%c0_71, %c0_72] : memref<1x128xf32, #tpu.memory_space<vmem>>, vector<1x128xf32>
    %130 = vector.broadcast %129 : vector<1x128xf32> to vector<8x128xf32>
    %131 = arith.addf %128, %130 : vector<8x128xf32>
    %132 = tpu.iota {dimensions = array<i32: 1>} : vector<8x128xi32>
    %c10_i32 = arith.constant 10 : i32
    %133 = vector.broadcast %c10_i32 : i32 to vector<8x128xi32>
    %134 = arith.cmpi slt, %132, %133 : vector<8x128xi32>
    %cst_73 = arith.constant -1.000000e+30 : f32
    %135 = vector.broadcast %cst_73 : f32 to vector<8x128xf32>
    %136 = arith.select %134, %131, %135 : vector<8x128xi1>, vector<8x128xf32>
    %cst_74 = arith.constant dense<0xFF800000> : vector<8xf32>
    %137 = vector.multi_reduction <maximumf>, %136, %cst_74 [1] : vector<8x128xf32> to vector<8xf32>
    %138 = vector.shape_cast %137 : vector<8xf32> to vector<8x1xf32>
    %139 = vector.broadcast %138 : vector<8x1xf32> to vector<8x128xf32>
    %140 = arith.subf %136, %139 : vector<8x128xf32>
    %141 = math.exp %140 : vector<8x128xf32>
    %cst_75 = arith.constant dense<0.000000e+00> : vector<8xf32>
    %142 = vector.multi_reduction <add>, %141, %cst_75 [1] : vector<8x128xf32> to vector<8xf32>
    %143 = vector.shape_cast %142 : vector<8xf32> to vector<8x1xf32>
    %144 = tpu.reciprocal %143 {approx = true} : vector<8x1xf32> -> vector<8x1xf32>
    %145 = vector.broadcast %144 : vector<8x1xf32> to vector<8x128xf32>
    %146 = arith.mulf %141, %145 : vector<8x128xf32>
    %c0_76 = arith.constant 0 : index
    %c0_77 = arith.constant 0 : index
    %147 = vector.load %arg10[%c0_76, %c0_77] : memref<8x128xf32, #tpu.memory_space<vmem>>, vector<8x128xf32>
    tpu.vector_store %arg10[%c0_76, %c0_77], %146 {strides = array<i32>} : memref<8x128xf32, #tpu.memory_space<vmem>>, vector<8x128xf32>,
    return
  }
  func.func @transform_0(%arg0: i32) -> (i32, i32, i32) {
    %c0_i32 = arith.constant 0 : i32
    %c0_i32_0 = arith.constant 0 : i32
    %c0_i32_1 = arith.constant 0 : i32
    return %c0_i32, %arg0, %c0_i32_0 : i32, i32, i32
  }
  func.func @transform_1(%arg0: i32) -> (i32, i32, i32) {
    %c0_i32 = arith.constant 0 : i32
    %c0_i32_0 = arith.constant 0 : i32
    %c0_i32_1 = arith.constant 0 : i32
    %c0_i32_2 = arith.constant 0 : i32
    return %c0_i32, %c0_i32_0, %c0_i32_1 : i32, i32, i32
  }
  func.func @transform_2(%arg0: i32) -> (i32, i32) {
    %c0_i32 = arith.constant 0 : i32
    %c0_i32_0 = arith.constant 0 : i32
    %c0_i32_1 = arith.constant 0 : i32
    return %c0_i32, %c0_i32_0 : i32, i32
  }
  func.func @transform_3(%arg0: i32) -> (i32, i32, i32) {
    %c0_i32 = arith.constant 0 : i32
    %c0_i32_0 = arith.constant 0 : i32
    %c0_i32_1 = arith.constant 0 : i32
    %c0_i32_2 = arith.constant 0 : i32
    return %c0_i32, %c0_i32_0, %c0_i32_1 : i32, i32, i32
  }
  func.func @transform_4(%arg0: i32) -> (i32, i32) {
    %c0_i32 = arith.constant 0 : i32
    %c0_i32_0 = arith.constant 0 : i32
    %c0_i32_1 = arith.constant 0 : i32
    return %c0_i32, %c0_i32_0 : i32, i32
  }
  func.func @transform_5(%arg0: i32) -> (i32, i32, i32) {
    %c0_i32 = arith.constant 0 : i32
    %c0_i32_0 = arith.constant 0 : i32
    %c0_i32_1 = arith.constant 0 : i32
    %c0_i32_2 = arith.constant 0 : i32
    return %c0_i32, %c0_i32_0, %c0_i32_1 : i32, i32, i32
  }
  func.func @transform_6(%arg0: i32) -> (i32, i32) {
    %c0_i32 = arith.constant 0 : i32
    %c0_i32_0 = arith.constant 0 : i32
    %c0_i32_1 = arith.constant 0 : i32
    return %c0_i32, %c0_i32_0 : i32, i32
  }
  func.func @transform_7(%arg0: i32) -> (i32, i32) {
    %c0_i32 = arith.constant 0 : i32
    %c0_i32_0 = arith.constant 0 : i32
    %c0_i32_1 = arith.constant 0 : i32
    return %c0_i32, %c0_i32_0 : i32, i32
  }
  func.func @transform_8(%arg0: i32) -> (i32, i32) {
    %c0_i32 = arith.constant 0 : i32
    %c0_i32_0 = arith.constant 0 : i32
    %c0_i32_1 = arith.constant 0 : i32
    return %c0_i32, %c0_i32_0 : i32, i32
  }
  func.func @transform_9(%arg0: i32) -> (i32, i32) {
    %c0_i32 = arith.constant 0 : i32
    %c0_i32_0 = arith.constant 0 : i32
    return %arg0, %c0_i32 : i32, i32
  }
}

</mosaic_0001>

<llo_original>
// kernel: bn_drop_forward.1
$region0: #{bn_drop_forward.1}
  #allocation0 [shape = 'u32[]', space=smem, size = 0x4, offset = 0x4, fixed_abs, tag = 'smem constant byte address 0x4 - core index']
  #allocation1 [shape = 'u32[144,128]{1,0:T(1,128)}', space=vmem, size = 0x12000, scoped, tag = 'internal scratch']
  %s0 = inlined_call_operand.vmem [shape: f32[28,16,28], index: 0, kind: input, shape index: {}]
  %s1 = inlined_call_operand.vmem [shape: bf16[5,28,480], index: 1, kind: input, shape index: {}]
  %s2 = inlined_call_operand.vmem [shape: f32[2,480], index: 2, kind: input, shape index: {}]
  %s3 = inlined_call_operand.vmem [shape: bf16[5,240,400], index: 3, kind: input, shape index: {}]
  %s4 = inlined_call_operand.vmem [shape: f32[2,400], index: 4, kind: input, shape index: {}]
  %s5 = inlined_call_operand.vmem [shape: bf16[4,200,500], index: 5, kind: input, shape index: {}]
  %s6 = inlined_call_operand.vmem [shape: f32[2,500], index: 6, kind: input, shape index: {}]
  %s7 = inlined_call_operand.vmem [shape: bf16[500,128], index: 7, kind: input, shape index: {}]
  %s8 = inlined_call_operand.vmem [shape: f32[1,128], index: 8, kind: input, shape index: {}]
  %s9 = inlined_call_operand.vmem [shape: f32[16,128], index: 9, kind: output, shape index: {}]
  %s10 = sld [smem:[#allocation0]]
  $region107: #{bn_drop_forward.1} parent=0
    _
  %s12 = ssub.s32 1, %s10
  %s13 = scalar_select 0, %s12, %s10
  $region1: #{bn_drop_forward.1} parent=0
    #allocation2 [shape = 'u8[229376]{0}', space=vmem, size = 0x38000, scoped, tag = 'input window, operand 0']
    loop: start=0, step=1, limit=4
    $region2: #{bn_drop_forward.1} parent=1 // loop_pre_header
      _
    $region3: #{bn_drop_forward.1} parent=1 // loop_header
      %s15 = sphi 0, %s19
      %p16 = scmp.ge.s32.totalorder %s15, 4
      %s25 = sphi 0, %s27
      %s28 = sphi 0, %s25
      %s29 = sphi 0, %s28
      %s45 = sphi 0, %s29
      %s49 = sphi 0, %s49
      %s51 = sphi 0, %s49
      %s52 = sphi 0, %s51
      %s66 = sphi 0, %s52
      %s70 = sphi 0, %s70
      %s72 = sphi 0, %s70
      %s73 = sphi 0, %s72
      %s87 = sphi 0, %s73
      %s91 = sphi 0, %s91
      %s93 = sphi 0, %s91
      %s94 = sphi 0, %s93
      %s108 = sphi 0, %s94
      %s112 = sphi 0, %s112
      %s114 = sphi 0, %s112
      %s115 = sphi 0, %s114
      %s129 = sphi 0, %s115
      %s133 = sphi 0, %s133
      %s135 = sphi 0, %s133
      %s136 = sphi 0, %s135
      %s150 = sphi 0, %s136
      %s154 = sphi 0, %s154
      %s156 = sphi 0, %s154
      %s157 = sphi 0, %s156
      %s171 = sphi 0, %s157
      %s175 = sphi 0, %s175
      %s177 = sphi 0, %s175
      %s178 = sphi 0, %s177
      %s192 = sphi 0, %s178
      %s196 = sphi 0, %s196
      %s198 = sphi 0, %s196
      %s199 = sphi 0, %s198
      %s213 = sphi 0, %s199
      %s219 = sphi 0, %s221
      %s222 = sphi 0, %s219
      %s223 = sphi 0, %s222
      %s239 = sphi 0, %s223
    $region4: #{bn_drop_forward.1} parent=1 // loop_header_branch
      %18 = sbr.rel (%p16) target = $region8
    $region5: #{bn_drop_forward.1} parent=1 // loop_body
      %s20 = ssub.s32 %s15, 1
      %s21 = ssub.s32 %s15, 2
      %s22 = sadd.s32 %s15, 1
      %s23 = ssub.s32 %s15, %s22
      %p24 = scmp.eq.s32.totalorder %s23, 0
      %s26 = sadd.s32 %s25, 1
      %s27 = scalar_select %p24, %s25, %s26
      %p30 = pneg %p24
      %p31 = scmp.eq.s32.totalorder %s15, 1
      %p32 = por %p30, %p31
      %p33 = scmp.ne.s32.totalorder %s25, %s28
      %p34 = scmp.eq.s32.totalorder %s15, 0
      %p35 = por %p33, %p34
      %p36 = scmp.ne.s32.totalorder %s25, %s28
      %p37 = scmp.eq.s32.totalorder %s20, 1
      %p38 = por %p36, %p37
      %p39 = scmp.ne.s32.totalorder %s28, %s29
      %p40 = scmp.eq.s32.totalorder %s20, 0
      %p41 = por %p39, %p40
      %p42 = scmp.ne.s32.totalorder %s28, %s29
      %p43 = scmp.eq.s32.totalorder %s21, 1
      %p44 = por %p42, %p43
      %p46 = scmp.ne.s32.totalorder %s29, %s45
      %p47 = scmp.eq.s32.totalorder %s21, 0
      %p48 = por %p46, %p47
      %s50 = sadd.s32 %s49, 1
      %p53 = scmp.eq.s32.totalorder %s15, 1
      %p54 = scmp.ne.s32.totalorder %s49, %s51
      %p55 = scmp.eq.s32.totalorder %s15, 0
      %p56 = por %p54, %p55
      %p57 = scmp.ne.s32.totalorder %s49, %s51
      %p58 = scmp.eq.s32.totalorder %s20, 1
      %p59 = por %p57, %p58
      %p60 = scmp.ne.s32.totalorder %s51, %s52
      %p61 = scmp.eq.s32.totalorder %s20, 0
      %p62 = por %p60, %p61
      %p63 = scmp.ne.s32.totalorder %s51, %s52
      %p64 = scmp.eq.s32.totalorder %s21, 1
      %p65 = por %p63, %p64
      %p67 = scmp.ne.s32.totalorder %s52, %s66
      %p68 = scmp.eq.s32.totalorder %s21, 0
      %p69 = por %p67, %p68
      %s71 = sadd.s32 %s70, 1
      %p74 = scmp.eq.s32.totalorder %s15, 1
      %p75 = scmp.ne.s32.totalorder %s70, %s72
      %p76 = scmp.eq.s32.totalorder %s15, 0
      %p77 = por %p75, %p76
      %p78 = scmp.ne.s32.totalorder %s70, %s72
      %p79 = scmp.eq.s32.totalorder %s20, 1
      %p80 = por %p78, %p79
      %p81 = scmp.ne.s32.totalorder %s72, %s73
      %p82 = scmp.eq.s32.totalorder %s20, 0
      %p83 = por %p81, %p82
      %p84 = scmp.ne.s32.totalorder %s72, %s73
      %p85 = scmp.eq.s32.totalorder %s21, 1
      %p86 = por %p84, %p85
      %p88 = scmp.ne.s32.totalorder %s73, %s87
      %p89 = scmp.eq.s32.totalorder %s21, 0
      %p90 = por %p88, %p89
      %s92 = sadd.s32 %s91, 1
      %p95 = scmp.eq.s32.totalorder %s15, 1
      %p96 = scmp.ne.s32.totalorder %s91, %s93
      %p97 = scmp.eq.s32.totalorder %s15, 0
      %p98 = por %p96, %p97
      %p99 = scmp.ne.s32.totalorder %s91, %s93
      %p100 = scmp.eq.s32.totalorder %s20, 1
      %p101 = por %p99, %p100
      %p102 = scmp.ne.s32.totalorder %s93, %s94
      %p103 = scmp.eq.s32.totalorder %s20, 0
      %p104 = por %p102, %p103
      %p105 = scmp.ne.s32.totalorder %s93, %s94
      %p106 = scmp.eq.s32.totalorder %s21, 1
      %p107 = por %p105, %p106
      %p109 = scmp.ne.s32.totalorder %s94, %s108
      %p110 = scmp.eq.s32.totalorder %s21, 0
      %p111 = por %p109, %p110
      %s113 = sadd.s32 %s112, 1
      %p116 = scmp.eq.s32.totalorder %s15, 1
      %p117 = scmp.ne.s32.totalorder %s112, %s114
      %p118 = scmp.eq.s32.totalorder %s15, 0
      %p119 = por %p117, %p118
      %p120 = scmp.ne.s32.totalorder %s112, %s114
      %p121 = scmp.eq.s32.totalorder %s20, 1
      %p122 = por %p120, %p121
      %p123 = scmp.ne.s32.totalorder %s114, %s115
      %p124 = scmp.eq.s32.totalorder %s20, 0
      %p125 = por %p123, %p124
      %p126 = scmp.ne.s32.totalorder %s114, %s115
      %p127 = scmp.eq.s32.totalorder %s21, 1
      %p128 = por %p126, %p127
      %p130 = scmp.ne.s32.totalorder %s115, %s129
      %p131 = scmp.eq.s32.totalorder %s21, 0
      %p132 = por %p130, %p131
      %s134 = sadd.s32 %s133, 1
      %p137 = scmp.eq.s32.totalorder %s15, 1
      %p138 = scmp.ne.s32.totalorder %s133, %s135
      %p139 = scmp.eq.s32.totalorder %s15, 0
      %p140 = por %p138, %p139
      %p141 = scmp.ne.s32.totalorder %s133, %s135
      %p142 = scmp.eq.s32.totalorder %s20, 1
      %p143 = por %p141, %p142
      %p144 = scmp.ne.s32.totalorder %s135, %s136
      %p145 = scmp.eq.s32.totalorder %s20, 0
      %p146 = por %p144, %p145
      %p147 = scmp.ne.s32.totalorder %s135, %s136
      %p148 = scmp.eq.s32.totalorder %s21, 1
      %p149 = por %p147, %p148
      %p151 = scmp.ne.s32.totalorder %s136, %s150
      %p152 = scmp.eq.s32.totalorder %s21, 0
      %p153 = por %p151, %p152
      %s155 = sadd.s32 %s154, 1
      %p158 = scmp.eq.s32.totalorder %s15, 1
      %p159 = scmp.ne.s32.totalorder %s154, %s156
      %p160 = scmp.eq.s32.totalorder %s15, 0
      %p161 = por %p159, %p160
      %p162 = scmp.ne.s32.totalorder %s154, %s156
      %p163 = scmp.eq.s32.totalorder %s20, 1
      %p164 = por %p162, %p163
      %p165 = scmp.ne.s32.totalorder %s156, %s157
      %p166 = scmp.eq.s32.totalorder %s20, 0
      %p167 = por %p165, %p166
      %p168 = scmp.ne.s32.totalorder %s156, %s157
      %p169 = scmp.eq.s32.totalorder %s21, 1
      %p170 = por %p168, %p169
      %p172 = scmp.ne.s32.totalorder %s157, %s171
      %p173 = scmp.eq.s32.totalorder %s21, 0
      %p174 = por %p172, %p173
      %s176 = sadd.s32 %s175, 1
      %p179 = scmp.eq.s32.totalorder %s15, 1
      %p180 = scmp.ne.s32.totalorder %s175, %s177
      %p181 = scmp.eq.s32.totalorder %s15, 0
      %p182 = por %p180, %p181
      %p183 = scmp.ne.s32.totalorder %s175, %s177
      %p184 = scmp.eq.s32.totalorder %s20, 1
      %p185 = por %p183, %p184
      %p186 = scmp.ne.s32.totalorder %s177, %s178
      %p187 = scmp.eq.s32.totalorder %s20, 0
      %p188 = por %p186, %p187
      %p189 = scmp.ne.s32.totalorder %s177, %s178
      %p190 = scmp.eq.s32.totalorder %s21, 1
      %p191 = por %p189, %p190
      %p193 = scmp.ne.s32.totalorder %s178, %s192
      %p194 = scmp.eq.s32.totalorder %s21, 0
      %p195 = por %p193, %p194
      %s197 = sadd.s32 %s196, 1
      %p200 = scmp.eq.s32.totalorder %s15, 1
      %p201 = scmp.ne.s32.totalorder %s196, %s198
      %p202 = scmp.eq.s32.totalorder %s15, 0
      %p203 = por %p201, %p202
      %p204 = scmp.ne.s32.totalorder %s196, %s198
      %p205 = scmp.eq.s32.totalorder %s20, 1
      %p206 = por %p204, %p205
      %p207 = scmp.ne.s32.totalorder %s198, %s199
      %p208 = scmp.eq.s32.totalorder %s20, 0
      %p209 = por %p207, %p208
      %p210 = scmp.ne.s32.totalorder %s198, %s199
      %p211 = scmp.eq.s32.totalorder %s21, 1
      %p212 = por %p210, %p211
      %p214 = scmp.ne.s32.totalorder %s199, %s213
      %p215 = scmp.eq.s32.totalorder %s21, 0
      %p216 = por %p214, %p215
      %s217 = ssub.s32 %s15, %s22
      %p218 = scmp.eq.s32.totalorder %s217, 0
      %s220 = sadd.s32 %s219, 1
      %s221 = scalar_select %p218, %s219, %s220
      %p224 = pneg %p218
      %p225 = scmp.eq.s32.totalorder %s15, 1
      %p226 = por %p224, %p225
      %p227 = scmp.ne.s32.totalorder %s219, %s222
      %p228 = scmp.eq.s32.totalorder %s15, 0
      %p229 = por %p227, %p228
      %p230 = scmp.ne.s32.totalorder %s219, %s222
      %p231 = scmp.eq.s32.totalorder %s20, 1
      %p232 = por %p230, %p231
      %p233 = scmp.ne.s32.totalorder %s222, %s223
      %p234 = scmp.eq.s32.totalorder %s20, 0
      %p235 = por %p233, %p234
      %p236 = scmp.ne.s32.totalorder %s222, %s223
      %p237 = scmp.eq.s32.totalorder %s21, 1
      %p238 = por %p236, %p237
      %p240 = scmp.ne.s32.totalorder %s223, %s239
      %p241 = scmp.eq.s32.totalorder %s21, 0
      %p242 = por %p240, %p241
      %p243 = scmp.le.s32.totalorder 1, %s15
      %p244 = scmp.lt.s32.totalorder %s15, 3
      %p245 = pnand %p243, %p244
      %p246 = pneg %p245
      // Predicated region
      $region9: #{bn_drop_forward.1} parent=5 // pred_check
        _
      $region10: #{bn_drop_forward.1} parent=5 // pred_check_branch
        %248 = sbr.rel (%p245) target = $region12
      $region11: #{bn_drop_forward.1} parent=5 // pred_region
        %s249 = ssub.s32 %s15, 1
        // Predicated region
        $region13: #{bn_drop_forward.1} parent=11 // pred_check
          %p250 = pneg %p62
        $region14: #{bn_drop_forward.1} parent=11 // pred_check_branch
          %252 = sbr.rel (%p250) target = $region16
        $region15: #{bn_drop_forward.1} parent=11 // pred_region
          _
        $region16: #{bn_drop_forward.1} parent=11 // pred_fallthru
          _
        // Predicated region
        $region17: #{bn_drop_forward.1} parent=11 // pred_check
          %p253 = pneg %p83
        $region18: #{bn_drop_forward.1} parent=11 // pred_check_branch
          %255 = sbr.rel (%p253) target = $region20
        $region19: #{bn_drop_forward.1} parent=11 // pred_region
          _
        $region20: #{bn_drop_forward.1} parent=11 // pred_fallthru
          _
        // Predicated region
        $region21: #{bn_drop_forward.1} parent=11 // pred_check
          %p256 = pneg %p104
        $region22: #{bn_drop_forward.1} parent=11 // pred_check_branch
          %258 = sbr.rel (%p256) target = $region24
        $region23: #{bn_drop_forward.1} parent=11 // pred_region
          _
        $region24: #{bn_drop_forward.1} parent=11 // pred_fallthru
          _
        // Predicated region
        $region25: #{bn_drop_forward.1} parent=11 // pred_check
          %p259 = pneg %p125
        $region26: #{bn_drop_forward.1} parent=11 // pred_check_branch
          %261 = sbr.rel (%p259) target = $region28
        $region27: #{bn_drop_forward.1} parent=11 // pred_region
          _
        $region28: #{bn_drop_forward.1} parent=11 // pred_fallthru
          _
        // Predicated region
        $region29: #{bn_drop_forward.1} parent=11 // pred_check
          %p262 = pneg %p146
        $region30: #{bn_drop_forward.1} parent=11 // pred_check_branch
          %264 = sbr.rel (%p262) target = $region32
        $region31: #{bn_drop_forward.1} parent=11 // pred_region
          _
        $region32: #{bn_drop_forward.1} parent=11 // pred_fallthru
          _
        // Predicated region
        $region33: #{bn_drop_forward.1} parent=11 // pred_check
          %p265 = pneg %p167
        $region34: #{bn_drop_forward.1} parent=11 // pred_check_branch
          %267 = sbr.rel (%p265) target = $region36
        $region35: #{bn_drop_forward.1} parent=11 // pred_region
          _
        $region36: #{bn_drop_forward.1} parent=11 // pred_fallthru
          _
        // Predicated region
        $region37: #{bn_drop_forward.1} parent=11 // pred_check
          %p268 = pneg %p188
        $region38: #{bn_drop_forward.1} parent=11 // pred_check_branch
          %270 = sbr.rel (%p268) target = $region40
        $region39: #{bn_drop_forward.1} parent=11 // pred_region
          _
        $region40: #{bn_drop_forward.1} parent=11 // pred_fallthru
          _
        // Predicated region
        $region41: #{bn_drop_forward.1} parent=11 // pred_check
          %p271 = pneg %p209
        $region42: #{bn_drop_forward.1} parent=11 // pred_check_branch
          %273 = sbr.rel (%p271) target = $region44
        $region43: #{bn_drop_forward.1} parent=11 // pred_region
          _
        $region44: #{bn_drop_forward.1} parent=11 // pred_fallthru
          _
      $region12: #{bn_drop_forward.1} parent=5 // pred_fallthru
        _
      %p274 = scmp.lt.s32.totalorder %s15, 2
      // Predicated region
      $region45: #{bn_drop_forward.1} parent=5 // pred_check
        %p275 = pneg %p274
      $region46: #{bn_drop_forward.1} parent=5 // pred_check_branch
        %277 = sbr.rel (%p275) target = $region48
      $region47: #{bn_drop_forward.1} parent=5 // pred_region
        // Predicated region
        $region49: #{bn_drop_forward.1} parent=47 // pred_check
          %p278 = pneg %p35
        $region50: #{bn_drop_forward.1} parent=47 // pred_check_branch
          %280 = sbr.rel (%p278) target = $region52
        $region51: #{bn_drop_forward.1} parent=47 // pred_region
          %s281 = sand.u32 %s25, 1
          %s282 = sand.u32 %s25, 1
          %s283 = smul.addr %s282, 224
          %s284 = scalar_lea.vmem [#allocation2], %s283
          %s285 = smul.addr %s15, 8
          %s286 = scalar_lea.vmem %s0, %s285
          // Predicated region
          $region53: #{bn_drop_forward.1} parent=51 // pred_check
            _
          $region54: #{bn_drop_forward.1} parent=51 // pred_check_branch
            %288 = sbr.rel (0) target = $region56
          $region55: #{bn_drop_forward.1} parent=51 // pred_region
            // Predicated region
            $region57: #{bn_drop_forward.1} parent=55 // pred_check
              _
            $region58: #{bn_drop_forward.1} parent=55 // pred_check_branch
              %290 = sbr.rel (0) target = $region60
            $region59: #{bn_drop_forward.1} parent=55 // pred_region
              // Predicated region
              $region72: #{bn_drop_forward.1} parent=59 // pred_check
                _
              $region73: #{bn_drop_forward.1} parent=59 // pred_check_branch
                %359 = sbr.rel (0) target = $region75
              $region74: #{bn_drop_forward.1} parent=59 // pred_region
                loop: start=0, step=1, limit=1
                $region76: #{bn_drop_forward.1} parent=74 // loop_pre_header
                  _
                $region77: #{bn_drop_forward.1} parent=74 // loop_header
                  %s361 = sphi 0, %s365
                  %p362 = scmp.ge.s32.totalorder %s361, 1
                  %s366 = sphi %s286, %s286
                  %s367 = sphi %s284, %s284
                $region78: #{bn_drop_forward.1} parent=74 // loop_header_branch
                  %364 = sbr.rel (%p362) target = $region82
                $region79: #{bn_drop_forward.1} parent=74 // loop_body
                  %v368 = vld [vmem:[%s366] sm:$0xff]
                  %369 = vst [vmem:[%s367] sm:$0xff] %v368
                  %v370 = vld [vmem:[%s366 + $0x10] sm:$0xff]
                  %371 = vst [vmem:[%s367 + $0x8] sm:$0xff] %v370
                  %v372 = vld [vmem:[%s366 + $0x20] sm:$0xff]
                  %373 = vst [vmem:[%s367 + $0x10] sm:$0xff] %v372
                  %v374 = vld [vmem:[%s366 + $0x30] sm:$0xff]
                  %375 = vst [vmem:[%s367 + $0x18] sm:$0xff] %v374
                  %v376 = vld [vmem:[%s366 + $0x40] sm:$0xff]
                  %377 = vst [vmem:[%s367 + $0x20] sm:$0xff] %v376
                  %v378 = vld [vmem:[%s366 + $0x50] sm:$0xff]
                  %379 = vst [vmem:[%s367 + $0x28] sm:$0xff] %v378
                  %v380 = vld [vmem:[%s366 + $0x60] sm:$0xff]
                  %381 = vst [vmem:[%s367 + $0x30] sm:$0xff] %v380
                  %v382 = vld [vmem:[%s366 + $0x70] sm:$0xff]
                  %383 = vst [vmem:[%s367 + $0x38] sm:$0xff] %v382
                  %v384 = vld [vmem:[%s366 + $0x80] sm:$0xff]
                  %385 = vst [vmem:[%s367 + $0x40] sm:$0xff] %v384
                  %v386 = vld [vmem:[%s366 + $0x90] sm:$0xff]
                  %387 = vst [vmem:[%s367 + $0x48] sm:$0xff] %v386
                  %v388 = vld [vmem:[%s366 + $0xa0] sm:$0xff]
                  %389 = vst [vmem:[%s367 + $0x50] sm:$0xff] %v388
                  %v390 = vld [vmem:[%s366 + $0xb0] sm:$0xff]
                  %391 = vst [vmem:[%s367 + $0x58] sm:$0xff] %v390
                  %v392 = vld [vmem:[%s366 + $0xc0] sm:$0xff]
                  %393 = vst [vmem:[%s367 + $0x60] sm:$0xff] %v392
                  %v394 = vld [vmem:[%s366 + $0xd0] sm:$0xff]
                  %395 = vst [vmem:[%s367 + $0x68] sm:$0xff] %v394
                  %v396 = vld [vmem:[%s366 + $0xe0] sm:$0xff]
                  %397 = vst [vmem:[%s367 + $0x70] sm:$0xff] %v396
                  %v398 = vld [vmem:[%s366 + $0xf0] sm:$0xff]
                  %399 = vst [vmem:[%s367 + $0x78] sm:$0xff] %v398
                  %v400 = vld [vmem:[%s366 + $0x100] sm:$0xff]
                  %401 = vst [vmem:[%s367 + $0x80] sm:$0xff] %v400
                  %v402 = vld [vmem:[%s366 + $0x110] sm:$0xff]
                  %403 = vst [vmem:[%s367 + $0x88] sm:$0xff] %v402
                  %v404 = vld [vmem:[%s366 + $0x120] sm:$0xff]
                  %405 = vst [vmem:[%s367 + $0x90] sm:$0xff] %v404
                  %v406 = vld [vmem:[%s366 + $0x130] sm:$0xff]
                  %407 = vst [vmem:[%s367 + $0x98] sm:$0xff] %v406
                  %v408 = vld [vmem:[%s366 + $0x140] sm:$0xff]
                  %409 = vst [vmem:[%s367 + $0xa0] sm:$0xff] %v408
                  %v410 = vld [vmem:[%s366 + $0x150] sm:$0xff]
                  %411 = vst [vmem:[%s367 + $0xa8] sm:$0xff] %v410
                  %v412 = vld [vmem:[%s366 + $0x160] sm:$0xff]
                  %413 = vst [vmem:[%s367 + $0xb0] sm:$0xff] %v412
                  %v414 = vld [vmem:[%s366 + $0x170] sm:$0xff]
                  %415 = vst [vmem:[%s367 + $0xb8] sm:$0xff] %v414
                  %v416 = vld [vmem:[%s366 + $0x180] sm:$0xff]
                  %417 = vst [vmem:[%s367 + $0xc0] sm:$0xff] %v416
                  %v418 = vld [vmem:[%s366 + $0x190] sm:$0xff]
                  %419 = vst [vmem:[%s367 + $0xc8] sm:$0xff] %v418
                  %v420 = vld [vmem:[%s366 + $0x1a0] sm:$0xff]
                  %421 = vst [vmem:[%s367 + $0xd0] sm:$0xff] %v420
                  %v422 = vld [vmem:[%s366 + $0x1b0] sm:$0xff]
                  %423 = vst [vmem:[%s367 + $0xd8] sm:$0xff] %v422
                $region80: #{bn_drop_forward.1} parent=74 // loop_footer
                  %s365 = sadd.s32 1, %s361
                $region81: #{bn_drop_forward.1} parent=74 // loop_footer_branch
                  %360 = sbr.rel target = $region77
                $region82: #{bn_drop_forward.1} parent=74 // loop_exit
                  _
              $region75: #{bn_drop_forward.1} parent=59 // pred_fallthru
                _
              // Predicated region
              $region83: #{bn_drop_forward.1} parent=59 // pred_check
                _
              $region84: #{bn_drop_forward.1} parent=59 // pred_check_branch
                %425 = sbr.rel target = $region86
              $region85: #{bn_drop_forward.1} parent=59 // pred_region
                _
              $region86: #{bn_drop_forward.1} parent=59 // pred_fallthru
                _
            $region60: #{bn_drop_forward.1} parent=55 // pred_fallthru
              _
            // Predicated region
            $region61: #{bn_drop_forward.1} parent=55 // pred_check
              _
            $region62: #{bn_drop_forward.1} parent=55 // pred_check_branch
              %292 = sbr.rel target = $region64
            $region63: #{bn_drop_forward.1} parent=55 // pred_region
              loop: start=0, step=1, limit=1
              $region65: #{bn_drop_forward.1} parent=63 // loop_pre_header
                _
              $region66: #{bn_drop_forward.1} parent=63 // loop_header
                %s295 = sphi 0, %s299
                %p296 = scmp.ge.s32.totalorder %s295, 1
                %s300 = sphi %s286, %s286
                %s301 = sphi %s284, %s284
              $region67: #{bn_drop_forward.1} parent=63 // loop_header_branch
                %298 = sbr.rel (%p296) target = $region71
              $region68: #{bn_drop_forward.1} parent=63 // loop_body
                %v302 = vld [vmem:[%s300] sm:$0xff]
                %303 = vst [vmem:[%s301] sm:$0xff] %v302
                %v304 = vld [vmem:[%s300 + $0x10] sm:$0xff]
                %305 = vst [vmem:[%s301 + $0x8] sm:$0xff] %v304
                %v306 = vld [vmem:[%s300 + $0x20] sm:$0xff]
                %307 = vst [vmem:[%s301 + $0x10] sm:$0xff] %v306
                %v308 = vld [vmem:[%s300 + $0x30] sm:$0xff]
                %309 = vst [vmem:[%s301 + $0x18] sm:$0xff] %v308
                %v310 = vld [vmem:[%s300 + $0x40] sm:$0xff]
                %311 = vst [vmem:[%s301 + $0x20] sm:$0xff] %v310
                %v312 = vld [vmem:[%s300 + $0x50] sm:$0xff]
                %313 = vst [vmem:[%s301 + $0x28] sm:$0xff] %v312
                %v314 = vld [vmem:[%s300 + $0x60] sm:$0xff]
                %315 = vst [vmem:[%s301 + $0x30] sm:$0xff] %v314
                %v316 = vld [vmem:[%s300 + $0x70] sm:$0xff]
                %317 = vst [vmem:[%s301 + $0x38] sm:$0xff] %v316
                %v318 = vld [vmem:[%s300 + $0x80] sm:$0xff]
                %319 = vst [vmem:[%s301 + $0x40] sm:$0xff] %v318
                %v320 = vld [vmem:[%s300 + $0x90] sm:$0xff]
                %321 = vst [vmem:[%s301 + $0x48] sm:$0xff] %v320
                %v322 = vld [vmem:[%s300 + $0xa0] sm:$0xff]
                %323 = vst [vmem:[%s301 + $0x50] sm:$0xff] %v322
                %v324 = vld [vmem:[%s300 + $0xb0] sm:$0xff]
                %325 = vst [vmem:[%s301 + $0x58] sm:$0xff] %v324
                %v326 = vld [vmem:[%s300 + $0xc0] sm:$0xff]
                %327 = vst [vmem:[%s301 + $0x60] sm:$0xff] %v326
                %v328 = vld [vmem:[%s300 + $0xd0] sm:$0xff]
                %329 = vst [vmem:[%s301 + $0x68] sm:$0xff] %v328
                %v330 = vld [vmem:[%s300 + $0xe0] sm:$0xff]
                %331 = vst [vmem:[%s301 + $0x70] sm:$0xff] %v330
                %v332 = vld [vmem:[%s300 + $0xf0] sm:$0xff]
                %333 = vst [vmem:[%s301 + $0x78] sm:$0xff] %v332
                %v334 = vld [vmem:[%s300 + $0x100] sm:$0xff]
                %335 = vst [vmem:[%s301 + $0x80] sm:$0xff] %v334
                %v336 = vld [vmem:[%s300 + $0x110] sm:$0xff]
                %337 = vst [vmem:[%s301 + $0x88] sm:$0xff] %v336
                %v338 = vld [vmem:[%s300 + $0x120] sm:$0xff]
                %339 = vst [vmem:[%s301 + $0x90] sm:$0xff] %v338
                %v340 = vld [vmem:[%s300 + $0x130] sm:$0xff]
                %341 = vst [vmem:[%s301 + $0x98] sm:$0xff] %v340
                %v342 = vld [vmem:[%s300 + $0x140] sm:$0xff]
                %343 = vst [vmem:[%s301 + $0xa0] sm:$0xff] %v342
                %v344 = vld [vmem:[%s300 + $0x150] sm:$0xff]
                %345 = vst [vmem:[%s301 + $0xa8] sm:$0xff] %v344
                %v346 = vld [vmem:[%s300 + $0x160] sm:$0xff]
                %347 = vst [vmem:[%s301 + $0xb0] sm:$0xff] %v346
                %v348 = vld [vmem:[%s300 + $0x170] sm:$0xff]
                %349 = vst [vmem:[%s301 + $0xb8] sm:$0xff] %v348
                %v350 = vld [vmem:[%s300 + $0x180] sm:$0xff]
                %351 = vst [vmem:[%s301 + $0xc0] sm:$0xff] %v350
                %v352 = vld [vmem:[%s300 + $0x190] sm:$0xff]
                %353 = vst [vmem:[%s301 + $0xc8] sm:$0xff] %v352
                %v354 = vld [vmem:[%s300 + $0x1a0] sm:$0xff]
                %355 = vst [vmem:[%s301 + $0xd0] sm:$0xff] %v354
                %v356 = vld [vmem:[%s300 + $0x1b0] sm:$0xff]
                %357 = vst [vmem:[%s301 + $0xd8] sm:$0xff] %v356
              $region69: #{bn_drop_forward.1} parent=63 // loop_footer
                %s299 = sadd.s32 1, %s295
              $region70: #{bn_drop_forward.1} parent=63 // loop_footer_branch
                %294 = sbr.rel target = $region66
              $region71: #{bn_drop_forward.1} parent=63 // loop_exit
                _
            $region64: #{bn_drop_forward.1} parent=55 // pred_fallthru
              _
          $region56: #{bn_drop_forward.1} parent=51 // pred_fallthru
            _
          %426 = vnop
        $region52: #{bn_drop_forward.1} parent=47 // pred_fallthru
          _
      $region48: #{bn_drop_forward.1} parent=5 // pred_fallthru
        _
      %p427 = scmp.le.s32.totalorder 1, %s15
      %p428 = scmp.lt.s32.totalorder %s15, 3
      %p429 = pnand %p427, %p428
      %p430 = pneg %p429
      // Predicated region
      $region87: #{bn_drop_forward.1} parent=5 // pred_check
        _
      $region88: #{bn_drop_forward.1} parent=5 // pred_check_branch
        %432 = sbr.rel (%p429) target = $region90
      $region89: #{bn_drop_forward.1} parent=5 // pred_region
        %s433 = ssub.s32 %s15, 1
        %s434 = sand.u32 %s28, 1
        %s435 = sand.u32 %s28, 1
        %s436 = smul.addr %s435, 224
        %s437 = scalar_lea.vmem [#allocation2], %s436
        // Predicated region
        $region91: #{bn_drop_forward.1} parent=89 // pred_check
          %p438 = pneg %p41
        $region92: #{bn_drop_forward.1} parent=89 // pred_check_branch
          %440 = sbr.rel (%p438) target = $region94
        $region93: #{bn_drop_forward.1} parent=89 // pred_region
          _
        $region94: #{bn_drop_forward.1} parent=89 // pred_fallthru
          _
        %s441 = sand.u32 %s28, 1
        %s442 = sand.u32 %s28, 1
        %s443 = smul.addr %s442, 224
        %s444 = scalar_lea.vmem [#allocation2], %s443
        %p445 = pneg %p41
        %p446 = pneg %p38
        %p447 = pneg %p62
        %p448 = pneg %p59
        %p449 = pneg %p83
        %p450 = pneg %p80
        %p451 = pneg %p104
        %p452 = pneg %p101
        %p453 = pneg %p125
        %p454 = pneg %p122
        %p455 = pneg %p146
        %p456 = pneg %p143
        %p457 = pneg %p167
        %p458 = pneg %p164
        %p459 = pneg %p188
        %p460 = pneg %p185
        %p461 = pneg %p209
        %p462 = pneg %p206
        %p463 = pneg %p235
        %p464 = pneg %p232
        %p465 = scmp.lt.s32.totalorder %s20, 1
        %s466 = scalar_select %p465, %s20, 1
        %s467 = smul.addr %s466, 8
        %s468 = scalar_lea.vmem %s9, %s467
        %p469 = scmp.lt.s32.totalorder %s20, 1
        %s470 = scalar_select %p469, %s20, 1
        %s471 = smul.addr %s470, 8
        %s472 = scalar_lea.vmem %s9, %s471
        %v474 = vld [vmem:[%s437] sm:$0xff]
        %v475 = vld [vmem:[%s437 + $0x8] sm:$0xff]
        %v476 = vld [vmem:[%s437 + $0x10] sm:$0xff]
        %v477 = vld [vmem:[%s437 + $0x18] sm:$0xff]
        %v478 = vld [vmem:[%s437 + $0x20] sm:$0xff]
        %v479 = vld [vmem:[%s437 + $0x28] sm:$0xff]
        %v480 = vld [vmem:[%s437 + $0x30] sm:$0xff]
        %v481 = vld [vmem:[%s437 + $0x38] sm:$0xff]
        %v482 = vld [vmem:[%s437 + $0x40] sm:$0xff]
        %v483 = vld [vmem:[%s437 + $0x48] sm:$0xff]
        %v484 = vld [vmem:[%s437 + $0x50] sm:$0xff]
        %v485 = vld [vmem:[%s437 + $0x58] sm:$0xff]
        %v486 = vld [vmem:[%s437 + $0x60] sm:$0xff]
        %v487 = vld [vmem:[%s437 + $0x68] sm:$0xff]
        %v488 = vld [vmem:[%s437 + $0x70] sm:$0xff]
        %v489 = vld [vmem:[%s437 + $0x78] sm:$0xff]
        %v490 = vld [vmem:[%s437 + $0x80] sm:$0xff]
        %v491 = vld [vmem:[%s437 + $0x88] sm:$0xff]
        %v492 = vld [vmem:[%s437 + $0x90] sm:$0xff]
        %v493 = vld [vmem:[%s437 + $0x98] sm:$0xff]
        %v494 = vld [vmem:[%s437 + $0xa0] sm:$0xff]
        %v495 = vld [vmem:[%s437 + $0xa8] sm:$0xff]
        %v496 = vld [vmem:[%s437 + $0xb0] sm:$0xff]
        %v497 = vld [vmem:[%s437 + $0xb8] sm:$0xff]
        %v498 = vld [vmem:[%s437 + $0xc0] sm:$0xff]
        %v499 = vld [vmem:[%s437 + $0xc8] sm:$0xff]
        %v500 = vld [vmem:[%s437 + $0xd0] sm:$0xff]
        %v501 = vld [vmem:[%s437 + $0xd8] sm:$0xff]
        %v502 = vpack.c.bf16 %v475, %v474
        %v503 = vpack.c.bf16 %v477, %v476
        %v504 = vpack.c.bf16 %v479, %v478
        %v505 = vpack.c.bf16 %v481, %v480
        %v506 = vpack.c.bf16 %v483, %v482
        %v507 = vpack.c.bf16 %v485, %v484
        %v508 = vpack.c.bf16 %v487, %v486
        %v509 = vpack.c.bf16 %v489, %v488
        %v510 = vpack.c.bf16 %v491, %v490
        %v511 = vpack.c.bf16 %v493, %v492
        %v512 = vpack.c.bf16 %v495, %v494
        %v513 = vpack.c.bf16 %v497, %v496
        %v514 = vld [vmem:[%s1] sm:$0xff]
        %v515 = vld [vmem:[%s1 + $0x8] sm:$0xff]
        %v516 = vld [vmem:[%s1 + $0x10] sm:$0xff]
        %v517 = vld [vmem:[%s1 + $0x18] sm:$0xff]
        %v518 = vld [vmem:[%s1 + $0x20] sm:$0xff]
        %v519 = vld [vmem:[%s1 + $0x28] sm:$0xff]
        %v520 = vld [vmem:[%s1 + $0x30] sm:$0x33]
        %v521 = vld [vmem:[%s1 + $0x38] sm:$0x33]
        %v522 = vpack.c.bf16 %v476, %v475
        %v523 = vpack.c.bf16 %v478, %v477
        %v524 = vpack.c.bf16 %v480, %v479
        %v525 = vpack.c.bf16 %v482, %v481
        %v526 = vpack.c.bf16 %v484, %v483
        %v527 = vpack.c.bf16 %v486, %v485
        %v528 = vpack.c.bf16 %v488, %v487
        %v529 = vpack.c.bf16 %v490, %v489
        %v530 = vpack.c.bf16 %v492, %v491
        %v531 = vpack.c.bf16 %v494, %v493
        %v532 = vpack.c.bf16 %v496, %v495
        %v533 = vpack.c.bf16 %v498, %v497
        %s534 = scalar_lea.vmem %s1, 64
        %v535 = vld [vmem:[%s534] sm:$0xff]
        %v536 = vld [vmem:[%s534 + $0x8] sm:$0xff]
        %v537 = vld [vmem:[%s534 + $0x10] sm:$0xff]
        %v538 = vld [vmem:[%s534 + $0x18] sm:$0xff]
        %v539 = vld [vmem:[%s534 + $0x20] sm:$0xff]
        %v540 = vld [vmem:[%s534 + $0x28] sm:$0xff]
        %v541 = vld [vmem:[%s534 + $0x30] sm:$0x33]
        %v542 = vld [vmem:[%s534 + $0x38] sm:$0x33]
        %v551 = vunpack.c.l.b16 %v535
        %v552 = vunpack.c.h.b16 %v535
        %v553 = vunpack.c.l.b16 %v536
        %v554 = vunpack.c.h.b16 %v536
        %v555 = vunpack.c.l.b16 %v537
        %v556 = vunpack.c.h.b16 %v537
        %v557 = vunpack.c.l.b16 %v538
        %v558 = vunpack.c.h.b16 %v538
        %v559 = vunpack.c.l.b16 %v539
        %v560 = vunpack.c.h.b16 %v539
        %v561 = vunpack.c.l.b16 %v540
        %v562 = vunpack.c.h.b16 %v540
        %v563 = vunpack.c.l.b16 %v541
        %v564 = vunpack.c.h.b16 %v541
        %v565 = vunpack.c.l.b16 %v542
        %v566 = vunpack.c.h.b16 %v542
        %v567 = vpack.c.b16 %v555, %v551
        %v568 = vpack.c.b16 %v556, %v552
        %v569 = vpack.c.b16 %v557, %v553
        %v570 = vpack.c.b16 %v558, %v554
        %v571 = vpack.c.b16 %v563, %v559
        %v572 = vpack.c.b16 %v564, %v560
        %v573 = vpack.c.b16 %v565, %v561
        %v574 = vpack.c.b16 %v566, %v562
        %vm579 = vcmask 228352
        %v581 = vsel %vm579, %v522, 0
        %v584 = vsel %vm579, %v523, 0
        %v587 = vsel %vm579, %v524, 0
        %v590 = vsel %vm579, %v525, 0
        %v593 = vsel %vm579, %v526, 0
        %v596 = vsel %vm579, %v527, 0
        %v599 = vsel %vm579, %v528, 0
        %v602 = vsel %vm579, %v529, 0
        %v605 = vsel %vm579, %v530, 0
        %v608 = vsel %vm579, %v531, 0
        %v611 = vsel %vm579, %v532, 0
        %v614 = vsel %vm579, %v533, 0
        %vm616 = vcmask 1045504
        %v618 = vsel %vm616, %v571, 0
        %v621 = vsel %vm616, %v572, 0
        %v624 = vsel %vm616, %v573, 0
        %v627 = vsel %vm616, %v574, 0
        %629 = vmatprep.subr.bf16.mxu0 %v568
        %630 = vmatpush1.bf16.msra.mxu0 %v567
        %631 = vmatprep.subr.bf16.mxu0 %v621
        %632 = vmatpush1.bf16.msra.mxu0 %v618
        %633 = vmatprep.subr.bf16.mxu0 0
        %634 = vmatpush1.bf16.msra.mxu0 0
        %635 = vmatprep.subr.bf16.mxu0 0
        %636 = vmatpush1.bf16.msra.mxu0 0
        %637 = vmatprep.subr.bf16.mxu0 0
        %638 = vmatpush1.bf16.msra.mxu0 0
        %639 = vmatprep.subr.bf16.mxu0 0
        %640 = vmatpush1.bf16.msra.mxu0 0
        %641 = vmatprep.subr.bf16.mxu0 0
        %642 = vmatpush1.bf16.msra.mxu0 0
        %643 = vmatprep.subr.bf16.mxu0 0
        %644 = vmatpush1.bf16.msra.mxu0 0
        %645 = vmatprep.subr.bf16.mxu0 0
        %646 = vmatpush1.bf16.msra.mxu0 0
        %647 = vmatprep.subr.bf16.mxu0 0
        %648 = vmatpush1.bf16.msra.mxu0 0
        %649 = vmatprep.subr.bf16.mxu0 0
        %650 = vmatpush1.bf16.msra.mxu0 0
        %651 = vmatprep.subr.bf16.mxu0 0
        %652 = vmatpush1.bf16.msra.mxu0 0
        %653 = vmatprep.subr.bf16.mxu0 0
        %654 = vmatpush1.bf16.msra.mxu0 0
        %655 = vmatprep.subr.bf16.mxu0 0
        %656 = vmatpush1.bf16.msra.mxu0 0
        %657 = vmatprep.subr.bf16.mxu0 0
        %658 = vmatpush1.bf16.msra.mxu0 0
        %659 = vmatprep.subr.bf16.mxu0 0
        %660 = vmatpush1.bf16.msra.mxu0 0
        %661 = vmatprep.mubr.bf16.mxu0 0
        %662 = vmatmul.mubr.bf16.gmra.mrb[0].mxu0 %v581
        %v663 = vpop.f32.mrb[0].mxu0
        %v664 = vadd.f32 0.0, %v663
        %v665 = vpop.f32.mrb[0].mxu0
        %v666 = vadd.f32 0.0, %v665
        %v667 = vpop.f32.mrb[0].mxu0
        %v668 = vadd.f32 0.0, %v667
        %v669 = vpop.f32.mrb[0].mxu0
        %v670 = vadd.f32 0.0, %v669
        %671 = vmatprep.mubr.bf16.mxu0 0
        %672 = vmatmul.mubr.bf16.gmra.mrb[0].mxu0 %v584
        %v673 = vpop.f32.mrb[0].mxu0
        %v674 = vadd.f32 0.0, %v673
        %v675 = vpop.f32.mrb[0].mxu0
        %v676 = vadd.f32 0.0, %v675
        %v677 = vpop.f32.mrb[0].mxu0
        %v678 = vadd.f32 0.0, %v677
        %v679 = vpop.f32.mrb[0].mxu0
        %v680 = vadd.f32 0.0, %v679
        %681 = vmatprep.mubr.bf16.mxu0 0
        %682 = vmatmul.mubr.bf16.gmra.mrb[0].mxu0 %v587
        %v683 = vpop.f32.mrb[0].mxu0
        %v684 = vadd.f32 0.0, %v683
        %v685 = vpop.f32.mrb[0].mxu0
        %v686 = vadd.f32 0.0, %v685
        %v687 = vpop.f32.mrb[0].mxu0
        %v688 = vadd.f32 0.0, %v687
        %v689 = vpop.f32.mrb[0].mxu0
        %v690 = vadd.f32 0.0, %v689
        %691 = vmatprep.mubr.bf16.mxu0 0
        %692 = vmatmul.mubr.bf16.gmra.mrb[0].mxu0 %v590
        %v693 = vpop.f32.mrb[0].mxu0
        %v694 = vadd.f32 0.0, %v693
        %v695 = vpop.f32.mrb[0].mxu0
        %v696 = vadd.f32 0.0, %v695
        %v697 = vpop.f32.mrb[0].mxu0
        %v698 = vadd.f32 0.0, %v697
        %v699 = vpop.f32.mrb[0].mxu0
        %v700 = vadd.f32 0.0, %v699
        %701 = vmatprep.mubr.bf16.mxu0 0
        %702 = vmatmul.mubr.bf16.gmra.mrb[0].mxu0 %v593
        %v703 = vpop.f32.mrb[0].mxu0
        %v704 = vadd.f32 0.0, %v703
        %v705 = vpop.f32.mrb[0].mxu0
        %v706 = vadd.f32 0.0, %v705
        %v707 = vpop.f32.mrb[0].mxu0
        %v708 = vadd.f32 0.0, %v707
        %v709 = vpop.f32.mrb[0].mxu0
        %v710 = vadd.f32 0.0, %v709
        %711 = vmatprep.mubr.bf16.mxu0 0
        %712 = vmatmul.mubr.bf16.gmra.mrb[0].mxu0 %v596
        %v713 = vpop.f32.mrb[0].mxu0
        %v714 = vadd.f32 0.0, %v713
        %v715 = vpop.f32.mrb[0].mxu0
        %v716 = vadd.f32 0.0, %v715
        %v717 = vpop.f32.mrb[0].mxu0
        %v718 = vadd.f32 0.0, %v717
        %v719 = vpop.f32.mrb[0].mxu0
        %v720 = vadd.f32 0.0, %v719
        %721 = vmatprep.mubr.bf16.mxu0 0
        %722 = vmatmul.mubr.bf16.gmra.mrb[0].mxu0 %v599
        %v723 = vpop.f32.mrb[0].mxu0
        %v724 = vadd.f32 0.0, %v723
        %v725 = vpop.f32.mrb[0].mxu0
        %v726 = vadd.f32 0.0, %v725
        %v727 = vpop.f32.mrb[0].mxu0
        %v728 = vadd.f32 0.0, %v727
        %v729 = vpop.f32.mrb[0].mxu0
        %v730 = vadd.f32 0.0, %v729
        %731 = vmatprep.mubr.bf16.mxu0 0
        %732 = vmatmul.mubr.bf16.gmra.mrb[0].mxu0 %v602
        %v733 = vpop.f32.mrb[0].mxu0
        %v734 = vadd.f32 0.0, %v733
        %v735 = vpop.f32.mrb[0].mxu0
        %v736 = vadd.f32 0.0, %v735
        %v737 = vpop.f32.mrb[0].mxu0
        %v738 = vadd.f32 0.0, %v737
        %v739 = vpop.f32.mrb[0].mxu0
        %v740 = vadd.f32 0.0, %v739
        %741 = vmatprep.mubr.bf16.mxu0 0
        %742 = vmatmul.mubr.bf16.gmra.mrb[0].mxu0 %v605
        %v743 = vpop.f32.mrb[0].mxu0
        %v744 = vadd.f32 0.0, %v743
        %v745 = vpop.f32.mrb[0].mxu0
        %v746 = vadd.f32 0.0, %v745
        %v747 = vpop.f32.mrb[0].mxu0
        %v748 = vadd.f32 0.0, %v747
        %v749 = vpop.f32.mrb[0].mxu0
        %v750 = vadd.f32 0.0, %v749
        %751 = vmatprep.mubr.bf16.mxu0 0
        %752 = vmatmul.mubr.bf16.gmra.mrb[0].mxu0 %v608
        %v753 = vpop.f32.mrb[0].mxu0
        %v754 = vadd.f32 0.0, %v753
        %v755 = vpop.f32.mrb[0].mxu0
        %v756 = vadd.f32 0.0, %v755
        %v757 = vpop.f32.mrb[0].mxu0
        %v758 = vadd.f32 0.0, %v757
        %v759 = vpop.f32.mrb[0].mxu0
        %v760 = vadd.f32 0.0, %v759
        %761 = vmatprep.mubr.bf16.mxu0 0
        %762 = vmatmul.mubr.bf16.gmra.mrb[0].mxu0 %v611
        %v763 = vpop.f32.mrb[0].mxu0
        %v764 = vadd.f32 0.0, %v763
        %v765 = vpop.f32.mrb[0].mxu0
        %v766 = vadd.f32 0.0, %v765
        %v767 = vpop.f32.mrb[0].mxu0
        %v768 = vadd.f32 0.0, %v767
        %v769 = vpop.f32.mrb[0].mxu0
        %v770 = vadd.f32 0.0, %v769
        %771 = vmatprep.mubr.bf16.mxu0 0
        %772 = vmatmul.mubr.bf16.gmra.mrb[0].mxu0 %v614
        %v773 = vpop.f32.mrb[0].mxu0
        %v774 = vadd.f32 0.0, %v773
        %v775 = vpop.f32.mrb[0].mxu0
        %v776 = vadd.f32 0.0, %v775
        %v777 = vpop.f32.mrb[0].mxu0
        %v778 = vadd.f32 0.0, %v777
        %v779 = vpop.f32.mrb[0].mxu0
        %v780 = vadd.f32 0.0, %v779
        %781 = vdwg.mxu0
        %782 = vmatprep.subr.bf16.mxu0 %v570
        %783 = vmatpush1.bf16.msra.mxu0 %v569
        %784 = vmatprep.subr.bf16.mxu0 %v627
        %785 = vmatpush1.bf16.msra.mxu0 %v624
        %786 = vmatprep.subr.bf16.mxu0 0
        %787 = vmatpush1.bf16.msra.mxu0 0
        %788 = vmatprep.subr.bf16.mxu0 0
        %789 = vmatpush1.bf16.msra.mxu0 0
        %790 = vmatprep.subr.bf16.mxu0 0
        %791 = vmatpush1.bf16.msra.mxu0 0
        %792 = vmatprep.subr.bf16.mxu0 0
        %793 = vmatpush1.bf16.msra.mxu0 0
        %794 = vmatprep.subr.bf16.mxu0 0
        %795 = vmatpush1.bf16.msra.mxu0 0
        %796 = vmatprep.subr.bf16.mxu0 0
        %797 = vmatpush1.bf16.msra.mxu0 0
        %798 = vmatprep.subr.bf16.mxu0 0
        %799 = vmatpush1.bf16.msra.mxu0 0
        %800 = vmatprep.subr.bf16.mxu0 0
        %801 = vmatpush1.bf16.msra.mxu0 0
        %802 = vmatprep.subr.bf16.mxu0 0
        %803 = vmatpush1.bf16.msra.mxu0 0
        %804 = vmatprep.subr.bf16.mxu0 0
        %805 = vmatpush1.bf16.msra.mxu0 0
        %806 = vmatprep.subr.bf16.mxu0 0
        %807 = vmatpush1.bf16.msra.mxu0 0
        %808 = vmatprep.subr.bf16.mxu0 0
        %809 = vmatpush1.bf16.msra.mxu0 0
        %810 = vmatprep.subr.bf16.mxu0 0
        %811 = vmatpush1.bf16.msra.mxu0 0
        %812 = vmatprep.subr.bf16.mxu0 0
        %813 = vmatpush1.bf16.msra.mxu0 0
        %814 = vmatprep.mubr.bf16.mxu0 0
        %815 = vmatmul.mubr.bf16.gmra.mrb[0].mxu0 %v581
        %v816 = vpop.f32.mrb[0].mxu0
        %v817 = vadd.f32 0.0, %v816
        %v818 = vpop.f32.mrb[0].mxu0
        %v819 = vadd.f32 0.0, %v818
        %v820 = vpop.f32.mrb[0].mxu0
        %v821 = vadd.f32 0.0, %v820
        %v822 = vpop.f32.mrb[0].mxu0
        %v823 = vadd.f32 0.0, %v822
        %824 = vmatprep.mubr.bf16.mxu0 0
        %825 = vmatmul.mubr.bf16.gmra.mrb[0].mxu0 %v584
        %v826 = vpop.f32.mrb[0].mxu0
        %v827 = vadd.f32 0.0, %v826
        %v828 = vpop.f32.mrb[0].mxu0
        %v829 = vadd.f32 0.0, %v828
        %v830 = vpop.f32.mrb[0].mxu0
        %v831 = vadd.f32 0.0, %v830
        %v832 = vpop.f32.mrb[0].mxu0
        %v833 = vadd.f32 0.0, %v832
        %834 = vmatprep.mubr.bf16.mxu0 0
        %835 = vmatmul.mubr.bf16.gmra.mrb[0].mxu0 %v587
        %v836 = vpop.f32.mrb[0].mxu0
        %v837 = vadd.f32 0.0, %v836
        %v838 = vpop.f32.mrb[0].mxu0
        %v839 = vadd.f32 0.0, %v838
        %v840 = vpop.f32.mrb[0].mxu0
        %v841 = vadd.f32 0.0, %v840
        %v842 = vpop.f32.mrb[0].mxu0
        %v843 = vadd.f32 0.0, %v842
        %844 = vmatprep.mubr.bf16.mxu0 0
        %845 = vmatmul.mubr.bf16.gmra.mrb[0].mxu0 %v590
        %v846 = vpop.f32.mrb[0].mxu0
        %v847 = vadd.f32 0.0, %v846
        %v848 = vpop.f32.mrb[0].mxu0
        %v849 = vadd.f32 0.0, %v848
        %v850 = vpop.f32.mrb[0].mxu0
        %v851 = vadd.f32 0.0, %v850
        %v852 = vpop.f32.mrb[0].mxu0
        %v853 = vadd.f32 0.0, %v852
        %854 = vmatprep.mubr.bf16.mxu0 0
        %855 = vmatmul.mubr.bf16.gmra.mrb[0].mxu0 %v593
        %v856 = vpop.f32.mrb[0].mxu0
        %v857 = vadd.f32 0.0, %v856
        %v858 = vpop.f32.mrb[0].mxu0
        %v859 = vadd.f32 0.0, %v858
        %v860 = vpop.f32.mrb[0].mxu0
        %v861 = vadd.f32 0.0, %v860
        %v862 = vpop.f32.mrb[0].mxu0
        %v863 = vadd.f32 0.0, %v862
        %864 = vmatprep.mubr.bf16.mxu0 0
        %865 = vmatmul.mubr.bf16.gmra.mrb[0].mxu0 %v596
        %v866 = vpop.f32.mrb[0].mxu0
        %v867 = vadd.f32 0.0, %v866
        %v868 = vpop.f32.mrb[0].mxu0
        %v869 = vadd.f32 0.0, %v868
        %v870 = vpop.f32.mrb[0].mxu0
        %v871 = vadd.f32 0.0, %v870
        %v872 = vpop.f32.mrb[0].mxu0
        %v873 = vadd.f32 0.0, %v872
        %874 = vmatprep.mubr.bf16.mxu0 0
        %875 = vmatmul.mubr.bf16.gmra.mrb[0].mxu0 %v599
        %v876 = vpop.f32.mrb[0].mxu0
        %v877 = vadd.f32 0.0, %v876
        %v878 = vpop.f32.mrb[0].mxu0
        %v879 = vadd.f32 0.0, %v878
        %v880 = vpop.f32.mrb[0].mxu0
        %v881 = vadd.f32 0.0, %v880
        %v882 = vpop.f32.mrb[0].mxu0
        %v883 = vadd.f32 0.0, %v882
        %884 = vmatprep.mubr.bf16.mxu0 0
        %885 = vmatmul.mubr.bf16.gmra.mrb[0].mxu0 %v602
        %v886 = vpop.f32.mrb[0].mxu0
        %v887 = vadd.f32 0.0, %v886
        %v888 = vpop.f32.mrb[0].mxu0
        %v889 = vadd.f32 0.0, %v888
        %v890 = vpop.f32.mrb[0].mxu0
        %v891 = vadd.f32 0.0, %v890
        %v892 = vpop.f32.mrb[0].mxu0
        %v893 = vadd.f32 0.0, %v892
        %894 = vmatprep.mubr.bf16.mxu0 0
        %895 = vmatmul.mubr.bf16.gmra.mrb[0].mxu0 %v605
        %v896 = vpop.f32.mrb[0].mxu0
        %v897 = vadd.f32 0.0, %v896
        %v898 = vpop.f32.mrb[0].mxu0
        %v899 = vadd.f32 0.0, %v898
        %v900 = vpop.f32.mrb[0].mxu0
        %v901 = vadd.f32 0.0, %v900
        %v902 = vpop.f32.mrb[0].mxu0
        %v903 = vadd.f32 0.0, %v902
        %904 = vmatprep.mubr.bf16.mxu0 0
        %905 = vmatmul.mubr.bf16.gmra.mrb[0].mxu0 %v608
        %v906 = vpop.f32.mrb[0].mxu0
        %v907 = vadd.f32 0.0, %v906
        %v908 = vpop.f32.mrb[0].mxu0
        %v909 = vadd.f32 0.0, %v908
        %v910 = vpop.f32.mrb[0].mxu0
        %v911 = vadd.f32 0.0, %v910
        %v912 = vpop.f32.mrb[0].mxu0
        %v913 = vadd.f32 0.0, %v912
        %914 = vmatprep.mubr.bf16.mxu0 0
        %915 = vmatmul.mubr.bf16.gmra.mrb[0].mxu0 %v611
        %v916 = vpop.f32.mrb[0].mxu0
        %v917 = vadd.f32 0.0, %v916
        %v918 = vpop.f32.mrb[0].mxu0
        %v919 = vadd.f32 0.0, %v918
        %v920 = vpop.f32.mrb[0].mxu0
        %v921 = vadd.f32 0.0, %v920
        %v922 = vpop.f32.mrb[0].mxu0
        %v923 = vadd.f32 0.0, %v922
        %924 = vmatprep.mubr.bf16.mxu0 0
        %925 = vmatmul.mubr.bf16.gmra.mrb[0].mxu0 %v614
        %v926 = vpop.f32.mrb[0].mxu0
        %v927 = vadd.f32 0.0, %v926
        %v928 = vpop.f32.mrb[0].mxu0
        %v929 = vadd.f32 0.0, %v928
        %v930 = vpop.f32.mrb[0].mxu0
        %v931 = vadd.f32 0.0, %v930
        %v932 = vpop.f32.mrb[0].mxu0
        %v933 = vadd.f32 0.0, %v932
        %934 = vdwg.mxu0
        %v943 = vunpack.c.l.b16 %v514
        %v944 = vunpack.c.h.b16 %v514
        %v945 = vunpack.c.l.b16 %v515
        %v946 = vunpack.c.h.b16 %v515
        %v947 = vunpack.c.l.b16 %v516
        %v948 = vunpack.c.h.b16 %v516
        %v949 = vunpack.c.l.b16 %v517
        %v950 = vunpack.c.h.b16 %v517
        %v951 = vunpack.c.l.b16 %v518
        %v952 = vunpack.c.h.b16 %v518
        %v953 = vunpack.c.l.b16 %v519
        %v954 = vunpack.c.h.b16 %v519
        %v955 = vunpack.c.l.b16 %v520
        %v956 = vunpack.c.h.b16 %v520
        %v957 = vunpack.c.l.b16 %v521
        %v958 = vunpack.c.h.b16 %v521
        %v959 = vpack.c.b16 %v947, %v943
        %v960 = vpack.c.b16 %v948, %v944
        %v961 = vpack.c.b16 %v949, %v945
        %v962 = vpack.c.b16 %v950, %v946
        %v963 = vpack.c.b16 %v955, %v951
        %v964 = vpack.c.b16 %v956, %v952
        %v965 = vpack.c.b16 %v957, %v953
        %v966 = vpack.c.b16 %v958, %v954
        %v972 = vsel %vm579, %v502, 0
        %v975 = vsel %vm579, %v503, 0
        %v978 = vsel %vm579, %v504, 0
        %v981 = vsel %vm579, %v505, 0
        %v984 = vsel %vm579, %v506, 0
        %v987 = vsel %vm579, %v507, 0
        %v990 = vsel %vm579, %v508, 0
        %v993 = vsel %vm579, %v509, 0
        %v996 = vsel %vm579, %v510, 0
        %v999 = vsel %vm579, %v511, 0
        %v1002 = vsel %vm579, %v512, 0
        %v1005 = vsel %vm579, %v513, 0
        %v1008 = vsel %vm616, %v963, 0
        %v1011 = vsel %vm616, %v964, 0
        %v1014 = vsel %vm616, %v965, 0
        %v1017 = vsel %vm616, %v966, 0
        %1019 = vmatprep.subr.bf16.mxu0 %v960
        %1020 = vmatpush1.bf16.msra.mxu0 %v959
        %1021 = vmatprep.subr.bf16.mxu0 %v1011
        %1022 = vmatpush1.bf16.msra.mxu0 %v1008
        %1023 = vmatprep.subr.bf16.mxu0 0
        %1024 = vmatpush1.bf16.msra.mxu0 0
        %1025 = vmatprep.subr.bf16.mxu0 0
        %1026 = vmatpush1.bf16.msra.mxu0 0
        %1027 = vmatprep.subr.bf16.mxu0 0
        %1028 = vmatpush1.bf16.msra.mxu0 0
        %1029 = vmatprep.subr.bf16.mxu0 0
        %1030 = vmatpush1.bf16.msra.mxu0 0
        %1031 = vmatprep.subr.bf16.mxu0 0
        %1032 = vmatpush1.bf16.msra.mxu0 0
        %1033 = vmatprep.subr.bf16.mxu0 0
        %1034 = vmatpush1.bf16.msra.mxu0 0
        %1035 = vmatprep.subr.bf16.mxu0 0
        %1036 = vmatpush1.bf16.msra.mxu0 0
        %1037 = vmatprep.subr.bf16.mxu0 0
        %1038 = vmatpush1.bf16.msra.mxu0 0
        %1039 = vmatprep.subr.bf16.mxu0 0
        %1040 = vmatpush1.bf16.msra.mxu0 0
        %1041 = vmatprep.subr.bf16.mxu0 0
        %1042 = vmatpush1.bf16.msra.mxu0 0
        %1043 = vmatprep.subr.bf16.mxu0 0
        %1044 = vmatpush1.bf16.msra.mxu0 0
        %1045 = vmatprep.subr.bf16.mxu0 0
        %1046 = vmatpush1.bf16.msra.mxu0 0
        %1047 = vmatprep.subr.bf16.mxu0 0
        %1048 = vmatpush1.bf16.msra.mxu0 0
        %1049 = vmatprep.subr.bf16.mxu0 0
        %1050 = vmatpush1.bf16.msra.mxu0 0
        %1051 = vmatprep.mubr.bf16.mxu0 0
        %1052 = vmatmul.mubr.bf16.gmra.mrb[0].mxu0 %v972
        %v1053 = vpop.f32.mrb[0].mxu0
        %v1054 = vadd.f32 %v664, %v1053
        %v1055 = vpop.f32.mrb[0].mxu0
        %v1056 = vadd.f32 %v666, %v1055
        %v1057 = vpop.f32.mrb[0].mxu0
        %v1058 = vadd.f32 %v668, %v1057
        %v1059 = vpop.f32.mrb[0].mxu0
        %v1060 = vadd.f32 %v670, %v1059
        %1061 = vmatprep.mubr.bf16.mxu0 0
        %1062 = vmatmul.mubr.bf16.gmra.mrb[0].mxu0 %v975
        %v1063 = vpop.f32.mrb[0].mxu0
        %v1064 = vadd.f32 %v674, %v1063
        %v1065 = vpop.f32.mrb[0].mxu0
        %v1066 = vadd.f32 %v676, %v1065
        %v1067 = vpop.f32.mrb[0].mxu0
        %v1068 = vadd.f32 %v678, %v1067
        %v1069 = vpop.f32.mrb[0].mxu0
        %v1070 = vadd.f32 %v680, %v1069
        %1071 = vmatprep.mubr.bf16.mxu0 0
        %1072 = vmatmul.mubr.bf16.gmra.mrb[0].mxu0 %v978
        %v1073 = vpop.f32.mrb[0].mxu0
        %v1074 = vadd.f32 %v684, %v1073
        %v1075 = vpop.f32.mrb[0].mxu0
        %v1076 = vadd.f32 %v686, %v1075
        %v1077 = vpop.f32.mrb[0].mxu0
        %v1078 = vadd.f32 %v688, %v1077
        %v1079 = vpop.f32.mrb[0].mxu0
        %v1080 = vadd.f32 %v690, %v1079
        %1081 = vmatprep.mubr.bf16.mxu0 0
        %1082 = vmatmul.mubr.bf16.gmra.mrb[0].mxu0 %v981
        %v1083 = vpop.f32.mrb[0].mxu0
        %v1084 = vadd.f32 %v694, %v1083
        %v1085 = vpop.f32.mrb[0].mxu0
        %v1086 = vadd.f32 %v696, %v1085
        %v1087 = vpop.f32.mrb[0].mxu0
        %v1088 = vadd.f32 %v698, %v1087
        %v1089 = vpop.f32.mrb[0].mxu0
        %v1090 = vadd.f32 %v700, %v1089
        %1091 = vmatprep.mubr.bf16.mxu0 0
        %1092 = vmatmul.mubr.bf16.gmra.mrb[0].mxu0 %v984
        %v1093 = vpop.f32.mrb[0].mxu0
        %v1094 = vadd.f32 %v704, %v1093
        %v1095 = vpop.f32.mrb[0].mxu0
        %v1096 = vadd.f32 %v706, %v1095
        %v1097 = vpop.f32.mrb[0].mxu0
        %v1098 = vadd.f32 %v708, %v1097
        %v1099 = vpop.f32.mrb[0].mxu0
        %v1100 = vadd.f32 %v710, %v1099
        %1101 = vmatprep.mubr.bf16.mxu0 0
        %1102 = vmatmul.mubr.bf16.gmra.mrb[0].mxu0 %v987
        %v1103 = vpop.f32.mrb[0].mxu0
        %v1104 = vadd.f32 %v714, %v1103
        %v1105 = vpop.f32.mrb[0].mxu0
        %v1106 = vadd.f32 %v716, %v1105
        %v1107 = vpop.f32.mrb[0].mxu0
        %v1108 = vadd.f32 %v718, %v1107
        %v1109 = vpop.f32.mrb[0].mxu0
        %v1110 = vadd.f32 %v720, %v1109
        %1111 = vmatprep.mubr.bf16.mxu0 0
        %1112 = vmatmul.mubr.bf16.gmra.mrb[0].mxu0 %v990
        %v1113 = vpop.f32.mrb[0].mxu0
        %v1114 = vadd.f32 %v724, %v1113
        %v1115 = vpop.f32.mrb[0].mxu0
        %v1116 = vadd.f32 %v726, %v1115
        %v1117 = vpop.f32.mrb[0].mxu0
        %v1118 = vadd.f32 %v728, %v1117
        %v1119 = vpop.f32.mrb[0].mxu0
        %v1120 = vadd.f32 %v730, %v1119
        %1121 = vmatprep.mubr.bf16.mxu0 0
        %1122 = vmatmul.mubr.bf16.gmra.mrb[0].mxu0 %v993
        %v1123 = vpop.f32.mrb[0].mxu0
        %v1124 = vadd.f32 %v734, %v1123
        %v1125 = vpop.f32.mrb[0].mxu0
        %v1126 = vadd.f32 %v736, %v1125
        %v1127 = vpop.f32.mrb[0].mxu0
        %v1128 = vadd.f32 %v738, %v1127
        %v1129 = vpop.f32.mrb[0].mxu0
        %v1130 = vadd.f32 %v740, %v1129
        %1131 = vmatprep.mubr.bf16.mxu0 0
        %1132 = vmatmul.mubr.bf16.gmra.mrb[0].mxu0 %v996
        %v1133 = vpop.f32.mrb[0].mxu0
        %v1134 = vadd.f32 %v744, %v1133
        %v1135 = vpop.f32.mrb[0].mxu0
        %v1136 = vadd.f32 %v746, %v1135
        %v1137 = vpop.f32.mrb[0].mxu0
        %v1138 = vadd.f32 %v748, %v1137
        %v1139 = vpop.f32.mrb[0].mxu0
        %v1140 = vadd.f32 %v750, %v1139
        %1141 = vmatprep.mubr.bf16.mxu0 0
        %1142 = vmatmul.mubr.bf16.gmra.mrb[0].mxu0 %v999
        %v1143 = vpop.f32.mrb[0].mxu0
        %v1144 = vadd.f32 %v754, %v1143
        %v1145 = vpop.f32.mrb[0].mxu0
        %v1146 = vadd.f32 %v756, %v1145
        %v1147 = vpop.f32.mrb[0].mxu0
        %v1148 = vadd.f32 %v758, %v1147
        %v1149 = vpop.f32.mrb[0].mxu0
        %v1150 = vadd.f32 %v760, %v1149
        %1151 = vmatprep.mubr.bf16.mxu0 0
        %1152 = vmatmul.mubr.bf16.gmra.mrb[0].mxu0 %v1002
        %v1153 = vpop.f32.mrb[0].mxu0
        %v1154 = vadd.f32 %v764, %v1153
        %v1155 = vpop.f32.mrb[0].mxu0
        %v1156 = vadd.f32 %v766, %v1155
        %v1157 = vpop.f32.mrb[0].mxu0
        %v1158 = vadd.f32 %v768, %v1157
        %v1159 = vpop.f32.mrb[0].mxu0
        %v1160 = vadd.f32 %v770, %v1159
        %1161 = vmatprep.mubr.bf16.mxu0 0
        %1162 = vmatmul.mubr.bf16.gmra.mrb[0].mxu0 %v1005
        %v1163 = vpop.f32.mrb[0].mxu0
        %v1164 = vadd.f32 %v774, %v1163
        %v1165 = vpop.f32.mrb[0].mxu0
        %v1166 = vadd.f32 %v776, %v1165
        %v1167 = vpop.f32.mrb[0].mxu0
        %v1168 = vadd.f32 %v778, %v1167
        %v1169 = vpop.f32.mrb[0].mxu0
        %v1170 = vadd.f32 %v780, %v1169
        %1171 = vdwg.mxu0
        %1172 = vmatprep.subr.bf16.mxu0 %v962
        %1173 = vmatpush1.bf16.msra.mxu0 %v961
        %1174 = vmatprep.subr.bf16.mxu0 %v1017
        %1175 = vmatpush1.bf16.msra.mxu0 %v1014
        %1176 = vmatprep.subr.bf16.mxu0 0
        %1177 = vmatpush1.bf16.msra.mxu0 0
        %1178 = vmatprep.subr.bf16.mxu0 0
        %1179 = vmatpush1.bf16.msra.mxu0 0
        %1180 = vmatprep.subr.bf16.mxu0 0
        %1181 = vmatpush1.bf16.msra.mxu0 0
        %1182 = vmatprep.subr.bf16.mxu0 0
        %1183 = vmatpush1.bf16.msra.mxu0 0
        %1184 = vmatprep.subr.bf16.mxu0 0
        %1185 = vmatpush1.bf16.msra.mxu0 0
        %1186 = vmatprep.subr.bf16.mxu0 0
        %1187 = vmatpush1.bf16.msra.mxu0 0
        %1188 = vmatprep.subr.bf16.mxu0 0
        %1189 = vmatpush1.bf16.msra.mxu0 0
        %1190 = vmatprep.subr.bf16.mxu0 0
        %1191 = vmatpush1.bf16.msra.mxu0 0
        %1192 = vmatprep.subr.bf16.mxu0 0
        %1193 = vmatpush1.bf16.msra.mxu0 0
        %1194 = vmatprep.subr.bf16.mxu0 0
        %1195 = vmatpush1.bf16.msra.mxu0 0
        %1196 = vmatprep.subr.bf16.mxu0 0
        %1197 = vmatpush1.bf16.msra.mxu0 0
        %1198 = vmatprep.subr.bf16.mxu0 0
        %1199 = vmatpush1.bf16.msra.mxu0 0
        %1200 = vmatprep.subr.bf16.mxu0 0
        %1201 = vmatpush1.bf16.msra.mxu0 0
        %1202 = vmatprep.subr.bf16.mxu0 0
        %1203 = vmatpush1.bf16.msra.mxu0 0
        %1204 = vmatprep.mubr.bf16.mxu0 0
        %1205 = vmatmul.mubr.bf16.gmra.mrb[0].mxu0 %v972
        %v1206 = vpop.f32.mrb[0].mxu0
        %v1207 = vadd.f32 %v817, %v1206
        %v1208 = vpop.f32.mrb[0].mxu0
        %v1209 = vadd.f32 %v819, %v1208
        %v1210 = vpop.f32.mrb[0].mxu0
        %v1211 = vadd.f32 %v821, %v1210
        %v1212 = vpop.f32.mrb[0].mxu0
        %v1213 = vadd.f32 %v823, %v1212
        %1214 = vmatprep.mubr.bf16.mxu0 0
        %1215 = vmatmul.mubr.bf16.gmra.mrb[0].mxu0 %v975
        %v1216 = vpop.f32.mrb[0].mxu0
        %v1217 = vadd.f32 %v827, %v1216
        %v1218 = vpop.f32.mrb[0].mxu0
        %v1219 = vadd.f32 %v829, %v1218
        %v1220 = vpop.f32.mrb[0].mxu0
        %v1221 = vadd.f32 %v831, %v1220
        %v1222 = vpop.f32.mrb[0].mxu0
        %v1223 = vadd.f32 %v833, %v1222
        %1224 = vmatprep.mubr.bf16.mxu0 0
        %1225 = vmatmul.mubr.bf16.gmra.mrb[0].mxu0 %v978
        %v1226 = vpop.f32.mrb[0].mxu0
        %v1227 = vadd.f32 %v837, %v1226
        %v1228 = vpop.f32.mrb[0].mxu0
        %v1229 = vadd.f32 %v839, %v1228
        %v1230 = vpop.f32.mrb[0].mxu0
        %v1231 = vadd.f32 %v841, %v1230
        %v1232 = vpop.f32.mrb[0].mxu0
        %v1233 = vadd.f32 %v843, %v1232
        %1234 = vmatprep.mubr.bf16.mxu0 0
        %1235 = vmatmul.mubr.bf16.gmra.mrb[0].mxu0 %v981
        %v1236 = vpop.f32.mrb[0].mxu0
        %v1237 = vadd.f32 %v847, %v1236
        %v1238 = vpop.f32.mrb[0].mxu0
        %v1239 = vadd.f32 %v849, %v1238
        %v1240 = vpop.f32.mrb[0].mxu0
        %v1241 = vadd.f32 %v851, %v1240
        %v1242 = vpop.f32.mrb[0].mxu0
        %v1243 = vadd.f32 %v853, %v1242
        %1244 = vmatprep.mubr.bf16.mxu0 0
        %1245 = vmatmul.mubr.bf16.gmra.mrb[0].mxu0 %v984
        %v1246 = vpop.f32.mrb[0].mxu0
        %v1247 = vadd.f32 %v857, %v1246
        %v1248 = vpop.f32.mrb[0].mxu0
        %v1249 = vadd.f32 %v859, %v1248
        %v1250 = vpop.f32.mrb[0].mxu0
        %v1251 = vadd.f32 %v861, %v1250
        %v1252 = vpop.f32.mrb[0].mxu0
        %v1253 = vadd.f32 %v863, %v1252
        %1254 = vmatprep.mubr.bf16.mxu0 0
        %1255 = vmatmul.mubr.bf16.gmra.mrb[0].mxu0 %v987
        %v1256 = vpop.f32.mrb[0].mxu0
        %v1257 = vadd.f32 %v867, %v1256
        %v1258 = vpop.f32.mrb[0].mxu0
        %v1259 = vadd.f32 %v869, %v1258
        %v1260 = vpop.f32.mrb[0].mxu0
        %v1261 = vadd.f32 %v871, %v1260
        %v1262 = vpop.f32.mrb[0].mxu0
        %v1263 = vadd.f32 %v873, %v1262
        %1264 = vmatprep.mubr.bf16.mxu0 0
        %1265 = vmatmul.mubr.bf16.gmra.mrb[0].mxu0 %v990
        %v1266 = vpop.f32.mrb[0].mxu0
        %v1267 = vadd.f32 %v877, %v1266
        %v1268 = vpop.f32.mrb[0].mxu0
        %v1269 = vadd.f32 %v879, %v1268
        %v1270 = vpop.f32.mrb[0].mxu0
        %v1271 = vadd.f32 %v881, %v1270
        %v1272 = vpop.f32.mrb[0].mxu0
        %v1273 = vadd.f32 %v883, %v1272
        %1274 = vmatprep.mubr.bf16.mxu0 0
        %1275 = vmatmul.mubr.bf16.gmra.mrb[0].mxu0 %v993
        %v1276 = vpop.f32.mrb[0].mxu0
        %v1277 = vadd.f32 %v887, %v1276
        %v1278 = vpop.f32.mrb[0].mxu0
        %v1279 = vadd.f32 %v889, %v1278
        %v1280 = vpop.f32.mrb[0].mxu0
        %v1281 = vadd.f32 %v891, %v1280
        %v1282 = vpop.f32.mrb[0].mxu0
        %v1283 = vadd.f32 %v893, %v1282
        %1284 = vmatprep.mubr.bf16.mxu0 0
        %1285 = vmatmul.mubr.bf16.gmra.mrb[0].mxu0 %v996
        %v1286 = vpop.f32.mrb[0].mxu0
        %v1287 = vadd.f32 %v897, %v1286
        %v1288 = vpop.f32.mrb[0].mxu0
        %v1289 = vadd.f32 %v899, %v1288
        %v1290 = vpop.f32.mrb[0].mxu0
        %v1291 = vadd.f32 %v901, %v1290
        %v1292 = vpop.f32.mrb[0].mxu0
        %v1293 = vadd.f32 %v903, %v1292
        %1294 = vmatprep.mubr.bf16.mxu0 0
        %1295 = vmatmul.mubr.bf16.gmra.mrb[0].mxu0 %v999
        %v1296 = vpop.f32.mrb[0].mxu0
        %v1297 = vadd.f32 %v907, %v1296
        %v1298 = vpop.f32.mrb[0].mxu0
        %v1299 = vadd.f32 %v909, %v1298
        %v1300 = vpop.f32.mrb[0].mxu0
        %v1301 = vadd.f32 %v911, %v1300
        %v1302 = vpop.f32.mrb[0].mxu0
        %v1303 = vadd.f32 %v913, %v1302
        %1304 = vmatprep.mubr.bf16.mxu0 0
        %1305 = vmatmul.mubr.bf16.gmra.mrb[0].mxu0 %v1002
        %v1306 = vpop.f32.mrb[0].mxu0
        %v1307 = vadd.f32 %v917, %v1306
        %v1308 = vpop.f32.mrb[0].mxu0
        %v1309 = vadd.f32 %v919, %v1308
        %v1310 = vpop.f32.mrb[0].mxu0
        %v1311 = vadd.f32 %v921, %v1310
        %v1312 = vpop.f32.mrb[0].mxu0
        %v1313 = vadd.f32 %v923, %v1312
        %1314 = vmatprep.mubr.bf16.mxu0 0
        %1315 = vmatmul.mubr.bf16.gmra.mrb[0].mxu0 %v1005
        %v1316 = vpop.f32.mrb[0].mxu0
        %v1317 = vadd.f32 %v927, %v1316
        %v1318 = vpop.f32.mrb[0].mxu0
        %v1319 = vadd.f32 %v929, %v1318
        %v1320 = vpop.f32.mrb[0].mxu0
        %v1321 = vadd.f32 %v931, %v1320
        %v1322 = vpop.f32.mrb[0].mxu0
        %v1323 = vadd.f32 %v933, %v1322
        %1324 = vdwg.mxu0
        %v1325 = vpack.c.bf16 %v499, %v498
        %s1326 = scalar_lea.vmem %s1, 128
        %v1327 = vld [vmem:[%s1326] sm:$0xff]
        %v1328 = vld [vmem:[%s1326 + $0x8] sm:$0xff]
        %v1329 = vld [vmem:[%s1326 + $0x10] sm:$0xff]
        %v1330 = vld [vmem:[%s1326 + $0x18] sm:$0xff]
        %v1331 = vld [vmem:[%s1326 + $0x20] sm:$0xff]
        %v1332 = vld [vmem:[%s1326 + $0x28] sm:$0xff]
        %v1333 = vld [vmem:[%s1326 + $0x30] sm:$0x33]
        %v1334 = vld [vmem:[%s1326 + $0x38] sm:$0x33]
        %v1343 = vunpack.c.l.b16 %v1327
        %v1344 = vunpack.c.h.b16 %v1327
        %v1345 = vunpack.c.l.b16 %v1328
        %v1346 = vunpack.c.h.b16 %v1328
        %v1347 = vunpack.c.l.b16 %v1329
        %v1348 = vunpack.c.h.b16 %v1329
        %v1349 = vunpack.c.l.b16 %v1330
        %v1350 = vunpack.c.h.b16 %v1330
        %v1351 = vunpack.c.l.b16 %v1331
        %v1352 = vunpack.c.h.b16 %v1331
        %v1353 = vunpack.c.l.b16 %v1332
        %v1354 = vunpack.c.h.b16 %v1332
        %v1355 = vunpack.c.l.b16 %v1333
        %v1356 = vunpack.c.h.b16 %v1333
        %v1357 = vunpack.c.l.b16 %v1334
        %v1358 = vunpack.c.h.b16 %v1334
        %v1359 = vpack.c.b16 %v1347, %v1343
        %v1360 = vpack.c.b16 %v1348, %v1344
        %v1361 = vpack.c.b16 %v1349, %v1345
        %v1362 = vpack.c.b16 %v1350, %v1346
        %v1363 = vpack.c.b16 %v1355, %v1351
        %v1364 = vpack.c.b16 %v1356, %v1352
        %v1365 = vpack.c.b16 %v1357, %v1353
        %v1366 = vpack.c.b16 %v1358, %v1354
        %v1372 = vsel %vm579, %v1325, 0
        %v1375 = vsel %vm616, %v1363, 0
        %v1378 = vsel %vm616, %v1364, 0
        %v1381 = vsel %vm616, %v1365, 0
        %v1384 = vsel %vm616, %v1366, 0
        %1386 = vmatprep.subr.bf16.mxu0 %v1360
        %1387 = vmatpush1.bf16.msra.mxu0 %v1359
        %1388 = vmatprep.subr.bf16.mxu0 %v1378
        %1389 = vmatpush1.bf16.msra.mxu0 %v1375
        %1390 = vmatprep.subr.bf16.mxu0 0
        %1391 = vmatpush1.bf16.msra.mxu0 0
        %1392 = vmatprep.subr.bf16.mxu0 0
        %1393 = vmatpush1.bf16.msra.mxu0 0
        %1394 = vmatprep.subr.bf16.mxu0 0
        %1395 = vmatpush1.bf16.msra.mxu0 0
        %1396 = vmatprep.subr.bf16.mxu0 0
        %1397 = vmatpush1.bf16.msra.mxu0 0
        %1398 = vmatprep.subr.bf16.mxu0 0
        %1399 = vmatpush1.bf16.msra.mxu0 0
        %1400 = vmatprep.subr.bf16.mxu0 0
        %1401 = vmatpush1.bf16.msra.mxu0 0
        %1402 = vmatprep.subr.bf16.mxu0 0
        %1403 = vmatpush1.bf16.msra.mxu0 0
        %1404 = vmatprep.subr.bf16.mxu0 0
        %1405 = vmatpush1.bf16.msra.mxu0 0
        %1406 = vmatprep.subr.bf16.mxu0 0
        %1407 = vmatpush1.bf16.msra.mxu0 0
        %1408 = vmatprep.subr.bf16.mxu0 0
        %1409 = vmatpush1.bf16.msra.mxu0 0
        %1410 = vmatprep.subr.bf16.mxu0 0
        %1411 = vmatpush1.bf16.msra.mxu0 0
        %1412 = vmatprep.subr.bf16.mxu0 0
        %1413 = vmatpush1.bf16.msra.mxu0 0
        %1414 = vmatprep.subr.bf16.mxu0 0
        %1415 = vmatpush1.bf16.msra.mxu0 0
        %1416 = vmatprep.subr.bf16.mxu0 0
        %1417 = vmatpush1.bf16.msra.mxu0 0
        %1418 = vmatprep.mubr.bf16.mxu0 0
        %1419 = vmatmul.mubr.bf16.gmra.mrb[0].mxu0 %v975
        %v1420 = vpop.f32.mrb[0].mxu0
        %v1421 = vadd.f32 0.0, %v1420
        %v1422 = vpop.f32.mrb[0].mxu0
        %v1423 = vadd.f32 0.0, %v1422
        %v1424 = vpop.f32.mrb[0].mxu0
        %v1425 = vadd.f32 0.0, %v1424
        %v1426 = vpop.f32.mrb[0].mxu0
        %v1427 = vadd.f32 0.0, %v1426
        %1428 = vmatprep.mubr.bf16.mxu0 0
        %1429 = vmatmul.mubr.bf16.gmra.mrb[0].mxu0 %v978
        %v1430 = vpop.f32.mrb[0].mxu0
        %v1431 = vadd.f32 0.0, %v1430
        %v1432 = vpop.f32.mrb[0].mxu0
        %v1433 = vadd.f32 0.0, %v1432
        %v1434 = vpop.f32.mrb[0].mxu0
        %v1435 = vadd.f32 0.0, %v1434
        %v1436 = vpop.f32.mrb[0].mxu0
        %v1437 = vadd.f32 0.0, %v1436
        %1438 = vmatprep.mubr.bf16.mxu0 0
        %1439 = vmatmul.mubr.bf16.gmra.mrb[0].mxu0 %v981
        %v1440 = vpop.f32.mrb[0].mxu0
        %v1441 = vadd.f32 0.0, %v1440
        %v1442 = vpop.f32.mrb[0].mxu0
        %v1443 = vadd.f32 0.0, %v1442
        %v1444 = vpop.f32.mrb[0].mxu0
        %v1445 = vadd.f32 0.0, %v1444
        %v1446 = vpop.f32.mrb[0].mxu0
        %v1447 = vadd.f32 0.0, %v1446
        %1448 = vmatprep.mubr.bf16.mxu0 0
        %1449 = vmatmul.mubr.bf16.gmra.mrb[0].mxu0 %v984
        %v1450 = vpop.f32.mrb[0].mxu0
        %v1451 = vadd.f32 0.0, %v1450
        %v1452 = vpop.f32.mrb[0].mxu0
        %v1453 = vadd.f32 0.0, %v1452
        %v1454 = vpop.f32.mrb[0].mxu0
        %v1455 = vadd.f32 0.0, %v1454
        %v1456 = vpop.f32.mrb[0].mxu0
        %v1457 = vadd.f32 0.0, %v1456
        %1458 = vmatprep.mubr.bf16.mxu0 0
        %1459 = vmatmul.mubr.bf16.gmra.mrb[0].mxu0 %v987
        %v1460 = vpop.f32.mrb[0].mxu0
        %v1461 = vadd.f32 0.0, %v1460
        %v1462 = vpop.f32.mrb[0].mxu0
        %v1463 = vadd.f32 0.0, %v1462
        %v1464 = vpop.f32.mrb[0].mxu0
        %v1465 = vadd.f32 0.0, %v1464
        %v1466 = vpop.f32.mrb[0].mxu0
        %v1467 = vadd.f32 0.0, %v1466
        %1468 = vmatprep.mubr.bf16.mxu0 0
        %1469 = vmatmul.mubr.bf16.gmra.mrb[0].mxu0 %v990
        %v1470 = vpop.f32.mrb[0].mxu0
        %v1471 = vadd.f32 0.0, %v1470
        %v1472 = vpop.f32.mrb[0].mxu0
        %v1473 = vadd.f32 0.0, %v1472
        %v1474 = vpop.f32.mrb[0].mxu0
        %v1475 = vadd.f32 0.0, %v1474
        %v1476 = vpop.f32.mrb[0].mxu0
        %v1477 = vadd.f32 0.0, %v1476
        %1478 = vmatprep.mubr.bf16.mxu0 0
        %1479 = vmatmul.mubr.bf16.gmra.mrb[0].mxu0 %v993
        %v1480 = vpop.f32.mrb[0].mxu0
        %v1481 = vadd.f32 0.0, %v1480
        %v1482 = vpop.f32.mrb[0].mxu0
        %v1483 = vadd.f32 0.0, %v1482
        %v1484 = vpop.f32.mrb[0].mxu0
        %v1485 = vadd.f32 0.0, %v1484
        %v1486 = vpop.f32.mrb[0].mxu0
        %v1487 = vadd.f32 0.0, %v1486
        %1488 = vmatprep.mubr.bf16.mxu0 0
        %1489 = vmatmul.mubr.bf16.gmra.mrb[0].mxu0 %v996
        %v1490 = vpop.f32.mrb[0].mxu0
        %v1491 = vadd.f32 0.0, %v1490
        %v1492 = vpop.f32.mrb[0].mxu0
        %v1493 = vadd.f32 0.0, %v1492
        %v1494 = vpop.f32.mrb[0].mxu0
        %v1495 = vadd.f32 0.0, %v1494
        %v1496 = vpop.f32.mrb[0].mxu0
        %v1497 = vadd.f32 0.0, %v1496
        %1498 = vmatprep.mubr.bf16.mxu0 0
        %1499 = vmatmul.mubr.bf16.gmra.mrb[0].mxu0 %v999
        %v1500 = vpop.f32.mrb[0].mxu0
        %v1501 = vadd.f32 0.0, %v1500
        %v1502 = vpop.f32.mrb[0].mxu0
        %v1503 = vadd.f32 0.0, %v1502
        %v1504 = vpop.f32.mrb[0].mxu0
        %v1505 = vadd.f32 0.0, %v1504
        %v1506 = vpop.f32.mrb[0].mxu0
        %v1507 = vadd.f32 0.0, %v1506
        %1508 = vmatprep.mubr.bf16.mxu0 0
        %1509 = vmatmul.mubr.bf16.gmra.mrb[0].mxu0 %v1002
        %v1510 = vpop.f32.mrb[0].mxu0
        %v1511 = vadd.f32 0.0, %v1510
        %v1512 = vpop.f32.mrb[0].mxu0
        %v1513 = vadd.f32 0.0, %v1512
        %v1514 = vpop.f32.mrb[0].mxu0
        %v1515 = vadd.f32 0.0, %v1514
        %v1516 = vpop.f32.mrb[0].mxu0
        %v1517 = vadd.f32 0.0, %v1516
        %1518 = vmatprep.mubr.bf16.mxu0 0
        %1519 = vmatmul.mubr.bf16.gmra.mrb[0].mxu0 %v1005
        %v1520 = vpop.f32.mrb[0].mxu0
        %v1521 = vadd.f32 0.0, %v1520
        %v1522 = vpop.f32.mrb[0].mxu0
        %v1523 = vadd.f32 0.0, %v1522
        %v1524 = vpop.f32.mrb[0].mxu0
        %v1525 = vadd.f32 0.0, %v1524
        %v1526 = vpop.f32.mrb[0].mxu0
        %v1527 = vadd.f32 0.0, %v1526
        %1528 = vmatprep.mubr.bf16.mxu0 0
        %1529 = vmatmul.mubr.bf16.gmra.mrb[0].mxu0 %v1372
        %v1530 = vpop.f32.mrb[0].mxu0
        %v1531 = vadd.f32 0.0, %v1530
        %v1532 = vpop.f32.mrb[0].mxu0
        %v1533 = vadd.f32 0.0, %v1532
        %v1534 = vpop.f32.mrb[0].mxu0
        %v1535 = vadd.f32 0.0, %v1534
        %v1536 = vpop.f32.mrb[0].mxu0
        %v1537 = vadd.f32 0.0, %v1536
        %1538 = vdwg.mxu0
        %1539 = vmatprep.subr.bf16.mxu0 %v1362
        %1540 = vmatpush1.bf16.msra.mxu0 %v1361
        %1541 = vmatprep.subr.bf16.mxu0 %v1384
        %1542 = vmatpush1.bf16.msra.mxu0 %v1381
        %1543 = vmatprep.subr.bf16.mxu0 0
        %1544 = vmatpush1.bf16.msra.mxu0 0
        %1545 = vmatprep.subr.bf16.mxu0 0
        %1546 = vmatpush1.bf16.msra.mxu0 0
        %1547 = vmatprep.subr.bf16.mxu0 0
        %1548 = vmatpush1.bf16.msra.mxu0 0
        %1549 = vmatprep.subr.bf16.mxu0 0
        %1550 = vmatpush1.bf16.msra.mxu0 0
        %1551 = vmatprep.subr.bf16.mxu0 0
        %1552 = vmatpush1.bf16.msra.mxu0 0
        %1553 = vmatprep.subr.bf16.mxu0 0
        %1554 = vmatpush1.bf16.msra.mxu0 0
        %1555 = vmatprep.subr.bf16.mxu0 0
        %1556 = vmatpush1.bf16.msra.mxu0 0
        %1557 = vmatprep.subr.bf16.mxu0 0
        %1558 = vmatpush1.bf16.msra.mxu0 0
        %1559 = vmatprep.subr.bf16.mxu0 0
        %1560 = vmatpush1.bf16.msra.mxu0 0
        %1561 = vmatprep.subr.bf16.mxu0 0
        %1562 = vmatpush1.bf16.msra.mxu0 0
        %1563 = vmatprep.subr.bf16.mxu0 0
        %1564 = vmatpush1.bf16.msra.mxu0 0
        %1565 = vmatprep.subr.bf16.mxu0 0
        %1566 = vmatpush1.bf16.msra.mxu0 0
        %1567 = vmatprep.subr.bf16.mxu0 0
        %1568 = vmatpush1.bf16.msra.mxu0 0
        %1569 = vmatprep.subr.bf16.mxu0 0
        %1570 = vmatpush1.bf16.msra.mxu0 0
        %1571 = vmatprep.mubr.bf16.mxu0 0
        %1572 = vmatmul.mubr.bf16.gmra.mrb[0].mxu0 %v975
        %v1573 = vpop.f32.mrb[0].mxu0
        %v1574 = vadd.f32 0.0, %v1573
        %v1575 = vpop.f32.mrb[0].mxu0
        %v1576 = vadd.f32 0.0, %v1575
        %v1577 = vpop.f32.mrb[0].mxu0
        %v1578 = vadd.f32 0.0, %v1577
        %v1579 = vpop.f32.mrb[0].mxu0
        %v1580 = vadd.f32 0.0, %v1579
        %1581 = vmatprep.mubr.bf16.mxu0 0
        %1582 = vmatmul.mubr.bf16.gmra.mrb[0].mxu0 %v978
        %v1583 = vpop.f32.mrb[0].mxu0
        %v1584 = vadd.f32 0.0, %v1583
        %v1585 = vpop.f32.mrb[0].mxu0
        %v1586 = vadd.f32 0.0, %v1585
        %v1587 = vpop.f32.mrb[0].mxu0
        %v1588 = vadd.f32 0.0, %v1587
        %v1589 = vpop.f32.mrb[0].mxu0
        %v1590 = vadd.f32 0.0, %v1589
        %1591 = vmatprep.mubr.bf16.mxu0 0
        %1592 = vmatmul.mubr.bf16.gmra.mrb[0].mxu0 %v981
        %v1593 = vpop.f32.mrb[0].mxu0
        %v1594 = vadd.f32 0.0, %v1593
        %v1595 = vpop.f32.mrb[0].mxu0
        %v1596 = vadd.f32 0.0, %v1595
        %v1597 = vpop.f32.mrb[0].mxu0
        %v1598 = vadd.f32 0.0, %v1597
        %v1599 = vpop.f32.mrb[0].mxu0
        %v1600 = vadd.f32 0.0, %v1599
        %1601 = vmatprep.mubr.bf16.mxu0 0
        %1602 = vmatmul.mubr.bf16.gmra.mrb[0].mxu0 %v984
        %v1603 = vpop.f32.mrb[0].mxu0
        %v1604 = vadd.f32 0.0, %v1603
        %v1605 = vpop.f32.mrb[0].mxu0
        %v1606 = vadd.f32 0.0, %v1605
        %v1607 = vpop.f32.mrb[0].mxu0
        %v1608 = vadd.f32 0.0, %v1607
        %v1609 = vpop.f32.mrb[0].mxu0
        %v1610 = vadd.f32 0.0, %v1609
        %1611 = vmatprep.mubr.bf16.mxu0 0
        %1612 = vmatmul.mubr.bf16.gmra.mrb[0].mxu0 %v987
        %v1613 = vpop.f32.mrb[0].mxu0
        %v1614 = vadd.f32 0.0, %v1613
        %v1615 = vpop.f32.mrb[0].mxu0
        %v1616 = vadd.f32 0.0, %v1615
        %v1617 = vpop.f32.mrb[0].mxu0
        %v1618 = vadd.f32 0.0, %v1617
        %v1619 = vpop.f32.mrb[0].mxu0
        %v1620 = vadd.f32 0.0, %v1619
        %1621 = vmatprep.mubr.bf16.mxu0 0
        %1622 = vmatmul.mubr.bf16.gmra.mrb[0].mxu0 %v990
        %v1623 = vpop.f32.mrb[0].mxu0
        %v1624 = vadd.f32 0.0, %v1623
        %v1625 = vpop.f32.mrb[0].mxu0
        %v1626 = vadd.f32 0.0, %v1625
        %v1627 = vpop.f32.mrb[0].mxu0
        %v1628 = vadd.f32 0.0, %v1627
        %v1629 = vpop.f32.mrb[0].mxu0
        %v1630 = vadd.f32 0.0, %v1629
        %1631 = vmatprep.mubr.bf16.mxu0 0
        %1632 = vmatmul.mubr.bf16.gmra.mrb[0].mxu0 %v993
        %v1633 = vpop.f32.mrb[0].mxu0
        %v1634 = vadd.f32 0.0, %v1633
        %v1635 = vpop.f32.mrb[0].mxu0
        %v1636 = vadd.f32 0.0, %v1635
        %v1637 = vpop.f32.mrb[0].mxu0
        %v1638 = vadd.f32 0.0, %v1637
        %v1639 = vpop.f32.mrb[0].mxu0
        %v1640 = vadd.f32 0.0, %v1639
        %1641 = vmatprep.mubr.bf16.mxu0 0
        %1642 = vmatmul.mubr.bf16.gmra.mrb[0].mxu0 %v996
        %v1643 = vpop.f32.mrb[0].mxu0
        %v1644 = vadd.f32 0.0, %v1643
        %v1645 = vpop.f32.mrb[0].mxu0
        %v1646 = vadd.f32 0.0, %v1645
        %v1647 = vpop.f32.mrb[0].mxu0
        %v1648 = vadd.f32 0.0, %v1647
        %v1649 = vpop.f32.mrb[0].mxu0
        %v1650 = vadd.f32 0.0, %v1649
        %1651 = vmatprep.mubr.bf16.mxu0 0
        %1652 = vmatmul.mubr.bf16.gmra.mrb[0].mxu0 %v999
        %v1653 = vpop.f32.mrb[0].mxu0
        %v1654 = vadd.f32 0.0, %v1653
        %v1655 = vpop.f32.mrb[0].mxu0
        %v1656 = vadd.f32 0.0, %v1655
        %v1657 = vpop.f32.mrb[0].mxu0
        %v1658 = vadd.f32 0.0, %v1657
        %v1659 = vpop.f32.mrb[0].mxu0
        %v1660 = vadd.f32 0.0, %v1659
        %1661 = vmatprep.mubr.bf16.mxu0 0
        %1662 = vmatmul.mubr.bf16.gmra.mrb[0].mxu0 %v1002
        %v1663 = vpop.f32.mrb[0].mxu0
        %v1664 = vadd.f32 0.0, %v1663
        %v1665 = vpop.f32.mrb[0].mxu0
        %v1666 = vadd.f32 0.0, %v1665
        %v1667 = vpop.f32.mrb[0].mxu0
        %v1668 = vadd.f32 0.0, %v1667
        %v1669 = vpop.f32.mrb[0].mxu0
        %v1670 = vadd.f32 0.0, %v1669
        %1671 = vmatprep.mubr.bf16.mxu0 0
        %1672 = vmatmul.mubr.bf16.gmra.mrb[0].mxu0 %v1005
        %v1673 = vpop.f32.mrb[0].mxu0
        %v1674 = vadd.f32 0.0, %v1673
        %v1675 = vpop.f32.mrb[0].mxu0
        %v1676 = vadd.f32 0.0, %v1675
        %v1677 = vpop.f32.mrb[0].mxu0
        %v1678 = vadd.f32 0.0, %v1677
        %v1679 = vpop.f32.mrb[0].mxu0
        %v1680 = vadd.f32 0.0, %v1679
        %1681 = vmatprep.mubr.bf16.mxu0 0
        %1682 = vmatmul.mubr.bf16.gmra.mrb[0].mxu0 %v1372
        %v1683 = vpop.f32.mrb[0].mxu0
        %v1684 = vadd.f32 0.0, %v1683
        %v1685 = vpop.f32.mrb[0].mxu0
        %v1686 = vadd.f32 0.0, %v1685
        %v1687 = vpop.f32.mrb[0].mxu0
        %v1688 = vadd.f32 0.0, %v1687
        %v1689 = vpop.f32.mrb[0].mxu0
        %v1690 = vadd.f32 0.0, %v1689
        %1691 = vdwg.mxu0
        %v1692 = vadd.f32 %v1054, %v1421
        %v1693 = vadd.f32 %v1056, %v1423
        %v1694 = vadd.f32 %v1207, %v1574
        %v1695 = vadd.f32 %v1209, %v1576
        %v1696 = vadd.f32 %v1058, %v1425
        %v1697 = vadd.f32 %v1060, %v1427
        %v1698 = vadd.f32 %v1211, %v1578
        %v1699 = vadd.f32 %v1213, %v1580
        %v1700 = vadd.f32 %v1064, %v1431
        %v1701 = vadd.f32 %v1066, %v1433
        %v1702 = vadd.f32 %v1217, %v1584
        %v1703 = vadd.f32 %v1219, %v1586
        %v1704 = vadd.f32 %v1068, %v1435
        %v1705 = vadd.f32 %v1070, %v1437
        %v1706 = vadd.f32 %v1221, %v1588
        %v1707 = vadd.f32 %v1223, %v1590
        %v1708 = vadd.f32 %v1074, %v1441
        %v1709 = vadd.f32 %v1076, %v1443
        %v1710 = vadd.f32 %v1227, %v1594
        %v1711 = vadd.f32 %v1229, %v1596
        %v1712 = vadd.f32 %v1078, %v1445
        %v1713 = vadd.f32 %v1080, %v1447
        %v1714 = vadd.f32 %v1231, %v1598
        %v1715 = vadd.f32 %v1233, %v1600
        %v1716 = vadd.f32 %v1084, %v1451
        %v1717 = vadd.f32 %v1086, %v1453
        %v1718 = vadd.f32 %v1237, %v1604
        %v1719 = vadd.f32 %v1239, %v1606
        %v1720 = vadd.f32 %v1088, %v1455
        %v1721 = vadd.f32 %v1090, %v1457
        %v1722 = vadd.f32 %v1241, %v1608
        %v1723 = vadd.f32 %v1243, %v1610
        %v1724 = vadd.f32 %v1094, %v1461
        %v1725 = vadd.f32 %v1096, %v1463
        %v1726 = vadd.f32 %v1247, %v1614
        %v1727 = vadd.f32 %v1249, %v1616
        %v1728 = vadd.f32 %v1098, %v1465
        %v1729 = vadd.f32 %v1100, %v1467
        %v1730 = vadd.f32 %v1251, %v1618
        %v1731 = vadd.f32 %v1253, %v1620
        %v1732 = vadd.f32 %v1104, %v1471
        %v1733 = vadd.f32 %v1106, %v1473
        %v1734 = vadd.f32 %v1257, %v1624
        %v1735 = vadd.f32 %v1259, %v1626
        %v1736 = vadd.f32 %v1108, %v1475
        %v1737 = vadd.f32 %v1110, %v1477
        %v1738 = vadd.f32 %v1261, %v1628
        %v1739 = vadd.f32 %v1263, %v1630
        %v1740 = vadd.f32 %v1114, %v1481
        %v1741 = vadd.f32 %v1116, %v1483
        %v1742 = vadd.f32 %v1267, %v1634
        %v1743 = vadd.f32 %v1269, %v1636
        %v1744 = vadd.f32 %v1118, %v1485
        %v1745 = vadd.f32 %v1120, %v1487
        %v1746 = vadd.f32 %v1271, %v1638
        %v1747 = vadd.f32 %v1273, %v1640
        %v1748 = vadd.f32 %v1124, %v1491
        %v1749 = vadd.f32 %v1126, %v1493
        %v1750 = vadd.f32 %v1277, %v1644
        %v1751 = vadd.f32 %v1279, %v1646
        %v1752 = vadd.f32 %v1128, %v1495
        %v1753 = vadd.f32 %v1130, %v1497
        %v1754 = vadd.f32 %v1281, %v1648
        %v1755 = vadd.f32 %v1283, %v1650
        %v1756 = vadd.f32 %v1134, %v1501
        %v1757 = vadd.f32 %v1136, %v1503
        %v1758 = vadd.f32 %v1287, %v1654
        %v1759 = vadd.f32 %v1289, %v1656
        %v1760 = vadd.f32 %v1138, %v1505
        %v1761 = vadd.f32 %v1140, %v1507
        %v1762 = vadd.f32 %v1291, %v1658
        %v1763 = vadd.f32 %v1293, %v1660
        %v1764 = vadd.f32 %v1144, %v1511
        %v1765 = vadd.f32 %v1146, %v1513
        %v1766 = vadd.f32 %v1297, %v1664
        %v1767 = vadd.f32 %v1299, %v1666
        %v1768 = vadd.f32 %v1148, %v1515
        %v1769 = vadd.f32 %v1150, %v1517
        %v1770 = vadd.f32 %v1301, %v1668
        %v1771 = vadd.f32 %v1303, %v1670
        %v1772 = vadd.f32 %v1154, %v1521
        %v1773 = vadd.f32 %v1156, %v1523
        %v1774 = vadd.f32 %v1307, %v1674
        %v1775 = vadd.f32 %v1309, %v1676
        %v1776 = vadd.f32 %v1158, %v1525
        %v1777 = vadd.f32 %v1160, %v1527
        %v1778 = vadd.f32 %v1311, %v1678
        %v1779 = vadd.f32 %v1313, %v1680
        %v1780 = vadd.f32 %v1164, %v1531
        %v1781 = vadd.f32 %v1166, %v1533
        %v1782 = vadd.f32 %v1317, %v1684
        %v1783 = vadd.f32 %v1319, %v1686
        %v1784 = vadd.f32 %v1168, %v1535
        %v1785 = vadd.f32 %v1170, %v1537
        %v1786 = vadd.f32 %v1321, %v1688
        %v1787 = vadd.f32 %v1323, %v1690
        %v1788 = vpack.c.bf16 %v500, %v499
        %s1789 = scalar_lea.vmem %s1, 192
        %v1790 = vld [vmem:[%s1789] sm:$0xff]
        %v1791 = vld [vmem:[%s1789 + $0x8] sm:$0xff]
        %v1792 = vld [vmem:[%s1789 + $0x10] sm:$0xff]
        %v1793 = vld [vmem:[%s1789 + $0x18] sm:$0xff]
        %v1794 = vld [vmem:[%s1789 + $0x20] sm:$0xff]
        %v1795 = vld [vmem:[%s1789 + $0x28] sm:$0xff]
        %v1796 = vld [vmem:[%s1789 + $0x30] sm:$0x33]
        %v1797 = vld [vmem:[%s1789 + $0x38] sm:$0x33]
        %v1806 = vunpack.c.l.b16 %v1790
        %v1807 = vunpack.c.h.b16 %v1790
        %v1808 = vunpack.c.l.b16 %v1791
        %v1809 = vunpack.c.h.b16 %v1791
        %v1810 = vunpack.c.l.b16 %v1792
        %v1811 = vunpack.c.h.b16 %v1792
        %v1812 = vunpack.c.l.b16 %v1793
        %v1813 = vunpack.c.h.b16 %v1793
        %v1814 = vunpack.c.l.b16 %v1794
        %v1815 = vunpack.c.h.b16 %v1794
        %v1816 = vunpack.c.l.b16 %v1795
        %v1817 = vunpack.c.h.b16 %v1795
        %v1818 = vunpack.c.l.b16 %v1796
        %v1819 = vunpack.c.h.b16 %v1796
        %v1820 = vunpack.c.l.b16 %v1797
        %v1821 = vunpack.c.h.b16 %v1797
        %v1822 = vpack.c.b16 %v1810, %v1806
        %v1823 = vpack.c.b16 %v1811, %v1807
        %v1824 = vpack.c.b16 %v1812, %v1808
        %v1825 = vpack.c.b16 %v1813, %v1809
        %v1826 = vpack.c.b16 %v1818, %v1814
        %v1827 = vpack.c.b16 %v1819, %v1815
        %v1828 = vpack.c.b16 %v1820, %v1816
        %v1829 = vpack.c.b16 %v1821, %v1817
        %v1835 = vsel %vm579, %v1788, 0
        %v1838 = vsel %vm616, %v1826, 0
        %v1841 = vsel %vm616, %v1827, 0
        %v1844 = vsel %vm616, %v1828, 0
        %v1847 = vsel %vm616, %v1829, 0
        %1849 = vmatprep.subr.bf16.mxu0 %v1823
        %1850 = vmatpush1.bf16.msra.mxu0 %v1822
        %1851 = vmatprep.subr.bf16.mxu0 %v1841
        %1852 = vmatpush1.bf16.msra.mxu0 %v1838
        %1853 = vmatprep.subr.bf16.mxu0 0
        %1854 = vmatpush1.bf16.msra.mxu0 0
        %1855 = vmatprep.subr.bf16.mxu0 0
        %1856 = vmatpush1.bf16.msra.mxu0 0
        %1857 = vmatprep.subr.bf16.mxu0 0
        %1858 = vmatpush1.bf16.msra.mxu0 0
        %1859 = vmatprep.subr.bf16.mxu0 0
        %1860 = vmatpush1.bf16.msra.mxu0 0
        %1861 = vmatprep.subr.bf16.mxu0 0
        %1862 = vmatpush1.bf16.msra.mxu0 0
        %1863 = vmatprep.subr.bf16.mxu0 0
        %1864 = vmatpush1.bf16.msra.mxu0 0
        %1865 = vmatprep.subr.bf16.mxu0 0
        %1866 = vmatpush1.bf16.msra.mxu0 0
        %1867 = vmatprep.subr.bf16.mxu0 0
        %1868 = vmatpush1.bf16.msra.mxu0 0
        %1869 = vmatprep.subr.bf16.mxu0 0
        %1870 = vmatpush1.bf16.msra.mxu0 0
        %1871 = vmatprep.subr.bf16.mxu0 0
        %1872 = vmatpush1.bf16.msra.mxu0 0
        %1873 = vmatprep.subr.bf16.mxu0 0
        %1874 = vmatpush1.bf16.msra.mxu0 0
        %1875 = vmatprep.subr.bf16.mxu0 0
        %1876 = vmatpush1.bf16.msra.mxu0 0
        %1877 = vmatprep.subr.bf16.mxu0 0
        %1878 = vmatpush1.bf16.msra.mxu0 0
        %1879 = vmatprep.subr.bf16.mxu0 0
        %1880 = vmatpush1.bf16.msra.mxu0 0
        %1881 = vmatprep.mubr.bf16.mxu0 0
        %1882 = vmatmul.mubr.bf16.gmra.mrb[0].mxu0 %v584
        %v1883 = vpop.f32.mrb[0].mxu0
        %v1884 = vadd.f32 0.0, %v1883
        %v1885 = vpop.f32.mrb[0].mxu0
        %v1886 = vadd.f32 0.0, %v1885
        %v1887 = vpop.f32.mrb[0].mxu0
        %v1888 = vadd.f32 0.0, %v1887
        %v1889 = vpop.f32.mrb[0].mxu0
        %v1890 = vadd.f32 0.0, %v1889
        %1891 = vmatprep.mubr.bf16.mxu0 0
        %1892 = vmatmul.mubr.bf16.gmra.mrb[0].mxu0 %v587
        %v1893 = vpop.f32.mrb[0].mxu0
        %v1894 = vadd.f32 0.0, %v1893
        %v1895 = vpop.f32.mrb[0].mxu0
        %v1896 = vadd.f32 0.0, %v1895
        %v1897 = vpop.f32.mrb[0].mxu0
        %v1898 = vadd.f32 0.0, %v1897
        %v1899 = vpop.f32.mrb[0].mxu0
        %v1900 = vadd.f32 0.0, %v1899
        %1901 = vmatprep.mubr.bf16.mxu0 0
        %1902 = vmatmul.mubr.bf16.gmra.mrb[0].mxu0 %v590
        %v1903 = vpop.f32.mrb[0].mxu0
        %v1904 = vadd.f32 0.0, %v1903
        %v1905 = vpop.f32.mrb[0].mxu0
        %v1906 = vadd.f32 0.0, %v1905
        %v1907 = vpop.f32.mrb[0].mxu0
        %v1908 = vadd.f32 0.0, %v1907
        %v1909 = vpop.f32.mrb[0].mxu0
        %v1910 = vadd.f32 0.0, %v1909
        %1911 = vmatprep.mubr.bf16.mxu0 0
        %1912 = vmatmul.mubr.bf16.gmra.mrb[0].mxu0 %v593
        %v1913 = vpop.f32.mrb[0].mxu0
        %v1914 = vadd.f32 0.0, %v1913
        %v1915 = vpop.f32.mrb[0].mxu0
        %v1916 = vadd.f32 0.0, %v1915
        %v1917 = vpop.f32.mrb[0].mxu0
        %v1918 = vadd.f32 0.0, %v1917
        %v1919 = vpop.f32.mrb[0].mxu0
        %v1920 = vadd.f32 0.0, %v1919
        %1921 = vmatprep.mubr.bf16.mxu0 0
        %1922 = vmatmul.mubr.bf16.gmra.mrb[0].mxu0 %v596
        %v1923 = vpop.f32.mrb[0].mxu0
        %v1924 = vadd.f32 0.0, %v1923
        %v1925 = vpop.f32.mrb[0].mxu0
        %v1926 = vadd.f32 0.0, %v1925
        %v1927 = vpop.f32.mrb[0].mxu0
        %v1928 = vadd.f32 0.0, %v1927
        %v1929 = vpop.f32.mrb[0].mxu0
        %v1930 = vadd.f32 0.0, %v1929
        %1931 = vmatprep.mubr.bf16.mxu0 0
        %1932 = vmatmul.mubr.bf16.gmra.mrb[0].mxu0 %v599
        %v1933 = vpop.f32.mrb[0].mxu0
        %v1934 = vadd.f32 0.0, %v1933
        %v1935 = vpop.f32.mrb[0].mxu0
        %v1936 = vadd.f32 0.0, %v1935
        %v1937 = vpop.f32.mrb[0].mxu0
        %v1938 = vadd.f32 0.0, %v1937
        %v1939 = vpop.f32.mrb[0].mxu0
        %v1940 = vadd.f32 0.0, %v1939
        %1941 = vmatprep.mubr.bf16.mxu0 0
        %1942 = vmatmul.mubr.bf16.gmra.mrb[0].mxu0 %v602
        %v1943 = vpop.f32.mrb[0].mxu0
        %v1944 = vadd.f32 0.0, %v1943
        %v1945 = vpop.f32.mrb[0].mxu0
        %v1946 = vadd.f32 0.0, %v1945
        %v1947 = vpop.f32.mrb[0].mxu0
        %v1948 = vadd.f32 0.0, %v1947
        %v1949 = vpop.f32.mrb[0].mxu0
        %v1950 = vadd.f32 0.0, %v1949
        %1951 = vmatprep.mubr.bf16.mxu0 0
        %1952 = vmatmul.mubr.bf16.gmra.mrb[0].mxu0 %v605
        %v1953 = vpop.f32.mrb[0].mxu0
        %v1954 = vadd.f32 0.0, %v1953
        %v1955 = vpop.f32.mrb[0].mxu0
        %v1956 = vadd.f32 0.0, %v1955
        %v1957 = vpop.f32.mrb[0].mxu0
        %v1958 = vadd.f32 0.0, %v1957
        %v1959 = vpop.f32.mrb[0].mxu0
        %v1960 = vadd.f32 0.0, %v1959
        %1961 = vmatprep.mubr.bf16.mxu0 0
        %1962 = vmatmul.mubr.bf16.gmra.mrb[0].mxu0 %v608
        %v1963 = vpop.f32.mrb[0].mxu0
        %v1964 = vadd.f32 0.0, %v1963
        %v1965 = vpop.f32.mrb[0].mxu0
        %v1966 = vadd.f32 0.0, %v1965
        %v1967 = vpop.f32.mrb[0].mxu0
        %v1968 = vadd.f32 0.0, %v1967
        %v1969 = vpop.f32.mrb[0].mxu0
        %v1970 = vadd.f32 0.0, %v1969
        %1971 = vmatprep.mubr.bf16.mxu0 0
        %1972 = vmatmul.mubr.bf16.gmra.mrb[0].mxu0 %v611
        %v1973 = vpop.f32.mrb[0].mxu0
        %v1974 = vadd.f32 0.0, %v1973
        %v1975 = vpop.f32.mrb[0].mxu0
        %v1976 = vadd.f32 0.0, %v1975
        %v1977 = vpop.f32.mrb[0].mxu0
        %v1978 = vadd.f32 0.0, %v1977
        %v1979 = vpop.f32.mrb[0].mxu0
        %v1980 = vadd.f32 0.0, %v1979
        %1981 = vmatprep.mubr.bf16.mxu0 0
        %1982 = vmatmul.mubr.bf16.gmra.mrb[0].mxu0 %v614
        %v1983 = vpop.f32.mrb[0].mxu0
        %v1984 = vadd.f32 0.0, %v1983
        %v1985 = vpop.f32.mrb[0].mxu0
        %v1986 = vadd.f32 0.0, %v1985
        %v1987 = vpop.f32.mrb[0].mxu0
        %v1988 = vadd.f32 0.0, %v1987
        %v1989 = vpop.f32.mrb[0].mxu0
        %v1990 = vadd.f32 0.0, %v1989
        %1991 = vmatprep.mubr.bf16.mxu0 0
        %1992 = vmatmul.mubr.bf16.gmra.mrb[0].mxu0 %v1835
        %v1993 = vpop.f32.mrb[0].mxu0
        %v1994 = vadd.f32 0.0, %v1993
        %v1995 = vpop.f32.mrb[0].mxu0
        %v1996 = vadd.f32 0.0, %v1995
        %v1997 = vpop.f32.mrb[0].mxu0
        %v1998 = vadd.f32 0.0, %v1997
        %v1999 = vpop.f32.mrb[0].mxu0
        %v2000 = vadd.f32 0.0, %v1999
        %2001 = vdwg.mxu0
        %2002 = vmatprep.subr.bf16.mxu0 %v1825
        %2003 = vmatpush1.bf16.msra.mxu0 %v1824
        %2004 = vmatprep.subr.bf16.mxu0 %v1847
        %2005 = vmatpush1.bf16.msra.mxu0 %v1844
        %2006 = vmatprep.subr.bf16.mxu0 0
        %2007 = vmatpush1.bf16.msra.mxu0 0
        %2008 = vmatprep.subr.bf16.mxu0 0
        %2009 = vmatpush1.bf16.msra.mxu0 0
        %2010 = vmatprep.subr.bf16.mxu0 0
        %2011 = vmatpush1.bf16.msra.mxu0 0
        %2012 = vmatprep.subr.bf16.mxu0 0
        %2013 = vmatpush1.bf16.msra.mxu0 0
        %2014 = vmatprep.subr.bf16.mxu0 0
        %2015 = vmatpush1.bf16.msra.mxu0 0
        %2016 = vmatprep.subr.bf16.mxu0 0
        %2017 = vmatpush1.bf16.msra.mxu0 0
        %2018 = vmatprep.subr.bf16.mxu0 0
        %2019 = vmatpush1.bf16.msra.mxu0 0
        %2020 = vmatprep.subr.bf16.mxu0 0
        %2021 = vmatpush1.bf16.msra.mxu0 0
        %2022 = vmatprep.subr.bf16.mxu0 0
        %2023 = vmatpush1.bf16.msra.mxu0 0
        %2024 = vmatprep.subr.bf16.mxu0 0
        %2025 = vmatpush1.bf16.msra.mxu0 0
        %2026 = vmatprep.subr.bf16.mxu0 0
        %2027 = vmatpush1.bf16.msra.mxu0 0
        %2028 = vmatprep.subr.bf16.mxu0 0
        %2029 = vmatpush1.bf16.msra.mxu0 0
        %2030 = vmatprep.subr.bf16.mxu0 0
        %2031 = vmatpush1.bf16.msra.mxu0 0
        %2032 = vmatprep.subr.bf16.mxu0 0
        %2033 = vmatpush1.bf16.msra.mxu0 0
        %2034 = vmatprep.mubr.bf16.mxu0 0
        %2035 = vmatmul.mubr.bf16.gmra.mrb[0].mxu0 %v584
        %v2036 = vpop.f32.mrb[0].mxu0
        %v2037 = vadd.f32 0.0, %v2036
        %v2038 = vpop.f32.mrb[0].mxu0
        %v2039 = vadd.f32 0.0, %v2038
        %v2040 = vpop.f32.mrb[0].mxu0
        %v2041 = vadd.f32 0.0, %v2040
        %v2042 = vpop.f32.mrb[0].mxu0
        %v2043 = vadd.f32 0.0, %v2042
        %2044 = vmatprep.mubr.bf16.mxu0 0
        %2045 = vmatmul.mubr.bf16.gmra.mrb[0].mxu0 %v587
        %v2046 = vpop.f32.mrb[0].mxu0
        %v2047 = vadd.f32 0.0, %v2046
        %v2048 = vpop.f32.mrb[0].mxu0
        %v2049 = vadd.f32 0.0, %v2048
        %v2050 = vpop.f32.mrb[0].mxu0
        %v2051 = vadd.f32 0.0, %v2050
        %v2052 = vpop.f32.mrb[0].mxu0
        %v2053 = vadd.f32 0.0, %v2052
        %2054 = vmatprep.mubr.bf16.mxu0 0
        %2055 = vmatmul.mubr.bf16.gmra.mrb[0].mxu0 %v590
        %v2056 = vpop.f32.mrb[0].mxu0
        %v2057 = vadd.f32 0.0, %v2056
        %v2058 = vpop.f32.mrb[0].mxu0
        %v2059 = vadd.f32 0.0, %v2058
        %v2060 = vpop.f32.mrb[0].mxu0
        %v2061 = vadd.f32 0.0, %v2060
        %v2062 = vpop.f32.mrb[0].mxu0
        %v2063 = vadd.f32 0.0, %v2062
        %2064 = vmatprep.mubr.bf16.mxu0 0
        %2065 = vmatmul.mubr.bf16.gmra.mrb[0].mxu0 %v593
        %v2066 = vpop.f32.mrb[0].mxu0
        %v2067 = vadd.f32 0.0, %v2066
        %v2068 = vpop.f32.mrb[0].mxu0
        %v2069 = vadd.f32 0.0, %v2068
        %v2070 = vpop.f32.mrb[0].mxu0
        %v2071 = vadd.f32 0.0, %v2070
        %v2072 = vpop.f32.mrb[0].mxu0
        %v2073 = vadd.f32 0.0, %v2072
        %2074 = vmatprep.mubr.bf16.mxu0 0
        %2075 = vmatmul.mubr.bf16.gmra.mrb[0].mxu0 %v596
        %v2076 = vpop.f32.mrb[0].mxu0
        %v2077 = vadd.f32 0.0, %v2076
        %v2078 = vpop.f32.mrb[0].mxu0
        %v2079 = vadd.f32 0.0, %v2078
        %v2080 = vpop.f32.mrb[0].mxu0
        %v2081 = vadd.f32 0.0, %v2080
        %v2082 = vpop.f32.mrb[0].mxu0
        %v2083 = vadd.f32 0.0, %v2082
        %2084 = vmatprep.mubr.bf16.mxu0 0
        %2085 = vmatmul.mubr.bf16.gmra.mrb[0].mxu0 %v599
        %v2086 = vpop.f32.mrb[0].mxu0
        %v2087 = vadd.f32 0.0, %v2086
        %v2088 = vpop.f32.mrb[0].mxu0
        %v2089 = vadd.f32 0.0, %v2088
        %v2090 = vpop.f32.mrb[0].mxu0
        %v2091 = vadd.f32 0.0, %v2090
        %v2092 = vpop.f32.mrb[0].mxu0
        %v2093 = vadd.f32 0.0, %v2092
        %2094 = vmatprep.mubr.bf16.mxu0 0
        %2095 = vmatmul.mubr.bf16.gmra.mrb[0].mxu0 %v602
        %v2096 = vpop.f32.mrb[0].mxu0
        %v2097 = vadd.f32 0.0, %v2096
        %v2098 = vpop.f32.mrb[0].mxu0
        %v2099 = vadd.f32 0.0, %v2098
        %v2100 = vpop.f32.mrb[0].mxu0
        %v2101 = vadd.f32 0.0, %v2100
        %v2102 = vpop.f32.mrb[0].mxu0
        %v2103 = vadd.f32 0.0, %v2102
        %2104 = vmatprep.mubr.bf16.mxu0 0
        %2105 = vmatmul.mubr.bf16.gmra.mrb[0].mxu0 %v605
        %v2106 = vpop.f32.mrb[0].mxu0
        %v2107 = vadd.f32 0.0, %v2106
        %v2108 = vpop.f32.mrb[0].mxu0
        %v2109 = vadd.f32 0.0, %v2108
        %v2110 = vpop.f32.mrb[0].mxu0
        %v2111 = vadd.f32 0.0, %v2110
        %v2112 = vpop.f32.mrb[0].mxu0
        %v2113 = vadd.f32 0.0, %v2112
        %2114 = vmatprep.mubr.bf16.mxu0 0
        %2115 = vmatmul.mubr.bf16.gmra.mrb[0].mxu0 %v608
        %v2116 = vpop.f32.mrb[0].mxu0
        %v2117 = vadd.f32 0.0, %v2116
        %v2118 = vpop.f32.mrb[0].mxu0
        %v2119 = vadd.f32 0.0, %v2118
        %v2120 = vpop.f32.mrb[0].mxu0
        %v2121 = vadd.f32 0.0, %v2120
        %v2122 = vpop.f32.mrb[0].mxu0
        %v2123 = vadd.f32 0.0, %v2122
        %2124 = vmatprep.mubr.bf16.mxu0 0
        %2125 = vmatmul.mubr.bf16.gmra.mrb[0].mxu0 %v611
        %v2126 = vpop.f32.mrb[0].mxu0
        %v2127 = vadd.f32 0.0, %v2126
        %v2128 = vpop.f32.mrb[0].mxu0
        %v2129 = vadd.f32 0.0, %v2128
        %v2130 = vpop.f32.mrb[0].mxu0
        %v2131 = vadd.f32 0.0, %v2130
        %v2132 = vpop.f32.mrb[0].mxu0
        %v2133 = vadd.f32 0.0, %v2132
        %2134 = vmatprep.mubr.bf16.mxu0 0
        %2135 = vmatmul.mubr.bf16.gmra.mrb[0].mxu0 %v614
        %v2136 = vpop.f32.mrb[0].mxu0
        %v2137 = vadd.f32 0.0, %v2136
        %v2138 = vpop.f32.mrb[0].mxu0
        %v2139 = vadd.f32 0.0, %v2138
        %v2140 = vpop.f32.mrb[0].mxu0
        %v2141 = vadd.f32 0.0, %v2140
        %v2142 = vpop.f32.mrb[0].mxu0
        %v2143 = vadd.f32 0.0, %v2142
        %2144 = vmatprep.mubr.bf16.mxu0 0
        %2145 = vmatmul.mubr.bf16.gmra.mrb[0].mxu0 %v1835
        %v2146 = vpop.f32.mrb[0].mxu0
        %v2147 = vadd.f32 0.0, %v2146
        %v2148 = vpop.f32.mrb[0].mxu0
        %v2149 = vadd.f32 0.0, %v2148
        %v2150 = vpop.f32.mrb[0].mxu0
        %v2151 = vadd.f32 0.0, %v2150
        %v2152 = vpop.f32.mrb[0].mxu0
        %v2153 = vadd.f32 0.0, %v2152
        %2154 = vdwg.mxu0
        %v2155 = vadd.f32 %v1692, %v1884
        %v2156 = vadd.f32 %v1693, %v1886
        %v2157 = vadd.f32 %v1694, %v2037
        %v2158 = vadd.f32 %v1695, %v2039
        %v2159 = vadd.f32 %v1696, %v1888
        %v2160 = vadd.f32 %v1697, %v1890
        %v2161 = vadd.f32 %v1698, %v2041
        %v2162 = vadd.f32 %v1699, %v2043
        %v2163 = vadd.f32 %v1700, %v1894
        %v2164 = vadd.f32 %v1701, %v1896
        %v2165 = vadd.f32 %v1702, %v2047
        %v2166 = vadd.f32 %v1703, %v2049
        %v2167 = vadd.f32 %v1704, %v1898
        %v2168 = vadd.f32 %v1705, %v1900
        %v2169 = vadd.f32 %v1706, %v2051
        %v2170 = vadd.f32 %v1707, %v2053
        %v2171 = vadd.f32 %v1708, %v1904
        %v2172 = vadd.f32 %v1709, %v1906
        %v2173 = vadd.f32 %v1710, %v2057
        %v2174 = vadd.f32 %v1711, %v2059
        %v2175 = vadd.f32 %v1712, %v1908
        %v2176 = vadd.f32 %v1713, %v1910
        %v2177 = vadd.f32 %v1714, %v2061
        %v2178 = vadd.f32 %v1715, %v2063
        %v2179 = vadd.f32 %v1716, %v1914
        %v2180 = vadd.f32 %v1717, %v1916
        %v2181 = vadd.f32 %v1718, %v2067
        %v2182 = vadd.f32 %v1719, %v2069
        %v2183 = vadd.f32 %v1720, %v1918
        %v2184 = vadd.f32 %v1721, %v1920
        %v2185 = vadd.f32 %v1722, %v2071
        %v2186 = vadd.f32 %v1723, %v2073
        %v2187 = vadd.f32 %v1724, %v1924
        %v2188 = vadd.f32 %v1725, %v1926
        %v2189 = vadd.f32 %v1726, %v2077
        %v2190 = vadd.f32 %v1727, %v2079
        %v2191 = vadd.f32 %v1728, %v1928
        %v2192 = vadd.f32 %v1729, %v1930
        %v2193 = vadd.f32 %v1730, %v2081
        %v2194 = vadd.f32 %v1731, %v2083
        %v2195 = vadd.f32 %v1732, %v1934
        %v2196 = vadd.f32 %v1733, %v1936
        %v2197 = vadd.f32 %v1734, %v2087
        %v2198 = vadd.f32 %v1735, %v2089
        %v2199 = vadd.f32 %v1736, %v1938
        %v2200 = vadd.f32 %v1737, %v1940
        %v2201 = vadd.f32 %v1738, %v2091
        %v2202 = vadd.f32 %v1739, %v2093
        %v2203 = vadd.f32 %v1740, %v1944
        %v2204 = vadd.f32 %v1741, %v1946
        %v2205 = vadd.f32 %v1742, %v2097
        %v2206 = vadd.f32 %v1743, %v2099
        %v2207 = vadd.f32 %v1744, %v1948
        %v2208 = vadd.f32 %v1745, %v1950
        %v2209 = vadd.f32 %v1746, %v2101
        %v2210 = vadd.f32 %v1747, %v2103
        %v2211 = vadd.f32 %v1748, %v1954
        %v2212 = vadd.f32 %v1749, %v1956
        %v2213 = vadd.f32 %v1750, %v2107
        %v2214 = vadd.f32 %v1751, %v2109
        %v2215 = vadd.f32 %v1752, %v1958
        %v2216 = vadd.f32 %v1753, %v1960
        %v2217 = vadd.f32 %v1754, %v2111
        %v2218 = vadd.f32 %v1755, %v2113
        %v2219 = vadd.f32 %v1756, %v1964
        %v2220 = vadd.f32 %v1757, %v1966
        %v2221 = vadd.f32 %v1758, %v2117
        %v2222 = vadd.f32 %v1759, %v2119
        %v2223 = vadd.f32 %v1760, %v1968
        %v2224 = vadd.f32 %v1761, %v1970
        %v2225 = vadd.f32 %v1762, %v2121
        %v2226 = vadd.f32 %v1763, %v2123
        %v2227 = vadd.f32 %v1764, %v1974
        %v2228 = vadd.f32 %v1765, %v1976
        %v2229 = vadd.f32 %v1766, %v2127
        %v2230 = vadd.f32 %v1767, %v2129
        %v2231 = vadd.f32 %v1768, %v1978
        %v2232 = vadd.f32 %v1769, %v1980
        %v2233 = vadd.f32 %v1770, %v2131
        %v2234 = vadd.f32 %v1771, %v2133
        %v2235 = vadd.f32 %v1772, %v1984
        %v2236 = vadd.f32 %v1773, %v1986
        %v2237 = vadd.f32 %v1774, %v2137
        %v2238 = vadd.f32 %v1775, %v2139
        %v2239 = vadd.f32 %v1776, %v1988
        %v2240 = vadd.f32 %v1777, %v1990
        %v2241 = vadd.f32 %v1778, %v2141
        %v2242 = vadd.f32 %v1779, %v2143
        %v2243 = vadd.f32 %v1780, %v1994
        %v2244 = vadd.f32 %v1781, %v1996
        %v2245 = vadd.f32 %v1782, %v2147
        %v2246 = vadd.f32 %v1783, %v2149
        %v2247 = vadd.f32 %v1784, %v1998
        %v2248 = vadd.f32 %v1785, %v2000
        %v2249 = vadd.f32 %v1786, %v2151
        %v2250 = vadd.f32 %v1787, %v2153
        %v2251 = vpack.c.bf16 %v501, %v500
        %s2252 = scalar_lea.vmem %s1, 256
        %v2253 = vld [vmem:[%s2252] sm:$0xff]
        %v2254 = vld [vmem:[%s2252 + $0x8] sm:$0xff]
        %v2255 = vld [vmem:[%s2252 + $0x10] sm:$0xff]
        %v2256 = vld [vmem:[%s2252 + $0x18] sm:$0xff]
        %v2257 = vld [vmem:[%s2252 + $0x20] sm:$0xff]
        %v2258 = vld [vmem:[%s2252 + $0x28] sm:$0xff]
        %v2259 = vld [vmem:[%s2252 + $0x30] sm:$0x33]
        %v2260 = vld [vmem:[%s2252 + $0x38] sm:$0x33]
        %v2269 = vunpack.c.l.b16 %v2253
        %v2270 = vunpack.c.h.b16 %v2253
        %v2271 = vunpack.c.l.b16 %v2254
        %v2272 = vunpack.c.h.b16 %v2254
        %v2273 = vunpack.c.l.b16 %v2255
        %v2274 = vunpack.c.h.b16 %v2255
        %v2275 = vunpack.c.l.b16 %v2256
        %v2276 = vunpack.c.h.b16 %v2256
        %v2277 = vunpack.c.l.b16 %v2257
        %v2278 = vunpack.c.h.b16 %v2257
        %v2279 = vunpack.c.l.b16 %v2258
        %v2280 = vunpack.c.h.b16 %v2258
        %v2281 = vunpack.c.l.b16 %v2259
        %v2282 = vunpack.c.h.b16 %v2259
        %v2283 = vunpack.c.l.b16 %v2260
        %v2284 = vunpack.c.h.b16 %v2260
        %v2285 = vpack.c.b16 %v2273, %v2269
        %v2286 = vpack.c.b16 %v2274, %v2270
        %v2287 = vpack.c.b16 %v2275, %v2271
        %v2288 = vpack.c.b16 %v2276, %v2272
        %v2289 = vpack.c.b16 %v2281, %v2277
        %v2290 = vpack.c.b16 %v2282, %v2278
        %v2291 = vpack.c.b16 %v2283, %v2279
        %v2292 = vpack.c.b16 %v2284, %v2280
        %v2298 = vsel %vm579, %v2251, 0
        %v2301 = vsel %vm616, %v2289, 0
        %v2304 = vsel %vm616, %v2290, 0
        %v2307 = vsel %vm616, %v2291, 0
        %v2310 = vsel %vm616, %v2292, 0
        %2312 = vmatprep.subr.bf16.mxu0 %v2286
        %2313 = vmatpush1.bf16.msra.mxu0 %v2285
        %2314 = vmatprep.subr.bf16.mxu0 %v2304
        %2315 = vmatpush1.bf16.msra.mxu0 %v2301
        %2316 = vmatprep.subr.bf16.mxu0 0
        %2317 = vmatpush1.bf16.msra.mxu0 0
        %2318 = vmatprep.subr.bf16.mxu0 0
        %2319 = vmatpush1.bf16.msra.mxu0 0
        %2320 = vmatprep.subr.bf16.mxu0 0
        %2321 = vmatpush1.bf16.msra.mxu0 0
        %2322 = vmatprep.subr.bf16.mxu0 0
        %2323 = vmatpush1.bf16.msra.mxu0 0
        %2324 = vmatprep.subr.bf16.mxu0 0
        %2325 = vmatpush1.bf16.msra.mxu0 0
        %2326 = vmatprep.subr.bf16.mxu0 0
        %2327 = vmatpush1.bf16.msra.mxu0 0
        %2328 = vmatprep.subr.bf16.mxu0 0
        %2329 = vmatpush1.bf16.msra.mxu0 0
        %2330 = vmatprep.subr.bf16.mxu0 0
        %2331 = vmatpush1.bf16.msra.mxu0 0
        %2332 = vmatprep.subr.bf16.mxu0 0
        %2333 = vmatpush1.bf16.msra.mxu0 0
        %2334 = vmatprep.subr.bf16.mxu0 0
        %2335 = vmatpush1.bf16.msra.mxu0 0
        %2336 = vmatprep.subr.bf16.mxu0 0
        %2337 = vmatpush1.bf16.msra.mxu0 0
        %2338 = vmatprep.subr.bf16.mxu0 0
        %2339 = vmatpush1.bf16.msra.mxu0 0
        %2340 = vmatprep.subr.bf16.mxu0 0
        %2341 = vmatpush1.bf16.msra.mxu0 0
        %2342 = vmatprep.subr.bf16.mxu0 0
        %2343 = vmatpush1.bf16.msra.mxu0 0
        %2344 = vmatprep.mubr.bf16.mxu0 0
        %2345 = vmatmul.mubr.bf16.gmra.mrb[0].mxu0 %v978
        %v2346 = vpop.f32.mrb[0].mxu0
        %v2347 = vadd.f32 0.0, %v2346
        %v2348 = vpop.f32.mrb[0].mxu0
        %v2349 = vadd.f32 0.0, %v2348
        %v2350 = vpop.f32.mrb[0].mxu0
        %v2351 = vadd.f32 0.0, %v2350
        %v2352 = vpop.f32.mrb[0].mxu0
        %v2353 = vadd.f32 0.0, %v2352
        %2354 = vmatprep.mubr.bf16.mxu0 0
        %2355 = vmatmul.mubr.bf16.gmra.mrb[0].mxu0 %v981
        %v2356 = vpop.f32.mrb[0].mxu0
        %v2357 = vadd.f32 0.0, %v2356
        %v2358 = vpop.f32.mrb[0].mxu0
        %v2359 = vadd.f32 0.0, %v2358
        %v2360 = vpop.f32.mrb[0].mxu0
        %v2361 = vadd.f32 0.0, %v2360
        %v2362 = vpop.f32.mrb[0].mxu0
        %v2363 = vadd.f32 0.0, %v2362
        %2364 = vmatprep.mubr.bf16.mxu0 0
        %2365 = vmatmul.mubr.bf16.gmra.mrb[0].mxu0 %v984
        %v2366 = vpop.f32.mrb[0].mxu0
        %v2367 = vadd.f32 0.0, %v2366
        %v2368 = vpop.f32.mrb[0].mxu0
        %v2369 = vadd.f32 0.0, %v2368
        %v2370 = vpop.f32.mrb[0].mxu0
        %v2371 = vadd.f32 0.0, %v2370
        %v2372 = vpop.f32.mrb[0].mxu0
        %v2373 = vadd.f32 0.0, %v2372
        %2374 = vmatprep.mubr.bf16.mxu0 0
        %2375 = vmatmul.mubr.bf16.gmra.mrb[0].mxu0 %v987
        %v2376 = vpop.f32.mrb[0].mxu0
        %v2377 = vadd.f32 0.0, %v2376
        %v2378 = vpop.f32.mrb[0].mxu0
        %v2379 = vadd.f32 0.0, %v2378
        %v2380 = vpop.f32.mrb[0].mxu0
        %v2381 = vadd.f32 0.0, %v2380
        %v2382 = vpop.f32.mrb[0].mxu0
        %v2383 = vadd.f32 0.0, %v2382
        %2384 = vmatprep.mubr.bf16.mxu0 0
        %2385 = vmatmul.mubr.bf16.gmra.mrb[0].mxu0 %v990
        %v2386 = vpop.f32.mrb[0].mxu0
        %v2387 = vadd.f32 0.0, %v2386
        %v2388 = vpop.f32.mrb[0].mxu0
        %v2389 = vadd.f32 0.0, %v2388
        %v2390 = vpop.f32.mrb[0].mxu0
        %v2391 = vadd.f32 0.0, %v2390
        %v2392 = vpop.f32.mrb[0].mxu0
        %v2393 = vadd.f32 0.0, %v2392
        %2394 = vmatprep.mubr.bf16.mxu0 0
        %2395 = vmatmul.mubr.bf16.gmra.mrb[0].mxu0 %v993
        %v2396 = vpop.f32.mrb[0].mxu0
        %v2397 = vadd.f32 0.0, %v2396
        %v2398 = vpop.f32.mrb[0].mxu0
        %v2399 = vadd.f32 0.0, %v2398
        %v2400 = vpop.f32.mrb[0].mxu0
        %v2401 = vadd.f32 0.0, %v2400
        %v2402 = vpop.f32.mrb[0].mxu0
        %v2403 = vadd.f32 0.0, %v2402
        %2404 = vmatprep.mubr.bf16.mxu0 0
        %2405 = vmatmul.mubr.bf16.gmra.mrb[0].mxu0 %v996
        %v2406 = vpop.f32.mrb[0].mxu0
        %v2407 = vadd.f32 0.0, %v2406
        %v2408 = vpop.f32.mrb[0].mxu0
        %v2409 = vadd.f32 0.0, %v2408
        %v2410 = vpop.f32.mrb[0].mxu0
        %v2411 = vadd.f32 0.0, %v2410
        %v2412 = vpop.f32.mrb[0].mxu0
        %v2413 = vadd.f32 0.0, %v2412
        %2414 = vmatprep.mubr.bf16.mxu0 0
        %2415 = vmatmul.mubr.bf16.gmra.mrb[0].mxu0 %v999
        %v2416 = vpop.f32.mrb[0].mxu0
        %v2417 = vadd.f32 0.0, %v2416
        %v2418 = vpop.f32.mrb[0].mxu0
        %v2419 = vadd.f32 0.0, %v2418
        %v2420 = vpop.f32.mrb[0].mxu0
        %v2421 = vadd.f32 0.0, %v2420
        %v2422 = vpop.f32.mrb[0].mxu0
        %v2423 = vadd.f32 0.0, %v2422
        %2424 = vmatprep.mubr.bf16.mxu0 0
        %2425 = vmatmul.mubr.bf16.gmra.mrb[0].mxu0 %v1002
        %v2426 = vpop.f32.mrb[0].mxu0
        %v2427 = vadd.f32 0.0, %v2426
        %v2428 = vpop.f32.mrb[0].mxu0
        %v2429 = vadd.f32 0.0, %v2428
        %v2430 = vpop.f32.mrb[0].mxu0
        %v2431 = vadd.f32 0.0, %v2430
        %v2432 = vpop.f32.mrb[0].mxu0
        %v2433 = vadd.f32 0.0, %v2432
        %2434 = vmatprep.mubr.bf16.mxu0 0
        %2435 = vmatmul.mubr.bf16.gmra.mrb[0].mxu0 %v1005
        %v2436 = vpop.f32.mrb[0].mxu0
        %v2437 = vadd.f32 0.0, %v2436
        %v2438 = vpop.f32.mrb[0].mxu0
        %v2439 = vadd.f32 0.0, %v2438
        %v2440 = vpop.f32.mrb[0].mxu0
        %v2441 = vadd.f32 0.0, %v2440
        %v2442 = vpop.f32.mrb[0].mxu0
        %v2443 = vadd.f32 0.0, %v2442
        %2444 = vmatprep.mubr.bf16.mxu0 0
        %2445 = vmatmul.mubr.bf16.gmra.mrb[0].mxu0 %v1372
        %v2446 = vpop.f32.mrb[0].mxu0
        %v2447 = vadd.f32 0.0, %v2446
        %v2448 = vpop.f32.mrb[0].mxu0
        %v2449 = vadd.f32 0.0, %v2448
        %v2450 = vpop.f32.mrb[0].mxu0
        %v2451 = vadd.f32 0.0, %v2450
        %v2452 = vpop.f32.mrb[0].mxu0
        %v2453 = vadd.f32 0.0, %v2452
        %2454 = vmatprep.mubr.bf16.mxu0 0
        %2455 = vmatmul.mubr.bf16.gmra.mrb[0].mxu0 %v2298
        %v2456 = vpop.f32.mrb[0].mxu0
        %v2457 = vadd.f32 0.0, %v2456
        %v2458 = vpop.f32.mrb[0].mxu0
        %v2459 = vadd.f32 0.0, %v2458
        %v2460 = vpop.f32.mrb[0].mxu0
        %v2461 = vadd.f32 0.0, %v2460
        %v2462 = vpop.f32.mrb[0].mxu0
        %v2463 = vadd.f32 0.0, %v2462
        %2464 = vdwg.mxu0
        %2465 = vmatprep.subr.bf16.mxu0 %v2288
        %2466 = vmatpush1.bf16.msra.mxu0 %v2287
        %2467 = vmatprep.subr.bf16.mxu0 %v2310
        %2468 = vmatpush1.bf16.msra.mxu0 %v2307
        %2469 = vmatprep.subr.bf16.mxu0 0
        %2470 = vmatpush1.bf16.msra.mxu0 0
        %2471 = vmatprep.subr.bf16.mxu0 0
        %2472 = vmatpush1.bf16.msra.mxu0 0
        %2473 = vmatprep.subr.bf16.mxu0 0
        %2474 = vmatpush1.bf16.msra.mxu0 0
        %2475 = vmatprep.subr.bf16.mxu0 0
        %2476 = vmatpush1.bf16.msra.mxu0 0
        %2477 = vmatprep.subr.bf16.mxu0 0
        %2478 = vmatpush1.bf16.msra.mxu0 0
        %2479 = vmatprep.subr.bf16.mxu0 0
        %2480 = vmatpush1.bf16.msra.mxu0 0
        %2481 = vmatprep.subr.bf16.mxu0 0
        %2482 = vmatpush1.bf16.msra.mxu0 0
        %2483 = vmatprep.subr.bf16.mxu0 0
        %2484 = vmatpush1.bf16.msra.mxu0 0
        %2485 = vmatprep.subr.bf16.mxu0 0
        %2486 = vmatpush1.bf16.msra.mxu0 0
        %2487 = vmatprep.subr.bf16.mxu0 0
        %2488 = vmatpush1.bf16.msra.mxu0 0
        %2489 = vmatprep.subr.bf16.mxu0 0
        %2490 = vmatpush1.bf16.msra.mxu0 0
        %2491 = vmatprep.subr.bf16.mxu0 0
        %2492 = vmatpush1.bf16.msra.mxu0 0
        %2493 = vmatprep.subr.bf16.mxu0 0
        %2494 = vmatpush1.bf16.msra.mxu0 0
        %2495 = vmatprep.subr.bf16.mxu0 0
        %2496 = vmatpush1.bf16.msra.mxu0 0
        %2497 = vmatprep.mubr.bf16.mxu0 0
        %2498 = vmatmul.mubr.bf16.gmra.mrb[0].mxu0 %v978
        %v2499 = vpop.f32.mrb[0].mxu0
        %v2500 = vadd.f32 0.0, %v2499
        %v2501 = vpop.f32.mrb[0].mxu0
        %v2502 = vadd.f32 0.0, %v2501
        %v2503 = vpop.f32.mrb[0].mxu0
        %v2504 = vadd.f32 0.0, %v2503
        %v2505 = vpop.f32.mrb[0].mxu0
        %v2506 = vadd.f32 0.0, %v2505
        %2507 = vmatprep.mubr.bf16.mxu0 0
        %2508 = vmatmul.mubr.bf16.gmra.mrb[0].mxu0 %v981
        %v2509 = vpop.f32.mrb[0].mxu0
        %v2510 = vadd.f32 0.0, %v2509
        %v2511 = vpop.f32.mrb[0].mxu0
        %v2512 = vadd.f32 0.0, %v2511
        %v2513 = vpop.f32.mrb[0].mxu0
        %v2514 = vadd.f32 0.0, %v2513
        %v2515 = vpop.f32.mrb[0].mxu0
        %v2516 = vadd.f32 0.0, %v2515
        %2517 = vmatprep.mubr.bf16.mxu0 0
        %2518 = vmatmul.mubr.bf16.gmra.mrb[0].mxu0 %v984
        %v2519 = vpop.f32.mrb[0].mxu0
        %v2520 = vadd.f32 0.0, %v2519
        %v2521 = vpop.f32.mrb[0].mxu0
        %v2522 = vadd.f32 0.0, %v2521
        %v2523 = vpop.f32.mrb[0].mxu0
        %v2524 = vadd.f32 0.0, %v2523
        %v2525 = vpop.f32.mrb[0].mxu0
        %v2526 = vadd.f32 0.0, %v2525
        %2527 = vmatprep.mubr.bf16.mxu0 0
        %2528 = vmatmul.mubr.bf16.gmra.mrb[0].mxu0 %v987
        %v2529 = vpop.f32.mrb[0].mxu0
        %v2530 = vadd.f32 0.0, %v2529
        %v2531 = vpop.f32.mrb[0].mxu0
        %v2532 = vadd.f32 0.0, %v2531
        %v2533 = vpop.f32.mrb[0].mxu0
        %v2534 = vadd.f32 0.0, %v2533
        %v2535 = vpop.f32.mrb[0].mxu0
        %v2536 = vadd.f32 0.0, %v2535
        %2537 = vmatprep.mubr.bf16.mxu0 0
        %2538 = vmatmul.mubr.bf16.gmra.mrb[0].mxu0 %v990
        %v2539 = vpop.f32.mrb[0].mxu0
        %v2540 = vadd.f32 0.0, %v2539
        %v2541 = vpop.f32.mrb[0].mxu0
        %v2542 = vadd.f32 0.0, %v2541
        %v2543 = vpop.f32.mrb[0].mxu0
        %v2544 = vadd.f32 0.0, %v2543
        %v2545 = vpop.f32.mrb[0].mxu0
        %v2546 = vadd.f32 0.0, %v2545
        %2547 = vmatprep.mubr.bf16.mxu0 0
        %2548 = vmatmul.mubr.bf16.gmra.mrb[0].mxu0 %v993
        %v2549 = vpop.f32.mrb[0].mxu0
        %v2550 = vadd.f32 0.0, %v2549
        %v2551 = vpop.f32.mrb[0].mxu0
        %v2552 = vadd.f32 0.0, %v2551
        %v2553 = vpop.f32.mrb[0].mxu0
        %v2554 = vadd.f32 0.0, %v2553
        %v2555 = vpop.f32.mrb[0].mxu0
        %v2556 = vadd.f32 0.0, %v2555
        %2557 = vmatprep.mubr.bf16.mxu0 0
        %2558 = vmatmul.mubr.bf16.gmra.mrb[0].mxu0 %v996
        %v2559 = vpop.f32.mrb[0].mxu0
        %v2560 = vadd.f32 0.0, %v2559
        %v2561 = vpop.f32.mrb[0].mxu0
        %v2562 = vadd.f32 0.0, %v2561
        %v2563 = vpop.f32.mrb[0].mxu0
        %v2564 = vadd.f32 0.0, %v2563
        %v2565 = vpop.f32.mrb[0].mxu0
        %v2566 = vadd.f32 0.0, %v2565
        %2567 = vmatprep.mubr.bf16.mxu0 0
        %2568 = vmatmul.mubr.bf16.gmra.mrb[0].mxu0 %v999
        %v2569 = vpop.f32.mrb[0].mxu0
        %v2570 = vadd.f32 0.0, %v2569
        %v2571 = vpop.f32.mrb[0].mxu0
        %v2572 = vadd.f32 0.0, %v2571
        %v2573 = vpop.f32.mrb[0].mxu0
        %v2574 = vadd.f32 0.0, %v2573
        %v2575 = vpop.f32.mrb[0].mxu0
        %v2576 = vadd.f32 0.0, %v2575
        %2577 = vmatprep.mubr.bf16.mxu0 0
        %2578 = vmatmul.mubr.bf16.gmra.mrb[0].mxu0 %v1002
        %v2579 = vpop.f32.mrb[0].mxu0
        %v2580 = vadd.f32 0.0, %v2579
        %v2581 = vpop.f32.mrb[0].mxu0
        %v2582 = vadd.f32 0.0, %v2581
        %v2583 = vpop.f32.mrb[0].mxu0
        %v2584 = vadd.f32 0.0, %v2583
        %v2585 = vpop.f32.mrb[0].mxu0
        %v2586 = vadd.f32 0.0, %v2585
        %2587 = vmatprep.mubr.bf16.mxu0 0
        %2588 = vmatmul.mubr.bf16.gmra.mrb[0].mxu0 %v1005
        %v2589 = vpop.f32.mrb[0].mxu0
        %v2590 = vadd.f32 0.0, %v2589
        %v2591 = vpop.f32.mrb[0].mxu0
        %v2592 = vadd.f32 0.0, %v2591
        %v2593 = vpop.f32.mrb[0].mxu0
        %v2594 = vadd.f32 0.0, %v2593
        %v2595 = vpop.f32.mrb[0].mxu0
        %v2596 = vadd.f32 0.0, %v2595
        %2597 = vmatprep.mubr.bf16.mxu0 0
        %2598 = vmatmul.mubr.bf16.gmra.mrb[0].mxu0 %v1372
        %v2599 = vpop.f32.mrb[0].mxu0
        %v2600 = vadd.f32 0.0, %v2599
        %v2601 = vpop.f32.mrb[0].mxu0
        %v2602 = vadd.f32 0.0, %v2601
        %v2603 = vpop.f32.mrb[0].mxu0
        %v2604 = vadd.f32 0.0, %v2603
        %v2605 = vpop.f32.mrb[0].mxu0
        %v2606 = vadd.f32 0.0, %v2605
        %2607 = vmatprep.mubr.bf16.mxu0 0
        %2608 = vmatmul.mubr.bf16.gmra.mrb[0].mxu0 %v2298
        %v2609 = vpop.f32.mrb[0].mxu0
        %v2610 = vadd.f32 0.0, %v2609
        %v2611 = vpop.f32.mrb[0].mxu0
        %v2612 = vadd.f32 0.0, %v2611
        %v2613 = vpop.f32.mrb[0].mxu0
        %v2614 = vadd.f32 0.0, %v2613
        %v2615 = vpop.f32.mrb[0].mxu0
        %v2616 = vadd.f32 0.0, %v2615
        %2617 = vdwg.mxu0
        %v2618 = vadd.f32 %v2155, %v2347
        %v2619 = vadd.f32 %v2156, %v2349
        %v2620 = vadd.f32 %v2157, %v2500
        %v2621 = vadd.f32 %v2158, %v2502
        %v2622 = vadd.f32 %v2159, %v2351
        %v2623 = vadd.f32 %v2160, %v2353
        %v2624 = vadd.f32 %v2161, %v2504
        %v2625 = vadd.f32 %v2162, %v2506
        %v2626 = vadd.f32 %v2163, %v2357
        %v2627 = vadd.f32 %v2164, %v2359
        %v2628 = vadd.f32 %v2165, %v2510
        %v2629 = vadd.f32 %v2166, %v2512
        %v2630 = vadd.f32 %v2167, %v2361
        %v2631 = vadd.f32 %v2168, %v2363
        %v2632 = vadd.f32 %v2169, %v2514
        %v2633 = vadd.f32 %v2170, %v2516
        %v2634 = vadd.f32 %v2171, %v2367
        %v2635 = vadd.f32 %v2172, %v2369
        %v2636 = vadd.f32 %v2173, %v2520
        %v2637 = vadd.f32 %v2174, %v2522
        %v2638 = vadd.f32 %v2175, %v2371
        %v2639 = vadd.f32 %v2176, %v2373
        %v2640 = vadd.f32 %v2177, %v2524
        %v2641 = vadd.f32 %v2178, %v2526
        %v2642 = vadd.f32 %v2179, %v2377
        %v2643 = vadd.f32 %v2180, %v2379
        %v2644 = vadd.f32 %v2181, %v2530
        %v2645 = vadd.f32 %v2182, %v2532
        %v2646 = vadd.f32 %v2183, %v2381
        %v2647 = vadd.f32 %v2184, %v2383
        %v2648 = vadd.f32 %v2185, %v2534
        %v2649 = vadd.f32 %v2186, %v2536
        %v2650 = vadd.f32 %v2187, %v2387
        %v2651 = vadd.f32 %v2188, %v2389
        %v2652 = vadd.f32 %v2189, %v2540
        %v2653 = vadd.f32 %v2190, %v2542
        %v2654 = vadd.f32 %v2191, %v2391
        %v2655 = vadd.f32 %v2192, %v2393
        %v2656 = vadd.f32 %v2193, %v2544
        %v2657 = vadd.f32 %v2194, %v2546
        %v2658 = vadd.f32 %v2195, %v2397
        %v2659 = vadd.f32 %v2196, %v2399
        %v2660 = vadd.f32 %v2197, %v2550
        %v2661 = vadd.f32 %v2198, %v2552
        %v2662 = vadd.f32 %v2199, %v2401
        %v2663 = vadd.f32 %v2200, %v2403
        %v2664 = vadd.f32 %v2201, %v2554
        %v2665 = vadd.f32 %v2202, %v2556
        %v2666 = vadd.f32 %v2203, %v2407
        %v2667 = vadd.f32 %v2204, %v2409
        %v2668 = vadd.f32 %v2205, %v2560
        %v2669 = vadd.f32 %v2206, %v2562
        %v2670 = vadd.f32 %v2207, %v2411
        %v2671 = vadd.f32 %v2208, %v2413
        %v2672 = vadd.f32 %v2209, %v2564
        %v2673 = vadd.f32 %v2210, %v2566
        %v2674 = vadd.f32 %v2211, %v2417
        %v2675 = vadd.f32 %v2212, %v2419
        %v2676 = vadd.f32 %v2213, %v2570
        %v2677 = vadd.f32 %v2214, %v2572
        %v2678 = vadd.f32 %v2215, %v2421
        %v2679 = vadd.f32 %v2216, %v2423
        %v2680 = vadd.f32 %v2217, %v2574
        %v2681 = vadd.f32 %v2218, %v2576
        %v2682 = vadd.f32 %v2219, %v2427
        %v2683 = vadd.f32 %v2220, %v2429
        %v2684 = vadd.f32 %v2221, %v2580
        %v2685 = vadd.f32 %v2222, %v2582
        %v2686 = vadd.f32 %v2223, %v2431
        %v2687 = vadd.f32 %v2224, %v2433
        %v2688 = vadd.f32 %v2225, %v2584
        %v2689 = vadd.f32 %v2226, %v2586
        %v2690 = vadd.f32 %v2227, %v2437
        %v2691 = vadd.f32 %v2228, %v2439
        %v2692 = vadd.f32 %v2229, %v2590
        %v2693 = vadd.f32 %v2230, %v2592
        %v2694 = vadd.f32 %v2231, %v2441
        %v2695 = vadd.f32 %v2232, %v2443
        %v2696 = vadd.f32 %v2233, %v2594
        %v2697 = vadd.f32 %v2234, %v2596
        %v2698 = vadd.f32 %v2235, %v2447
        %v2699 = vadd.f32 %v2236, %v2449
        %v2700 = vadd.f32 %v2237, %v2600
        %v2701 = vadd.f32 %v2238, %v2602
        %v2702 = vadd.f32 %v2239, %v2451
        %v2703 = vadd.f32 %v2240, %v2453
        %v2704 = vadd.f32 %v2241, %v2604
        %v2705 = vadd.f32 %v2242, %v2606
        %v2706 = vadd.f32 %v2243, %v2457
        %v2707 = vadd.f32 %v2244, %v2459
        %v2708 = vadd.f32 %v2245, %v2610
        %v2709 = vadd.f32 %v2246, %v2612
        %v2710 = vadd.f32 %v2247, %v2461
        %v2711 = vadd.f32 %v2248, %v2463
        %v2712 = vadd.f32 %v2249, %v2614
        %v2713 = vadd.f32 %v2250, %v2616
        %v2714 = vld [vmem:[%s2] ss:$2 sm:$0xf]
        %v2716 = vlaneseq
        %v2717 = vshrl.u32 %v2716, 7
        %v2718 = vsub.s32 0, %v2717
        %v2719 = vrot.slane %v2714, %v2718
        %v2720 = vlaneseq
        %v2721 = vshrl.u32 %v2720, 7
        %v2722 = vsub.s32 1, %v2721
        %v2723 = vrot.slane %v2714, %v2722
        %v2724 = vlaneseq
        %v2725 = vshrl.u32 %v2724, 7
        %v2726 = vsub.s32 2, %v2725
        %v2727 = vrot.slane %v2714, %v2726
        %v2728 = vlaneseq
        %v2729 = vshrl.u32 %v2728, 7
        %v2730 = vsub.s32 3, %v2729
        %v2731 = vrot.slane %v2714, %v2730
        %v2736 = vmul.f32 %v2618, %v2719
        %v2737 = vmul.f32 %v2619, %v2723
        %v2738 = vmul.f32 %v2620, %v2727
        %v2739 = vmul.f32 %v2621, %v2731
        %v2740 = vmul.f32 %v2622, %v2719
        %v2741 = vmul.f32 %v2623, %v2723
        %v2742 = vmul.f32 %v2624, %v2727
        %v2743 = vmul.f32 %v2625, %v2731
        %v2744 = vmul.f32 %v2626, %v2719
        %v2745 = vmul.f32 %v2627, %v2723
        %v2746 = vmul.f32 %v2628, %v2727
        %v2747 = vmul.f32 %v2629, %v2731
        %v2748 = vmul.f32 %v2630, %v2719
        %v2749 = vmul.f32 %v2631, %v2723
        %v2750 = vmul.f32 %v2632, %v2727
        %v2751 = vmul.f32 %v2633, %v2731
        %v2752 = vmul.f32 %v2634, %v2719
        %v2753 = vmul.f32 %v2635, %v2723
        %v2754 = vmul.f32 %v2636, %v2727
        %v2755 = vmul.f32 %v2637, %v2731
        %v2756 = vmul.f32 %v2638, %v2719
        %v2757 = vmul.f32 %v2639, %v2723
        %v2758 = vmul.f32 %v2640, %v2727
        %v2759 = vmul.f32 %v2641, %v2731
        %v2760 = vmul.f32 %v2642, %v2719
        %v2761 = vmul.f32 %v2643, %v2723
        %v2762 = vmul.f32 %v2644, %v2727
        %v2763 = vmul.f32 %v2645, %v2731
        %v2764 = vmul.f32 %v2646, %v2719
        %v2765 = vmul.f32 %v2647, %v2723
        %v2766 = vmul.f32 %v2648, %v2727
        %v2767 = vmul.f32 %v2649, %v2731
        %v2768 = vmul.f32 %v2650, %v2719
        %v2769 = vmul.f32 %v2651, %v2723
        %v2770 = vmul.f32 %v2652, %v2727
        %v2771 = vmul.f32 %v2653, %v2731
        %v2772 = vmul.f32 %v2654, %v2719
        %v2773 = vmul.f32 %v2655, %v2723
        %v2774 = vmul.f32 %v2656, %v2727
        %v2775 = vmul.f32 %v2657, %v2731
        %v2776 = vmul.f32 %v2658, %v2719
        %v2777 = vmul.f32 %v2659, %v2723
        %v2778 = vmul.f32 %v2660, %v2727
        %v2779 = vmul.f32 %v2661, %v2731
        %v2780 = vmul.f32 %v2662, %v2719
        %v2781 = vmul.f32 %v2663, %v2723
        %v2782 = vmul.f32 %v2664, %v2727
        %v2783 = vmul.f32 %v2665, %v2731
        %v2784 = vmul.f32 %v2666, %v2719
        %v2785 = vmul.f32 %v2667, %v2723
        %v2786 = vmul.f32 %v2668, %v2727
        %v2787 = vmul.f32 %v2669, %v2731
        %v2788 = vmul.f32 %v2670, %v2719
        %v2789 = vmul.f32 %v2671, %v2723
        %v2790 = vmul.f32 %v2672, %v2727
        %v2791 = vmul.f32 %v2673, %v2731
        %v2792 = vmul.f32 %v2674, %v2719
        %v2793 = vmul.f32 %v2675, %v2723
        %v2794 = vmul.f32 %v2676, %v2727
        %v2795 = vmul.f32 %v2677, %v2731
        %v2796 = vmul.f32 %v2678, %v2719
        %v2797 = vmul.f32 %v2679, %v2723
        %v2798 = vmul.f32 %v2680, %v2727
        %v2799 = vmul.f32 %v2681, %v2731
        %v2800 = vmul.f32 %v2682, %v2719
        %v2801 = vmul.f32 %v2683, %v2723
        %v2802 = vmul.f32 %v2684, %v2727
        %v2803 = vmul.f32 %v2685, %v2731
        %v2804 = vmul.f32 %v2686, %v2719
        %v2805 = vmul.f32 %v2687, %v2723
        %v2806 = vmul.f32 %v2688, %v2727
        %v2807 = vmul.f32 %v2689, %v2731
        %v2808 = vmul.f32 %v2690, %v2719
        %v2809 = vmul.f32 %v2691, %v2723
        %v2810 = vmul.f32 %v2692, %v2727
        %v2811 = vmul.f32 %v2693, %v2731
        %v2812 = vmul.f32 %v2694, %v2719
        %v2813 = vmul.f32 %v2695, %v2723
        %v2814 = vmul.f32 %v2696, %v2727
        %v2815 = vmul.f32 %v2697, %v2731
        %v2816 = vmul.f32 %v2698, %v2719
        %v2817 = vmul.f32 %v2699, %v2723
        %v2818 = vmul.f32 %v2700, %v2727
        %v2819 = vmul.f32 %v2701, %v2731
        %v2820 = vmul.f32 %v2702, %v2719
        %v2821 = vmul.f32 %v2703, %v2723
        %v2822 = vmul.f32 %v2704, %v2727
        %v2823 = vmul.f32 %v2705, %v2731
        %v2824 = vmul.f32 %v2706, %v2719
        %v2825 = vmul.f32 %v2707, %v2723
        %v2826 = vmul.f32 %v2708, %v2727
        %v2827 = vmul.f32 %v2709, %v2731
        %v2828 = vmul.f32 %v2710, %v2719
        %v2829 = vmul.f32 %v2711, %v2723
        %v2830 = vmul.f32 %v2712, %v2727
        %v2831 = vmul.f32 %v2713, %v2731
        %s2832 = scalar_lea.vmem %s2, 1
        %v2833 = vld [vmem:[%s2832] ss:$2 sm:$0xf]
        %v2835 = vlaneseq
        %v2836 = vshrl.u32 %v2835, 7
        %v2837 = vsub.s32 0, %v2836
        %v2838 = vrot.slane %v2833, %v2837
        %v2839 = vlaneseq
        %v2840 = vshrl.u32 %v2839, 7
        %v2841 = vsub.s32 1, %v2840
        %v2842 = vrot.slane %v2833, %v2841
        %v2843 = vlaneseq
        %v2844 = vshrl.u32 %v2843, 7
        %v2845 = vsub.s32 2, %v2844
        %v2846 = vrot.slane %v2833, %v2845
        %v2847 = vlaneseq
        %v2848 = vshrl.u32 %v2847, 7
        %v2849 = vsub.s32 3, %v2848
        %v2850 = vrot.slane %v2833, %v2849
        %v2855 = vadd.f32 %v2736, %v2838
        %v2856 = vadd.f32 %v2737, %v2842
        %v2857 = vadd.f32 %v2738, %v2846
        %v2858 = vadd.f32 %v2739, %v2850
        %v2859 = vadd.f32 %v2740, %v2838
        %v2860 = vadd.f32 %v2741, %v2842
        %v2861 = vadd.f32 %v2742, %v2846
        %v2862 = vadd.f32 %v2743, %v2850
        %v2863 = vadd.f32 %v2744, %v2838
        %v2864 = vadd.f32 %v2745, %v2842
        %v2865 = vadd.f32 %v2746, %v2846
        %v2866 = vadd.f32 %v2747, %v2850
        %v2867 = vadd.f32 %v2748, %v2838
        %v2868 = vadd.f32 %v2749, %v2842
        %v2869 = vadd.f32 %v2750, %v2846
        %v2870 = vadd.f32 %v2751, %v2850
        %v2871 = vadd.f32 %v2752, %v2838
        %v2872 = vadd.f32 %v2753, %v2842
        %v2873 = vadd.f32 %v2754, %v2846
        %v2874 = vadd.f32 %v2755, %v2850
        %v2875 = vadd.f32 %v2756, %v2838
        %v2876 = vadd.f32 %v2757, %v2842
        %v2877 = vadd.f32 %v2758, %v2846
        %v2878 = vadd.f32 %v2759, %v2850
        %v2879 = vadd.f32 %v2760, %v2838
        %v2880 = vadd.f32 %v2761, %v2842
        %v2881 = vadd.f32 %v2762, %v2846
        %v2882 = vadd.f32 %v2763, %v2850
        %v2883 = vadd.f32 %v2764, %v2838
        %v2884 = vadd.f32 %v2765, %v2842
        %v2885 = vadd.f32 %v2766, %v2846
        %v2886 = vadd.f32 %v2767, %v2850
        %v2887 = vadd.f32 %v2768, %v2838
        %v2888 = vadd.f32 %v2769, %v2842
        %v2889 = vadd.f32 %v2770, %v2846
        %v2890 = vadd.f32 %v2771, %v2850
        %v2891 = vadd.f32 %v2772, %v2838
        %v2892 = vadd.f32 %v2773, %v2842
        %v2893 = vadd.f32 %v2774, %v2846
        %v2894 = vadd.f32 %v2775, %v2850
        %v2895 = vadd.f32 %v2776, %v2838
        %v2896 = vadd.f32 %v2777, %v2842
        %v2897 = vadd.f32 %v2778, %v2846
        %v2898 = vadd.f32 %v2779, %v2850
        %v2899 = vadd.f32 %v2780, %v2838
        %v2900 = vadd.f32 %v2781, %v2842
        %v2901 = vadd.f32 %v2782, %v2846
        %v2902 = vadd.f32 %v2783, %v2850
        %v2903 = vadd.f32 %v2784, %v2838
        %v2904 = vadd.f32 %v2785, %v2842
        %v2905 = vadd.f32 %v2786, %v2846
        %v2906 = vadd.f32 %v2787, %v2850
        %v2907 = vadd.f32 %v2788, %v2838
        %v2908 = vadd.f32 %v2789, %v2842
        %v2909 = vadd.f32 %v2790, %v2846
        %v2910 = vadd.f32 %v2791, %v2850
        %v2911 = vadd.f32 %v2792, %v2838
        %v2912 = vadd.f32 %v2793, %v2842
        %v2913 = vadd.f32 %v2794, %v2846
        %v2914 = vadd.f32 %v2795, %v2850
        %v2915 = vadd.f32 %v2796, %v2838
        %v2916 = vadd.f32 %v2797, %v2842
        %v2917 = vadd.f32 %v2798, %v2846
        %v2918 = vadd.f32 %v2799, %v2850
        %v2919 = vadd.f32 %v2800, %v2838
        %v2920 = vadd.f32 %v2801, %v2842
        %v2921 = vadd.f32 %v2802, %v2846
        %v2922 = vadd.f32 %v2803, %v2850
        %v2923 = vadd.f32 %v2804, %v2838
        %v2924 = vadd.f32 %v2805, %v2842
        %v2925 = vadd.f32 %v2806, %v2846
        %v2926 = vadd.f32 %v2807, %v2850
        %v2927 = vadd.f32 %v2808, %v2838
        %v2928 = vadd.f32 %v2809, %v2842
        %v2929 = vadd.f32 %v2810, %v2846
        %v2930 = vadd.f32 %v2811, %v2850
        %v2931 = vadd.f32 %v2812, %v2838
        %v2932 = vadd.f32 %v2813, %v2842
        %v2933 = vadd.f32 %v2814, %v2846
        %v2934 = vadd.f32 %v2815, %v2850
        %v2935 = vadd.f32 %v2816, %v2838
        %v2936 = vadd.f32 %v2817, %v2842
        %v2937 = vadd.f32 %v2818, %v2846
        %v2938 = vadd.f32 %v2819, %v2850
        %v2939 = vadd.f32 %v2820, %v2838
        %v2940 = vadd.f32 %v2821, %v2842
        %v2941 = vadd.f32 %v2822, %v2846
        %v2942 = vadd.f32 %v2823, %v2850
        %v2943 = vadd.f32 %v2824, %v2838
        %v2944 = vadd.f32 %v2825, %v2842
        %v2945 = vadd.f32 %v2826, %v2846
        %v2946 = vadd.f32 %v2827, %v2850
        %v2947 = vadd.f32 %v2828, %v2838
        %v2948 = vadd.f32 %v2829, %v2842
        %v2949 = vadd.f32 %v2830, %v2846
        %v2950 = vadd.f32 %v2831, %v2850
        %3023 = vrot.lane.b32.xlu0 %v2856, 16
        %v3024 = vpop.permute.xlu0 %3023
        %3025 = vrot.lane.b32.xlu0 %v2857, 16
        %v3026 = vpop.permute.xlu0 %3025
        %3027 = vrot.lane.b32.xlu0 %v2858, 16
        %v3028 = vpop.permute.xlu0 %3027
        %3029 = vrot.lane.b32.xlu0 %v2860, 16
        %v3030 = vpop.permute.xlu0 %3029
        %3031 = vrot.lane.b32.xlu0 %v2861, 16
        %v3032 = vpop.permute.xlu0 %3031
        %3033 = vrot.lane.b32.xlu0 %v2862, 16
        %v3034 = vpop.permute.xlu0 %3033
        %3035 = vrot.lane.b32.xlu0 %v2864, 16
        %v3036 = vpop.permute.xlu0 %3035
        %3037 = vrot.lane.b32.xlu0 %v2865, 16
        %v3038 = vpop.permute.xlu0 %3037
        %3039 = vrot.lane.b32.xlu0 %v2866, 16
        %v3040 = vpop.permute.xlu0 %3039
        %3041 = vrot.lane.b32.xlu0 %v2868, 16
        %v3042 = vpop.permute.xlu0 %3041
        %3043 = vrot.lane.b32.xlu0 %v2869, 16
        %v3044 = vpop.permute.xlu0 %3043
        %3045 = vrot.lane.b32.xlu0 %v2870, 16
        %v3046 = vpop.permute.xlu0 %3045
        %3047 = vrot.lane.b32.xlu0 %v2872, 16
        %v3048 = vpop.permute.xlu0 %3047
        %3049 = vrot.lane.b32.xlu0 %v2873, 16
        %v3050 = vpop.permute.xlu0 %3049
        %3051 = vrot.lane.b32.xlu0 %v2874, 16
        %v3052 = vpop.permute.xlu0 %3051
        %3053 = vrot.lane.b32.xlu0 %v2876, 16
        %v3054 = vpop.permute.xlu0 %3053
        %3055 = vrot.lane.b32.xlu0 %v2877, 16
        %v3056 = vpop.permute.xlu0 %3055
        %3057 = vrot.lane.b32.xlu0 %v2878, 16
        %v3058 = vpop.permute.xlu0 %3057
        %3059 = vrot.lane.b32.xlu0 %v2880, 16
        %v3060 = vpop.permute.xlu0 %3059
        %3061 = vrot.lane.b32.xlu0 %v2881, 16
        %v3062 = vpop.permute.xlu0 %3061
        %3063 = vrot.lane.b32.xlu0 %v2882, 16
        %v3064 = vpop.permute.xlu0 %3063
        %3065 = vrot.lane.b32.xlu0 %v2884, 16
        %v3066 = vpop.permute.xlu0 %3065
        %3067 = vrot.lane.b32.xlu0 %v2885, 16
        %v3068 = vpop.permute.xlu0 %3067
        %3069 = vrot.lane.b32.xlu0 %v2886, 16
        %v3070 = vpop.permute.xlu0 %3069
        %3071 = vrot.lane.b32.xlu0 %v2888, 16
        %v3072 = vpop.permute.xlu0 %3071
        %3073 = vrot.lane.b32.xlu0 %v2889, 16
        %v3074 = vpop.permute.xlu0 %3073
        %3075 = vrot.lane.b32.xlu0 %v2890, 16
        %v3076 = vpop.permute.xlu0 %3075
        %3077 = vrot.lane.b32.xlu0 %v2892, 16
        %v3078 = vpop.permute.xlu0 %3077
        %3079 = vrot.lane.b32.xlu0 %v2893, 16
        %v3080 = vpop.permute.xlu0 %3079
        %3081 = vrot.lane.b32.xlu0 %v2894, 16
        %v3082 = vpop.permute.xlu0 %3081
        %3083 = vrot.lane.b32.xlu0 %v2896, 16
        %v3084 = vpop.permute.xlu0 %3083
        %3085 = vrot.lane.b32.xlu0 %v2897, 16
        %v3086 = vpop.permute.xlu0 %3085
        %3087 = vrot.lane.b32.xlu0 %v2898, 16
        %v3088 = vpop.permute.xlu0 %3087
        %3089 = vrot.lane.b32.xlu0 %v2900, 16
        %v3090 = vpop.permute.xlu0 %3089
        %3091 = vrot.lane.b32.xlu0 %v2901, 16
        %v3092 = vpop.permute.xlu0 %3091
        %3093 = vrot.lane.b32.xlu0 %v2902, 16
        %v3094 = vpop.permute.xlu0 %3093
        %3095 = vrot.lane.b32.xlu0 %v2904, 16
        %v3096 = vpop.permute.xlu0 %3095
        %3097 = vrot.lane.b32.xlu0 %v2905, 16
        %v3098 = vpop.permute.xlu0 %3097
        %3099 = vrot.lane.b32.xlu0 %v2906, 16
        %v3100 = vpop.permute.xlu0 %3099
        %3101 = vrot.lane.b32.xlu0 %v2908, 16
        %v3102 = vpop.permute.xlu0 %3101
        %3103 = vrot.lane.b32.xlu0 %v2909, 16
        %v3104 = vpop.permute.xlu0 %3103
        %3105 = vrot.lane.b32.xlu0 %v2910, 16
        %v3106 = vpop.permute.xlu0 %3105
        %3107 = vrot.lane.b32.xlu0 %v2912, 16
        %v3108 = vpop.permute.xlu0 %3107
        %3109 = vrot.lane.b32.xlu0 %v2913, 16
        %v3110 = vpop.permute.xlu0 %3109
        %3111 = vrot.lane.b32.xlu0 %v2914, 16
        %v3112 = vpop.permute.xlu0 %3111
        %3113 = vrot.lane.b32.xlu0 %v2916, 16
        %v3114 = vpop.permute.xlu0 %3113
        %3115 = vrot.lane.b32.xlu0 %v2917, 16
        %v3116 = vpop.permute.xlu0 %3115
        %3117 = vrot.lane.b32.xlu0 %v2918, 16
        %v3118 = vpop.permute.xlu0 %3117
        %3119 = vrot.lane.b32.xlu0 %v2920, 16
        %v3120 = vpop.permute.xlu0 %3119
        %3121 = vrot.lane.b32.xlu0 %v2921, 16
        %v3122 = vpop.permute.xlu0 %3121
        %3123 = vrot.lane.b32.xlu0 %v2922, 16
        %v3124 = vpop.permute.xlu0 %3123
        %3125 = vrot.lane.b32.xlu0 %v2924, 16
        %v3126 = vpop.permute.xlu0 %3125
        %3127 = vrot.lane.b32.xlu0 %v2925, 16
        %v3128 = vpop.permute.xlu0 %3127
        %3129 = vrot.lane.b32.xlu0 %v2926, 16
        %v3130 = vpop.permute.xlu0 %3129
        %3131 = vrot.lane.b32.xlu0 %v2928, 16
        %v3132 = vpop.permute.xlu0 %3131
        %3133 = vrot.lane.b32.xlu0 %v2929, 16
        %v3134 = vpop.permute.xlu0 %3133
        %3135 = vrot.lane.b32.xlu0 %v2930, 16
        %v3136 = vpop.permute.xlu0 %3135
        %3137 = vrot.lane.b32.xlu0 %v2932, 16
        %v3138 = vpop.permute.xlu0 %3137
        %3139 = vrot.lane.b32.xlu0 %v2933, 16
        %v3140 = vpop.permute.xlu0 %3139
        %3141 = vrot.lane.b32.xlu0 %v2934, 16
        %v3142 = vpop.permute.xlu0 %3141
        %3143 = vrot.lane.b32.xlu0 %v2936, 16
        %v3144 = vpop.permute.xlu0 %3143
        %3145 = vrot.lane.b32.xlu0 %v2937, 16
        %v3146 = vpop.permute.xlu0 %3145
        %3147 = vrot.lane.b32.xlu0 %v2938, 16
        %v3148 = vpop.permute.xlu0 %3147
        %3149 = vrot.lane.b32.xlu0 %v2940, 16
        %v3150 = vpop.permute.xlu0 %3149
        %3151 = vrot.lane.b32.xlu0 %v2941, 16
        %v3152 = vpop.permute.xlu0 %3151
        %3153 = vrot.lane.b32.xlu0 %v2942, 16
        %v3154 = vpop.permute.xlu0 %3153
        %3155 = vrot.lane.b32.xlu0 %v2944, 16
        %v3156 = vpop.permute.xlu0 %3155
        %3157 = vrot.lane.b32.xlu0 %v2945, 16
        %v3158 = vpop.permute.xlu0 %3157
        %3159 = vrot.lane.b32.xlu0 %v2946, 16
        %v3160 = vpop.permute.xlu0 %3159
        %3161 = vrot.lane.b32.xlu0 %v2948, 16
        %v3162 = vpop.permute.xlu0 %3161
        %3163 = vrot.lane.b32.xlu0 %v2949, 16
        %v3164 = vpop.permute.xlu0 %3163
        %3165 = vrot.lane.b32.xlu0 %v2950, 16
        %v3166 = vpop.permute.xlu0 %3165
        %vm3167 = vcmask 130048
        %v3168 = vsel %vm3167, %v3024, %v3026
        %v3169 = vsel %vm3167, %v3026, %v3028
        %v3170 = vsel %vm3167, %v3030, %v3032
        %v3171 = vsel %vm3167, %v3032, %v3034
        %v3172 = vsel %vm3167, %v3036, %v3038
        %v3173 = vsel %vm3167, %v3038, %v3040
        %v3174 = vsel %vm3167, %v3042, %v3044
        %v3175 = vsel %vm3167, %v3044, %v3046
        %v3176 = vsel %vm3167, %v3048, %v3050
        %v3177 = vsel %vm3167, %v3050, %v3052
        %v3178 = vsel %vm3167, %v3054, %v3056
        %v3179 = vsel %vm3167, %v3056, %v3058
        %v3180 = vsel %vm3167, %v3060, %v3062
        %v3181 = vsel %vm3167, %v3062, %v3064
        %v3182 = vsel %vm3167, %v3066, %v3068
        %v3183 = vsel %vm3167, %v3068, %v3070
        %v3184 = vsel %vm3167, %v3072, %v3074
        %v3185 = vsel %vm3167, %v3074, %v3076
        %v3186 = vsel %vm3167, %v3078, %v3080
        %v3187 = vsel %vm3167, %v3080, %v3082
        %v3188 = vsel %vm3167, %v3084, %v3086
        %v3189 = vsel %vm3167, %v3086, %v3088
        %v3190 = vsel %vm3167, %v3090, %v3092
        %v3191 = vsel %vm3167, %v3092, %v3094
        %v3192 = vsel %vm3167, %v3096, %v3098
        %v3193 = vsel %vm3167, %v3098, %v3100
        %v3194 = vsel %vm3167, %v3102, %v3104
        %v3195 = vsel %vm3167, %v3104, %v3106
        %v3196 = vsel %vm3167, %v3108, %v3110
        %v3197 = vsel %vm3167, %v3110, %v3112
        %v3198 = vsel %vm3167, %v3114, %v3116
        %v3199 = vsel %vm3167, %v3116, %v3118
        %v3200 = vsel %vm3167, %v3120, %v3122
        %v3201 = vsel %vm3167, %v3122, %v3124
        %v3202 = vsel %vm3167, %v3126, %v3128
        %v3203 = vsel %vm3167, %v3128, %v3130
        %v3204 = vsel %vm3167, %v3132, %v3134
        %v3205 = vsel %vm3167, %v3134, %v3136
        %v3206 = vsel %vm3167, %v3138, %v3140
        %v3207 = vsel %vm3167, %v3140, %v3142
        %v3208 = vsel %vm3167, %v3144, %v3146
        %v3209 = vsel %vm3167, %v3146, %v3148
        %v3210 = vsel %vm3167, %v3150, %v3152
        %v3211 = vsel %vm3167, %v3152, %v3154
        %v3212 = vsel %vm3167, %v3156, %v3158
        %v3213 = vsel %vm3167, %v3158, %v3160
        %v3214 = vsel %vm3167, %v3162, %v3164
        %v3215 = vsel %vm3167, %v3164, %v3166
        %v3264 = vmax.f32 %v2855, %v3168
        %v3265 = vmax.f32 %v2856, %v3169
        %v3266 = vmax.f32 %v2859, %v3170
        %v3267 = vmax.f32 %v2860, %v3171
        %v3268 = vmax.f32 %v2863, %v3172
        %v3269 = vmax.f32 %v2864, %v3173
        %v3270 = vmax.f32 %v2867, %v3174
        %v3271 = vmax.f32 %v2868, %v3175
        %v3272 = vmax.f32 %v2871, %v3176
        %v3273 = vmax.f32 %v2872, %v3177
        %v3274 = vmax.f32 %v2875, %v3178
        %v3275 = vmax.f32 %v2876, %v3179
        %v3276 = vmax.f32 %v2879, %v3180
        %v3277 = vmax.f32 %v2880, %v3181
        %v3278 = vmax.f32 %v2883, %v3182
        %v3279 = vmax.f32 %v2884, %v3183
        %v3280 = vmax.f32 %v2887, %v3184
        %v3281 = vmax.f32 %v2888, %v3185
        %v3282 = vmax.f32 %v2891, %v3186
        %v3283 = vmax.f32 %v2892, %v3187
        %v3284 = vmax.f32 %v2895, %v3188
        %v3285 = vmax.f32 %v2896, %v3189
        %v3286 = vmax.f32 %v2899, %v3190
        %v3287 = vmax.f32 %v2900, %v3191
        %v3288 = vmax.f32 %v2903, %v3192
        %v3289 = vmax.f32 %v2904, %v3193
        %v3290 = vmax.f32 %v2907, %v3194
        %v3291 = vmax.f32 %v2908, %v3195
        %v3292 = vmax.f32 %v2911, %v3196
        %v3293 = vmax.f32 %v2912, %v3197
        %v3294 = vmax.f32 %v2915, %v3198
        %v3295 = vmax.f32 %v2916, %v3199
        %v3296 = vmax.f32 %v2919, %v3200
        %v3297 = vmax.f32 %v2920, %v3201
        %v3298 = vmax.f32 %v2923, %v3202
        %v3299 = vmax.f32 %v2924, %v3203
        %v3300 = vmax.f32 %v2927, %v3204
        %v3301 = vmax.f32 %v2928, %v3205
        %v3302 = vmax.f32 %v2931, %v3206
        %v3303 = vmax.f32 %v2932, %v3207
        %v3304 = vmax.f32 %v2935, %v3208
        %v3305 = vmax.f32 %v2936, %v3209
        %v3306 = vmax.f32 %v2939, %v3210
        %v3307 = vmax.f32 %v2940, %v3211
        %v3308 = vmax.f32 %v2943, %v3212
        %v3309 = vmax.f32 %v2944, %v3213
        %v3310 = vmax.f32 %v2947, %v3214
        %v3311 = vmax.f32 %v2948, %v3215
        %v3312 = vmax.f32 %v3264, %v3266
        %vm3313 = vcmask 916480
        %v3314 = vsel %vm3313, %v3265, -inf
        %v3315 = vsel %vm3313, %v3267, -inf
        %v3316 = vmax.f32 %v3314, %v3315
        %v3317 = vmax.f32 %v3268, %v3270
        %v3318 = vsel %vm3313, %v3269, -inf
        %v3319 = vsel %vm3313, %v3271, -inf
        %v3320 = vmax.f32 %v3318, %v3319
        %v3321 = vmax.f32 %v3272, %v3274
        %v3322 = vsel %vm3313, %v3273, -inf
        %v3323 = vsel %vm3313, %v3275, -inf
        %v3324 = vmax.f32 %v3322, %v3323
        %v3325 = vmax.f32 %v3276, %v3278
        %v3326 = vsel %vm3313, %v3277, -inf
        %v3327 = vsel %vm3313, %v3279, -inf
        %v3328 = vmax.f32 %v3326, %v3327
        %v3329 = vmax.f32 %v3280, %v3282
        %v3330 = vsel %vm3313, %v3281, -inf
        %v3331 = vsel %vm3313, %v3283, -inf
        %v3332 = vmax.f32 %v3330, %v3331
        %v3333 = vmax.f32 %v3284, %v3286
        %v3334 = vsel %vm3313, %v3285, -inf
        %v3335 = vsel %vm3313, %v3287, -inf
        %v3336 = vmax.f32 %v3334, %v3335
        %v3337 = vmax.f32 %v3288, %v3290
        %v3338 = vsel %vm3313, %v3289, -inf
        %v3339 = vsel %vm3313, %v3291, -inf
        %v3340 = vmax.f32 %v3338, %v3339
        %v3341 = vmax.f32 %v3292, %v3294
        %v3342 = vsel %vm3313, %v3293, -inf
        %v3343 = vsel %vm3313, %v3295, -inf
        %v3344 = vmax.f32 %v3342, %v3343
        %v3345 = vmax.f32 %v3296, %v3298
        %v3346 = vsel %vm3313, %v3297, -inf
        %v3347 = vsel %vm3313, %v3299, -inf
        %v3348 = vmax.f32 %v3346, %v3347
        %v3349 = vmax.f32 %v3300, %v3302
        %v3350 = vsel %vm3313, %v3301, -inf
        %v3351 = vsel %vm3313, %v3303, -inf
        %v3352 = vmax.f32 %v3350, %v3351
        %v3353 = vmax.f32 %v3304, %v3306
        %v3354 = vsel %vm3313, %v3305, -inf
        %v3355 = vsel %vm3313, %v3307, -inf
        %v3356 = vmax.f32 %v3354, %v3355
        %v3357 = vmax.f32 %v3308, %v3310
        %v3358 = vsel %vm3313, %v3309, -inf
        %v3359 = vsel %vm3313, %v3311, -inf
        %v3360 = vmax.f32 %v3358, %v3359
        %v3361 = vpack.c.bf16 %v3317, %v3312
        %v3362 = vpack.c.bf16 %v3320, %v3316
        %v3363 = vpack.c.bf16 %v3325, %v3321
        %v3364 = vpack.c.bf16 %v3328, %v3324
        %v3365 = vpack.c.bf16 %v3333, %v3329
        %v3366 = vpack.c.bf16 %v3336, %v3332
        %v3367 = vpack.c.bf16 %v3341, %v3337
        %v3368 = vpack.c.bf16 %v3344, %v3340
        %v3369 = vld [vmem:[%s3] sm:$0xff]
        %v3370 = vld [vmem:[%s3 + $0x8] sm:$0xff]
        %v3371 = vld [vmem:[%s3 + $0x10] sm:$0xff]
        %v3372 = vld [vmem:[%s3 + $0x18] sm:$0xff]
        %v3373 = vld [vmem:[%s3 + $0x20] sm:$0xff]
        %v3374 = vld [vmem:[%s3 + $0x28] sm:$0xff]
        %v3375 = vld [vmem:[%s3 + $0x30] sm:$0xff]
        %v3376 = vld [vmem:[%s3 + $0x38] sm:$0xff]
        %v3377 = vld [vmem:[%s3 + $0x40] sm:$0xff]
        %v3378 = vld [vmem:[%s3 + $0x48] sm:$0xff]
        %v3379 = vld [vmem:[%s3 + $0x50] sm:$0xff]
        %v3380 = vld [vmem:[%s3 + $0x58] sm:$0xff]
        %v3381 = vld [vmem:[%s3 + $0x60] sm:$0xff]
        %v3382 = vld [vmem:[%s3 + $0x68] sm:$0xff]
        %v3383 = vld [vmem:[%s3 + $0x70] sm:$0xff]
        %v3384 = vld [vmem:[%s3 + $0x78] sm:$0xff]
        %v3385 = vld [vmem:[%s3 + $0x80] sm:$0xff]
        %v3386 = vld [vmem:[%s3 + $0x88] sm:$0xff]
        %v3387 = vld [vmem:[%s3 + $0x90] sm:$0xff]
        %v3388 = vld [vmem:[%s3 + $0x98] sm:$0xff]
        %v3389 = vld [vmem:[%s3 + $0xa0] sm:$0xff]
        %v3390 = vld [vmem:[%s3 + $0xa8] sm:$0xff]
        %v3391 = vld [vmem:[%s3 + $0xb0] sm:$0xff]
        %v3392 = vld [vmem:[%s3 + $0xb8] sm:$0xff]
        %v3393 = vld [vmem:[%s3 + $0xc0] sm:$0xff]
        %v3394 = vld [vmem:[%s3 + $0xc8] sm:$0xff]
        %v3395 = vld [vmem:[%s3 + $0xd0] sm:$0xff]
        %v3396 = vld [vmem:[%s3 + $0xd8] sm:$0xff]
        %v3397 = vld [vmem:[%s3 + $0xe0] sm:$0xff]
        %v3398 = vld [vmem:[%s3 + $0xe8] sm:$0xff]
        %v3399 = vld [vmem:[%s3 + $0xf0] sm:$0xff]
        %v3400 = vld [vmem:[%s3 + $0xf8] sm:$0xff]
        %v3401 = vld [vmem:[%s3 + $0x100] sm:$0xff]
        %v3402 = vld [vmem:[%s3 + $0x108] sm:$0xff]
        %v3403 = vld [vmem:[%s3 + $0x110] sm:$0xff]
        %v3404 = vld [vmem:[%s3 + $0x118] sm:$0xff]
        %v3405 = vld [vmem:[%s3 + $0x120] sm:$0xff]
        %v3406 = vld [vmem:[%s3 + $0x128] sm:$0xff]
        %v3407 = vld [vmem:[%s3 + $0x130] sm:$0xff]
        %v3408 = vld [vmem:[%s3 + $0x138] sm:$0xff]
        %v3409 = vld [vmem:[%s3 + $0x140] sm:$0xff]
        %v3410 = vld [vmem:[%s3 + $0x148] sm:$0xff]
        %v3411 = vld [vmem:[%s3 + $0x150] sm:$0xff]
        %v3412 = vld [vmem:[%s3 + $0x158] sm:$0xff]
        %v3413 = vld [vmem:[%s3 + $0x160] sm:$0xff]
        %v3414 = vld [vmem:[%s3 + $0x168] sm:$0xff]
        %v3415 = vld [vmem:[%s3 + $0x170] sm:$0xff]
        %v3416 = vld [vmem:[%s3 + $0x178] sm:$0xff]
        %v3417 = vld [vmem:[%s3 + $0x180] sm:$0xff]
        %v3418 = vld [vmem:[%s3 + $0x188] sm:$0xff]
        %v3419 = vld [vmem:[%s3 + $0x190] sm:$0xff]
        %v3420 = vld [vmem:[%s3 + $0x198] sm:$0xff]
        %v3421 = vld [vmem:[%s3 + $0x1a0] sm:$0xff]
        %v3422 = vld [vmem:[%s3 + $0x1a8] sm:$0xff]
        %v3423 = vld [vmem:[%s3 + $0x1b0] sm:$0xff]
        %v3424 = vld [vmem:[%s3 + $0x1b8] sm:$0xff]
        %v3425 = vld [vmem:[%s3 + $0x1c0] sm:$0xff]
        %v3426 = vld [vmem:[%s3 + $0x1c8] sm:$0xff]
        %v3427 = vld [vmem:[%s3 + $0x1d0] sm:$0xff]
        %v3428 = vld [vmem:[%s3 + $0x1d8] sm:$0xff]
        %v3429 = vpack.c.bf16 %v3321, %v3317
        %v3430 = vpack.c.bf16 %v3324, %v3320
        %v3431 = vpack.c.bf16 %v3329, %v3325
        %v3432 = vpack.c.bf16 %v3332, %v3328
        %v3433 = vpack.c.bf16 %v3337, %v3333
        %v3434 = vpack.c.bf16 %v3340, %v3336
        %v3435 = vpack.c.bf16 %v3345, %v3341
        %v3436 = vpack.c.bf16 %v3348, %v3344
        %s3437 = scalar_lea.vmem %s3, 480
        %v3438 = vld [vmem:[%s3437] sm:$0xff]
        %v3439 = vld [vmem:[%s3437 + $0x8] sm:$0xff]
        %v3440 = vld [vmem:[%s3437 + $0x10] sm:$0xff]
        %v3441 = vld [vmem:[%s3437 + $0x18] sm:$0xff]
        %v3442 = vld [vmem:[%s3437 + $0x20] sm:$0xff]
        %v3443 = vld [vmem:[%s3437 + $0x28] sm:$0xff]
        %v3444 = vld [vmem:[%s3437 + $0x30] sm:$0xff]
        %v3445 = vld [vmem:[%s3437 + $0x38] sm:$0xff]
        %v3446 = vld [vmem:[%s3437 + $0x40] sm:$0xff]
        %v3447 = vld [vmem:[%s3437 + $0x48] sm:$0xff]
        %v3448 = vld [vmem:[%s3437 + $0x50] sm:$0xff]
        %v3449 = vld [vmem:[%s3437 + $0x58] sm:$0xff]
        %v3450 = vld [vmem:[%s3437 + $0x60] sm:$0xff]
        %v3451 = vld [vmem:[%s3437 + $0x68] sm:$0xff]
        %v3452 = vld [vmem:[%s3437 + $0x70] sm:$0xff]
        %v3453 = vld [vmem:[%s3437 + $0x78] sm:$0xff]
        %v3454 = vld [vmem:[%s3437 + $0x80] sm:$0xff]
        %v3455 = vld [vmem:[%s3437 + $0x88] sm:$0xff]
        %v3456 = vld [vmem:[%s3437 + $0x90] sm:$0xff]
        %v3457 = vld [vmem:[%s3437 + $0x98] sm:$0xff]
        %v3458 = vld [vmem:[%s3437 + $0xa0] sm:$0xff]
        %v3459 = vld [vmem:[%s3437 + $0xa8] sm:$0xff]
        %v3460 = vld [vmem:[%s3437 + $0xb0] sm:$0xff]
        %v3461 = vld [vmem:[%s3437 + $0xb8] sm:$0xff]
        %v3462 = vld [vmem:[%s3437 + $0xc0] sm:$0xff]
        %v3463 = vld [vmem:[%s3437 + $0xc8] sm:$0xff]
        %v3464 = vld [vmem:[%s3437 + $0xd0] sm:$0xff]
        %v3465 = vld [vmem:[%s3437 + $0xd8] sm:$0xff]
        %v3466 = vld [vmem:[%s3437 + $0xe0] sm:$0xff]
        %v3467 = vld [vmem:[%s3437 + $0xe8] sm:$0xff]
        %v3468 = vld [vmem:[%s3437 + $0xf0] sm:$0xff]
        %v3469 = vld [vmem:[%s3437 + $0xf8] sm:$0xff]
        %v3470 = vld [vmem:[%s3437 + $0x100] sm:$0xff]
        %v3471 = vld [vmem:[%s3437 + $0x108] sm:$0xff]
        %v3472 = vld [vmem:[%s3437 + $0x110] sm:$0xff]
        %v3473 = vld [vmem:[%s3437 + $0x118] sm:$0xff]
        %v3474 = vld [vmem:[%s3437 + $0x120] sm:$0xff]
        %v3475 = vld [vmem:[%s3437 + $0x128] sm:$0xff]
        %v3476 = vld [vmem:[%s3437 + $0x130] sm:$0xff]
        %v3477 = vld [vmem:[%s3437 + $0x138] sm:$0xff]
        %v3478 = vld [vmem:[%s3437 + $0x140] sm:$0xff]
        %v3479 = vld [vmem:[%s3437 + $0x148] sm:$0xff]
        %v3480 = vld [vmem:[%s3437 + $0x150] sm:$0xff]
        %v3481 = vld [vmem:[%s3437 + $0x158] sm:$0xff]
        %v3482 = vld [vmem:[%s3437 + $0x160] sm:$0xff]
        %v3483 = vld [vmem:[%s3437 + $0x168] sm:$0xff]
        %v3484 = vld [vmem:[%s3437 + $0x170] sm:$0xff]
        %v3485 = vld [vmem:[%s3437 + $0x178] sm:$0xff]
        %v3486 = vld [vmem:[%s3437 + $0x180] sm:$0xff]
        %v3487 = vld [vmem:[%s3437 + $0x188] sm:$0xff]
        %v3488 = vld [vmem:[%s3437 + $0x190] sm:$0xff]
        %v3489 = vld [vmem:[%s3437 + $0x198] sm:$0xff]
        %v3490 = vld [vmem:[%s3437 + $0x1a0] sm:$0xff]
        %v3491 = vld [vmem:[%s3437 + $0x1a8] sm:$0xff]
        %v3492 = vld [vmem:[%s3437 + $0x1b0] sm:$0xff]
        %v3493 = vld [vmem:[%s3437 + $0x1b8] sm:$0xff]
        %v3494 = vld [vmem:[%s3437 + $0x1c0] sm:$0xff]
        %v3495 = vld [vmem:[%s3437 + $0x1c8] sm:$0xff]
        %v3496 = vld [vmem:[%s3437 + $0x1d0] sm:$0xff]
        %v3497 = vld [vmem:[%s3437 + $0x1d8] sm:$0xff]
        %v3558 = vunpack.c.l.b16 %v3438
        %v3559 = vunpack.c.h.b16 %v3438
        %v3560 = vunpack.c.l.b16 %v3439
        %v3561 = vunpack.c.h.b16 %v3439
        %v3562 = vunpack.c.l.b16 %v3440
        %v3563 = vunpack.c.h.b16 %v3440
        %v3564 = vunpack.c.l.b16 %v3441
        %v3565 = vunpack.c.h.b16 %v3441
        %v3566 = vunpack.c.l.b16 %v3442
        %v3567 = vunpack.c.h.b16 %v3442
        %v3568 = vunpack.c.l.b16 %v3443
        %v3569 = vunpack.c.h.b16 %v3443
        %v3570 = vunpack.c.l.b16 %v3444
        %v3571 = vunpack.c.h.b16 %v3444
        %v3572 = vunpack.c.l.b16 %v3445
        %v3573 = vunpack.c.h.b16 %v3445
        %v3574 = vunpack.c.l.b16 %v3446
        %v3575 = vunpack.c.h.b16 %v3446
        %v3576 = vunpack.c.l.b16 %v3447
        %v3577 = vunpack.c.h.b16 %v3447
        %v3578 = vunpack.c.l.b16 %v3448
        %v3579 = vunpack.c.h.b16 %v3448
        %v3580 = vunpack.c.l.b16 %v3449
        %v3581 = vunpack.c.h.b16 %v3449
        %v3582 = vunpack.c.l.b16 %v3450
        %v3583 = vunpack.c.h.b16 %v3450
        %v3584 = vunpack.c.l.b16 %v3451
        %v3585 = vunpack.c.h.b16 %v3451
        %v3586 = vunpack.c.l.b16 %v3452
        %v3587 = vunpack.c.h.b16 %v3452
        %v3588 = vunpack.c.l.b16 %v3453
        %v3589 = vunpack.c.h.b16 %v3453
        %v3590 = vunpack.c.l.b16 %v3454
        %v3591 = vunpack.c.h.b16 %v3454
        %v3592 = vunpack.c.l.b16 %v3455
        %v3593 = vunpack.c.h.b16 %v3455
        %v3594 = vunpack.c.l.b16 %v3456
        %v3595 = vunpack.c.h.b16 %v3456
        %v3596 = vunpack.c.l.b16 %v3457
        %v3597 = vunpack.c.h.b16 %v3457
        %v3598 = vunpack.c.l.b16 %v3458
        %v3599 = vunpack.c.h.b16 %v3458
        %v3600 = vunpack.c.l.b16 %v3459
        %v3601 = vunpack.c.h.b16 %v3459
        %v3602 = vunpack.c.l.b16 %v3460
        %v3603 = vunpack.c.h.b16 %v3460
        %v3604 = vunpack.c.l.b16 %v3461
        %v3605 = vunpack.c.h.b16 %v3461
        %v3606 = vunpack.c.l.b16 %v3462
        %v3607 = vunpack.c.h.b16 %v3462
        %v3608 = vunpack.c.l.b16 %v3463
        %v3609 = vunpack.c.h.b16 %v3463
        %v3610 = vunpack.c.l.b16 %v3464
        %v3611 = vunpack.c.h.b16 %v3464
        %v3612 = vunpack.c.l.b16 %v3465
        %v3613 = vunpack.c.h.b16 %v3465
        %v3614 = vunpack.c.l.b16 %v3466
        %v3615 = vunpack.c.h.b16 %v3466
        %v3616 = vunpack.c.l.b16 %v3467
        %v3617 = vunpack.c.h.b16 %v3467
        %v3618 = vunpack.c.l.b16 %v3468
        %v3619 = vunpack.c.h.b16 %v3468
        %v3620 = vunpack.c.l.b16 %v3469
        %v3621 = vunpack.c.h.b16 %v3469
        %v3622 = vunpack.c.l.b16 %v3470
        %v3623 = vunpack.c.h.b16 %v3470
        %v3624 = vunpack.c.l.b16 %v3471
        %v3625 = vunpack.c.h.b16 %v3471
        %v3626 = vunpack.c.l.b16 %v3472
        %v3627 = vunpack.c.h.b16 %v3472
        %v3628 = vunpack.c.l.b16 %v3473
        %v3629 = vunpack.c.h.b16 %v3473
        %v3630 = vunpack.c.l.b16 %v3474
        %v3631 = vunpack.c.h.b16 %v3474
        %v3632 = vunpack.c.l.b16 %v3475
        %v3633 = vunpack.c.h.b16 %v3475
        %v3634 = vunpack.c.l.b16 %v3476
        %v3635 = vunpack.c.h.b16 %v3476
        %v3636 = vunpack.c.l.b16 %v3477
        %v3637 = vunpack.c.h.b16 %v3477
        %v3638 = vunpack.c.l.b16 %v3478
        %v3639 = vunpack.c.h.b16 %v3478
        %v3640 = vunpack.c.l.b16 %v3479
        %v3641 = vunpack.c.h.b16 %v3479
        %v3642 = vunpack.c.l.b16 %v3480
        %v3643 = vunpack.c.h.b16 %v3480
        %v3644 = vunpack.c.l.b16 %v3481
        %v3645 = vunpack.c.h.b16 %v3481
        %v3646 = vunpack.c.l.b16 %v3482
        %v3647 = vunpack.c.h.b16 %v3482
        %v3648 = vunpack.c.l.b16 %v3483
        %v3649 = vunpack.c.h.b16 %v3483
        %v3650 = vunpack.c.l.b16 %v3484
        %v3651 = vunpack.c.h.b16 %v3484
        %v3652 = vunpack.c.l.b16 %v3485
        %v3653 = vunpack.c.h.b16 %v3485
        %v3654 = vunpack.c.l.b16 %v3486
        %v3655 = vunpack.c.h.b16 %v3486
        %v3656 = vunpack.c.l.b16 %v3487
        %v3657 = vunpack.c.h.b16 %v3487
        %v3658 = vunpack.c.l.b16 %v3488
        %v3659 = vunpack.c.h.b16 %v3488
        %v3660 = vunpack.c.l.b16 %v3489
        %v3661 = vunpack.c.h.b16 %v3489
        %v3662 = vunpack.c.l.b16 %v3490
        %v3663 = vunpack.c.h.b16 %v3490
        %v3664 = vunpack.c.l.b16 %v3491
        %v3665 = vunpack.c.h.b16 %v3491
        %v3666 = vunpack.c.l.b16 %v3492
        %v3667 = vunpack.c.h.b16 %v3492
        %v3668 = vunpack.c.l.b16 %v3493
        %v3669 = vunpack.c.h.b16 %v3493
        %v3670 = vunpack.c.l.b16 %v3494
        %v3671 = vunpack.c.h.b16 %v3494
        %v3672 = vunpack.c.l.b16 %v3495
        %v3673 = vunpack.c.h.b16 %v3495
        %v3674 = vunpack.c.l.b16 %v3496
        %v3675 = vunpack.c.h.b16 %v3496
        %v3676 = vunpack.c.l.b16 %v3497
        %v3677 = vunpack.c.h.b16 %v3497
        %v3678 = vpack.c.b16 %v3562, %v3558
        %v3679 = vpack.c.b16 %v3563, %v3559
        %v3680 = vpack.c.b16 %v3564, %v3560
        %v3681 = vpack.c.b16 %v3565, %v3561
        %v3682 = vpack.c.b16 %v3570, %v3566
        %v3683 = vpack.c.b16 %v3571, %v3567
        %v3684 = vpack.c.b16 %v3572, %v3568
        %v3685 = vpack.c.b16 %v3573, %v3569
        %v3686 = vpack.c.b16 %v3578, %v3574
        %v3687 = vpack.c.b16 %v3579, %v3575
        %v3688 = vpack.c.b16 %v3580, %v3576
        %v3689 = vpack.c.b16 %v3581, %v3577
        %v3690 = vpack.c.b16 %v3586, %v3582
        %v3691 = vpack.c.b16 %v3587, %v3583
        %v3692 = vpack.c.b16 %v3588, %v3584
        %v3693 = vpack.c.b16 %v3589, %v3585
        %v3694 = vpack.c.b16 %v3594, %v3590
        %v3695 = vpack.c.b16 %v3595, %v3591
        %v3696 = vpack.c.b16 %v3596, %v3592
        %v3697 = vpack.c.b16 %v3597, %v3593
        %v3698 = vpack.c.b16 %v3602, %v3598
        %v3699 = vpack.c.b16 %v3603, %v3599
        %v3700 = vpack.c.b16 %v3604, %v3600
        %v3701 = vpack.c.b16 %v3605, %v3601
        %v3702 = vpack.c.b16 %v3610, %v3606
        %v3703 = vpack.c.b16 %v3611, %v3607
        %v3704 = vpack.c.b16 %v3612, %v3608
        %v3705 = vpack.c.b16 %v3613, %v3609
        %v3706 = vpack.c.b16 %v3618, %v3614
        %v3707 = vpack.c.b16 %v3619, %v3615
        %v3708 = vpack.c.b16 %v3620, %v3616
        %v3709 = vpack.c.b16 %v3621, %v3617
        %v3710 = vpack.c.b16 %v3626, %v3622
        %v3711 = vpack.c.b16 %v3627, %v3623
        %v3712 = vpack.c.b16 %v3628, %v3624
        %v3713 = vpack.c.b16 %v3629, %v3625
        %v3714 = vpack.c.b16 %v3634, %v3630
        %v3715 = vpack.c.b16 %v3635, %v3631
        %v3716 = vpack.c.b16 %v3636, %v3632
        %v3717 = vpack.c.b16 %v3637, %v3633
        %v3718 = vpack.c.b16 %v3642, %v3638
        %v3719 = vpack.c.b16 %v3643, %v3639
        %v3720 = vpack.c.b16 %v3644, %v3640
        %v3721 = vpack.c.b16 %v3645, %v3641
        %v3722 = vpack.c.b16 %v3650, %v3646
        %v3723 = vpack.c.b16 %v3651, %v3647
        %v3724 = vpack.c.b16 %v3652, %v3648
        %v3725 = vpack.c.b16 %v3653, %v3649
        %v3726 = vpack.c.b16 %v3658, %v3654
        %v3727 = vpack.c.b16 %v3659, %v3655
        %v3728 = vpack.c.b16 %v3660, %v3656
        %v3729 = vpack.c.b16 %v3661, %v3657
        %v3730 = vpack.c.b16 %v3666, %v3662
        %v3731 = vpack.c.b16 %v3667, %v3663
        %v3732 = vpack.c.b16 %v3668, %v3664
        %v3733 = vpack.c.b16 %v3669, %v3665
        %v3734 = vpack.c.b16 %v3674, %v3670
        %v3735 = vpack.c.b16 %v3675, %v3671
        %v3736 = vpack.c.b16 %v3676, %v3672
        %v3737 = vpack.c.b16 %v3677, %v3673
        %v3799 = vsel %vm3313, %v3430, 0
        %v3802 = vsel %vm3313, %v3432, 0
        %v3805 = vsel %vm3313, %v3434, 0
        %v3808 = vsel %vm3313, %v3436, 0
        %3810 = vmatprep.subr.bf16.mxu0 %v3679
        %3811 = vmatpush1.bf16.msra.mxu0 %v3678
        %3812 = vmatprep.subr.bf16.mxu0 %v3683
        %3813 = vmatpush1.bf16.msra.mxu0 %v3682
        %3814 = vmatprep.subr.bf16.mxu0 %v3687
        %3815 = vmatpush1.bf16.msra.mxu0 %v3686
        %3816 = vmatprep.subr.bf16.mxu0 %v3691
        %3817 = vmatpush1.bf16.msra.mxu0 %v3690
        %3818 = vmatprep.subr.bf16.mxu0 %v3695
        %3819 = vmatpush1.bf16.msra.mxu0 %v3694
        %3820 = vmatprep.subr.bf16.mxu0 %v3699
        %3821 = vmatpush1.bf16.msra.mxu0 %v3698
        %3822 = vmatprep.subr.bf16.mxu0 %v3703
        %3823 = vmatpush1.bf16.msra.mxu0 %v3702
        %3824 = vmatprep.subr.bf16.mxu0 %v3707
        %3825 = vmatpush1.bf16.msra.mxu0 %v3706
        %3826 = vmatprep.subr.bf16.mxu0 %v3711
        %3827 = vmatpush1.bf16.msra.mxu0 %v3710
        %3828 = vmatprep.subr.bf16.mxu0 %v3715
        %3829 = vmatpush1.bf16.msra.mxu0 %v3714
        %3830 = vmatprep.subr.bf16.mxu0 %v3719
        %3831 = vmatpush1.bf16.msra.mxu0 %v3718
        %3832 = vmatprep.subr.bf16.mxu0 %v3723
        %3833 = vmatpush1.bf16.msra.mxu0 %v3722
        %3834 = vmatprep.subr.bf16.mxu0 %v3727
        %3835 = vmatpush1.bf16.msra.mxu0 %v3726
        %3836 = vmatprep.subr.bf16.mxu0 %v3731
        %3837 = vmatpush1.bf16.msra.mxu0 %v3730
        %3838 = vmatprep.subr.bf16.mxu0 %v3735
        %3839 = vmatpush1.bf16.msra.mxu0 %v3734
        %3840 = vmatprep.subr.bf16.mxu0 0
        %3841 = vmatpush1.bf16.msra.mxu0 0
        %3842 = vmatprep.mubr.bf16.mxu0 %v3799
        %3843 = vmatmul.mubr.bf16.gmra.mrb[0].mxu0 %v3429
        %v3844 = vpop.f32.mrb[0].mxu0
        %v3845 = vadd.f32 0.0, %v3844
        %v3846 = vpop.f32.mrb[0].mxu0
        %v3847 = vadd.f32 0.0, %v3846
        %v3848 = vpop.f32.mrb[0].mxu0
        %v3849 = vadd.f32 0.0, %v3848
        %v3850 = vpop.f32.mrb[0].mxu0
        %v3851 = vadd.f32 0.0, %v3850
        %3852 = vmatprep.mubr.bf16.mxu0 %v3802
        %3853 = vmatmul.mubr.bf16.gmra.mrb[0].mxu0 %v3431
        %v3854 = vpop.f32.mrb[0].mxu0
        %v3855 = vadd.f32 0.0, %v3854
        %v3856 = vpop.f32.mrb[0].mxu0
        %v3857 = vadd.f32 0.0, %v3856
        %v3858 = vpop.f32.mrb[0].mxu0
        %v3859 = vadd.f32 0.0, %v3858
        %v3860 = vpop.f32.mrb[0].mxu0
        %v3861 = vadd.f32 0.0, %v3860
        %3862 = vmatprep.mubr.bf16.mxu0 %v3805
        %3863 = vmatmul.mubr.bf16.gmra.mrb[0].mxu0 %v3433
        %v3864 = vpop.f32.mrb[0].mxu0
        %v3865 = vadd.f32 0.0, %v3864
        %v3866 = vpop.f32.mrb[0].mxu0
        %v3867 = vadd.f32 0.0, %v3866
        %v3868 = vpop.f32.mrb[0].mxu0
        %v3869 = vadd.f32 0.0, %v3868
        %v3870 = vpop.f32.mrb[0].mxu0
        %v3871 = vadd.f32 0.0, %v3870
        %3872 = vmatprep.mubr.bf16.mxu0 %v3808
        %3873 = vmatmul.mubr.bf16.gmra.mrb[0].mxu0 %v3435
        %v3874 = vpop.f32.mrb[0].mxu0
        %v3875 = vadd.f32 0.0, %v3874
        %v3876 = vpop.f32.mrb[0].mxu0
        %v3877 = vadd.f32 0.0, %v3876
        %v3878 = vpop.f32.mrb[0].mxu0
        %v3879 = vadd.f32 0.0, %v3878
        %v3880 = vpop.f32.mrb[0].mxu0
        %v3881 = vadd.f32 0.0, %v3880
        %3882 = vdwg.mxu0
        %3883 = vmatprep.subr.bf16.mxu0 %v3681
        %3884 = vmatpush1.bf16.msra.mxu0 %v3680
        %3885 = vmatprep.subr.bf16.mxu0 %v3685
        %3886 = vmatpush1.bf16.msra.mxu0 %v3684
        %3887 = vmatprep.subr.bf16.mxu0 %v3689
        %3888 = vmatpush1.bf16.msra.mxu0 %v3688
        %3889 = vmatprep.subr.bf16.mxu0 %v3693
        %3890 = vmatpush1.bf16.msra.mxu0 %v3692
        %3891 = vmatprep.subr.bf16.mxu0 %v3697
        %3892 = vmatpush1.bf16.msra.mxu0 %v3696
        %3893 = vmatprep.subr.bf16.mxu0 %v3701
        %3894 = vmatpush1.bf16.msra.mxu0 %v3700
        %3895 = vmatprep.subr.bf16.mxu0 %v3705
        %3896 = vmatpush1.bf16.msra.mxu0 %v3704
        %3897 = vmatprep.subr.bf16.mxu0 %v3709
        %3898 = vmatpush1.bf16.msra.mxu0 %v3708
        %3899 = vmatprep.subr.bf16.mxu0 %v3713
        %3900 = vmatpush1.bf16.msra.mxu0 %v3712
        %3901 = vmatprep.subr.bf16.mxu0 %v3717
        %3902 = vmatpush1.bf16.msra.mxu0 %v3716
        %3903 = vmatprep.subr.bf16.mxu0 %v3721
        %3904 = vmatpush1.bf16.msra.mxu0 %v3720
        %3905 = vmatprep.subr.bf16.mxu0 %v3725
        %3906 = vmatpush1.bf16.msra.mxu0 %v3724
        %3907 = vmatprep.subr.bf16.mxu0 %v3729
        %3908 = vmatpush1.bf16.msra.mxu0 %v3728
        %3909 = vmatprep.subr.bf16.mxu0 %v3733
        %3910 = vmatpush1.bf16.msra.mxu0 %v3732
        %3911 = vmatprep.subr.bf16.mxu0 %v3737
        %3912 = vmatpush1.bf16.msra.mxu0 %v3736
        %3913 = vmatprep.subr.bf16.mxu0 0
        %3914 = vmatpush1.bf16.msra.mxu0 0
        %3915 = vmatprep.mubr.bf16.mxu0 %v3799
        %3916 = vmatmul.mubr.bf16.gmra.mrb[0].mxu0 %v3429
        %v3917 = vpop.f32.mrb[0].mxu0
        %v3918 = vadd.f32 0.0, %v3917
        %v3919 = vpop.f32.mrb[0].mxu0
        %v3920 = vadd.f32 0.0, %v3919
        %v3921 = vpop.f32.mrb[0].mxu0
        %v3922 = vadd.f32 0.0, %v3921
        %v3923 = vpop.f32.mrb[0].mxu0
        %v3924 = vadd.f32 0.0, %v3923
        %3925 = vmatprep.mubr.bf16.mxu0 %v3802
        %3926 = vmatmul.mubr.bf16.gmra.mrb[0].mxu0 %v3431
        %v3927 = vpop.f32.mrb[0].mxu0
        %v3928 = vadd.f32 0.0, %v3927
        %v3929 = vpop.f32.mrb[0].mxu0
        %v3930 = vadd.f32 0.0, %v3929
        %v3931 = vpop.f32.mrb[0].mxu0
        %v3932 = vadd.f32 0.0, %v3931
        %v3933 = vpop.f32.mrb[0].mxu0
        %v3934 = vadd.f32 0.0, %v3933
        %3935 = vmatprep.mubr.bf16.mxu0 %v3805
        %3936 = vmatmul.mubr.bf16.gmra.mrb[0].mxu0 %v3433
        %v3937 = vpop.f32.mrb[0].mxu0
        %v3938 = vadd.f32 0.0, %v3937
        %v3939 = vpop.f32.mrb[0].mxu0
        %v3940 = vadd.f32 0.0, %v3939
        %v3941 = vpop.f32.mrb[0].mxu0
        %v3942 = vadd.f32 0.0, %v3941
        %v3943 = vpop.f32.mrb[0].mxu0
        %v3944 = vadd.f32 0.0, %v3943
        %3945 = vmatprep.mubr.bf16.mxu0 %v3808
        %3946 = vmatmul.mubr.bf16.gmra.mrb[0].mxu0 %v3435
        %v3947 = vpop.f32.mrb[0].mxu0
        %v3948 = vadd.f32 0.0, %v3947
        %v3949 = vpop.f32.mrb[0].mxu0
        %v3950 = vadd.f32 0.0, %v3949
        %v3951 = vpop.f32.mrb[0].mxu0
        %v3952 = vadd.f32 0.0, %v3951
        %v3953 = vpop.f32.mrb[0].mxu0
        %v3954 = vadd.f32 0.0, %v3953
        %3955 = vdwg.mxu0
        %v4016 = vunpack.c.l.b16 %v3369
        %v4017 = vunpack.c.h.b16 %v3369
        %v4018 = vunpack.c.l.b16 %v3370
        %v4019 = vunpack.c.h.b16 %v3370
        %v4020 = vunpack.c.l.b16 %v3371
        %v4021 = vunpack.c.h.b16 %v3371
        %v4022 = vunpack.c.l.b16 %v3372
        %v4023 = vunpack.c.h.b16 %v3372
        %v4024 = vunpack.c.l.b16 %v3373
        %v4025 = vunpack.c.h.b16 %v3373
        %v4026 = vunpack.c.l.b16 %v3374
        %v4027 = vunpack.c.h.b16 %v3374
        %v4028 = vunpack.c.l.b16 %v3375
        %v4029 = vunpack.c.h.b16 %v3375
        %v4030 = vunpack.c.l.b16 %v3376
        %v4031 = vunpack.c.h.b16 %v3376
        %v4032 = vunpack.c.l.b16 %v3377
        %v4033 = vunpack.c.h.b16 %v3377
        %v4034 = vunpack.c.l.b16 %v3378
        %v4035 = vunpack.c.h.b16 %v3378
        %v4036 = vunpack.c.l.b16 %v3379
        %v4037 = vunpack.c.h.b16 %v3379
        %v4038 = vunpack.c.l.b16 %v3380
        %v4039 = vunpack.c.h.b16 %v3380
        %v4040 = vunpack.c.l.b16 %v3381
        %v4041 = vunpack.c.h.b16 %v3381
        %v4042 = vunpack.c.l.b16 %v3382
        %v4043 = vunpack.c.h.b16 %v3382
        %v4044 = vunpack.c.l.b16 %v3383
        %v4045 = vunpack.c.h.b16 %v3383
        %v4046 = vunpack.c.l.b16 %v3384
        %v4047 = vunpack.c.h.b16 %v3384
        %v4048 = vunpack.c.l.b16 %v3385
        %v4049 = vunpack.c.h.b16 %v3385
        %v4050 = vunpack.c.l.b16 %v3386
        %v4051 = vunpack.c.h.b16 %v3386
        %v4052 = vunpack.c.l.b16 %v3387
        %v4053 = vunpack.c.h.b16 %v3387
        %v4054 = vunpack.c.l.b16 %v3388
        %v4055 = vunpack.c.h.b16 %v3388
        %v4056 = vunpack.c.l.b16 %v3389
        %v4057 = vunpack.c.h.b16 %v3389
        %v4058 = vunpack.c.l.b16 %v3390
        %v4059 = vunpack.c.h.b16 %v3390
        %v4060 = vunpack.c.l.b16 %v3391
        %v4061 = vunpack.c.h.b16 %v3391
        %v4062 = vunpack.c.l.b16 %v3392
        %v4063 = vunpack.c.h.b16 %v3392
        %v4064 = vunpack.c.l.b16 %v3393
        %v4065 = vunpack.c.h.b16 %v3393
        %v4066 = vunpack.c.l.b16 %v3394
        %v4067 = vunpack.c.h.b16 %v3394
        %v4068 = vunpack.c.l.b16 %v3395
        %v4069 = vunpack.c.h.b16 %v3395
        %v4070 = vunpack.c.l.b16 %v3396
        %v4071 = vunpack.c.h.b16 %v3396
        %v4072 = vunpack.c.l.b16 %v3397
        %v4073 = vunpack.c.h.b16 %v3397
        %v4074 = vunpack.c.l.b16 %v3398
        %v4075 = vunpack.c.h.b16 %v3398
        %v4076 = vunpack.c.l.b16 %v3399
        %v4077 = vunpack.c.h.b16 %v3399
        %v4078 = vunpack.c.l.b16 %v3400
        %v4079 = vunpack.c.h.b16 %v3400
        %v4080 = vunpack.c.l.b16 %v3401
        %v4081 = vunpack.c.h.b16 %v3401
        %v4082 = vunpack.c.l.b16 %v3402
        %v4083 = vunpack.c.h.b16 %v3402
        %v4084 = vunpack.c.l.b16 %v3403
        %v4085 = vunpack.c.h.b16 %v3403
        %v4086 = vunpack.c.l.b16 %v3404
        %v4087 = vunpack.c.h.b16 %v3404
        %v4088 = vunpack.c.l.b16 %v3405
        %v4089 = vunpack.c.h.b16 %v3405
        %v4090 = vunpack.c.l.b16 %v3406
        %v4091 = vunpack.c.h.b16 %v3406
        %v4092 = vunpack.c.l.b16 %v3407
        %v4093 = vunpack.c.h.b16 %v3407
        %v4094 = vunpack.c.l.b16 %v3408
        %v4095 = vunpack.c.h.b16 %v3408
        %v4096 = vunpack.c.l.b16 %v3409
        %v4097 = vunpack.c.h.b16 %v3409
        %v4098 = vunpack.c.l.b16 %v3410
        %v4099 = vunpack.c.h.b16 %v3410
        %v4100 = vunpack.c.l.b16 %v3411
        %v4101 = vunpack.c.h.b16 %v3411
        %v4102 = vunpack.c.l.b16 %v3412
        %v4103 = vunpack.c.h.b16 %v3412
        %v4104 = vunpack.c.l.b16 %v3413
        %v4105 = vunpack.c.h.b16 %v3413
        %v4106 = vunpack.c.l.b16 %v3414
        %v4107 = vunpack.c.h.b16 %v3414
        %v4108 = vunpack.c.l.b16 %v3415
        %v4109 = vunpack.c.h.b16 %v3415
        %v4110 = vunpack.c.l.b16 %v3416
        %v4111 = vunpack.c.h.b16 %v3416
        %v4112 = vunpack.c.l.b16 %v3417
        %v4113 = vunpack.c.h.b16 %v3417
        %v4114 = vunpack.c.l.b16 %v3418
        %v4115 = vunpack.c.h.b16 %v3418
        %v4116 = vunpack.c.l.b16 %v3419
        %v4117 = vunpack.c.h.b16 %v3419
        %v4118 = vunpack.c.l.b16 %v3420
        %v4119 = vunpack.c.h.b16 %v3420
        %v4120 = vunpack.c.l.b16 %v3421
        %v4121 = vunpack.c.h.b16 %v3421
        %v4122 = vunpack.c.l.b16 %v3422
        %v4123 = vunpack.c.h.b16 %v3422
        %v4124 = vunpack.c.l.b16 %v3423
        %v4125 = vunpack.c.h.b16 %v3423
        %v4126 = vunpack.c.l.b16 %v3424
        %v4127 = vunpack.c.h.b16 %v3424
        %v4128 = vunpack.c.l.b16 %v3425
        %v4129 = vunpack.c.h.b16 %v3425
        %v4130 = vunpack.c.l.b16 %v3426
        %v4131 = vunpack.c.h.b16 %v3426
        %v4132 = vunpack.c.l.b16 %v3427
        %v4133 = vunpack.c.h.b16 %v3427
        %v4134 = vunpack.c.l.b16 %v3428
        %v4135 = vunpack.c.h.b16 %v3428
        %v4136 = vpack.c.b16 %v4020, %v4016
        %v4137 = vpack.c.b16 %v4021, %v4017
        %v4138 = vpack.c.b16 %v4022, %v4018
        %v4139 = vpack.c.b16 %v4023, %v4019
        %v4140 = vpack.c.b16 %v4028, %v4024
        %v4141 = vpack.c.b16 %v4029, %v4025
        %v4142 = vpack.c.b16 %v4030, %v4026
        %v4143 = vpack.c.b16 %v4031, %v4027
        %v4144 = vpack.c.b16 %v4036, %v4032
        %v4145 = vpack.c.b16 %v4037, %v4033
        %v4146 = vpack.c.b16 %v4038, %v4034
        %v4147 = vpack.c.b16 %v4039, %v4035
        %v4148 = vpack.c.b16 %v4044, %v4040
        %v4149 = vpack.c.b16 %v4045, %v4041
        %v4150 = vpack.c.b16 %v4046, %v4042
        %v4151 = vpack.c.b16 %v4047, %v4043
        %v4152 = vpack.c.b16 %v4052, %v4048
        %v4153 = vpack.c.b16 %v4053, %v4049
        %v4154 = vpack.c.b16 %v4054, %v4050
        %v4155 = vpack.c.b16 %v4055, %v4051
        %v4156 = vpack.c.b16 %v4060, %v4056
        %v4157 = vpack.c.b16 %v4061, %v4057
        %v4158 = vpack.c.b16 %v4062, %v4058
        %v4159 = vpack.c.b16 %v4063, %v4059
        %v4160 = vpack.c.b16 %v4068, %v4064
        %v4161 = vpack.c.b16 %v4069, %v4065
        %v4162 = vpack.c.b16 %v4070, %v4066
        %v4163 = vpack.c.b16 %v4071, %v4067
        %v4164 = vpack.c.b16 %v4076, %v4072
        %v4165 = vpack.c.b16 %v4077, %v4073
        %v4166 = vpack.c.b16 %v4078, %v4074
        %v4167 = vpack.c.b16 %v4079, %v4075
        %v4168 = vpack.c.b16 %v4084, %v4080
        %v4169 = vpack.c.b16 %v4085, %v4081
        %v4170 = vpack.c.b16 %v4086, %v4082
        %v4171 = vpack.c.b16 %v4087, %v4083
        %v4172 = vpack.c.b16 %v4092, %v4088
        %v4173 = vpack.c.b16 %v4093, %v4089
        %v4174 = vpack.c.b16 %v4094, %v4090
        %v4175 = vpack.c.b16 %v4095, %v4091
        %v4176 = vpack.c.b16 %v4100, %v4096
        %v4177 = vpack.c.b16 %v4101, %v4097
        %v4178 = vpack.c.b16 %v4102, %v4098
        %v4179 = vpack.c.b16 %v4103, %v4099
        %v4180 = vpack.c.b16 %v4108, %v4104
        %v4181 = vpack.c.b16 %v4109, %v4105
        %v4182 = vpack.c.b16 %v4110, %v4106
        %v4183 = vpack.c.b16 %v4111, %v4107
        %v4184 = vpack.c.b16 %v4116, %v4112
        %v4185 = vpack.c.b16 %v4117, %v4113
        %v4186 = vpack.c.b16 %v4118, %v4114
        %v4187 = vpack.c.b16 %v4119, %v4115
        %v4188 = vpack.c.b16 %v4124, %v4120
        %v4189 = vpack.c.b16 %v4125, %v4121
        %v4190 = vpack.c.b16 %v4126, %v4122
        %v4191 = vpack.c.b16 %v4127, %v4123
        %v4192 = vpack.c.b16 %v4132, %v4128
        %v4193 = vpack.c.b16 %v4133, %v4129
        %v4194 = vpack.c.b16 %v4134, %v4130
        %v4195 = vpack.c.b16 %v4135, %v4131
        %v4257 = vsel %vm3313, %v3362, 0
        %v4260 = vsel %vm3313, %v3364, 0
        %v4263 = vsel %vm3313, %v3366, 0
        %v4266 = vsel %vm3313, %v3368, 0
        %4268 = vmatprep.subr.bf16.mxu0 %v4137
        %4269 = vmatpush1.bf16.msra.mxu0 %v4136
        %4270 = vmatprep.subr.bf16.mxu0 %v4141
        %4271 = vmatpush1.bf16.msra.mxu0 %v4140
        %4272 = vmatprep.subr.bf16.mxu0 %v4145
        %4273 = vmatpush1.bf16.msra.mxu0 %v4144
        %4274 = vmatprep.subr.bf16.mxu0 %v4149
        %4275 = vmatpush1.bf16.msra.mxu0 %v4148
        %4276 = vmatprep.subr.bf16.mxu0 %v4153
        %4277 = vmatpush1.bf16.msra.mxu0 %v4152
        %4278 = vmatprep.subr.bf16.mxu0 %v4157
        %4279 = vmatpush1.bf16.msra.mxu0 %v4156
        %4280 = vmatprep.subr.bf16.mxu0 %v4161
        %4281 = vmatpush1.bf16.msra.mxu0 %v4160
        %4282 = vmatprep.subr.bf16.mxu0 %v4165
        %4283 = vmatpush1.bf16.msra.mxu0 %v4164
        %4284 = vmatprep.subr.bf16.mxu0 %v4169
        %4285 = vmatpush1.bf16.msra.mxu0 %v4168
        %4286 = vmatprep.subr.bf16.mxu0 %v4173
        %4287 = vmatpush1.bf16.msra.mxu0 %v4172
        %4288 = vmatprep.subr.bf16.mxu0 %v4177
        %4289 = vmatpush1.bf16.msra.mxu0 %v4176
        %4290 = vmatprep.subr.bf16.mxu0 %v4181
        %4291 = vmatpush1.bf16.msra.mxu0 %v4180
        %4292 = vmatprep.subr.bf16.mxu0 %v4185
        %4293 = vmatpush1.bf16.msra.mxu0 %v4184
        %4294 = vmatprep.subr.bf16.mxu0 %v4189
        %4295 = vmatpush1.bf16.msra.mxu0 %v4188
        %4296 = vmatprep.subr.bf16.mxu0 %v4193
        %4297 = vmatpush1.bf16.msra.mxu0 %v4192
        %4298 = vmatprep.subr.bf16.mxu0 0
        %4299 = vmatpush1.bf16.msra.mxu0 0
        %4300 = vmatprep.mubr.bf16.mxu0 %v4257
        %4301 = vmatmul.mubr.bf16.gmra.mrb[0].mxu0 %v3361
        %v4302 = vpop.f32.mrb[0].mxu0
        %v4303 = vadd.f32 %v3845, %v4302
        %v4304 = vpop.f32.mrb[0].mxu0
        %v4305 = vadd.f32 %v3847, %v4304
        %v4306 = vpop.f32.mrb[0].mxu0
        %v4307 = vadd.f32 %v3849, %v4306
        %v4308 = vpop.f32.mrb[0].mxu0
        %v4309 = vadd.f32 %v3851, %v4308
        %4310 = vmatprep.mubr.bf16.mxu0 %v4260
        %4311 = vmatmul.mubr.bf16.gmra.mrb[0].mxu0 %v3363
        %v4312 = vpop.f32.mrb[0].mxu0
        %v4313 = vadd.f32 %v3855, %v4312
        %v4314 = vpop.f32.mrb[0].mxu0
        %v4315 = vadd.f32 %v3857, %v4314
        %v4316 = vpop.f32.mrb[0].mxu0
        %v4317 = vadd.f32 %v3859, %v4316
        %v4318 = vpop.f32.mrb[0].mxu0
        %v4319 = vadd.f32 %v3861, %v4318
        %4320 = vmatprep.mubr.bf16.mxu0 %v4263
        %4321 = vmatmul.mubr.bf16.gmra.mrb[0].mxu0 %v3365
        %v4322 = vpop.f32.mrb[0].mxu0
        %v4323 = vadd.f32 %v3865, %v4322
        %v4324 = vpop.f32.mrb[0].mxu0
        %v4325 = vadd.f32 %v3867, %v4324
        %v4326 = vpop.f32.mrb[0].mxu0
        %v4327 = vadd.f32 %v3869, %v4326
        %v4328 = vpop.f32.mrb[0].mxu0
        %v4329 = vadd.f32 %v3871, %v4328
        %4330 = vmatprep.mubr.bf16.mxu0 %v4266
        %4331 = vmatmul.mubr.bf16.gmra.mrb[0].mxu0 %v3367
        %v4332 = vpop.f32.mrb[0].mxu0
        %v4333 = vadd.f32 %v3875, %v4332
        %v4334 = vpop.f32.mrb[0].mxu0
        %v4335 = vadd.f32 %v3877, %v4334
        %v4336 = vpop.f32.mrb[0].mxu0
        %v4337 = vadd.f32 %v3879, %v4336
        %v4338 = vpop.f32.mrb[0].mxu0
        %v4339 = vadd.f32 %v3881, %v4338
        %4340 = vdwg.mxu0
        %4341 = vmatprep.subr.bf16.mxu0 %v4139
        %4342 = vmatpush1.bf16.msra.mxu0 %v4138
        %4343 = vmatprep.subr.bf16.mxu0 %v4143
        %4344 = vmatpush1.bf16.msra.mxu0 %v4142
        %4345 = vmatprep.subr.bf16.mxu0 %v4147
        %4346 = vmatpush1.bf16.msra.mxu0 %v4146
        %4347 = vmatprep.subr.bf16.mxu0 %v4151
        %4348 = vmatpush1.bf16.msra.mxu0 %v4150
        %4349 = vmatprep.subr.bf16.mxu0 %v4155
        %4350 = vmatpush1.bf16.msra.mxu0 %v4154
        %4351 = vmatprep.subr.bf16.mxu0 %v4159
        %4352 = vmatpush1.bf16.msra.mxu0 %v4158
        %4353 = vmatprep.subr.bf16.mxu0 %v4163
        %4354 = vmatpush1.bf16.msra.mxu0 %v4162
        %4355 = vmatprep.subr.bf16.mxu0 %v4167
        %4356 = vmatpush1.bf16.msra.mxu0 %v4166
        %4357 = vmatprep.subr.bf16.mxu0 %v4171
        %4358 = vmatpush1.bf16.msra.mxu0 %v4170
        %4359 = vmatprep.subr.bf16.mxu0 %v4175
        %4360 = vmatpush1.bf16.msra.mxu0 %v4174
        %4361 = vmatprep.subr.bf16.mxu0 %v4179
        %4362 = vmatpush1.bf16.msra.mxu0 %v4178
        %4363 = vmatprep.subr.bf16.mxu0 %v4183
        %4364 = vmatpush1.bf16.msra.mxu0 %v4182
        %4365 = vmatprep.subr.bf16.mxu0 %v4187
        %4366 = vmatpush1.bf16.msra.mxu0 %v4186
        %4367 = vmatprep.subr.bf16.mxu0 %v4191
        %4368 = vmatpush1.bf16.msra.mxu0 %v4190
        %4369 = vmatprep.subr.bf16.mxu0 %v4195
        %4370 = vmatpush1.bf16.msra.mxu0 %v4194
        %4371 = vmatprep.subr.bf16.mxu0 0
        %4372 = vmatpush1.bf16.msra.mxu0 0
        %4373 = vmatprep.mubr.bf16.mxu0 %v4257
        %4374 = vmatmul.mubr.bf16.gmra.mrb[0].mxu0 %v3361
        %v4375 = vpop.f32.mrb[0].mxu0
        %v4376 = vadd.f32 %v3918, %v4375
        %v4377 = vpop.f32.mrb[0].mxu0
        %v4378 = vadd.f32 %v3920, %v4377
        %v4379 = vpop.f32.mrb[0].mxu0
        %v4380 = vadd.f32 %v3922, %v4379
        %v4381 = vpop.f32.mrb[0].mxu0
        %v4382 = vadd.f32 %v3924, %v4381
        %4383 = vmatprep.mubr.bf16.mxu0 %v4260
        %4384 = vmatmul.mubr.bf16.gmra.mrb[0].mxu0 %v3363
        %v4385 = vpop.f32.mrb[0].mxu0
        %v4386 = vadd.f32 %v3928, %v4385
        %v4387 = vpop.f32.mrb[0].mxu0
        %v4388 = vadd.f32 %v3930, %v4387
        %v4389 = vpop.f32.mrb[0].mxu0
        %v4390 = vadd.f32 %v3932, %v4389
        %v4391 = vpop.f32.mrb[0].mxu0
        %v4392 = vadd.f32 %v3934, %v4391
        %4393 = vmatprep.mubr.bf16.mxu0 %v4263
        %4394 = vmatmul.mubr.bf16.gmra.mrb[0].mxu0 %v3365
        %v4395 = vpop.f32.mrb[0].mxu0
        %v4396 = vadd.f32 %v3938, %v4395
        %v4397 = vpop.f32.mrb[0].mxu0
        %v4398 = vadd.f32 %v3940, %v4397
        %v4399 = vpop.f32.mrb[0].mxu0
        %v4400 = vadd.f32 %v3942, %v4399
        %v4401 = vpop.f32.mrb[0].mxu0
        %v4402 = vadd.f32 %v3944, %v4401
        %4403 = vmatprep.mubr.bf16.mxu0 %v4266
        %4404 = vmatmul.mubr.bf16.gmra.mrb[0].mxu0 %v3367
        %v4405 = vpop.f32.mrb[0].mxu0
        %v4406 = vadd.f32 %v3948, %v4405
        %v4407 = vpop.f32.mrb[0].mxu0
        %v4408 = vadd.f32 %v3950, %v4407
        %v4409 = vpop.f32.mrb[0].mxu0
        %v4410 = vadd.f32 %v3952, %v4409
        %v4411 = vpop.f32.mrb[0].mxu0
        %v4412 = vadd.f32 %v3954, %v4411
        %4413 = vdwg.mxu0
        %v4414 = vpack.c.bf16 %v3349, %v3345
        %v4415 = vpack.c.bf16 %v3352, %v3348
        %s4416 = scalar_lea.vmem %s3, 960
        %v4417 = vld [vmem:[%s4416] sm:$0xff]
        %v4418 = vld [vmem:[%s4416 + $0x8] sm:$0xff]
        %v4419 = vld [vmem:[%s4416 + $0x10] sm:$0xff]
        %v4420 = vld [vmem:[%s4416 + $0x18] sm:$0xff]
        %v4421 = vld [vmem:[%s4416 + $0x20] sm:$0xff]
        %v4422 = vld [vmem:[%s4416 + $0x28] sm:$0xff]
        %v4423 = vld [vmem:[%s4416 + $0x30] sm:$0xff]
        %v4424 = vld [vmem:[%s4416 + $0x38] sm:$0xff]
        %v4425 = vld [vmem:[%s4416 + $0x40] sm:$0xff]
        %v4426 = vld [vmem:[%s4416 + $0x48] sm:$0xff]
        %v4427 = vld [vmem:[%s4416 + $0x50] sm:$0xff]
        %v4428 = vld [vmem:[%s4416 + $0x58] sm:$0xff]
        %v4429 = vld [vmem:[%s4416 + $0x60] sm:$0xff]
        %v4430 = vld [vmem:[%s4416 + $0x68] sm:$0xff]
        %v4431 = vld [vmem:[%s4416 + $0x70] sm:$0xff]
        %v4432 = vld [vmem:[%s4416 + $0x78] sm:$0xff]
        %v4433 = vld [vmem:[%s4416 + $0x80] sm:$0xff]
        %v4434 = vld [vmem:[%s4416 + $0x88] sm:$0xff]
        %v4435 = vld [vmem:[%s4416 + $0x90] sm:$0xff]
        %v4436 = vld [vmem:[%s4416 + $0x98] sm:$0xff]
        %v4437 = vld [vmem:[%s4416 + $0xa0] sm:$0xff]
        %v4438 = vld [vmem:[%s4416 + $0xa8] sm:$0xff]
        %v4439 = vld [vmem:[%s4416 + $0xb0] sm:$0xff]
        %v4440 = vld [vmem:[%s4416 + $0xb8] sm:$0xff]
        %v4441 = vld [vmem:[%s4416 + $0xc0] sm:$0xff]
        %v4442 = vld [vmem:[%s4416 + $0xc8] sm:$0xff]
        %v4443 = vld [vmem:[%s4416 + $0xd0] sm:$0xff]
        %v4444 = vld [vmem:[%s4416 + $0xd8] sm:$0xff]
        %v4445 = vld [vmem:[%s4416 + $0xe0] sm:$0xff]
        %v4446 = vld [vmem:[%s4416 + $0xe8] sm:$0xff]
        %v4447 = vld [vmem:[%s4416 + $0xf0] sm:$0xff]
        %v4448 = vld [vmem:[%s4416 + $0xf8] sm:$0xff]
        %v4449 = vld [vmem:[%s4416 + $0x100] sm:$0xff]
        %v4450 = vld [vmem:[%s4416 + $0x108] sm:$0xff]
        %v4451 = vld [vmem:[%s4416 + $0x110] sm:$0xff]
        %v4452 = vld [vmem:[%s4416 + $0x118] sm:$0xff]
        %v4453 = vld [vmem:[%s4416 + $0x120] sm:$0xff]
        %v4454 = vld [vmem:[%s4416 + $0x128] sm:$0xff]
        %v4455 = vld [vmem:[%s4416 + $0x130] sm:$0xff]
        %v4456 = vld [vmem:[%s4416 + $0x138] sm:$0xff]
        %v4457 = vld [vmem:[%s4416 + $0x140] sm:$0xff]
        %v4458 = vld [vmem:[%s4416 + $0x148] sm:$0xff]
        %v4459 = vld [vmem:[%s4416 + $0x150] sm:$0xff]
        %v4460 = vld [vmem:[%s4416 + $0x158] sm:$0xff]
        %v4461 = vld [vmem:[%s4416 + $0x160] sm:$0xff]
        %v4462 = vld [vmem:[%s4416 + $0x168] sm:$0xff]
        %v4463 = vld [vmem:[%s4416 + $0x170] sm:$0xff]
        %v4464 = vld [vmem:[%s4416 + $0x178] sm:$0xff]
        %v4465 = vld [vmem:[%s4416 + $0x180] sm:$0xff]
        %v4466 = vld [vmem:[%s4416 + $0x188] sm:$0xff]
        %v4467 = vld [vmem:[%s4416 + $0x190] sm:$0xff]
        %v4468 = vld [vmem:[%s4416 + $0x198] sm:$0xff]
        %v4469 = vld [vmem:[%s4416 + $0x1a0] sm:$0xff]
        %v4470 = vld [vmem:[%s4416 + $0x1a8] sm:$0xff]
        %v4471 = vld [vmem:[%s4416 + $0x1b0] sm:$0xff]
        %v4472 = vld [vmem:[%s4416 + $0x1b8] sm:$0xff]
        %v4473 = vld [vmem:[%s4416 + $0x1c0] sm:$0xff]
        %v4474 = vld [vmem:[%s4416 + $0x1c8] sm:$0xff]
        %v4475 = vld [vmem:[%s4416 + $0x1d0] sm:$0xff]
        %v4476 = vld [vmem:[%s4416 + $0x1d8] sm:$0xff]
        %v4537 = vunpack.c.l.b16 %v4417
        %v4538 = vunpack.c.h.b16 %v4417
        %v4539 = vunpack.c.l.b16 %v4418
        %v4540 = vunpack.c.h.b16 %v4418
        %v4541 = vunpack.c.l.b16 %v4419
        %v4542 = vunpack.c.h.b16 %v4419
        %v4543 = vunpack.c.l.b16 %v4420
        %v4544 = vunpack.c.h.b16 %v4420
        %v4545 = vunpack.c.l.b16 %v4421
        %v4546 = vunpack.c.h.b16 %v4421
        %v4547 = vunpack.c.l.b16 %v4422
        %v4548 = vunpack.c.h.b16 %v4422
        %v4549 = vunpack.c.l.b16 %v4423
        %v4550 = vunpack.c.h.b16 %v4423
        %v4551 = vunpack.c.l.b16 %v4424
        %v4552 = vunpack.c.h.b16 %v4424
        %v4553 = vunpack.c.l.b16 %v4425
        %v4554 = vunpack.c.h.b16 %v4425
        %v4555 = vunpack.c.l.b16 %v4426
        %v4556 = vunpack.c.h.b16 %v4426
        %v4557 = vunpack.c.l.b16 %v4427
        %v4558 = vunpack.c.h.b16 %v4427
        %v4559 = vunpack.c.l.b16 %v4428
        %v4560 = vunpack.c.h.b16 %v4428
        %v4561 = vunpack.c.l.b16 %v4429
        %v4562 = vunpack.c.h.b16 %v4429
        %v4563 = vunpack.c.l.b16 %v4430
        %v4564 = vunpack.c.h.b16 %v4430
        %v4565 = vunpack.c.l.b16 %v4431
        %v4566 = vunpack.c.h.b16 %v4431
        %v4567 = vunpack.c.l.b16 %v4432
        %v4568 = vunpack.c.h.b16 %v4432
        %v4569 = vunpack.c.l.b16 %v4433
        %v4570 = vunpack.c.h.b16 %v4433
        %v4571 = vunpack.c.l.b16 %v4434
        %v4572 = vunpack.c.h.b16 %v4434
        %v4573 = vunpack.c.l.b16 %v4435
        %v4574 = vunpack.c.h.b16 %v4435
        %v4575 = vunpack.c.l.b16 %v4436
        %v4576 = vunpack.c.h.b16 %v4436
        %v4577 = vunpack.c.l.b16 %v4437
        %v4578 = vunpack.c.h.b16 %v4437
        %v4579 = vunpack.c.l.b16 %v4438
        %v4580 = vunpack.c.h.b16 %v4438
        %v4581 = vunpack.c.l.b16 %v4439
        %v4582 = vunpack.c.h.b16 %v4439
        %v4583 = vunpack.c.l.b16 %v4440
        %v4584 = vunpack.c.h.b16 %v4440
        %v4585 = vunpack.c.l.b16 %v4441
        %v4586 = vunpack.c.h.b16 %v4441
        %v4587 = vunpack.c.l.b16 %v4442
        %v4588 = vunpack.c.h.b16 %v4442
        %v4589 = vunpack.c.l.b16 %v4443
        %v4590 = vunpack.c.h.b16 %v4443
        %v4591 = vunpack.c.l.b16 %v4444
        %v4592 = vunpack.c.h.b16 %v4444
        %v4593 = vunpack.c.l.b16 %v4445
        %v4594 = vunpack.c.h.b16 %v4445
        %v4595 = vunpack.c.l.b16 %v4446
        %v4596 = vunpack.c.h.b16 %v4446
        %v4597 = vunpack.c.l.b16 %v4447
        %v4598 = vunpack.c.h.b16 %v4447
        %v4599 = vunpack.c.l.b16 %v4448
        %v4600 = vunpack.c.h.b16 %v4448
        %v4601 = vunpack.c.l.b16 %v4449
        %v4602 = vunpack.c.h.b16 %v4449
        %v4603 = vunpack.c.l.b16 %v4450
        %v4604 = vunpack.c.h.b16 %v4450
        %v4605 = vunpack.c.l.b16 %v4451
        %v4606 = vunpack.c.h.b16 %v4451
        %v4607 = vunpack.c.l.b16 %v4452
        %v4608 = vunpack.c.h.b16 %v4452
        %v4609 = vunpack.c.l.b16 %v4453
        %v4610 = vunpack.c.h.b16 %v4453
        %v4611 = vunpack.c.l.b16 %v4454
        %v4612 = vunpack.c.h.b16 %v4454
        %v4613 = vunpack.c.l.b16 %v4455
        %v4614 = vunpack.c.h.b16 %v4455
        %v4615 = vunpack.c.l.b16 %v4456
        %v4616 = vunpack.c.h.b16 %v4456
        %v4617 = vunpack.c.l.b16 %v4457
        %v4618 = vunpack.c.h.b16 %v4457
        %v4619 = vunpack.c.l.b16 %v4458
        %v4620 = vunpack.c.h.b16 %v4458
        %v4621 = vunpack.c.l.b16 %v4459
        %v4622 = vunpack.c.h.b16 %v4459
        %v4623 = vunpack.c.l.b16 %v4460
        %v4624 = vunpack.c.h.b16 %v4460
        %v4625 = vunpack.c.l.b16 %v4461
        %v4626 = vunpack.c.h.b16 %v4461
        %v4627 = vunpack.c.l.b16 %v4462
        %v4628 = vunpack.c.h.b16 %v4462
        %v4629 = vunpack.c.l.b16 %v4463
        %v4630 = vunpack.c.h.b16 %v4463
        %v4631 = vunpack.c.l.b16 %v4464
        %v4632 = vunpack.c.h.b16 %v4464
        %v4633 = vunpack.c.l.b16 %v4465
        %v4634 = vunpack.c.h.b16 %v4465
        %v4635 = vunpack.c.l.b16 %v4466
        %v4636 = vunpack.c.h.b16 %v4466
        %v4637 = vunpack.c.l.b16 %v4467
        %v4638 = vunpack.c.h.b16 %v4467
        %v4639 = vunpack.c.l.b16 %v4468
        %v4640 = vunpack.c.h.b16 %v4468
        %v4641 = vunpack.c.l.b16 %v4469
        %v4642 = vunpack.c.h.b16 %v4469
        %v4643 = vunpack.c.l.b16 %v4470
        %v4644 = vunpack.c.h.b16 %v4470
        %v4645 = vunpack.c.l.b16 %v4471
        %v4646 = vunpack.c.h.b16 %v4471
        %v4647 = vunpack.c.l.b16 %v4472
        %v4648 = vunpack.c.h.b16 %v4472
        %v4649 = vunpack.c.l.b16 %v4473
        %v4650 = vunpack.c.h.b16 %v4473
        %v4651 = vunpack.c.l.b16 %v4474
        %v4652 = vunpack.c.h.b16 %v4474
        %v4653 = vunpack.c.l.b16 %v4475
        %v4654 = vunpack.c.h.b16 %v4475
        %v4655 = vunpack.c.l.b16 %v4476
        %v4656 = vunpack.c.h.b16 %v4476
        %v4657 = vpack.c.b16 %v4541, %v4537
        %v4658 = vpack.c.b16 %v4542, %v4538
        %v4659 = vpack.c.b16 %v4543, %v4539
        %v4660 = vpack.c.b16 %v4544, %v4540
        %v4661 = vpack.c.b16 %v4549, %v4545
        %v4662 = vpack.c.b16 %v4550, %v4546
        %v4663 = vpack.c.b16 %v4551, %v4547
        %v4664 = vpack.c.b16 %v4552, %v4548
        %v4665 = vpack.c.b16 %v4557, %v4553
        %v4666 = vpack.c.b16 %v4558, %v4554
        %v4667 = vpack.c.b16 %v4559, %v4555
        %v4668 = vpack.c.b16 %v4560, %v4556
        %v4669 = vpack.c.b16 %v4565, %v4561
        %v4670 = vpack.c.b16 %v4566, %v4562
        %v4671 = vpack.c.b16 %v4567, %v4563
        %v4672 = vpack.c.b16 %v4568, %v4564
        %v4673 = vpack.c.b16 %v4573, %v4569
        %v4674 = vpack.c.b16 %v4574, %v4570
        %v4675 = vpack.c.b16 %v4575, %v4571
        %v4676 = vpack.c.b16 %v4576, %v4572
        %v4677 = vpack.c.b16 %v4581, %v4577
        %v4678 = vpack.c.b16 %v4582, %v4578
        %v4679 = vpack.c.b16 %v4583, %v4579
        %v4680 = vpack.c.b16 %v4584, %v4580
        %v4681 = vpack.c.b16 %v4589, %v4585
        %v4682 = vpack.c.b16 %v4590, %v4586
        %v4683 = vpack.c.b16 %v4591, %v4587
        %v4684 = vpack.c.b16 %v4592, %v4588
        %v4685 = vpack.c.b16 %v4597, %v4593
        %v4686 = vpack.c.b16 %v4598, %v4594
        %v4687 = vpack.c.b16 %v4599, %v4595
        %v4688 = vpack.c.b16 %v4600, %v4596
        %v4689 = vpack.c.b16 %v4605, %v4601
        %v4690 = vpack.c.b16 %v4606, %v4602
        %v4691 = vpack.c.b16 %v4607, %v4603
        %v4692 = vpack.c.b16 %v4608, %v4604
        %v4693 = vpack.c.b16 %v4613, %v4609
        %v4694 = vpack.c.b16 %v4614, %v4610
        %v4695 = vpack.c.b16 %v4615, %v4611
        %v4696 = vpack.c.b16 %v4616, %v4612
        %v4697 = vpack.c.b16 %v4621, %v4617
        %v4698 = vpack.c.b16 %v4622, %v4618
        %v4699 = vpack.c.b16 %v4623, %v4619
        %v4700 = vpack.c.b16 %v4624, %v4620
        %v4701 = vpack.c.b16 %v4629, %v4625
        %v4702 = vpack.c.b16 %v4630, %v4626
        %v4703 = vpack.c.b16 %v4631, %v4627
        %v4704 = vpack.c.b16 %v4632, %v4628
        %v4705 = vpack.c.b16 %v4637, %v4633
        %v4706 = vpack.c.b16 %v4638, %v4634
        %v4707 = vpack.c.b16 %v4639, %v4635
        %v4708 = vpack.c.b16 %v4640, %v4636
        %v4709 = vpack.c.b16 %v4645, %v4641
        %v4710 = vpack.c.b16 %v4646, %v4642
        %v4711 = vpack.c.b16 %v4647, %v4643
        %v4712 = vpack.c.b16 %v4648, %v4644
        %v4713 = vpack.c.b16 %v4653, %v4649
        %v4714 = vpack.c.b16 %v4654, %v4650
        %v4715 = vpack.c.b16 %v4655, %v4651
        %v4716 = vpack.c.b16 %v4656, %v4652
        %v4778 = vsel %vm3313, %v4415, 0
        %4780 = vmatprep.subr.bf16.mxu0 %v4658
        %4781 = vmatpush1.bf16.msra.mxu0 %v4657
        %4782 = vmatprep.subr.bf16.mxu0 %v4662
        %4783 = vmatpush1.bf16.msra.mxu0 %v4661
        %4784 = vmatprep.subr.bf16.mxu0 %v4666
        %4785 = vmatpush1.bf16.msra.mxu0 %v4665
        %4786 = vmatprep.subr.bf16.mxu0 %v4670
        %4787 = vmatpush1.bf16.msra.mxu0 %v4669
        %4788 = vmatprep.subr.bf16.mxu0 %v4674
        %4789 = vmatpush1.bf16.msra.mxu0 %v4673
        %4790 = vmatprep.subr.bf16.mxu0 %v4678
        %4791 = vmatpush1.bf16.msra.mxu0 %v4677
        %4792 = vmatprep.subr.bf16.mxu0 %v4682
        %4793 = vmatpush1.bf16.msra.mxu0 %v4681
        %4794 = vmatprep.subr.bf16.mxu0 %v4686
        %4795 = vmatpush1.bf16.msra.mxu0 %v4685
        %4796 = vmatprep.subr.bf16.mxu0 %v4690
        %4797 = vmatpush1.bf16.msra.mxu0 %v4689
        %4798 = vmatprep.subr.bf16.mxu0 %v4694
        %4799 = vmatpush1.bf16.msra.mxu0 %v4693
        %4800 = vmatprep.subr.bf16.mxu0 %v4698
        %4801 = vmatpush1.bf16.msra.mxu0 %v4697
        %4802 = vmatprep.subr.bf16.mxu0 %v4702
        %4803 = vmatpush1.bf16.msra.mxu0 %v4701
        %4804 = vmatprep.subr.bf16.mxu0 %v4706
        %4805 = vmatpush1.bf16.msra.mxu0 %v4705
        %4806 = vmatprep.subr.bf16.mxu0 %v4710
        %4807 = vmatpush1.bf16.msra.mxu0 %v4709
        %4808 = vmatprep.subr.bf16.mxu0 %v4714
        %4809 = vmatpush1.bf16.msra.mxu0 %v4713
        %4810 = vmatprep.subr.bf16.mxu0 0
        %4811 = vmatpush1.bf16.msra.mxu0 0
        %4812 = vmatprep.mubr.bf16.mxu0 %v4260
        %4813 = vmatmul.mubr.bf16.gmra.mrb[0].mxu0 %v3363
        %v4814 = vpop.f32.mrb[0].mxu0
        %v4815 = vadd.f32 0.0, %v4814
        %v4816 = vpop.f32.mrb[0].mxu0
        %v4817 = vadd.f32 0.0, %v4816
        %v4818 = vpop.f32.mrb[0].mxu0
        %v4819 = vadd.f32 0.0, %v4818
        %v4820 = vpop.f32.mrb[0].mxu0
        %v4821 = vadd.f32 0.0, %v4820
        %4822 = vmatprep.mubr.bf16.mxu0 %v4263
        %4823 = vmatmul.mubr.bf16.gmra.mrb[0].mxu0 %v3365
        %v4824 = vpop.f32.mrb[0].mxu0
        %v4825 = vadd.f32 0.0, %v4824
        %v4826 = vpop.f32.mrb[0].mxu0
        %v4827 = vadd.f32 0.0, %v4826
        %v4828 = vpop.f32.mrb[0].mxu0
        %v4829 = vadd.f32 0.0, %v4828
        %v4830 = vpop.f32.mrb[0].mxu0
        %v4831 = vadd.f32 0.0, %v4830
        %4832 = vmatprep.mubr.bf16.mxu0 %v4266
        %4833 = vmatmul.mubr.bf16.gmra.mrb[0].mxu0 %v3367
        %v4834 = vpop.f32.mrb[0].mxu0
        %v4835 = vadd.f32 0.0, %v4834
        %v4836 = vpop.f32.mrb[0].mxu0
        %v4837 = vadd.f32 0.0, %v4836
        %v4838 = vpop.f32.mrb[0].mxu0
        %v4839 = vadd.f32 0.0, %v4838
        %v4840 = vpop.f32.mrb[0].mxu0
        %v4841 = vadd.f32 0.0, %v4840
        %4842 = vmatprep.mubr.bf16.mxu0 %v4778
        %4843 = vmatmul.mubr.bf16.gmra.mrb[0].mxu0 %v4414
        %v4844 = vpop.f32.mrb[0].mxu0
        %v4845 = vadd.f32 0.0, %v4844
        %v4846 = vpop.f32.mrb[0].mxu0
        %v4847 = vadd.f32 0.0, %v4846
        %v4848 = vpop.f32.mrb[0].mxu0
        %v4849 = vadd.f32 0.0, %v4848
        %v4850 = vpop.f32.mrb[0].mxu0
        %v4851 = vadd.f32 0.0, %v4850
        %4852 = vdwg.mxu0
        %4853 = vmatprep.subr.bf16.mxu0 %v4660
        %4854 = vmatpush1.bf16.msra.mxu0 %v4659
        %4855 = vmatprep.subr.bf16.mxu0 %v4664
        %4856 = vmatpush1.bf16.msra.mxu0 %v4663
        %4857 = vmatprep.subr.bf16.mxu0 %v4668
        %4858 = vmatpush1.bf16.msra.mxu0 %v4667
        %4859 = vmatprep.subr.bf16.mxu0 %v4672
        %4860 = vmatpush1.bf16.msra.mxu0 %v4671
        %4861 = vmatprep.subr.bf16.mxu0 %v4676
        %4862 = vmatpush1.bf16.msra.mxu0 %v4675
        %4863 = vmatprep.subr.bf16.mxu0 %v4680
        %4864 = vmatpush1.bf16.msra.mxu0 %v4679
        %4865 = vmatprep.subr.bf16.mxu0 %v4684
        %4866 = vmatpush1.bf16.msra.mxu0 %v4683
        %4867 = vmatprep.subr.bf16.mxu0 %v4688
        %4868 = vmatpush1.bf16.msra.mxu0 %v4687
        %4869 = vmatprep.subr.bf16.mxu0 %v4692
        %4870 = vmatpush1.bf16.msra.mxu0 %v4691
        %4871 = vmatprep.subr.bf16.mxu0 %v4696
        %4872 = vmatpush1.bf16.msra.mxu0 %v4695
        %4873 = vmatprep.subr.bf16.mxu0 %v4700
        %4874 = vmatpush1.bf16.msra.mxu0 %v4699
        %4875 = vmatprep.subr.bf16.mxu0 %v4704
        %4876 = vmatpush1.bf16.msra.mxu0 %v4703
        %4877 = vmatprep.subr.bf16.mxu0 %v4708
        %4878 = vmatpush1.bf16.msra.mxu0 %v4707
        %4879 = vmatprep.subr.bf16.mxu0 %v4712
        %4880 = vmatpush1.bf16.msra.mxu0 %v4711
        %4881 = vmatprep.subr.bf16.mxu0 %v4716
        %4882 = vmatpush1.bf16.msra.mxu0 %v4715
        %4883 = vmatprep.subr.bf16.mxu0 0
        %4884 = vmatpush1.bf16.msra.mxu0 0
        %4885 = vmatprep.mubr.bf16.mxu0 %v4260
        %4886 = vmatmul.mubr.bf16.gmra.mrb[0].mxu0 %v3363
        %v4887 = vpop.f32.mrb[0].mxu0
        %v4888 = vadd.f32 0.0, %v4887
        %v4889 = vpop.f32.mrb[0].mxu0
        %v4890 = vadd.f32 0.0, %v4889
        %v4891 = vpop.f32.mrb[0].mxu0
        %v4892 = vadd.f32 0.0, %v4891
        %v4893 = vpop.f32.mrb[0].mxu0
        %v4894 = vadd.f32 0.0, %v4893
        %4895 = vmatprep.mubr.bf16.mxu0 %v4263
        %4896 = vmatmul.mubr.bf16.gmra.mrb[0].mxu0 %v3365
        %v4897 = vpop.f32.mrb[0].mxu0
        %v4898 = vadd.f32 0.0, %v4897
        %v4899 = vpop.f32.mrb[0].mxu0
        %v4900 = vadd.f32 0.0, %v4899
        %v4901 = vpop.f32.mrb[0].mxu0
        %v4902 = vadd.f32 0.0, %v4901
        %v4903 = vpop.f32.mrb[0].mxu0
        %v4904 = vadd.f32 0.0, %v4903
        %4905 = vmatprep.mubr.bf16.mxu0 %v4266
        %4906 = vmatmul.mubr.bf16.gmra.mrb[0].mxu0 %v3367
        %v4907 = vpop.f32.mrb[0].mxu0
        %v4908 = vadd.f32 0.0, %v4907
        %v4909 = vpop.f32.mrb[0].mxu0
        %v4910 = vadd.f32 0.0, %v4909
        %v4911 = vpop.f32.mrb[0].mxu0
        %v4912 = vadd.f32 0.0, %v4911
        %v4913 = vpop.f32.mrb[0].mxu0
        %v4914 = vadd.f32 0.0, %v4913
        %4915 = vmatprep.mubr.bf16.mxu0 %v4778
        %4916 = vmatmul.mubr.bf16.gmra.mrb[0].mxu0 %v4414
        %v4917 = vpop.f32.mrb[0].mxu0
        %v4918 = vadd.f32 0.0, %v4917
        %v4919 = vpop.f32.mrb[0].mxu0
        %v4920 = vadd.f32 0.0, %v4919
        %v4921 = vpop.f32.mrb[0].mxu0
        %v4922 = vadd.f32 0.0, %v4921
        %v4923 = vpop.f32.mrb[0].mxu0
        %v4924 = vadd.f32 0.0, %v4923
        %4925 = vdwg.mxu0
        %v4926 = vadd.f32 %v4303, %v4815
        %v4927 = vadd.f32 %v4305, %v4817
        %v4928 = vadd.f32 %v4376, %v4888
        %v4929 = vadd.f32 %v4378, %v4890
        %v4930 = vadd.f32 %v4307, %v4819
        %v4931 = vadd.f32 %v4309, %v4821
        %v4932 = vadd.f32 %v4380, %v4892
        %v4933 = vadd.f32 %v4382, %v4894
        %v4934 = vadd.f32 %v4313, %v4825
        %v4935 = vadd.f32 %v4315, %v4827
        %v4936 = vadd.f32 %v4386, %v4898
        %v4937 = vadd.f32 %v4388, %v4900
        %v4938 = vadd.f32 %v4317, %v4829
        %v4939 = vadd.f32 %v4319, %v4831
        %v4940 = vadd.f32 %v4390, %v4902
        %v4941 = vadd.f32 %v4392, %v4904
        %v4942 = vadd.f32 %v4323, %v4835
        %v4943 = vadd.f32 %v4325, %v4837
        %v4944 = vadd.f32 %v4396, %v4908
        %v4945 = vadd.f32 %v4398, %v4910
        %v4946 = vadd.f32 %v4327, %v4839
        %v4947 = vadd.f32 %v4329, %v4841
        %v4948 = vadd.f32 %v4400, %v4912
        %v4949 = vadd.f32 %v4402, %v4914
        %v4950 = vadd.f32 %v4333, %v4845
        %v4951 = vadd.f32 %v4335, %v4847
        %v4952 = vadd.f32 %v4406, %v4918
        %v4953 = vadd.f32 %v4408, %v4920
        %v4954 = vadd.f32 %v4337, %v4849
        %v4955 = vadd.f32 %v4339, %v4851
        %v4956 = vadd.f32 %v4410, %v4922
        %v4957 = vadd.f32 %v4412, %v4924
        %v4958 = vpack.c.bf16 %v3353, %v3349
        %v4959 = vpack.c.bf16 %v3356, %v3352
        %s4960 = scalar_lea.vmem %s3, 1440
        %v4961 = vld [vmem:[%s4960] sm:$0xff]
        %v4962 = vld [vmem:[%s4960 + $0x8] sm:$0xff]
        %v4963 = vld [vmem:[%s4960 + $0x10] sm:$0xff]
        %v4964 = vld [vmem:[%s4960 + $0x18] sm:$0xff]
        %v4965 = vld [vmem:[%s4960 + $0x20] sm:$0xff]
        %v4966 = vld [vmem:[%s4960 + $0x28] sm:$0xff]
        %v4967 = vld [vmem:[%s4960 + $0x30] sm:$0xff]
        %v4968 = vld [vmem:[%s4960 + $0x38] sm:$0xff]
        %v4969 = vld [vmem:[%s4960 + $0x40] sm:$0xff]
        %v4970 = vld [vmem:[%s4960 + $0x48] sm:$0xff]
        %v4971 = vld [vmem:[%s4960 + $0x50] sm:$0xff]
        %v4972 = vld [vmem:[%s4960 + $0x58] sm:$0xff]
        %v4973 = vld [vmem:[%s4960 + $0x60] sm:$0xff]
        %v4974 = vld [vmem:[%s4960 + $0x68] sm:$0xff]
        %v4975 = vld [vmem:[%s4960 + $0x70] sm:$0xff]
        %v4976 = vld [vmem:[%s4960 + $0x78] sm:$0xff]
        %v4977 = vld [vmem:[%s4960 + $0x80] sm:$0xff]
        %v4978 = vld [vmem:[%s4960 + $0x88] sm:$0xff]
        %v4979 = vld [vmem:[%s4960 + $0x90] sm:$0xff]
        %v4980 = vld [vmem:[%s4960 + $0x98] sm:$0xff]
        %v4981 = vld [vmem:[%s4960 + $0xa0] sm:$0xff]
        %v4982 = vld [vmem:[%s4960 + $0xa8] sm:$0xff]
        %v4983 = vld [vmem:[%s4960 + $0xb0] sm:$0xff]
        %v4984 = vld [vmem:[%s4960 + $0xb8] sm:$0xff]
        %v4985 = vld [vmem:[%s4960 + $0xc0] sm:$0xff]
        %v4986 = vld [vmem:[%s4960 + $0xc8] sm:$0xff]
        %v4987 = vld [vmem:[%s4960 + $0xd0] sm:$0xff]
        %v4988 = vld [vmem:[%s4960 + $0xd8] sm:$0xff]
        %v4989 = vld [vmem:[%s4960 + $0xe0] sm:$0xff]
        %v4990 = vld [vmem:[%s4960 + $0xe8] sm:$0xff]
        %v4991 = vld [vmem:[%s4960 + $0xf0] sm:$0xff]
        %v4992 = vld [vmem:[%s4960 + $0xf8] sm:$0xff]
        %v4993 = vld [vmem:[%s4960 + $0x100] sm:$0xff]
        %v4994 = vld [vmem:[%s4960 + $0x108] sm:$0xff]
        %v4995 = vld [vmem:[%s4960 + $0x110] sm:$0xff]
        %v4996 = vld [vmem:[%s4960 + $0x118] sm:$0xff]
        %v4997 = vld [vmem:[%s4960 + $0x120] sm:$0xff]
        %v4998 = vld [vmem:[%s4960 + $0x128] sm:$0xff]
        %v4999 = vld [vmem:[%s4960 + $0x130] sm:$0xff]
        %v5000 = vld [vmem:[%s4960 + $0x138] sm:$0xff]
        %v5001 = vld [vmem:[%s4960 + $0x140] sm:$0xff]
        %v5002 = vld [vmem:[%s4960 + $0x148] sm:$0xff]
        %v5003 = vld [vmem:[%s4960 + $0x150] sm:$0xff]
        %v5004 = vld [vmem:[%s4960 + $0x158] sm:$0xff]
        %v5005 = vld [vmem:[%s4960 + $0x160] sm:$0xff]
        %v5006 = vld [vmem:[%s4960 + $0x168] sm:$0xff]
        %v5007 = vld [vmem:[%s4960 + $0x170] sm:$0xff]
        %v5008 = vld [vmem:[%s4960 + $0x178] sm:$0xff]
        %v5009 = vld [vmem:[%s4960 + $0x180] sm:$0xff]
        %v5010 = vld [vmem:[%s4960 + $0x188] sm:$0xff]
        %v5011 = vld [vmem:[%s4960 + $0x190] sm:$0xff]
        %v5012 = vld [vmem:[%s4960 + $0x198] sm:$0xff]
        %v5013 = vld [vmem:[%s4960 + $0x1a0] sm:$0xff]
        %v5014 = vld [vmem:[%s4960 + $0x1a8] sm:$0xff]
        %v5015 = vld [vmem:[%s4960 + $0x1b0] sm:$0xff]
        %v5016 = vld [vmem:[%s4960 + $0x1b8] sm:$0xff]
        %v5017 = vld [vmem:[%s4960 + $0x1c0] sm:$0xff]
        %v5018 = vld [vmem:[%s4960 + $0x1c8] sm:$0xff]
        %v5019 = vld [vmem:[%s4960 + $0x1d0] sm:$0xff]
        %v5020 = vld [vmem:[%s4960 + $0x1d8] sm:$0xff]
        %v5081 = vunpack.c.l.b16 %v4961
        %v5082 = vunpack.c.h.b16 %v4961
        %v5083 = vunpack.c.l.b16 %v4962
        %v5084 = vunpack.c.h.b16 %v4962
        %v5085 = vunpack.c.l.b16 %v4963
        %v5086 = vunpack.c.h.b16 %v4963
        %v5087 = vunpack.c.l.b16 %v4964
        %v5088 = vunpack.c.h.b16 %v4964
        %v5089 = vunpack.c.l.b16 %v4965
        %v5090 = vunpack.c.h.b16 %v4965
        %v5091 = vunpack.c.l.b16 %v4966
        %v5092 = vunpack.c.h.b16 %v4966
        %v5093 = vunpack.c.l.b16 %v4967
        %v5094 = vunpack.c.h.b16 %v4967
        %v5095 = vunpack.c.l.b16 %v4968
        %v5096 = vunpack.c.h.b16 %v4968
        %v5097 = vunpack.c.l.b16 %v4969
        %v5098 = vunpack.c.h.b16 %v4969
        %v5099 = vunpack.c.l.b16 %v4970
        %v5100 = vunpack.c.h.b16 %v4970
        %v5101 = vunpack.c.l.b16 %v4971
        %v5102 = vunpack.c.h.b16 %v4971
        %v5103 = vunpack.c.l.b16 %v4972
        %v5104 = vunpack.c.h.b16 %v4972
        %v5105 = vunpack.c.l.b16 %v4973
        %v5106 = vunpack.c.h.b16 %v4973
        %v5107 = vunpack.c.l.b16 %v4974
        %v5108 = vunpack.c.h.b16 %v4974
        %v5109 = vunpack.c.l.b16 %v4975
        %v5110 = vunpack.c.h.b16 %v4975
        %v5111 = vunpack.c.l.b16 %v4976
        %v5112 = vunpack.c.h.b16 %v4976
        %v5113 = vunpack.c.l.b16 %v4977
        %v5114 = vunpack.c.h.b16 %v4977
        %v5115 = vunpack.c.l.b16 %v4978
        %v5116 = vunpack.c.h.b16 %v4978
        %v5117 = vunpack.c.l.b16 %v4979
        %v5118 = vunpack.c.h.b16 %v4979
        %v5119 = vunpack.c.l.b16 %v4980
        %v5120 = vunpack.c.h.b16 %v4980
        %v5121 = vunpack.c.l.b16 %v4981
        %v5122 = vunpack.c.h.b16 %v4981
        %v5123 = vunpack.c.l.b16 %v4982
        %v5124 = vunpack.c.h.b16 %v4982
        %v5125 = vunpack.c.l.b16 %v4983
        %v5126 = vunpack.c.h.b16 %v4983
        %v5127 = vunpack.c.l.b16 %v4984
        %v5128 = vunpack.c.h.b16 %v4984
        %v5129 = vunpack.c.l.b16 %v4985
        %v5130 = vunpack.c.h.b16 %v4985
        %v5131 = vunpack.c.l.b16 %v4986
        %v5132 = vunpack.c.h.b16 %v4986
        %v5133 = vunpack.c.l.b16 %v4987
        %v5134 = vunpack.c.h.b16 %v4987
        %v5135 = vunpack.c.l.b16 %v4988
        %v5136 = vunpack.c.h.b16 %v4988
        %v5137 = vunpack.c.l.b16 %v4989
        %v5138 = vunpack.c.h.b16 %v4989
        %v5139 = vunpack.c.l.b16 %v4990
        %v5140 = vunpack.c.h.b16 %v4990
        %v5141 = vunpack.c.l.b16 %v4991
        %v5142 = vunpack.c.h.b16 %v4991
        %v5143 = vunpack.c.l.b16 %v4992
        %v5144 = vunpack.c.h.b16 %v4992
        %v5145 = vunpack.c.l.b16 %v4993
        %v5146 = vunpack.c.h.b16 %v4993
        %v5147 = vunpack.c.l.b16 %v4994
        %v5148 = vunpack.c.h.b16 %v4994
        %v5149 = vunpack.c.l.b16 %v4995
        %v5150 = vunpack.c.h.b16 %v4995
        %v5151 = vunpack.c.l.b16 %v4996
        %v5152 = vunpack.c.h.b16 %v4996
        %v5153 = vunpack.c.l.b16 %v4997
        %v5154 = vunpack.c.h.b16 %v4997
        %v5155 = vunpack.c.l.b16 %v4998
        %v5156 = vunpack.c.h.b16 %v4998
        %v5157 = vunpack.c.l.b16 %v4999
        %v5158 = vunpack.c.h.b16 %v4999
        %v5159 = vunpack.c.l.b16 %v5000
        %v5160 = vunpack.c.h.b16 %v5000
        %v5161 = vunpack.c.l.b16 %v5001
        %v5162 = vunpack.c.h.b16 %v5001
        %v5163 = vunpack.c.l.b16 %v5002
        %v5164 = vunpack.c.h.b16 %v5002
        %v5165 = vunpack.c.l.b16 %v5003
        %v5166 = vunpack.c.h.b16 %v5003
        %v5167 = vunpack.c.l.b16 %v5004
        %v5168 = vunpack.c.h.b16 %v5004
        %v5169 = vunpack.c.l.b16 %v5005
        %v5170 = vunpack.c.h.b16 %v5005
        %v5171 = vunpack.c.l.b16 %v5006
        %v5172 = vunpack.c.h.b16 %v5006
        %v5173 = vunpack.c.l.b16 %v5007
        %v5174 = vunpack.c.h.b16 %v5007
        %v5175 = vunpack.c.l.b16 %v5008
        %v5176 = vunpack.c.h.b16 %v5008
        %v5177 = vunpack.c.l.b16 %v5009
        %v5178 = vunpack.c.h.b16 %v5009
        %v5179 = vunpack.c.l.b16 %v5010
        %v5180 = vunpack.c.h.b16 %v5010
        %v5181 = vunpack.c.l.b16 %v5011
        %v5182 = vunpack.c.h.b16 %v5011
        %v5183 = vunpack.c.l.b16 %v5012
        %v5184 = vunpack.c.h.b16 %v5012
        %v5185 = vunpack.c.l.b16 %v5013
        %v5186 = vunpack.c.h.b16 %v5013
        %v5187 = vunpack.c.l.b16 %v5014
        %v5188 = vunpack.c.h.b16 %v5014
        %v5189 = vunpack.c.l.b16 %v5015
        %v5190 = vunpack.c.h.b16 %v5015
        %v5191 = vunpack.c.l.b16 %v5016
        %v5192 = vunpack.c.h.b16 %v5016
        %v5193 = vunpack.c.l.b16 %v5017
        %v5194 = vunpack.c.h.b16 %v5017
        %v5195 = vunpack.c.l.b16 %v5018
        %v5196 = vunpack.c.h.b16 %v5018
        %v5197 = vunpack.c.l.b16 %v5019
        %v5198 = vunpack.c.h.b16 %v5019
        %v5199 = vunpack.c.l.b16 %v5020
        %v5200 = vunpack.c.h.b16 %v5020
        %v5201 = vpack.c.b16 %v5085, %v5081
        %v5202 = vpack.c.b16 %v5086, %v5082
        %v5203 = vpack.c.b16 %v5087, %v5083
        %v5204 = vpack.c.b16 %v5088, %v5084
        %v5205 = vpack.c.b16 %v5093, %v5089
        %v5206 = vpack.c.b16 %v5094, %v5090
        %v5207 = vpack.c.b16 %v5095, %v5091
        %v5208 = vpack.c.b16 %v5096, %v5092
        %v5209 = vpack.c.b16 %v5101, %v5097
        %v5210 = vpack.c.b16 %v5102, %v5098
        %v5211 = vpack.c.b16 %v5103, %v5099
        %v5212 = vpack.c.b16 %v5104, %v5100
        %v5213 = vpack.c.b16 %v5109, %v5105
        %v5214 = vpack.c.b16 %v5110, %v5106
        %v5215 = vpack.c.b16 %v5111, %v5107
        %v5216 = vpack.c.b16 %v5112, %v5108
        %v5217 = vpack.c.b16 %v5117, %v5113
        %v5218 = vpack.c.b16 %v5118, %v5114
        %v5219 = vpack.c.b16 %v5119, %v5115
        %v5220 = vpack.c.b16 %v5120, %v5116
        %v5221 = vpack.c.b16 %v5125, %v5121
        %v5222 = vpack.c.b16 %v5126, %v5122
        %v5223 = vpack.c.b16 %v5127, %v5123
        %v5224 = vpack.c.b16 %v5128, %v5124
        %v5225 = vpack.c.b16 %v5133, %v5129
        %v5226 = vpack.c.b16 %v5134, %v5130
        %v5227 = vpack.c.b16 %v5135, %v5131
        %v5228 = vpack.c.b16 %v5136, %v5132
        %v5229 = vpack.c.b16 %v5141, %v5137
        %v5230 = vpack.c.b16 %v5142, %v5138
        %v5231 = vpack.c.b16 %v5143, %v5139
        %v5232 = vpack.c.b16 %v5144, %v5140
        %v5233 = vpack.c.b16 %v5149, %v5145
        %v5234 = vpack.c.b16 %v5150, %v5146
        %v5235 = vpack.c.b16 %v5151, %v5147
        %v5236 = vpack.c.b16 %v5152, %v5148
        %v5237 = vpack.c.b16 %v5157, %v5153
        %v5238 = vpack.c.b16 %v5158, %v5154
        %v5239 = vpack.c.b16 %v5159, %v5155
        %v5240 = vpack.c.b16 %v5160, %v5156
        %v5241 = vpack.c.b16 %v5165, %v5161
        %v5242 = vpack.c.b16 %v5166, %v5162
        %v5243 = vpack.c.b16 %v5167, %v5163
        %v5244 = vpack.c.b16 %v5168, %v5164
        %v5245 = vpack.c.b16 %v5173, %v5169
        %v5246 = vpack.c.b16 %v5174, %v5170
        %v5247 = vpack.c.b16 %v5175, %v5171
        %v5248 = vpack.c.b16 %v5176, %v5172
        %v5249 = vpack.c.b16 %v5181, %v5177
        %v5250 = vpack.c.b16 %v5182, %v5178
        %v5251 = vpack.c.b16 %v5183, %v5179
        %v5252 = vpack.c.b16 %v5184, %v5180
        %v5253 = vpack.c.b16 %v5189, %v5185
        %v5254 = vpack.c.b16 %v5190, %v5186
        %v5255 = vpack.c.b16 %v5191, %v5187
        %v5256 = vpack.c.b16 %v5192, %v5188
        %v5257 = vpack.c.b16 %v5197, %v5193
        %v5258 = vpack.c.b16 %v5198, %v5194
        %v5259 = vpack.c.b16 %v5199, %v5195
        %v5260 = vpack.c.b16 %v5200, %v5196
        %v5322 = vsel %vm3313, %v4959, 0
        %5324 = vmatprep.subr.bf16.mxu0 %v5202
        %5325 = vmatpush1.bf16.msra.mxu0 %v5201
        %5326 = vmatprep.subr.bf16.mxu0 %v5206
        %5327 = vmatpush1.bf16.msra.mxu0 %v5205
        %5328 = vmatprep.subr.bf16.mxu0 %v5210
        %5329 = vmatpush1.bf16.msra.mxu0 %v5209
        %5330 = vmatprep.subr.bf16.mxu0 %v5214
        %5331 = vmatpush1.bf16.msra.mxu0 %v5213
        %5332 = vmatprep.subr.bf16.mxu0 %v5218
        %5333 = vmatpush1.bf16.msra.mxu0 %v5217
        %5334 = vmatprep.subr.bf16.mxu0 %v5222
        %5335 = vmatpush1.bf16.msra.mxu0 %v5221
        %5336 = vmatprep.subr.bf16.mxu0 %v5226
        %5337 = vmatpush1.bf16.msra.mxu0 %v5225
        %5338 = vmatprep.subr.bf16.mxu0 %v5230
        %5339 = vmatpush1.bf16.msra.mxu0 %v5229
        %5340 = vmatprep.subr.bf16.mxu0 %v5234
        %5341 = vmatpush1.bf16.msra.mxu0 %v5233
        %5342 = vmatprep.subr.bf16.mxu0 %v5238
        %5343 = vmatpush1.bf16.msra.mxu0 %v5237
        %5344 = vmatprep.subr.bf16.mxu0 %v5242
        %5345 = vmatpush1.bf16.msra.mxu0 %v5241
        %5346 = vmatprep.subr.bf16.mxu0 %v5246
        %5347 = vmatpush1.bf16.msra.mxu0 %v5245
        %5348 = vmatprep.subr.bf16.mxu0 %v5250
        %5349 = vmatpush1.bf16.msra.mxu0 %v5249
        %5350 = vmatprep.subr.bf16.mxu0 %v5254
        %5351 = vmatpush1.bf16.msra.mxu0 %v5253
        %5352 = vmatprep.subr.bf16.mxu0 %v5258
        %5353 = vmatpush1.bf16.msra.mxu0 %v5257
        %5354 = vmatprep.subr.bf16.mxu0 0
        %5355 = vmatpush1.bf16.msra.mxu0 0
        %5356 = vmatprep.mubr.bf16.mxu0 %v3802
        %5357 = vmatmul.mubr.bf16.gmra.mrb[0].mxu0 %v3431
        %v5358 = vpop.f32.mrb[0].mxu0
        %v5359 = vadd.f32 0.0, %v5358
        %v5360 = vpop.f32.mrb[0].mxu0
        %v5361 = vadd.f32 0.0, %v5360
        %v5362 = vpop.f32.mrb[0].mxu0
        %v5363 = vadd.f32 0.0, %v5362
        %v5364 = vpop.f32.mrb[0].mxu0
        %v5365 = vadd.f32 0.0, %v5364
        %5366 = vmatprep.mubr.bf16.mxu0 %v3805
        %5367 = vmatmul.mubr.bf16.gmra.mrb[0].mxu0 %v3433
        %v5368 = vpop.f32.mrb[0].mxu0
        %v5369 = vadd.f32 0.0, %v5368
        %v5370 = vpop.f32.mrb[0].mxu0
        %v5371 = vadd.f32 0.0, %v5370
        %v5372 = vpop.f32.mrb[0].mxu0
        %v5373 = vadd.f32 0.0, %v5372
        %v5374 = vpop.f32.mrb[0].mxu0
        %v5375 = vadd.f32 0.0, %v5374
        %5376 = vmatprep.mubr.bf16.mxu0 %v3808
        %5377 = vmatmul.mubr.bf16.gmra.mrb[0].mxu0 %v3435
        %v5378 = vpop.f32.mrb[0].mxu0
        %v5379 = vadd.f32 0.0, %v5378
        %v5380 = vpop.f32.mrb[0].mxu0
        %v5381 = vadd.f32 0.0, %v5380
        %v5382 = vpop.f32.mrb[0].mxu0
        %v5383 = vadd.f32 0.0, %v5382
        %v5384 = vpop.f32.mrb[0].mxu0
        %v5385 = vadd.f32 0.0, %v5384
        %5386 = vmatprep.mubr.bf16.mxu0 %v5322
        %5387 = vmatmul.mubr.bf16.gmra.mrb[0].mxu0 %v4958
        %v5388 = vpop.f32.mrb[0].mxu0
        %v5389 = vadd.f32 0.0, %v5388
        %v5390 = vpop.f32.mrb[0].mxu0
        %v5391 = vadd.f32 0.0, %v5390
        %v5392 = vpop.f32.mrb[0].mxu0
        %v5393 = vadd.f32 0.0, %v5392
        %v5394 = vpop.f32.mrb[0].mxu0
        %v5395 = vadd.f32 0.0, %v5394
        %5396 = vdwg.mxu0
        %5397 = vmatprep.subr.bf16.mxu0 %v5204
        %5398 = vmatpush1.bf16.msra.mxu0 %v5203
        %5399 = vmatprep.subr.bf16.mxu0 %v5208
        %5400 = vmatpush1.bf16.msra.mxu0 %v5207
        %5401 = vmatprep.subr.bf16.mxu0 %v5212
        %5402 = vmatpush1.bf16.msra.mxu0 %v5211
        %5403 = vmatprep.subr.bf16.mxu0 %v5216
        %5404 = vmatpush1.bf16.msra.mxu0 %v5215
        %5405 = vmatprep.subr.bf16.mxu0 %v5220
        %5406 = vmatpush1.bf16.msra.mxu0 %v5219
        %5407 = vmatprep.subr.bf16.mxu0 %v5224
        %5408 = vmatpush1.bf16.msra.mxu0 %v5223
        %5409 = vmatprep.subr.bf16.mxu0 %v5228
        %5410 = vmatpush1.bf16.msra.mxu0 %v5227
        %5411 = vmatprep.subr.bf16.mxu0 %v5232
        %5412 = vmatpush1.bf16.msra.mxu0 %v5231
        %5413 = vmatprep.subr.bf16.mxu0 %v5236
        %5414 = vmatpush1.bf16.msra.mxu0 %v5235
        %5415 = vmatprep.subr.bf16.mxu0 %v5240
        %5416 = vmatpush1.bf16.msra.mxu0 %v5239
        %5417 = vmatprep.subr.bf16.mxu0 %v5244
        %5418 = vmatpush1.bf16.msra.mxu0 %v5243
        %5419 = vmatprep.subr.bf16.mxu0 %v5248
        %5420 = vmatpush1.bf16.msra.mxu0 %v5247
        %5421 = vmatprep.subr.bf16.mxu0 %v5252
        %5422 = vmatpush1.bf16.msra.mxu0 %v5251
        %5423 = vmatprep.subr.bf16.mxu0 %v5256
        %5424 = vmatpush1.bf16.msra.mxu0 %v5255
        %5425 = vmatprep.subr.bf16.mxu0 %v5260
        %5426 = vmatpush1.bf16.msra.mxu0 %v5259
        %5427 = vmatprep.subr.bf16.mxu0 0
        %5428 = vmatpush1.bf16.msra.mxu0 0
        %5429 = vmatprep.mubr.bf16.mxu0 %v3802
        %5430 = vmatmul.mubr.bf16.gmra.mrb[0].mxu0 %v3431
        %v5431 = vpop.f32.mrb[0].mxu0
        %v5432 = vadd.f32 0.0, %v5431
        %v5433 = vpop.f32.mrb[0].mxu0
        %v5434 = vadd.f32 0.0, %v5433
        %v5435 = vpop.f32.mrb[0].mxu0
        %v5436 = vadd.f32 0.0, %v5435
        %v5437 = vpop.f32.mrb[0].mxu0
        %v5438 = vadd.f32 0.0, %v5437
        %5439 = vmatprep.mubr.bf16.mxu0 %v3805
        %5440 = vmatmul.mubr.bf16.gmra.mrb[0].mxu0 %v3433
        %v5441 = vpop.f32.mrb[0].mxu0
        %v5442 = vadd.f32 0.0, %v5441
        %v5443 = vpop.f32.mrb[0].mxu0
        %v5444 = vadd.f32 0.0, %v5443
        %v5445 = vpop.f32.mrb[0].mxu0
        %v5446 = vadd.f32 0.0, %v5445
        %v5447 = vpop.f32.mrb[0].mxu0
        %v5448 = vadd.f32 0.0, %v5447
        %5449 = vmatprep.mubr.bf16.mxu0 %v3808
        %5450 = vmatmul.mubr.bf16.gmra.mrb[0].mxu0 %v3435
        %v5451 = vpop.f32.mrb[0].mxu0
        %v5452 = vadd.f32 0.0, %v5451
        %v5453 = vpop.f32.mrb[0].mxu0
        %v5454 = vadd.f32 0.0, %v5453
        %v5455 = vpop.f32.mrb[0].mxu0
        %v5456 = vadd.f32 0.0, %v5455
        %v5457 = vpop.f32.mrb[0].mxu0
        %v5458 = vadd.f32 0.0, %v5457
        %5459 = vmatprep.mubr.bf16.mxu0 %v5322
        %5460 = vmatmul.mubr.bf16.gmra.mrb[0].mxu0 %v4958
        %v5461 = vpop.f32.mrb[0].mxu0
        %v5462 = vadd.f32 0.0, %v5461
        %v5463 = vpop.f32.mrb[0].mxu0
        %v5464 = vadd.f32 0.0, %v5463
        %v5465 = vpop.f32.mrb[0].mxu0
        %v5466 = vadd.f32 0.0, %v5465
        %v5467 = vpop.f32.mrb[0].mxu0
        %v5468 = vadd.f32 0.0, %v5467
        %5469 = vdwg.mxu0
        %v5470 = vadd.f32 %v4926, %v5359
        %v5471 = vadd.f32 %v4927, %v5361
        %v5472 = vadd.f32 %v4928, %v5432
        %v5473 = vadd.f32 %v4929, %v5434
        %v5474 = vadd.f32 %v4930, %v5363
        %v5475 = vadd.f32 %v4931, %v5365
        %v5476 = vadd.f32 %v4932, %v5436
        %v5477 = vadd.f32 %v4933, %v5438
        %v5478 = vadd.f32 %v4934, %v5369
        %v5479 = vadd.f32 %v4935, %v5371
        %v5480 = vadd.f32 %v4936, %v5442
        %v5481 = vadd.f32 %v4937, %v5444
        %v5482 = vadd.f32 %v4938, %v5373
        %v5483 = vadd.f32 %v4939, %v5375
        %v5484 = vadd.f32 %v4940, %v5446
        %v5485 = vadd.f32 %v4941, %v5448
        %v5486 = vadd.f32 %v4942, %v5379
        %v5487 = vadd.f32 %v4943, %v5381
        %v5488 = vadd.f32 %v4944, %v5452
        %v5489 = vadd.f32 %v4945, %v5454
        %v5490 = vadd.f32 %v4946, %v5383
        %v5491 = vadd.f32 %v4947, %v5385
        %v5492 = vadd.f32 %v4948, %v5456
        %v5493 = vadd.f32 %v4949, %v5458
        %v5494 = vadd.f32 %v4950, %v5389
        %v5495 = vadd.f32 %v4951, %v5391
        %v5496 = vadd.f32 %v4952, %v5462
        %v5497 = vadd.f32 %v4953, %v5464
        %v5498 = vadd.f32 %v4954, %v5393
        %v5499 = vadd.f32 %v4955, %v5395
        %v5500 = vadd.f32 %v4956, %v5466
        %v5501 = vadd.f32 %v4957, %v5468
        %v5502 = vpack.c.bf16 %v3357, %v3353
        %v5503 = vpack.c.bf16 %v3360, %v3356
        %s5504 = scalar_lea.vmem %s3, 1920
        %v5505 = vld [vmem:[%s5504] sm:$0xff]
        %v5506 = vld [vmem:[%s5504 + $0x8] sm:$0xff]
        %v5507 = vld [vmem:[%s5504 + $0x10] sm:$0xff]
        %v5508 = vld [vmem:[%s5504 + $0x18] sm:$0xff]
        %v5509 = vld [vmem:[%s5504 + $0x20] sm:$0xff]
        %v5510 = vld [vmem:[%s5504 + $0x28] sm:$0xff]
        %v5511 = vld [vmem:[%s5504 + $0x30] sm:$0xff]
        %v5512 = vld [vmem:[%s5504 + $0x38] sm:$0xff]
        %v5513 = vld [vmem:[%s5504 + $0x40] sm:$0xff]
        %v5514 = vld [vmem:[%s5504 + $0x48] sm:$0xff]
        %v5515 = vld [vmem:[%s5504 + $0x50] sm:$0xff]
        %v5516 = vld [vmem:[%s5504 + $0x58] sm:$0xff]
        %v5517 = vld [vmem:[%s5504 + $0x60] sm:$0xff]
        %v5518 = vld [vmem:[%s5504 + $0x68] sm:$0xff]
        %v5519 = vld [vmem:[%s5504 + $0x70] sm:$0xff]
        %v5520 = vld [vmem:[%s5504 + $0x78] sm:$0xff]
        %v5521 = vld [vmem:[%s5504 + $0x80] sm:$0xff]
        %v5522 = vld [vmem:[%s5504 + $0x88] sm:$0xff]
        %v5523 = vld [vmem:[%s5504 + $0x90] sm:$0xff]
        %v5524 = vld [vmem:[%s5504 + $0x98] sm:$0xff]
        %v5525 = vld [vmem:[%s5504 + $0xa0] sm:$0xff]
        %v5526 = vld [vmem:[%s5504 + $0xa8] sm:$0xff]
        %v5527 = vld [vmem:[%s5504 + $0xb0] sm:$0xff]
        %v5528 = vld [vmem:[%s5504 + $0xb8] sm:$0xff]
        %v5529 = vld [vmem:[%s5504 + $0xc0] sm:$0xff]
        %v5530 = vld [vmem:[%s5504 + $0xc8] sm:$0xff]
        %v5531 = vld [vmem:[%s5504 + $0xd0] sm:$0xff]
        %v5532 = vld [vmem:[%s5504 + $0xd8] sm:$0xff]
        %v5533 = vld [vmem:[%s5504 + $0xe0] sm:$0xff]
        %v5534 = vld [vmem:[%s5504 + $0xe8] sm:$0xff]
        %v5535 = vld [vmem:[%s5504 + $0xf0] sm:$0xff]
        %v5536 = vld [vmem:[%s5504 + $0xf8] sm:$0xff]
        %v5537 = vld [vmem:[%s5504 + $0x100] sm:$0xff]
        %v5538 = vld [vmem:[%s5504 + $0x108] sm:$0xff]
        %v5539 = vld [vmem:[%s5504 + $0x110] sm:$0xff]
        %v5540 = vld [vmem:[%s5504 + $0x118] sm:$0xff]
        %v5541 = vld [vmem:[%s5504 + $0x120] sm:$0xff]
        %v5542 = vld [vmem:[%s5504 + $0x128] sm:$0xff]
        %v5543 = vld [vmem:[%s5504 + $0x130] sm:$0xff]
        %v5544 = vld [vmem:[%s5504 + $0x138] sm:$0xff]
        %v5545 = vld [vmem:[%s5504 + $0x140] sm:$0xff]
        %v5546 = vld [vmem:[%s5504 + $0x148] sm:$0xff]
        %v5547 = vld [vmem:[%s5504 + $0x150] sm:$0xff]
        %v5548 = vld [vmem:[%s5504 + $0x158] sm:$0xff]
        %v5549 = vld [vmem:[%s5504 + $0x160] sm:$0xff]
        %v5550 = vld [vmem:[%s5504 + $0x168] sm:$0xff]
        %v5551 = vld [vmem:[%s5504 + $0x170] sm:$0xff]
        %v5552 = vld [vmem:[%s5504 + $0x178] sm:$0xff]
        %v5553 = vld [vmem:[%s5504 + $0x180] sm:$0xff]
        %v5554 = vld [vmem:[%s5504 + $0x188] sm:$0xff]
        %v5555 = vld [vmem:[%s5504 + $0x190] sm:$0xff]
        %v5556 = vld [vmem:[%s5504 + $0x198] sm:$0xff]
        %v5557 = vld [vmem:[%s5504 + $0x1a0] sm:$0xff]
        %v5558 = vld [vmem:[%s5504 + $0x1a8] sm:$0xff]
        %v5559 = vld [vmem:[%s5504 + $0x1b0] sm:$0xff]
        %v5560 = vld [vmem:[%s5504 + $0x1b8] sm:$0xff]
        %v5561 = vld [vmem:[%s5504 + $0x1c0] sm:$0xff]
        %v5562 = vld [vmem:[%s5504 + $0x1c8] sm:$0xff]
        %v5563 = vld [vmem:[%s5504 + $0x1d0] sm:$0xff]
        %v5564 = vld [vmem:[%s5504 + $0x1d8] sm:$0xff]
        %v5625 = vunpack.c.l.b16 %v5505
        %v5626 = vunpack.c.h.b16 %v5505
        %v5627 = vunpack.c.l.b16 %v5506
        %v5628 = vunpack.c.h.b16 %v5506
        %v5629 = vunpack.c.l.b16 %v5507
        %v5630 = vunpack.c.h.b16 %v5507
        %v5631 = vunpack.c.l.b16 %v5508
        %v5632 = vunpack.c.h.b16 %v5508
        %v5633 = vunpack.c.l.b16 %v5509
        %v5634 = vunpack.c.h.b16 %v5509
        %v5635 = vunpack.c.l.b16 %v5510
        %v5636 = vunpack.c.h.b16 %v5510
        %v5637 = vunpack.c.l.b16 %v5511
        %v5638 = vunpack.c.h.b16 %v5511
        %v5639 = vunpack.c.l.b16 %v5512
        %v5640 = vunpack.c.h.b16 %v5512
        %v5641 = vunpack.c.l.b16 %v5513
        %v5642 = vunpack.c.h.b16 %v5513
        %v5643 = vunpack.c.l.b16 %v5514
        %v5644 = vunpack.c.h.b16 %v5514
        %v5645 = vunpack.c.l.b16 %v5515
        %v5646 = vunpack.c.h.b16 %v5515
        %v5647 = vunpack.c.l.b16 %v5516
        %v5648 = vunpack.c.h.b16 %v5516
        %v5649 = vunpack.c.l.b16 %v5517
        %v5650 = vunpack.c.h.b16 %v5517
        %v5651 = vunpack.c.l.b16 %v5518
        %v5652 = vunpack.c.h.b16 %v5518
        %v5653 = vunpack.c.l.b16 %v5519
        %v5654 = vunpack.c.h.b16 %v5519
        %v5655 = vunpack.c.l.b16 %v5520
        %v5656 = vunpack.c.h.b16 %v5520
        %v5657 = vunpack.c.l.b16 %v5521
        %v5658 = vunpack.c.h.b16 %v5521
        %v5659 = vunpack.c.l.b16 %v5522
        %v5660 = vunpack.c.h.b16 %v5522
        %v5661 = vunpack.c.l.b16 %v5523
        %v5662 = vunpack.c.h.b16 %v5523
        %v5663 = vunpack.c.l.b16 %v5524
        %v5664 = vunpack.c.h.b16 %v5524
        %v5665 = vunpack.c.l.b16 %v5525
        %v5666 = vunpack.c.h.b16 %v5525
        %v5667 = vunpack.c.l.b16 %v5526
        %v5668 = vunpack.c.h.b16 %v5526
        %v5669 = vunpack.c.l.b16 %v5527
        %v5670 = vunpack.c.h.b16 %v5527
        %v5671 = vunpack.c.l.b16 %v5528
        %v5672 = vunpack.c.h.b16 %v5528
        %v5673 = vunpack.c.l.b16 %v5529
        %v5674 = vunpack.c.h.b16 %v5529
        %v5675 = vunpack.c.l.b16 %v5530
        %v5676 = vunpack.c.h.b16 %v5530
        %v5677 = vunpack.c.l.b16 %v5531
        %v5678 = vunpack.c.h.b16 %v5531
        %v5679 = vunpack.c.l.b16 %v5532
        %v5680 = vunpack.c.h.b16 %v5532
        %v5681 = vunpack.c.l.b16 %v5533
        %v5682 = vunpack.c.h.b16 %v5533
        %v5683 = vunpack.c.l.b16 %v5534
        %v5684 = vunpack.c.h.b16 %v5534
        %v5685 = vunpack.c.l.b16 %v5535
        %v5686 = vunpack.c.h.b16 %v5535
        %v5687 = vunpack.c.l.b16 %v5536
        %v5688 = vunpack.c.h.b16 %v5536
        %v5689 = vunpack.c.l.b16 %v5537
        %v5690 = vunpack.c.h.b16 %v5537
        %v5691 = vunpack.c.l.b16 %v5538
        %v5692 = vunpack.c.h.b16 %v5538
        %v5693 = vunpack.c.l.b16 %v5539
        %v5694 = vunpack.c.h.b16 %v5539
        %v5695 = vunpack.c.l.b16 %v5540
        %v5696 = vunpack.c.h.b16 %v5540
        %v5697 = vunpack.c.l.b16 %v5541
        %v5698 = vunpack.c.h.b16 %v5541
        %v5699 = vunpack.c.l.b16 %v5542
        %v5700 = vunpack.c.h.b16 %v5542
        %v5701 = vunpack.c.l.b16 %v5543
        %v5702 = vunpack.c.h.b16 %v5543
        %v5703 = vunpack.c.l.b16 %v5544
        %v5704 = vunpack.c.h.b16 %v5544
        %v5705 = vunpack.c.l.b16 %v5545
        %v5706 = vunpack.c.h.b16 %v5545
        %v5707 = vunpack.c.l.b16 %v5546
        %v5708 = vunpack.c.h.b16 %v5546
        %v5709 = vunpack.c.l.b16 %v5547
        %v5710 = vunpack.c.h.b16 %v5547
        %v5711 = vunpack.c.l.b16 %v5548
        %v5712 = vunpack.c.h.b16 %v5548
        %v5713 = vunpack.c.l.b16 %v5549
        %v5714 = vunpack.c.h.b16 %v5549
        %v5715 = vunpack.c.l.b16 %v5550
        %v5716 = vunpack.c.h.b16 %v5550
        %v5717 = vunpack.c.l.b16 %v5551
        %v5718 = vunpack.c.h.b16 %v5551
        %v5719 = vunpack.c.l.b16 %v5552
        %v5720 = vunpack.c.h.b16 %v5552
        %v5721 = vunpack.c.l.b16 %v5553
        %v5722 = vunpack.c.h.b16 %v5553
        %v5723 = vunpack.c.l.b16 %v5554
        %v5724 = vunpack.c.h.b16 %v5554
        %v5725 = vunpack.c.l.b16 %v5555
        %v5726 = vunpack.c.h.b16 %v5555
        %v5727 = vunpack.c.l.b16 %v5556
        %v5728 = vunpack.c.h.b16 %v5556
        %v5729 = vunpack.c.l.b16 %v5557
        %v5730 = vunpack.c.h.b16 %v5557
        %v5731 = vunpack.c.l.b16 %v5558
        %v5732 = vunpack.c.h.b16 %v5558
        %v5733 = vunpack.c.l.b16 %v5559
        %v5734 = vunpack.c.h.b16 %v5559
        %v5735 = vunpack.c.l.b16 %v5560
        %v5736 = vunpack.c.h.b16 %v5560
        %v5737 = vunpack.c.l.b16 %v5561
        %v5738 = vunpack.c.h.b16 %v5561
        %v5739 = vunpack.c.l.b16 %v5562
        %v5740 = vunpack.c.h.b16 %v5562
        %v5741 = vunpack.c.l.b16 %v5563
        %v5742 = vunpack.c.h.b16 %v5563
        %v5743 = vunpack.c.l.b16 %v5564
        %v5744 = vunpack.c.h.b16 %v5564
        %v5745 = vpack.c.b16 %v5629, %v5625
        %v5746 = vpack.c.b16 %v5630, %v5626
        %v5747 = vpack.c.b16 %v5631, %v5627
        %v5748 = vpack.c.b16 %v5632, %v5628
        %v5749 = vpack.c.b16 %v5637, %v5633
        %v5750 = vpack.c.b16 %v5638, %v5634
        %v5751 = vpack.c.b16 %v5639, %v5635
        %v5752 = vpack.c.b16 %v5640, %v5636
        %v5753 = vpack.c.b16 %v5645, %v5641
        %v5754 = vpack.c.b16 %v5646, %v5642
        %v5755 = vpack.c.b16 %v5647, %v5643
        %v5756 = vpack.c.b16 %v5648, %v5644
        %v5757 = vpack.c.b16 %v5653, %v5649
        %v5758 = vpack.c.b16 %v5654, %v5650
        %v5759 = vpack.c.b16 %v5655, %v5651
        %v5760 = vpack.c.b16 %v5656, %v5652
        %v5761 = vpack.c.b16 %v5661, %v5657
        %v5762 = vpack.c.b16 %v5662, %v5658
        %v5763 = vpack.c.b16 %v5663, %v5659
        %v5764 = vpack.c.b16 %v5664, %v5660
        %v5765 = vpack.c.b16 %v5669, %v5665
        %v5766 = vpack.c.b16 %v5670, %v5666
        %v5767 = vpack.c.b16 %v5671, %v5667
        %v5768 = vpack.c.b16 %v5672, %v5668
        %v5769 = vpack.c.b16 %v5677, %v5673
        %v5770 = vpack.c.b16 %v5678, %v5674
        %v5771 = vpack.c.b16 %v5679, %v5675
        %v5772 = vpack.c.b16 %v5680, %v5676
        %v5773 = vpack.c.b16 %v5685, %v5681
        %v5774 = vpack.c.b16 %v5686, %v5682
        %v5775 = vpack.c.b16 %v5687, %v5683
        %v5776 = vpack.c.b16 %v5688, %v5684
        %v5777 = vpack.c.b16 %v5693, %v5689
        %v5778 = vpack.c.b16 %v5694, %v5690
        %v5779 = vpack.c.b16 %v5695, %v5691
        %v5780 = vpack.c.b16 %v5696, %v5692
        %v5781 = vpack.c.b16 %v5701, %v5697
        %v5782 = vpack.c.b16 %v5702, %v5698
        %v5783 = vpack.c.b16 %v5703, %v5699
        %v5784 = vpack.c.b16 %v5704, %v5700
        %v5785 = vpack.c.b16 %v5709, %v5705
        %v5786 = vpack.c.b16 %v5710, %v5706
        %v5787 = vpack.c.b16 %v5711, %v5707
        %v5788 = vpack.c.b16 %v5712, %v5708
        %v5789 = vpack.c.b16 %v5717, %v5713
        %v5790 = vpack.c.b16 %v5718, %v5714
        %v5791 = vpack.c.b16 %v5719, %v5715
        %v5792 = vpack.c.b16 %v5720, %v5716
        %v5793 = vpack.c.b16 %v5725, %v5721
        %v5794 = vpack.c.b16 %v5726, %v5722
        %v5795 = vpack.c.b16 %v5727, %v5723
        %v5796 = vpack.c.b16 %v5728, %v5724
        %v5797 = vpack.c.b16 %v5733, %v5729
        %v5798 = vpack.c.b16 %v5734, %v5730
        %v5799 = vpack.c.b16 %v5735, %v5731
        %v5800 = vpack.c.b16 %v5736, %v5732
        %v5801 = vpack.c.b16 %v5741, %v5737
        %v5802 = vpack.c.b16 %v5742, %v5738
        %v5803 = vpack.c.b16 %v5743, %v5739
        %v5804 = vpack.c.b16 %v5744, %v5740
        %v5866 = vsel %vm3313, %v5503, 0
        %5868 = vmatprep.subr.bf16.mxu0 %v5746
        %5869 = vmatpush1.bf16.msra.mxu0 %v5745
        %5870 = vmatprep.subr.bf16.mxu0 %v5750
        %5871 = vmatpush1.bf16.msra.mxu0 %v5749
        %5872 = vmatprep.subr.bf16.mxu0 %v5754
        %5873 = vmatpush1.bf16.msra.mxu0 %v5753
        %5874 = vmatprep.subr.bf16.mxu0 %v5758
        %5875 = vmatpush1.bf16.msra.mxu0 %v5757
        %5876 = vmatprep.subr.bf16.mxu0 %v5762
        %5877 = vmatpush1.bf16.msra.mxu0 %v5761
        %5878 = vmatprep.subr.bf16.mxu0 %v5766
        %5879 = vmatpush1.bf16.msra.mxu0 %v5765
        %5880 = vmatprep.subr.bf16.mxu0 %v5770
        %5881 = vmatpush1.bf16.msra.mxu0 %v5769
        %5882 = vmatprep.subr.bf16.mxu0 %v5774
        %5883 = vmatpush1.bf16.msra.mxu0 %v5773
        %5884 = vmatprep.subr.bf16.mxu0 %v5778
        %5885 = vmatpush1.bf16.msra.mxu0 %v5777
        %5886 = vmatprep.subr.bf16.mxu0 %v5782
        %5887 = vmatpush1.bf16.msra.mxu0 %v5781
        %5888 = vmatprep.subr.bf16.mxu0 %v5786
        %5889 = vmatpush1.bf16.msra.mxu0 %v5785
        %5890 = vmatprep.subr.bf16.mxu0 %v5790
        %5891 = vmatpush1.bf16.msra.mxu0 %v5789
        %5892 = vmatprep.subr.bf16.mxu0 %v5794
        %5893 = vmatpush1.bf16.msra.mxu0 %v5793
        %5894 = vmatprep.subr.bf16.mxu0 %v5798
        %5895 = vmatpush1.bf16.msra.mxu0 %v5797
        %5896 = vmatprep.subr.bf16.mxu0 %v5802
        %5897 = vmatpush1.bf16.msra.mxu0 %v5801
        %5898 = vmatprep.subr.bf16.mxu0 0
        %5899 = vmatpush1.bf16.msra.mxu0 0
        %5900 = vmatprep.mubr.bf16.mxu0 %v4263
        %5901 = vmatmul.mubr.bf16.gmra.mrb[0].mxu0 %v3365
        %v5902 = vpop.f32.mrb[0].mxu0
        %v5903 = vadd.f32 0.0, %v5902
        %v5904 = vpop.f32.mrb[0].mxu0
        %v5905 = vadd.f32 0.0, %v5904
        %v5906 = vpop.f32.mrb[0].mxu0
        %v5907 = vadd.f32 0.0, %v5906
        %v5908 = vpop.f32.mrb[0].mxu0
        %v5909 = vadd.f32 0.0, %v5908
        %5910 = vmatprep.mubr.bf16.mxu0 %v4266
        %5911 = vmatmul.mubr.bf16.gmra.mrb[0].mxu0 %v3367
        %v5912 = vpop.f32.mrb[0].mxu0
        %v5913 = vadd.f32 0.0, %v5912
        %v5914 = vpop.f32.mrb[0].mxu0
        %v5915 = vadd.f32 0.0, %v5914
        %v5916 = vpop.f32.mrb[0].mxu0
        %v5917 = vadd.f32 0.0, %v5916
        %v5918 = vpop.f32.mrb[0].mxu0
        %v5919 = vadd.f32 0.0, %v5918
        %5920 = vmatprep.mubr.bf16.mxu0 %v4778
        %5921 = vmatmul.mubr.bf16.gmra.mrb[0].mxu0 %v4414
        %v5922 = vpop.f32.mrb[0].mxu0
        %v5923 = vadd.f32 0.0, %v5922
        %v5924 = vpop.f32.mrb[0].mxu0
        %v5925 = vadd.f32 0.0, %v5924
        %v5926 = vpop.f32.mrb[0].mxu0
        %v5927 = vadd.f32 0.0, %v5926
        %v5928 = vpop.f32.mrb[0].mxu0
        %v5929 = vadd.f32 0.0, %v5928
        %5930 = vmatprep.mubr.bf16.mxu0 %v5866
        %5931 = vmatmul.mubr.bf16.gmra.mrb[0].mxu0 %v5502
        %v5932 = vpop.f32.mrb[0].mxu0
        %v5933 = vadd.f32 0.0, %v5932
        %v5934 = vpop.f32.mrb[0].mxu0
        %v5935 = vadd.f32 0.0, %v5934
        %v5936 = vpop.f32.mrb[0].mxu0
        %v5937 = vadd.f32 0.0, %v5936
        %v5938 = vpop.f32.mrb[0].mxu0
        %v5939 = vadd.f32 0.0, %v5938
        %5940 = vdwg.mxu0
        %5941 = vmatprep.subr.bf16.mxu0 %v5748
        %5942 = vmatpush1.bf16.msra.mxu0 %v5747
        %5943 = vmatprep.subr.bf16.mxu0 %v5752
        %5944 = vmatpush1.bf16.msra.mxu0 %v5751
        %5945 = vmatprep.subr.bf16.mxu0 %v5756
        %5946 = vmatpush1.bf16.msra.mxu0 %v5755
        %5947 = vmatprep.subr.bf16.mxu0 %v5760
        %5948 = vmatpush1.bf16.msra.mxu0 %v5759
        %5949 = vmatprep.subr.bf16.mxu0 %v5764
        %5950 = vmatpush1.bf16.msra.mxu0 %v5763
        %5951 = vmatprep.subr.bf16.mxu0 %v5768
        %5952 = vmatpush1.bf16.msra.mxu0 %v5767
        %5953 = vmatprep.subr.bf16.mxu0 %v5772
        %5954 = vmatpush1.bf16.msra.mxu0 %v5771
        %5955 = vmatprep.subr.bf16.mxu0 %v5776
        %5956 = vmatpush1.bf16.msra.mxu0 %v5775
        %5957 = vmatprep.subr.bf16.mxu0 %v5780
        %5958 = vmatpush1.bf16.msra.mxu0 %v5779
        %5959 = vmatprep.subr.bf16.mxu0 %v5784
        %5960 = vmatpush1.bf16.msra.mxu0 %v5783
        %5961 = vmatprep.subr.bf16.mxu0 %v5788
        %5962 = vmatpush1.bf16.msra.mxu0 %v5787
        %5963 = vmatprep.subr.bf16.mxu0 %v5792
        %5964 = vmatpush1.bf16.msra.mxu0 %v5791
        %5965 = vmatprep.subr.bf16.mxu0 %v5796
        %5966 = vmatpush1.bf16.msra.mxu0 %v5795
        %5967 = vmatprep.subr.bf16.mxu0 %v5800
        %5968 = vmatpush1.bf16.msra.mxu0 %v5799
        %5969 = vmatprep.subr.bf16.mxu0 %v5804
        %5970 = vmatpush1.bf16.msra.mxu0 %v5803
        %5971 = vmatprep.subr.bf16.mxu0 0
        %5972 = vmatpush1.bf16.msra.mxu0 0
        %5973 = vmatprep.mubr.bf16.mxu0 %v4263
        %5974 = vmatmul.mubr.bf16.gmra.mrb[0].mxu0 %v3365
        %v5975 = vpop.f32.mrb[0].mxu0
        %v5976 = vadd.f32 0.0, %v5975
        %v5977 = vpop.f32.mrb[0].mxu0
        %v5978 = vadd.f32 0.0, %v5977
        %v5979 = vpop.f32.mrb[0].mxu0
        %v5980 = vadd.f32 0.0, %v5979
        %v5981 = vpop.f32.mrb[0].mxu0
        %v5982 = vadd.f32 0.0, %v5981
        %5983 = vmatprep.mubr.bf16.mxu0 %v4266
        %5984 = vmatmul.mubr.bf16.gmra.mrb[0].mxu0 %v3367
        %v5985 = vpop.f32.mrb[0].mxu0
        %v5986 = vadd.f32 0.0, %v5985
        %v5987 = vpop.f32.mrb[0].mxu0
        %v5988 = vadd.f32 0.0, %v5987
        %v5989 = vpop.f32.mrb[0].mxu0
        %v5990 = vadd.f32 0.0, %v5989
        %v5991 = vpop.f32.mrb[0].mxu0
        %v5992 = vadd.f32 0.0, %v5991
        %5993 = vmatprep.mubr.bf16.mxu0 %v4778
        %5994 = vmatmul.mubr.bf16.gmra.mrb[0].mxu0 %v4414
        %v5995 = vpop.f32.mrb[0].mxu0
        %v5996 = vadd.f32 0.0, %v5995
        %v5997 = vpop.f32.mrb[0].mxu0
        %v5998 = vadd.f32 0.0, %v5997
        %v5999 = vpop.f32.mrb[0].mxu0
        %v6000 = vadd.f32 0.0, %v5999
        %v6001 = vpop.f32.mrb[0].mxu0
        %v6002 = vadd.f32 0.0, %v6001
        %6003 = vmatprep.mubr.bf16.mxu0 %v5866
        %6004 = vmatmul.mubr.bf16.gmra.mrb[0].mxu0 %v5502
        %v6005 = vpop.f32.mrb[0].mxu0
        %v6006 = vadd.f32 0.0, %v6005
        %v6007 = vpop.f32.mrb[0].mxu0
        %v6008 = vadd.f32 0.0, %v6007
        %v6009 = vpop.f32.mrb[0].mxu0
        %v6010 = vadd.f32 0.0, %v6009
        %v6011 = vpop.f32.mrb[0].mxu0
        %v6012 = vadd.f32 0.0, %v6011
        %6013 = vdwg.mxu0
        %v6014 = vadd.f32 %v5470, %v5903
        %v6015 = vadd.f32 %v5471, %v5905
        %v6016 = vadd.f32 %v5472, %v5976
        %v6017 = vadd.f32 %v5473, %v5978
        %v6018 = vadd.f32 %v5474, %v5907
        %v6019 = vadd.f32 %v5475, %v5909
        %v6020 = vadd.f32 %v5476, %v5980
        %v6021 = vadd.f32 %v5477, %v5982
        %v6022 = vadd.f32 %v5478, %v5913
        %v6023 = vadd.f32 %v5479, %v5915
        %v6024 = vadd.f32 %v5480, %v5986
        %v6025 = vadd.f32 %v5481, %v5988
        %v6026 = vadd.f32 %v5482, %v5917
        %v6027 = vadd.f32 %v5483, %v5919
        %v6028 = vadd.f32 %v5484, %v5990
        %v6029 = vadd.f32 %v5485, %v5992
        %v6030 = vadd.f32 %v5486, %v5923
        %v6031 = vadd.f32 %v5487, %v5925
        %v6032 = vadd.f32 %v5488, %v5996
        %v6033 = vadd.f32 %v5489, %v5998
        %v6034 = vadd.f32 %v5490, %v5927
        %v6035 = vadd.f32 %v5491, %v5929
        %v6036 = vadd.f32 %v5492, %v6000
        %v6037 = vadd.f32 %v5493, %v6002
        %v6038 = vadd.f32 %v5494, %v5933
        %v6039 = vadd.f32 %v5495, %v5935
        %v6040 = vadd.f32 %v5496, %v6006
        %v6041 = vadd.f32 %v5497, %v6008
        %v6042 = vadd.f32 %v5498, %v5937
        %v6043 = vadd.f32 %v5499, %v5939
        %v6044 = vadd.f32 %v5500, %v6010
        %v6045 = vadd.f32 %v5501, %v6012
        %v6046 = vld [vmem:[%s4] ss:$2 sm:$0xf]
        %v6048 = vlaneseq
        %v6049 = vshrl.u32 %v6048, 7
        %v6050 = vsub.s32 0, %v6049
        %v6051 = vrot.slane %v6046, %v6050
        %v6052 = vlaneseq
        %v6053 = vshrl.u32 %v6052, 7
        %v6054 = vsub.s32 1, %v6053
        %v6055 = vrot.slane %v6046, %v6054
        %v6056 = vlaneseq
        %v6057 = vshrl.u32 %v6056, 7
        %v6058 = vsub.s32 2, %v6057
        %v6059 = vrot.slane %v6046, %v6058
        %v6060 = vlaneseq
        %v6061 = vshrl.u32 %v6060, 7
        %v6062 = vsub.s32 3, %v6061
        %v6063 = vrot.slane %v6046, %v6062
        %v6068 = vmul.f32 %v6014, %v6051
        %v6069 = vmul.f32 %v6015, %v6055
        %v6070 = vmul.f32 %v6016, %v6059
        %v6071 = vmul.f32 %v6017, %v6063
        %v6072 = vmul.f32 %v6018, %v6051
        %v6073 = vmul.f32 %v6019, %v6055
        %v6074 = vmul.f32 %v6020, %v6059
        %v6075 = vmul.f32 %v6021, %v6063
        %v6076 = vmul.f32 %v6022, %v6051
        %v6077 = vmul.f32 %v6023, %v6055
        %v6078 = vmul.f32 %v6024, %v6059
        %v6079 = vmul.f32 %v6025, %v6063
        %v6080 = vmul.f32 %v6026, %v6051
        %v6081 = vmul.f32 %v6027, %v6055
        %v6082 = vmul.f32 %v6028, %v6059
        %v6083 = vmul.f32 %v6029, %v6063
        %v6084 = vmul.f32 %v6030, %v6051
        %v6085 = vmul.f32 %v6031, %v6055
        %v6086 = vmul.f32 %v6032, %v6059
        %v6087 = vmul.f32 %v6033, %v6063
        %v6088 = vmul.f32 %v6034, %v6051
        %v6089 = vmul.f32 %v6035, %v6055
        %v6090 = vmul.f32 %v6036, %v6059
        %v6091 = vmul.f32 %v6037, %v6063
        %v6092 = vmul.f32 %v6038, %v6051
        %v6093 = vmul.f32 %v6039, %v6055
        %v6094 = vmul.f32 %v6040, %v6059
        %v6095 = vmul.f32 %v6041, %v6063
        %v6096 = vmul.f32 %v6042, %v6051
        %v6097 = vmul.f32 %v6043, %v6055
        %v6098 = vmul.f32 %v6044, %v6059
        %v6099 = vmul.f32 %v6045, %v6063
        %s6100 = scalar_lea.vmem %s4, 1
        %v6101 = vld [vmem:[%s6100] ss:$2 sm:$0xf]
        %v6103 = vlaneseq
        %v6104 = vshrl.u32 %v6103, 7
        %v6105 = vsub.s32 0, %v6104
        %v6106 = vrot.slane %v6101, %v6105
        %v6107 = vlaneseq
        %v6108 = vshrl.u32 %v6107, 7
        %v6109 = vsub.s32 1, %v6108
        %v6110 = vrot.slane %v6101, %v6109
        %v6111 = vlaneseq
        %v6112 = vshrl.u32 %v6111, 7
        %v6113 = vsub.s32 2, %v6112
        %v6114 = vrot.slane %v6101, %v6113
        %v6115 = vlaneseq
        %v6116 = vshrl.u32 %v6115, 7
        %v6117 = vsub.s32 3, %v6116
        %v6118 = vrot.slane %v6101, %v6117
        %v6123 = vadd.f32 %v6068, %v6106
        %v6124 = vadd.f32 %v6069, %v6110
        %v6125 = vadd.f32 %v6070, %v6114
        %v6126 = vadd.f32 %v6071, %v6118
        %v6127 = vadd.f32 %v6072, %v6106
        %v6128 = vadd.f32 %v6073, %v6110
        %v6129 = vadd.f32 %v6074, %v6114
        %v6130 = vadd.f32 %v6075, %v6118
        %v6131 = vadd.f32 %v6076, %v6106
        %v6132 = vadd.f32 %v6077, %v6110
        %v6133 = vadd.f32 %v6078, %v6114
        %v6134 = vadd.f32 %v6079, %v6118
        %v6135 = vadd.f32 %v6080, %v6106
        %v6136 = vadd.f32 %v6081, %v6110
        %v6137 = vadd.f32 %v6082, %v6114
        %v6138 = vadd.f32 %v6083, %v6118
        %v6139 = vadd.f32 %v6084, %v6106
        %v6140 = vadd.f32 %v6085, %v6110
        %v6141 = vadd.f32 %v6086, %v6114
        %v6142 = vadd.f32 %v6087, %v6118
        %v6143 = vadd.f32 %v6088, %v6106
        %v6144 = vadd.f32 %v6089, %v6110
        %v6145 = vadd.f32 %v6090, %v6114
        %v6146 = vadd.f32 %v6091, %v6118
        %v6147 = vadd.f32 %v6092, %v6106
        %v6148 = vadd.f32 %v6093, %v6110
        %v6149 = vadd.f32 %v6094, %v6114
        %v6150 = vadd.f32 %v6095, %v6118
        %v6151 = vadd.f32 %v6096, %v6106
        %v6152 = vadd.f32 %v6097, %v6110
        %v6153 = vadd.f32 %v6098, %v6114
        %v6154 = vadd.f32 %v6099, %v6118
        %6179 = vrot.lane.b32.xlu0 %v6124, 56
        %v6180 = vpop.permute.xlu0 %6179
        %6181 = vrot.lane.b32.xlu0 %v6125, 56
        %v6182 = vpop.permute.xlu0 %6181
        %6183 = vrot.lane.b32.xlu0 %v6126, 56
        %v6184 = vpop.permute.xlu0 %6183
        %6185 = vrot.lane.b32.xlu0 %v6128, 56
        %v6186 = vpop.permute.xlu0 %6185
        %6187 = vrot.lane.b32.xlu0 %v6129, 56
        %v6188 = vpop.permute.xlu0 %6187
        %6189 = vrot.lane.b32.xlu0 %v6130, 56
        %v6190 = vpop.permute.xlu0 %6189
        %6191 = vrot.lane.b32.xlu0 %v6132, 56
        %v6192 = vpop.permute.xlu0 %6191
        %6193 = vrot.lane.b32.xlu0 %v6133, 56
        %v6194 = vpop.permute.xlu0 %6193
        %6195 = vrot.lane.b32.xlu0 %v6134, 56
        %v6196 = vpop.permute.xlu0 %6195
        %6197 = vrot.lane.b32.xlu0 %v6136, 56
        %v6198 = vpop.permute.xlu0 %6197
        %6199 = vrot.lane.b32.xlu0 %v6137, 56
        %v6200 = vpop.permute.xlu0 %6199
        %6201 = vrot.lane.b32.xlu0 %v6138, 56
        %v6202 = vpop.permute.xlu0 %6201
        %6203 = vrot.lane.b32.xlu0 %v6140, 56
        %v6204 = vpop.permute.xlu0 %6203
        %6205 = vrot.lane.b32.xlu0 %v6141, 56
        %v6206 = vpop.permute.xlu0 %6205
        %6207 = vrot.lane.b32.xlu0 %v6142, 56
        %v6208 = vpop.permute.xlu0 %6207
        %6209 = vrot.lane.b32.xlu0 %v6144, 56
        %v6210 = vpop.permute.xlu0 %6209
        %6211 = vrot.lane.b32.xlu0 %v6145, 56
        %v6212 = vpop.permute.xlu0 %6211
        %6213 = vrot.lane.b32.xlu0 %v6146, 56
        %v6214 = vpop.permute.xlu0 %6213
        %6215 = vrot.lane.b32.xlu0 %v6148, 56
        %v6216 = vpop.permute.xlu0 %6215
        %6217 = vrot.lane.b32.xlu0 %v6149, 56
        %v6218 = vpop.permute.xlu0 %6217
        %6219 = vrot.lane.b32.xlu0 %v6150, 56
        %v6220 = vpop.permute.xlu0 %6219
        %6221 = vrot.lane.b32.xlu0 %v6152, 56
        %v6222 = vpop.permute.xlu0 %6221
        %6223 = vrot.lane.b32.xlu0 %v6153, 56
        %v6224 = vpop.permute.xlu0 %6223
        %6225 = vrot.lane.b32.xlu0 %v6154, 56
        %v6226 = vpop.permute.xlu0 %6225
        %vm6227 = vcmask 457728
        %v6228 = vsel %vm6227, %v6180, %v6182
        %v6229 = vsel %vm6227, %v6182, %v6184
        %v6230 = vsel %vm6227, %v6186, %v6188
        %v6231 = vsel %vm6227, %v6188, %v6190
        %v6232 = vsel %vm6227, %v6192, %v6194
        %v6233 = vsel %vm6227, %v6194, %v6196
        %v6234 = vsel %vm6227, %v6198, %v6200
        %v6235 = vsel %vm6227, %v6200, %v6202
        %v6236 = vsel %vm6227, %v6204, %v6206
        %v6237 = vsel %vm6227, %v6206, %v6208
        %v6238 = vsel %vm6227, %v6210, %v6212
        %v6239 = vsel %vm6227, %v6212, %v6214
        %v6240 = vsel %vm6227, %v6216, %v6218
        %v6241 = vsel %vm6227, %v6218, %v6220
        %v6242 = vsel %vm6227, %v6222, %v6224
        %v6243 = vsel %vm6227, %v6224, %v6226
        %v6260 = vmax.f32 %v6123, %v6228
        %v6261 = vmax.f32 %v6124, %v6229
        %v6262 = vmax.f32 %v6127, %v6230
        %v6263 = vmax.f32 %v6128, %v6231
        %v6264 = vmax.f32 %v6131, %v6232
        %v6265 = vmax.f32 %v6132, %v6233
        %v6266 = vmax.f32 %v6135, %v6234
        %v6267 = vmax.f32 %v6136, %v6235
        %v6268 = vmax.f32 %v6139, %v6236
        %v6269 = vmax.f32 %v6140, %v6237
        %v6270 = vmax.f32 %v6143, %v6238
        %v6271 = vmax.f32 %v6144, %v6239
        %v6272 = vmax.f32 %v6147, %v6240
        %v6273 = vmax.f32 %v6148, %v6241
        %v6274 = vmax.f32 %v6151, %v6242
        %v6275 = vmax.f32 %v6152, %v6243
        %v6276 = vmax.f32 %v6260, %v6262
        %vm6277 = vcmask 588800
        %v6278 = vsel %vm6277, %v6261, -inf
        %v6279 = vsel %vm6277, %v6263, -inf
        %v6280 = vmax.f32 %v6278, %v6279
        %v6281 = vmax.f32 %v6264, %v6266
        %v6282 = vsel %vm6277, %v6265, -inf
        %v6283 = vsel %vm6277, %v6267, -inf
        %v6284 = vmax.f32 %v6282, %v6283
        %v6285 = vmax.f32 %v6268, %v6270
        %v6286 = vsel %vm6277, %v6269, -inf
        %v6287 = vsel %vm6277, %v6271, -inf
        %v6288 = vmax.f32 %v6286, %v6287
        %v6289 = vmax.f32 %v6272, %v6274
        %v6290 = vsel %vm6277, %v6273, -inf
        %v6291 = vsel %vm6277, %v6275, -inf
        %v6292 = vmax.f32 %v6290, %v6291
        %v6293 = vpack.c.bf16 %v6276, %v6276
        %v6294 = vpack.c.bf16 %v6280, %v6280
        %v6295 = vld [vmem:[%s5] sm:$0xff]
        %v6296 = vld [vmem:[%s5 + $0x8] sm:$0xff]
        %v6297 = vld [vmem:[%s5 + $0x10] sm:$0xff]
        %v6298 = vld [vmem:[%s5 + $0x18] sm:$0xff]
        %v6299 = vld [vmem:[%s5 + $0x20] sm:$0xff]
        %v6300 = vld [vmem:[%s5 + $0x28] sm:$0xff]
        %v6301 = vld [vmem:[%s5 + $0x30] sm:$0xff]
        %v6302 = vld [vmem:[%s5 + $0x38] sm:$0xff]
        %v6303 = vld [vmem:[%s5 + $0x40] sm:$0xff]
        %v6304 = vld [vmem:[%s5 + $0x48] sm:$0xff]
        %v6305 = vld [vmem:[%s5 + $0x50] sm:$0xff]
        %v6306 = vld [vmem:[%s5 + $0x58] sm:$0xff]
        %v6307 = vld [vmem:[%s5 + $0x60] sm:$0xff]
        %v6308 = vld [vmem:[%s5 + $0x68] sm:$0xff]
        %v6309 = vld [vmem:[%s5 + $0x70] sm:$0xff]
        %v6310 = vld [vmem:[%s5 + $0x78] sm:$0xff]
        %v6311 = vld [vmem:[%s5 + $0x80] sm:$0xff]
        %v6312 = vld [vmem:[%s5 + $0x88] sm:$0xff]
        %v6313 = vld [vmem:[%s5 + $0x90] sm:$0xff]
        %v6314 = vld [vmem:[%s5 + $0x98] sm:$0xff]
        %v6315 = vld [vmem:[%s5 + $0xa0] sm:$0xff]
        %v6316 = vld [vmem:[%s5 + $0xa8] sm:$0xff]
        %v6317 = vld [vmem:[%s5 + $0xb0] sm:$0xff]
        %v6318 = vld [vmem:[%s5 + $0xb8] sm:$0xff]
        %v6319 = vld [vmem:[%s5 + $0xc0] sm:$0xff]
        %v6320 = vld [vmem:[%s5 + $0xc8] sm:$0xff]
        %v6321 = vld [vmem:[%s5 + $0xd0] sm:$0xff]
        %v6322 = vld [vmem:[%s5 + $0xd8] sm:$0xff]
        %v6323 = vld [vmem:[%s5 + $0xe0] sm:$0xff]
        %v6324 = vld [vmem:[%s5 + $0xe8] sm:$0xff]
        %v6325 = vld [vmem:[%s5 + $0xf0] sm:$0xff]
        %v6326 = vld [vmem:[%s5 + $0xf8] sm:$0xff]
        %v6327 = vld [vmem:[%s5 + $0x100] sm:$0xff]
        %v6328 = vld [vmem:[%s5 + $0x108] sm:$0xff]
        %v6329 = vld [vmem:[%s5 + $0x110] sm:$0xff]
        %v6330 = vld [vmem:[%s5 + $0x118] sm:$0xff]
        %v6331 = vld [vmem:[%s5 + $0x120] sm:$0xff]
        %v6332 = vld [vmem:[%s5 + $0x128] sm:$0xff]
        %v6333 = vld [vmem:[%s5 + $0x130] sm:$0xff]
        %v6334 = vld [vmem:[%s5 + $0x138] sm:$0xff]
        %v6335 = vld [vmem:[%s5 + $0x140] sm:$0xff]
        %v6336 = vld [vmem:[%s5 + $0x148] sm:$0xff]
        %v6337 = vld [vmem:[%s5 + $0x150] sm:$0xff]
        %v6338 = vld [vmem:[%s5 + $0x158] sm:$0xff]
        %v6339 = vld [vmem:[%s5 + $0x160] sm:$0xff]
        %v6340 = vld [vmem:[%s5 + $0x168] sm:$0xff]
        %v6341 = vld [vmem:[%s5 + $0x170] sm:$0xff]
        %v6342 = vld [vmem:[%s5 + $0x178] sm:$0xff]
        %v6343 = vld [vmem:[%s5 + $0x180] sm:$0xff]
        %v6344 = vld [vmem:[%s5 + $0x188] sm:$0xff]
        %v6345 = vpack.c.bf16 %v6281, %v6281
        %v6346 = vpack.c.bf16 %v6284, %v6284
        %s6347 = scalar_lea.vmem %s5, 400
        %v6348 = vld [vmem:[%s6347] sm:$0xff]
        %v6349 = vld [vmem:[%s6347 + $0x8] sm:$0xff]
        %v6350 = vld [vmem:[%s6347 + $0x10] sm:$0xff]
        %v6351 = vld [vmem:[%s6347 + $0x18] sm:$0xff]
        %v6352 = vld [vmem:[%s6347 + $0x20] sm:$0xff]
        %v6353 = vld [vmem:[%s6347 + $0x28] sm:$0xff]
        %v6354 = vld [vmem:[%s6347 + $0x30] sm:$0xff]
        %v6355 = vld [vmem:[%s6347 + $0x38] sm:$0xff]
        %v6356 = vld [vmem:[%s6347 + $0x40] sm:$0xff]
        %v6357 = vld [vmem:[%s6347 + $0x48] sm:$0xff]
        %v6358 = vld [vmem:[%s6347 + $0x50] sm:$0xff]
        %v6359 = vld [vmem:[%s6347 + $0x58] sm:$0xff]
        %v6360 = vld [vmem:[%s6347 + $0x60] sm:$0xff]
        %v6361 = vld [vmem:[%s6347 + $0x68] sm:$0xff]
        %v6362 = vld [vmem:[%s6347 + $0x70] sm:$0xff]
        %v6363 = vld [vmem:[%s6347 + $0x78] sm:$0xff]
        %v6364 = vld [vmem:[%s6347 + $0x80] sm:$0xff]
        %v6365 = vld [vmem:[%s6347 + $0x88] sm:$0xff]
        %v6366 = vld [vmem:[%s6347 + $0x90] sm:$0xff]
        %v6367 = vld [vmem:[%s6347 + $0x98] sm:$0xff]
        %v6368 = vld [vmem:[%s6347 + $0xa0] sm:$0xff]
        %v6369 = vld [vmem:[%s6347 + $0xa8] sm:$0xff]
        %v6370 = vld [vmem:[%s6347 + $0xb0] sm:$0xff]
        %v6371 = vld [vmem:[%s6347 + $0xb8] sm:$0xff]
        %v6372 = vld [vmem:[%s6347 + $0xc0] sm:$0xff]
        %v6373 = vld [vmem:[%s6347 + $0xc8] sm:$0xff]
        %v6374 = vld [vmem:[%s6347 + $0xd0] sm:$0xff]
        %v6375 = vld [vmem:[%s6347 + $0xd8] sm:$0xff]
        %v6376 = vld [vmem:[%s6347 + $0xe0] sm:$0xff]
        %v6377 = vld [vmem:[%s6347 + $0xe8] sm:$0xff]
        %v6378 = vld [vmem:[%s6347 + $0xf0] sm:$0xff]
        %v6379 = vld [vmem:[%s6347 + $0xf8] sm:$0xff]
        %v6380 = vld [vmem:[%s6347 + $0x100] sm:$0xff]
        %v6381 = vld [vmem:[%s6347 + $0x108] sm:$0xff]
        %v6382 = vld [vmem:[%s6347 + $0x110] sm:$0xff]
        %v6383 = vld [vmem:[%s6347 + $0x118] sm:$0xff]
        %v6384 = vld [vmem:[%s6347 + $0x120] sm:$0xff]
        %v6385 = vld [vmem:[%s6347 + $0x128] sm:$0xff]
        %v6386 = vld [vmem:[%s6347 + $0x130] sm:$0xff]
        %v6387 = vld [vmem:[%s6347 + $0x138] sm:$0xff]
        %v6388 = vld [vmem:[%s6347 + $0x140] sm:$0xff]
        %v6389 = vld [vmem:[%s6347 + $0x148] sm:$0xff]
        %v6390 = vld [vmem:[%s6347 + $0x150] sm:$0xff]
        %v6391 = vld [vmem:[%s6347 + $0x158] sm:$0xff]
        %v6392 = vld [vmem:[%s6347 + $0x160] sm:$0xff]
        %v6393 = vld [vmem:[%s6347 + $0x168] sm:$0xff]
        %v6394 = vld [vmem:[%s6347 + $0x170] sm:$0xff]
        %v6395 = vld [vmem:[%s6347 + $0x178] sm:$0xff]
        %v6396 = vld [vmem:[%s6347 + $0x180] sm:$0xff]
        %v6397 = vld [vmem:[%s6347 + $0x188] sm:$0xff]
        %v6448 = vunpack.c.l.b16 %v6348
        %v6449 = vunpack.c.h.b16 %v6348
        %v6450 = vunpack.c.l.b16 %v6349
        %v6451 = vunpack.c.h.b16 %v6349
        %v6452 = vunpack.c.l.b16 %v6350
        %v6453 = vunpack.c.h.b16 %v6350
        %v6454 = vunpack.c.l.b16 %v6351
        %v6455 = vunpack.c.h.b16 %v6351
        %v6456 = vunpack.c.l.b16 %v6352
        %v6457 = vunpack.c.h.b16 %v6352
        %v6458 = vunpack.c.l.b16 %v6353
        %v6459 = vunpack.c.h.b16 %v6353
        %v6460 = vunpack.c.l.b16 %v6354
        %v6461 = vunpack.c.h.b16 %v6354
        %v6462 = vunpack.c.l.b16 %v6355
        %v6463 = vunpack.c.h.b16 %v6355
        %v6464 = vunpack.c.l.b16 %v6356
        %v6465 = vunpack.c.h.b16 %v6356
        %v6466 = vunpack.c.l.b16 %v6357
        %v6467 = vunpack.c.h.b16 %v6357
        %v6468 = vunpack.c.l.b16 %v6358
        %v6469 = vunpack.c.h.b16 %v6358
        %v6470 = vunpack.c.l.b16 %v6359
        %v6471 = vunpack.c.h.b16 %v6359
        %v6472 = vunpack.c.l.b16 %v6360
        %v6473 = vunpack.c.h.b16 %v6360
        %v6474 = vunpack.c.l.b16 %v6361
        %v6475 = vunpack.c.h.b16 %v6361
        %v6476 = vunpack.c.l.b16 %v6362
        %v6477 = vunpack.c.h.b16 %v6362
        %v6478 = vunpack.c.l.b16 %v6363
        %v6479 = vunpack.c.h.b16 %v6363
        %v6480 = vunpack.c.l.b16 %v6364
        %v6481 = vunpack.c.h.b16 %v6364
        %v6482 = vunpack.c.l.b16 %v6365
        %v6483 = vunpack.c.h.b16 %v6365
        %v6484 = vunpack.c.l.b16 %v6366
        %v6485 = vunpack.c.h.b16 %v6366
        %v6486 = vunpack.c.l.b16 %v6367
        %v6487 = vunpack.c.h.b16 %v6367
        %v6488 = vunpack.c.l.b16 %v6368
        %v6489 = vunpack.c.h.b16 %v6368
        %v6490 = vunpack.c.l.b16 %v6369
        %v6491 = vunpack.c.h.b16 %v6369
        %v6492 = vunpack.c.l.b16 %v6370
        %v6493 = vunpack.c.h.b16 %v6370
        %v6494 = vunpack.c.l.b16 %v6371
        %v6495 = vunpack.c.h.b16 %v6371
        %v6496 = vunpack.c.l.b16 %v6372
        %v6497 = vunpack.c.h.b16 %v6372
        %v6498 = vunpack.c.l.b16 %v6373
        %v6499 = vunpack.c.h.b16 %v6373
        %v6500 = vunpack.c.l.b16 %v6374
        %v6501 = vunpack.c.h.b16 %v6374
        %v6502 = vunpack.c.l.b16 %v6375
        %v6503 = vunpack.c.h.b16 %v6375
        %v6504 = vunpack.c.l.b16 %v6376
        %v6505 = vunpack.c.h.b16 %v6376
        %v6506 = vunpack.c.l.b16 %v6377
        %v6507 = vunpack.c.h.b16 %v6377
        %v6508 = vunpack.c.l.b16 %v6378
        %v6509 = vunpack.c.h.b16 %v6378
        %v6510 = vunpack.c.l.b16 %v6379
        %v6511 = vunpack.c.h.b16 %v6379
        %v6512 = vunpack.c.l.b16 %v6380
        %v6513 = vunpack.c.h.b16 %v6380
        %v6514 = vunpack.c.l.b16 %v6381
        %v6515 = vunpack.c.h.b16 %v6381
        %v6516 = vunpack.c.l.b16 %v6382
        %v6517 = vunpack.c.h.b16 %v6382
        %v6518 = vunpack.c.l.b16 %v6383
        %v6519 = vunpack.c.h.b16 %v6383
        %v6520 = vunpack.c.l.b16 %v6384
        %v6521 = vunpack.c.h.b16 %v6384
        %v6522 = vunpack.c.l.b16 %v6385
        %v6523 = vunpack.c.h.b16 %v6385
        %v6524 = vunpack.c.l.b16 %v6386
        %v6525 = vunpack.c.h.b16 %v6386
        %v6526 = vunpack.c.l.b16 %v6387
        %v6527 = vunpack.c.h.b16 %v6387
        %v6528 = vunpack.c.l.b16 %v6388
        %v6529 = vunpack.c.h.b16 %v6388
        %v6530 = vunpack.c.l.b16 %v6389
        %v6531 = vunpack.c.h.b16 %v6389
        %v6532 = vunpack.c.l.b16 %v6390
        %v6533 = vunpack.c.h.b16 %v6390
        %v6534 = vunpack.c.l.b16 %v6391
        %v6535 = vunpack.c.h.b16 %v6391
        %v6536 = vunpack.c.l.b16 %v6392
        %v6537 = vunpack.c.h.b16 %v6392
        %v6538 = vunpack.c.l.b16 %v6393
        %v6539 = vunpack.c.h.b16 %v6393
        %v6540 = vunpack.c.l.b16 %v6394
        %v6541 = vunpack.c.h.b16 %v6394
        %v6542 = vunpack.c.l.b16 %v6395
        %v6543 = vunpack.c.h.b16 %v6395
        %v6544 = vunpack.c.l.b16 %v6396
        %v6545 = vunpack.c.h.b16 %v6396
        %v6546 = vunpack.c.l.b16 %v6397
        %v6547 = vunpack.c.h.b16 %v6397
        %v6548 = vpack.c.b16 %v6452, %v6448
        %v6549 = vpack.c.b16 %v6453, %v6449
        %v6550 = vpack.c.b16 %v6454, %v6450
        %v6551 = vpack.c.b16 %v6455, %v6451
        %v6552 = vpack.c.b16 %v6460, %v6456
        %v6553 = vpack.c.b16 %v6461, %v6457
        %v6554 = vpack.c.b16 %v6462, %v6458
        %v6555 = vpack.c.b16 %v6463, %v6459
        %v6556 = vpack.c.b16 %v6468, %v6464
        %v6557 = vpack.c.b16 %v6469, %v6465
        %v6558 = vpack.c.b16 %v6470, %v6466
        %v6559 = vpack.c.b16 %v6471, %v6467
        %v6560 = vpack.c.b16 %v6476, %v6472
        %v6561 = vpack.c.b16 %v6477, %v6473
        %v6562 = vpack.c.b16 %v6478, %v6474
        %v6563 = vpack.c.b16 %v6479, %v6475
        %v6564 = vpack.c.b16 %v6484, %v6480
        %v6565 = vpack.c.b16 %v6485, %v6481
        %v6566 = vpack.c.b16 %v6486, %v6482
        %v6567 = vpack.c.b16 %v6487, %v6483
        %v6568 = vpack.c.b16 %v6492, %v6488
        %v6569 = vpack.c.b16 %v6493, %v6489
        %v6570 = vpack.c.b16 %v6494, %v6490
        %v6571 = vpack.c.b16 %v6495, %v6491
        %v6572 = vpack.c.b16 %v6500, %v6496
        %v6573 = vpack.c.b16 %v6501, %v6497
        %v6574 = vpack.c.b16 %v6502, %v6498
        %v6575 = vpack.c.b16 %v6503, %v6499
        %v6576 = vpack.c.b16 %v6508, %v6504
        %v6577 = vpack.c.b16 %v6509, %v6505
        %v6578 = vpack.c.b16 %v6510, %v6506
        %v6579 = vpack.c.b16 %v6511, %v6507
        %v6580 = vpack.c.b16 %v6516, %v6512
        %v6581 = vpack.c.b16 %v6517, %v6513
        %v6582 = vpack.c.b16 %v6518, %v6514
        %v6583 = vpack.c.b16 %v6519, %v6515
        %v6584 = vpack.c.b16 %v6524, %v6520
        %v6585 = vpack.c.b16 %v6525, %v6521
        %v6586 = vpack.c.b16 %v6526, %v6522
        %v6587 = vpack.c.b16 %v6527, %v6523
        %v6588 = vpack.c.b16 %v6532, %v6528
        %v6589 = vpack.c.b16 %v6533, %v6529
        %v6590 = vpack.c.b16 %v6534, %v6530
        %v6591 = vpack.c.b16 %v6535, %v6531
        %v6592 = vpack.c.b16 %v6540, %v6536
        %v6593 = vpack.c.b16 %v6541, %v6537
        %v6594 = vpack.c.b16 %v6542, %v6538
        %v6595 = vpack.c.b16 %v6543, %v6539
        %v6596 = vpack.c.b16 %v6544, %v6544
        %v6597 = vpack.c.b16 %v6545, %v6545
        %v6598 = vpack.c.b16 %v6546, %v6546
        %v6599 = vpack.c.b16 %v6547, %v6547
        %v6649 = vsel %vm6277, %v6346, 0
        %vm6651 = vcmask 1043456
        %v6653 = vsel %vm6651, %v6596, 0
        %v6656 = vsel %vm6651, %v6597, 0
        %v6659 = vsel %vm6651, %v6598, 0
        %v6662 = vsel %vm6651, %v6599, 0
        %6664 = vmatprep.subr.bf16.mxu0 %v6549
        %6665 = vmatpush1.bf16.msra.mxu0 %v6548
        %6666 = vmatprep.subr.bf16.mxu0 %v6553
        %6667 = vmatpush1.bf16.msra.mxu0 %v6552
        %6668 = vmatprep.subr.bf16.mxu0 %v6557
        %6669 = vmatpush1.bf16.msra.mxu0 %v6556
        %6670 = vmatprep.subr.bf16.mxu0 %v6561
        %6671 = vmatpush1.bf16.msra.mxu0 %v6560
        %6672 = vmatprep.subr.bf16.mxu0 %v6565
        %6673 = vmatpush1.bf16.msra.mxu0 %v6564
        %6674 = vmatprep.subr.bf16.mxu0 %v6569
        %6675 = vmatpush1.bf16.msra.mxu0 %v6568
        %6676 = vmatprep.subr.bf16.mxu0 %v6573
        %6677 = vmatpush1.bf16.msra.mxu0 %v6572
        %6678 = vmatprep.subr.bf16.mxu0 %v6577
        %6679 = vmatpush1.bf16.msra.mxu0 %v6576
        %6680 = vmatprep.subr.bf16.mxu0 %v6581
        %6681 = vmatpush1.bf16.msra.mxu0 %v6580
        %6682 = vmatprep.subr.bf16.mxu0 %v6585
        %6683 = vmatpush1.bf16.msra.mxu0 %v6584
        %6684 = vmatprep.subr.bf16.mxu0 %v6589
        %6685 = vmatpush1.bf16.msra.mxu0 %v6588
        %6686 = vmatprep.subr.bf16.mxu0 %v6593
        %6687 = vmatpush1.bf16.msra.mxu0 %v6592
        %6688 = vmatprep.subr.bf16.mxu0 %v6656
        %6689 = vmatpush1.bf16.msra.mxu0 %v6653
        %6690 = vmatprep.subr.bf16.mxu0 0
        %6691 = vmatpush1.bf16.msra.mxu0 0
        %6692 = vmatprep.subr.bf16.mxu0 0
        %6693 = vmatpush1.bf16.msra.mxu0 0
        %6694 = vmatprep.subr.bf16.mxu0 0
        %6695 = vmatpush1.bf16.msra.mxu0 0
        %6696 = vmatprep.mubr.bf16.mxu0 %v6649
        %6697 = vmatmul.mubr.bf16.gmra.mrb[0].mxu0 %v6345
        %v6698 = vpop.f32.mrb[0].mxu0
        %v6699 = vadd.f32 0.0, %v6698
        %v6700 = vpop.f32.mrb[0].mxu0
        %v6701 = vadd.f32 0.0, %v6700
        %v6702 = vpop.f32.mrb[0].mxu0
        %v6703 = vpop.f32.mrb[0].mxu0
        %6704 = vdwg.mxu0
        %6705 = vmatprep.subr.bf16.mxu0 %v6551
        %6706 = vmatpush1.bf16.msra.mxu0 %v6550
        %6707 = vmatprep.subr.bf16.mxu0 %v6555
        %6708 = vmatpush1.bf16.msra.mxu0 %v6554
        %6709 = vmatprep.subr.bf16.mxu0 %v6559
        %6710 = vmatpush1.bf16.msra.mxu0 %v6558
        %6711 = vmatprep.subr.bf16.mxu0 %v6563
        %6712 = vmatpush1.bf16.msra.mxu0 %v6562
        %6713 = vmatprep.subr.bf16.mxu0 %v6567
        %6714 = vmatpush1.bf16.msra.mxu0 %v6566
        %6715 = vmatprep.subr.bf16.mxu0 %v6571
        %6716 = vmatpush1.bf16.msra.mxu0 %v6570
        %6717 = vmatprep.subr.bf16.mxu0 %v6575
        %6718 = vmatpush1.bf16.msra.mxu0 %v6574
        %6719 = vmatprep.subr.bf16.mxu0 %v6579
        %6720 = vmatpush1.bf16.msra.mxu0 %v6578
        %6721 = vmatprep.subr.bf16.mxu0 %v6583
        %6722 = vmatpush1.bf16.msra.mxu0 %v6582
        %6723 = vmatprep.subr.bf16.mxu0 %v6587
        %6724 = vmatpush1.bf16.msra.mxu0 %v6586
        %6725 = vmatprep.subr.bf16.mxu0 %v6591
        %6726 = vmatpush1.bf16.msra.mxu0 %v6590
        %6727 = vmatprep.subr.bf16.mxu0 %v6595
        %6728 = vmatpush1.bf16.msra.mxu0 %v6594
        %6729 = vmatprep.subr.bf16.mxu0 %v6662
        %6730 = vmatpush1.bf16.msra.mxu0 %v6659
        %6731 = vmatprep.subr.bf16.mxu0 0
        %6732 = vmatpush1.bf16.msra.mxu0 0
        %6733 = vmatprep.subr.bf16.mxu0 0
        %6734 = vmatpush1.bf16.msra.mxu0 0
        %6735 = vmatprep.subr.bf16.mxu0 0
        %6736 = vmatpush1.bf16.msra.mxu0 0
        %6737 = vmatprep.mubr.bf16.mxu0 %v6649
        %6738 = vmatmul.mubr.bf16.gmra.mrb[0].mxu0 %v6345
        %v6739 = vpop.f32.mrb[0].mxu0
        %v6740 = vadd.f32 0.0, %v6739
        %v6741 = vpop.f32.mrb[0].mxu0
        %v6742 = vadd.f32 0.0, %v6741
        %v6743 = vpop.f32.mrb[0].mxu0
        %v6744 = vpop.f32.mrb[0].mxu0
        %6745 = vdwg.mxu0
        %v6796 = vunpack.c.l.b16 %v6295
        %v6797 = vunpack.c.h.b16 %v6295
        %v6798 = vunpack.c.l.b16 %v6296
        %v6799 = vunpack.c.h.b16 %v6296
        %v6800 = vunpack.c.l.b16 %v6297
        %v6801 = vunpack.c.h.b16 %v6297
        %v6802 = vunpack.c.l.b16 %v6298
        %v6803 = vunpack.c.h.b16 %v6298
        %v6804 = vunpack.c.l.b16 %v6299
        %v6805 = vunpack.c.h.b16 %v6299
        %v6806 = vunpack.c.l.b16 %v6300
        %v6807 = vunpack.c.h.b16 %v6300
        %v6808 = vunpack.c.l.b16 %v6301
        %v6809 = vunpack.c.h.b16 %v6301
        %v6810 = vunpack.c.l.b16 %v6302
        %v6811 = vunpack.c.h.b16 %v6302
        %v6812 = vunpack.c.l.b16 %v6303
        %v6813 = vunpack.c.h.b16 %v6303
        %v6814 = vunpack.c.l.b16 %v6304
        %v6815 = vunpack.c.h.b16 %v6304
        %v6816 = vunpack.c.l.b16 %v6305
        %v6817 = vunpack.c.h.b16 %v6305
        %v6818 = vunpack.c.l.b16 %v6306
        %v6819 = vunpack.c.h.b16 %v6306
        %v6820 = vunpack.c.l.b16 %v6307
        %v6821 = vunpack.c.h.b16 %v6307
        %v6822 = vunpack.c.l.b16 %v6308
        %v6823 = vunpack.c.h.b16 %v6308
        %v6824 = vunpack.c.l.b16 %v6309
        %v6825 = vunpack.c.h.b16 %v6309
        %v6826 = vunpack.c.l.b16 %v6310
        %v6827 = vunpack.c.h.b16 %v6310
        %v6828 = vunpack.c.l.b16 %v6311
        %v6829 = vunpack.c.h.b16 %v6311
        %v6830 = vunpack.c.l.b16 %v6312
        %v6831 = vunpack.c.h.b16 %v6312
        %v6832 = vunpack.c.l.b16 %v6313
        %v6833 = vunpack.c.h.b16 %v6313
        %v6834 = vunpack.c.l.b16 %v6314
        %v6835 = vunpack.c.h.b16 %v6314
        %v6836 = vunpack.c.l.b16 %v6315
        %v6837 = vunpack.c.h.b16 %v6315
        %v6838 = vunpack.c.l.b16 %v6316
        %v6839 = vunpack.c.h.b16 %v6316
        %v6840 = vunpack.c.l.b16 %v6317
        %v6841 = vunpack.c.h.b16 %v6317
        %v6842 = vunpack.c.l.b16 %v6318
        %v6843 = vunpack.c.h.b16 %v6318
        %v6844 = vunpack.c.l.b16 %v6319
        %v6845 = vunpack.c.h.b16 %v6319
        %v6846 = vunpack.c.l.b16 %v6320
        %v6847 = vunpack.c.h.b16 %v6320
        %v6848 = vunpack.c.l.b16 %v6321
        %v6849 = vunpack.c.h.b16 %v6321
        %v6850 = vunpack.c.l.b16 %v6322
        %v6851 = vunpack.c.h.b16 %v6322
        %v6852 = vunpack.c.l.b16 %v6323
        %v6853 = vunpack.c.h.b16 %v6323
        %v6854 = vunpack.c.l.b16 %v6324
        %v6855 = vunpack.c.h.b16 %v6324
        %v6856 = vunpack.c.l.b16 %v6325
        %v6857 = vunpack.c.h.b16 %v6325
        %v6858 = vunpack.c.l.b16 %v6326
        %v6859 = vunpack.c.h.b16 %v6326
        %v6860 = vunpack.c.l.b16 %v6327
        %v6861 = vunpack.c.h.b16 %v6327
        %v6862 = vunpack.c.l.b16 %v6328
        %v6863 = vunpack.c.h.b16 %v6328
        %v6864 = vunpack.c.l.b16 %v6329
        %v6865 = vunpack.c.h.b16 %v6329
        %v6866 = vunpack.c.l.b16 %v6330
        %v6867 = vunpack.c.h.b16 %v6330
        %v6868 = vunpack.c.l.b16 %v6331
        %v6869 = vunpack.c.h.b16 %v6331
        %v6870 = vunpack.c.l.b16 %v6332
        %v6871 = vunpack.c.h.b16 %v6332
        %v6872 = vunpack.c.l.b16 %v6333
        %v6873 = vunpack.c.h.b16 %v6333
        %v6874 = vunpack.c.l.b16 %v6334
        %v6875 = vunpack.c.h.b16 %v6334
        %v6876 = vunpack.c.l.b16 %v6335
        %v6877 = vunpack.c.h.b16 %v6335
        %v6878 = vunpack.c.l.b16 %v6336
        %v6879 = vunpack.c.h.b16 %v6336
        %v6880 = vunpack.c.l.b16 %v6337
        %v6881 = vunpack.c.h.b16 %v6337
        %v6882 = vunpack.c.l.b16 %v6338
        %v6883 = vunpack.c.h.b16 %v6338
        %v6884 = vunpack.c.l.b16 %v6339
        %v6885 = vunpack.c.h.b16 %v6339
        %v6886 = vunpack.c.l.b16 %v6340
        %v6887 = vunpack.c.h.b16 %v6340
        %v6888 = vunpack.c.l.b16 %v6341
        %v6889 = vunpack.c.h.b16 %v6341
        %v6890 = vunpack.c.l.b16 %v6342
        %v6891 = vunpack.c.h.b16 %v6342
        %v6892 = vunpack.c.l.b16 %v6343
        %v6893 = vunpack.c.h.b16 %v6343
        %v6894 = vunpack.c.l.b16 %v6344
        %v6895 = vunpack.c.h.b16 %v6344
        %v6896 = vpack.c.b16 %v6800, %v6796
        %v6897 = vpack.c.b16 %v6801, %v6797
        %v6898 = vpack.c.b16 %v6802, %v6798
        %v6899 = vpack.c.b16 %v6803, %v6799
        %v6900 = vpack.c.b16 %v6808, %v6804
        %v6901 = vpack.c.b16 %v6809, %v6805
        %v6902 = vpack.c.b16 %v6810, %v6806
        %v6903 = vpack.c.b16 %v6811, %v6807
        %v6904 = vpack.c.b16 %v6816, %v6812
        %v6905 = vpack.c.b16 %v6817, %v6813
        %v6906 = vpack.c.b16 %v6818, %v6814
        %v6907 = vpack.c.b16 %v6819, %v6815
        %v6908 = vpack.c.b16 %v6824, %v6820
        %v6909 = vpack.c.b16 %v6825, %v6821
        %v6910 = vpack.c.b16 %v6826, %v6822
        %v6911 = vpack.c.b16 %v6827, %v6823
        %v6912 = vpack.c.b16 %v6832, %v6828
        %v6913 = vpack.c.b16 %v6833, %v6829
        %v6914 = vpack.c.b16 %v6834, %v6830
        %v6915 = vpack.c.b16 %v6835, %v6831
        %v6916 = vpack.c.b16 %v6840, %v6836
        %v6917 = vpack.c.b16 %v6841, %v6837
        %v6918 = vpack.c.b16 %v6842, %v6838
        %v6919 = vpack.c.b16 %v6843, %v6839
        %v6920 = vpack.c.b16 %v6848, %v6844
        %v6921 = vpack.c.b16 %v6849, %v6845
        %v6922 = vpack.c.b16 %v6850, %v6846
        %v6923 = vpack.c.b16 %v6851, %v6847
        %v6924 = vpack.c.b16 %v6856, %v6852
        %v6925 = vpack.c.b16 %v6857, %v6853
        %v6926 = vpack.c.b16 %v6858, %v6854
        %v6927 = vpack.c.b16 %v6859, %v6855
        %v6928 = vpack.c.b16 %v6864, %v6860
        %v6929 = vpack.c.b16 %v6865, %v6861
        %v6930 = vpack.c.b16 %v6866, %v6862
        %v6931 = vpack.c.b16 %v6867, %v6863
        %v6932 = vpack.c.b16 %v6872, %v6868
        %v6933 = vpack.c.b16 %v6873, %v6869
        %v6934 = vpack.c.b16 %v6874, %v6870
        %v6935 = vpack.c.b16 %v6875, %v6871
        %v6936 = vpack.c.b16 %v6880, %v6876
        %v6937 = vpack.c.b16 %v6881, %v6877
        %v6938 = vpack.c.b16 %v6882, %v6878
        %v6939 = vpack.c.b16 %v6883, %v6879
        %v6940 = vpack.c.b16 %v6888, %v6884
        %v6941 = vpack.c.b16 %v6889, %v6885
        %v6942 = vpack.c.b16 %v6890, %v6886
        %v6943 = vpack.c.b16 %v6891, %v6887
        %v6944 = vpack.c.b16 %v6892, %v6892
        %v6945 = vpack.c.b16 %v6893, %v6893
        %v6946 = vpack.c.b16 %v6894, %v6894
        %v6947 = vpack.c.b16 %v6895, %v6895
        %v6997 = vsel %vm6277, %v6294, 0
        %v7000 = vsel %vm6651, %v6944, 0
        %v7003 = vsel %vm6651, %v6945, 0
        %v7006 = vsel %vm6651, %v6946, 0
        %v7009 = vsel %vm6651, %v6947, 0
        %7011 = vmatprep.subr.bf16.mxu0 %v6897
        %7012 = vmatpush1.bf16.msra.mxu0 %v6896
        %7013 = vmatprep.subr.bf16.mxu0 %v6901
        %7014 = vmatpush1.bf16.msra.mxu0 %v6900
        %7015 = vmatprep.subr.bf16.mxu0 %v6905
        %7016 = vmatpush1.bf16.msra.mxu0 %v6904
        %7017 = vmatprep.subr.bf16.mxu0 %v6909
        %7018 = vmatpush1.bf16.msra.mxu0 %v6908
        %7019 = vmatprep.subr.bf16.mxu0 %v6913
        %7020 = vmatpush1.bf16.msra.mxu0 %v6912
        %7021 = vmatprep.subr.bf16.mxu0 %v6917
        %7022 = vmatpush1.bf16.msra.mxu0 %v6916
        %7023 = vmatprep.subr.bf16.mxu0 %v6921
        %7024 = vmatpush1.bf16.msra.mxu0 %v6920
        %7025 = vmatprep.subr.bf16.mxu0 %v6925
        %7026 = vmatpush1.bf16.msra.mxu0 %v6924
        %7027 = vmatprep.subr.bf16.mxu0 %v6929
        %7028 = vmatpush1.bf16.msra.mxu0 %v6928
        %7029 = vmatprep.subr.bf16.mxu0 %v6933
        %7030 = vmatpush1.bf16.msra.mxu0 %v6932
        %7031 = vmatprep.subr.bf16.mxu0 %v6937
        %7032 = vmatpush1.bf16.msra.mxu0 %v6936
        %7033 = vmatprep.subr.bf16.mxu0 %v6941
        %7034 = vmatpush1.bf16.msra.mxu0 %v6940
        %7035 = vmatprep.subr.bf16.mxu0 %v7003
        %7036 = vmatpush1.bf16.msra.mxu0 %v7000
        %7037 = vmatprep.subr.bf16.mxu0 0
        %7038 = vmatpush1.bf16.msra.mxu0 0
        %7039 = vmatprep.subr.bf16.mxu0 0
        %7040 = vmatpush1.bf16.msra.mxu0 0
        %7041 = vmatprep.subr.bf16.mxu0 0
        %7042 = vmatpush1.bf16.msra.mxu0 0
        %7043 = vmatprep.mubr.bf16.mxu0 %v6997
        %7044 = vmatmul.mubr.bf16.gmra.mrb[0].mxu0 %v6293
        %v7045 = vpop.f32.mrb[0].mxu0
        %v7046 = vadd.f32 %v6699, %v7045
        %v7047 = vpop.f32.mrb[0].mxu0
        %v7048 = vadd.f32 %v6701, %v7047
        %v7049 = vpop.f32.mrb[0].mxu0
        %v7050 = vpop.f32.mrb[0].mxu0
        %7051 = vdwg.mxu0
        %7052 = vmatprep.subr.bf16.mxu0 %v6899
        %7053 = vmatpush1.bf16.msra.mxu0 %v6898
        %7054 = vmatprep.subr.bf16.mxu0 %v6903
        %7055 = vmatpush1.bf16.msra.mxu0 %v6902
        %7056 = vmatprep.subr.bf16.mxu0 %v6907
        %7057 = vmatpush1.bf16.msra.mxu0 %v6906
        %7058 = vmatprep.subr.bf16.mxu0 %v6911
        %7059 = vmatpush1.bf16.msra.mxu0 %v6910
        %7060 = vmatprep.subr.bf16.mxu0 %v6915
        %7061 = vmatpush1.bf16.msra.mxu0 %v6914
        %7062 = vmatprep.subr.bf16.mxu0 %v6919
        %7063 = vmatpush1.bf16.msra.mxu0 %v6918
        %7064 = vmatprep.subr.bf16.mxu0 %v6923
        %7065 = vmatpush1.bf16.msra.mxu0 %v6922
        %7066 = vmatprep.subr.bf16.mxu0 %v6927
        %7067 = vmatpush1.bf16.msra.mxu0 %v6926
        %7068 = vmatprep.subr.bf16.mxu0 %v6931
        %7069 = vmatpush1.bf16.msra.mxu0 %v6930
        %7070 = vmatprep.subr.bf16.mxu0 %v6935
        %7071 = vmatpush1.bf16.msra.mxu0 %v6934
        %7072 = vmatprep.subr.bf16.mxu0 %v6939
        %7073 = vmatpush1.bf16.msra.mxu0 %v6938
        %7074 = vmatprep.subr.bf16.mxu0 %v6943
        %7075 = vmatpush1.bf16.msra.mxu0 %v6942
        %7076 = vmatprep.subr.bf16.mxu0 %v7009
        %7077 = vmatpush1.bf16.msra.mxu0 %v7006
        %7078 = vmatprep.subr.bf16.mxu0 0
        %7079 = vmatpush1.bf16.msra.mxu0 0
        %7080 = vmatprep.subr.bf16.mxu0 0
        %7081 = vmatpush1.bf16.msra.mxu0 0
        %7082 = vmatprep.subr.bf16.mxu0 0
        %7083 = vmatpush1.bf16.msra.mxu0 0
        %7084 = vmatprep.mubr.bf16.mxu0 %v6997
        %7085 = vmatmul.mubr.bf16.gmra.mrb[0].mxu0 %v6293
        %v7086 = vpop.f32.mrb[0].mxu0
        %v7087 = vadd.f32 %v6740, %v7086
        %v7088 = vpop.f32.mrb[0].mxu0
        %v7089 = vadd.f32 %v6742, %v7088
        %v7090 = vpop.f32.mrb[0].mxu0
        %v7091 = vpop.f32.mrb[0].mxu0
        %7092 = vdwg.mxu0
        %v7093 = vpack.c.bf16 %v6285, %v6285
        %v7094 = vpack.c.bf16 %v6288, %v6288
        %s7095 = scalar_lea.vmem %s5, 800
        %v7096 = vld [vmem:[%s7095] sm:$0xff]
        %v7097 = vld [vmem:[%s7095 + $0x8] sm:$0xff]
        %v7098 = vld [vmem:[%s7095 + $0x10] sm:$0xff]
        %v7099 = vld [vmem:[%s7095 + $0x18] sm:$0xff]
        %v7100 = vld [vmem:[%s7095 + $0x20] sm:$0xff]
        %v7101 = vld [vmem:[%s7095 + $0x28] sm:$0xff]
        %v7102 = vld [vmem:[%s7095 + $0x30] sm:$0xff]
        %v7103 = vld [vmem:[%s7095 + $0x38] sm:$0xff]
        %v7104 = vld [vmem:[%s7095 + $0x40] sm:$0xff]
        %v7105 = vld [vmem:[%s7095 + $0x48] sm:$0xff]
        %v7106 = vld [vmem:[%s7095 + $0x50] sm:$0xff]
        %v7107 = vld [vmem:[%s7095 + $0x58] sm:$0xff]
        %v7108 = vld [vmem:[%s7095 + $0x60] sm:$0xff]
        %v7109 = vld [vmem:[%s7095 + $0x68] sm:$0xff]
        %v7110 = vld [vmem:[%s7095 + $0x70] sm:$0xff]
        %v7111 = vld [vmem:[%s7095 + $0x78] sm:$0xff]
        %v7112 = vld [vmem:[%s7095 + $0x80] sm:$0xff]
        %v7113 = vld [vmem:[%s7095 + $0x88] sm:$0xff]
        %v7114 = vld [vmem:[%s7095 + $0x90] sm:$0xff]
        %v7115 = vld [vmem:[%s7095 + $0x98] sm:$0xff]
        %v7116 = vld [vmem:[%s7095 + $0xa0] sm:$0xff]
        %v7117 = vld [vmem:[%s7095 + $0xa8] sm:$0xff]
        %v7118 = vld [vmem:[%s7095 + $0xb0] sm:$0xff]
        %v7119 = vld [vmem:[%s7095 + $0xb8] sm:$0xff]
        %v7120 = vld [vmem:[%s7095 + $0xc0] sm:$0xff]
        %v7121 = vld [vmem:[%s7095 + $0xc8] sm:$0xff]
        %v7122 = vld [vmem:[%s7095 + $0xd0] sm:$0xff]
        %v7123 = vld [vmem:[%s7095 + $0xd8] sm:$0xff]
        %v7124 = vld [vmem:[%s7095 + $0xe0] sm:$0xff]
        %v7125 = vld [vmem:[%s7095 + $0xe8] sm:$0xff]
        %v7126 = vld [vmem:[%s7095 + $0xf0] sm:$0xff]
        %v7127 = vld [vmem:[%s7095 + $0xf8] sm:$0xff]
        %v7128 = vld [vmem:[%s7095 + $0x100] sm:$0xff]
        %v7129 = vld [vmem:[%s7095 + $0x108] sm:$0xff]
        %v7130 = vld [vmem:[%s7095 + $0x110] sm:$0xff]
        %v7131 = vld [vmem:[%s7095 + $0x118] sm:$0xff]
        %v7132 = vld [vmem:[%s7095 + $0x120] sm:$0xff]
        %v7133 = vld [vmem:[%s7095 + $0x128] sm:$0xff]
        %v7134 = vld [vmem:[%s7095 + $0x130] sm:$0xff]
        %v7135 = vld [vmem:[%s7095 + $0x138] sm:$0xff]
        %v7136 = vld [vmem:[%s7095 + $0x140] sm:$0xff]
        %v7137 = vld [vmem:[%s7095 + $0x148] sm:$0xff]
        %v7138 = vld [vmem:[%s7095 + $0x150] sm:$0xff]
        %v7139 = vld [vmem:[%s7095 + $0x158] sm:$0xff]
        %v7140 = vld [vmem:[%s7095 + $0x160] sm:$0xff]
        %v7141 = vld [vmem:[%s7095 + $0x168] sm:$0xff]
        %v7142 = vld [vmem:[%s7095 + $0x170] sm:$0xff]
        %v7143 = vld [vmem:[%s7095 + $0x178] sm:$0xff]
        %v7144 = vld [vmem:[%s7095 + $0x180] sm:$0xff]
        %v7145 = vld [vmem:[%s7095 + $0x188] sm:$0xff]
        %v7196 = vunpack.c.l.b16 %v7096
        %v7197 = vunpack.c.h.b16 %v7096
        %v7198 = vunpack.c.l.b16 %v7097
        %v7199 = vunpack.c.h.b16 %v7097
        %v7200 = vunpack.c.l.b16 %v7098
        %v7201 = vunpack.c.h.b16 %v7098
        %v7202 = vunpack.c.l.b16 %v7099
        %v7203 = vunpack.c.h.b16 %v7099
        %v7204 = vunpack.c.l.b16 %v7100
        %v7205 = vunpack.c.h.b16 %v7100
        %v7206 = vunpack.c.l.b16 %v7101
        %v7207 = vunpack.c.h.b16 %v7101
        %v7208 = vunpack.c.l.b16 %v7102
        %v7209 = vunpack.c.h.b16 %v7102
        %v7210 = vunpack.c.l.b16 %v7103
        %v7211 = vunpack.c.h.b16 %v7103
        %v7212 = vunpack.c.l.b16 %v7104
        %v7213 = vunpack.c.h.b16 %v7104
        %v7214 = vunpack.c.l.b16 %v7105
        %v7215 = vunpack.c.h.b16 %v7105
        %v7216 = vunpack.c.l.b16 %v7106
        %v7217 = vunpack.c.h.b16 %v7106
        %v7218 = vunpack.c.l.b16 %v7107
        %v7219 = vunpack.c.h.b16 %v7107
        %v7220 = vunpack.c.l.b16 %v7108
        %v7221 = vunpack.c.h.b16 %v7108
        %v7222 = vunpack.c.l.b16 %v7109
        %v7223 = vunpack.c.h.b16 %v7109
        %v7224 = vunpack.c.l.b16 %v7110
        %v7225 = vunpack.c.h.b16 %v7110
        %v7226 = vunpack.c.l.b16 %v7111
        %v7227 = vunpack.c.h.b16 %v7111
        %v7228 = vunpack.c.l.b16 %v7112
        %v7229 = vunpack.c.h.b16 %v7112
        %v7230 = vunpack.c.l.b16 %v7113
        %v7231 = vunpack.c.h.b16 %v7113
        %v7232 = vunpack.c.l.b16 %v7114
        %v7233 = vunpack.c.h.b16 %v7114
        %v7234 = vunpack.c.l.b16 %v7115
        %v7235 = vunpack.c.h.b16 %v7115
        %v7236 = vunpack.c.l.b16 %v7116
        %v7237 = vunpack.c.h.b16 %v7116
        %v7238 = vunpack.c.l.b16 %v7117
        %v7239 = vunpack.c.h.b16 %v7117
        %v7240 = vunpack.c.l.b16 %v7118
        %v7241 = vunpack.c.h.b16 %v7118
        %v7242 = vunpack.c.l.b16 %v7119
        %v7243 = vunpack.c.h.b16 %v7119
        %v7244 = vunpack.c.l.b16 %v7120
        %v7245 = vunpack.c.h.b16 %v7120
        %v7246 = vunpack.c.l.b16 %v7121
        %v7247 = vunpack.c.h.b16 %v7121
        %v7248 = vunpack.c.l.b16 %v7122
        %v7249 = vunpack.c.h.b16 %v7122
        %v7250 = vunpack.c.l.b16 %v7123
        %v7251 = vunpack.c.h.b16 %v7123
        %v7252 = vunpack.c.l.b16 %v7124
        %v7253 = vunpack.c.h.b16 %v7124
        %v7254 = vunpack.c.l.b16 %v7125
        %v7255 = vunpack.c.h.b16 %v7125
        %v7256 = vunpack.c.l.b16 %v7126
        %v7257 = vunpack.c.h.b16 %v7126
        %v7258 = vunpack.c.l.b16 %v7127
        %v7259 = vunpack.c.h.b16 %v7127
        %v7260 = vunpack.c.l.b16 %v7128
        %v7261 = vunpack.c.h.b16 %v7128
        %v7262 = vunpack.c.l.b16 %v7129
        %v7263 = vunpack.c.h.b16 %v7129
        %v7264 = vunpack.c.l.b16 %v7130
        %v7265 = vunpack.c.h.b16 %v7130
        %v7266 = vunpack.c.l.b16 %v7131
        %v7267 = vunpack.c.h.b16 %v7131
        %v7268 = vunpack.c.l.b16 %v7132
        %v7269 = vunpack.c.h.b16 %v7132
        %v7270 = vunpack.c.l.b16 %v7133
        %v7271 = vunpack.c.h.b16 %v7133
        %v7272 = vunpack.c.l.b16 %v7134
        %v7273 = vunpack.c.h.b16 %v7134
        %v7274 = vunpack.c.l.b16 %v7135
        %v7275 = vunpack.c.h.b16 %v7135
        %v7276 = vunpack.c.l.b16 %v7136
        %v7277 = vunpack.c.h.b16 %v7136
        %v7278 = vunpack.c.l.b16 %v7137
        %v7279 = vunpack.c.h.b16 %v7137
        %v7280 = vunpack.c.l.b16 %v7138
        %v7281 = vunpack.c.h.b16 %v7138
        %v7282 = vunpack.c.l.b16 %v7139
        %v7283 = vunpack.c.h.b16 %v7139
        %v7284 = vunpack.c.l.b16 %v7140
        %v7285 = vunpack.c.h.b16 %v7140
        %v7286 = vunpack.c.l.b16 %v7141
        %v7287 = vunpack.c.h.b16 %v7141
        %v7288 = vunpack.c.l.b16 %v7142
        %v7289 = vunpack.c.h.b16 %v7142
        %v7290 = vunpack.c.l.b16 %v7143
        %v7291 = vunpack.c.h.b16 %v7143
        %v7292 = vunpack.c.l.b16 %v7144
        %v7293 = vunpack.c.h.b16 %v7144
        %v7294 = vunpack.c.l.b16 %v7145
        %v7295 = vunpack.c.h.b16 %v7145
        %v7296 = vpack.c.b16 %v7200, %v7196
        %v7297 = vpack.c.b16 %v7201, %v7197
        %v7298 = vpack.c.b16 %v7202, %v7198
        %v7299 = vpack.c.b16 %v7203, %v7199
        %v7300 = vpack.c.b16 %v7208, %v7204
        %v7301 = vpack.c.b16 %v7209, %v7205
        %v7302 = vpack.c.b16 %v7210, %v7206
        %v7303 = vpack.c.b16 %v7211, %v7207
        %v7304 = vpack.c.b16 %v7216, %v7212
        %v7305 = vpack.c.b16 %v7217, %v7213
        %v7306 = vpack.c.b16 %v7218, %v7214
        %v7307 = vpack.c.b16 %v7219, %v7215
        %v7308 = vpack.c.b16 %v7224, %v7220
        %v7309 = vpack.c.b16 %v7225, %v7221
        %v7310 = vpack.c.b16 %v7226, %v7222
        %v7311 = vpack.c.b16 %v7227, %v7223
        %v7312 = vpack.c.b16 %v7232, %v7228
        %v7313 = vpack.c.b16 %v7233, %v7229
        %v7314 = vpack.c.b16 %v7234, %v7230
        %v7315 = vpack.c.b16 %v7235, %v7231
        %v7316 = vpack.c.b16 %v7240, %v7236
        %v7317 = vpack.c.b16 %v7241, %v7237
        %v7318 = vpack.c.b16 %v7242, %v7238
        %v7319 = vpack.c.b16 %v7243, %v7239
        %v7320 = vpack.c.b16 %v7248, %v7244
        %v7321 = vpack.c.b16 %v7249, %v7245
        %v7322 = vpack.c.b16 %v7250, %v7246
        %v7323 = vpack.c.b16 %v7251, %v7247
        %v7324 = vpack.c.b16 %v7256, %v7252
        %v7325 = vpack.c.b16 %v7257, %v7253
        %v7326 = vpack.c.b16 %v7258, %v7254
        %v7327 = vpack.c.b16 %v7259, %v7255
        %v7328 = vpack.c.b16 %v7264, %v7260
        %v7329 = vpack.c.b16 %v7265, %v7261
        %v7330 = vpack.c.b16 %v7266, %v7262
        %v7331 = vpack.c.b16 %v7267, %v7263
        %v7332 = vpack.c.b16 %v7272, %v7268
        %v7333 = vpack.c.b16 %v7273, %v7269
        %v7334 = vpack.c.b16 %v7274, %v7270
        %v7335 = vpack.c.b16 %v7275, %v7271
        %v7336 = vpack.c.b16 %v7280, %v7276
        %v7337 = vpack.c.b16 %v7281, %v7277
        %v7338 = vpack.c.b16 %v7282, %v7278
        %v7339 = vpack.c.b16 %v7283, %v7279
        %v7340 = vpack.c.b16 %v7288, %v7284
        %v7341 = vpack.c.b16 %v7289, %v7285
        %v7342 = vpack.c.b16 %v7290, %v7286
        %v7343 = vpack.c.b16 %v7291, %v7287
        %v7344 = vpack.c.b16 %v7292, %v7292
        %v7345 = vpack.c.b16 %v7293, %v7293
        %v7346 = vpack.c.b16 %v7294, %v7294
        %v7347 = vpack.c.b16 %v7295, %v7295
        %v7397 = vsel %vm6277, %v7094, 0
        %v7400 = vsel %vm6651, %v7344, 0
        %v7403 = vsel %vm6651, %v7345, 0
        %v7406 = vsel %vm6651, %v7346, 0
        %v7409 = vsel %vm6651, %v7347, 0
        %7411 = vmatprep.subr.bf16.mxu0 %v7297
        %7412 = vmatpush1.bf16.msra.mxu0 %v7296
        %7413 = vmatprep.subr.bf16.mxu0 %v7301
        %7414 = vmatpush1.bf16.msra.mxu0 %v7300
        %7415 = vmatprep.subr.bf16.mxu0 %v7305
        %7416 = vmatpush1.bf16.msra.mxu0 %v7304
        %7417 = vmatprep.subr.bf16.mxu0 %v7309
        %7418 = vmatpush1.bf16.msra.mxu0 %v7308
        %7419 = vmatprep.subr.bf16.mxu0 %v7313
        %7420 = vmatpush1.bf16.msra.mxu0 %v7312
        %7421 = vmatprep.subr.bf16.mxu0 %v7317
        %7422 = vmatpush1.bf16.msra.mxu0 %v7316
        %7423 = vmatprep.subr.bf16.mxu0 %v7321
        %7424 = vmatpush1.bf16.msra.mxu0 %v7320
        %7425 = vmatprep.subr.bf16.mxu0 %v7325
        %7426 = vmatpush1.bf16.msra.mxu0 %v7324
        %7427 = vmatprep.subr.bf16.mxu0 %v7329
        %7428 = vmatpush1.bf16.msra.mxu0 %v7328
        %7429 = vmatprep.subr.bf16.mxu0 %v7333
        %7430 = vmatpush1.bf16.msra.mxu0 %v7332
        %7431 = vmatprep.subr.bf16.mxu0 %v7337
        %7432 = vmatpush1.bf16.msra.mxu0 %v7336
        %7433 = vmatprep.subr.bf16.mxu0 %v7341
        %7434 = vmatpush1.bf16.msra.mxu0 %v7340
        %7435 = vmatprep.subr.bf16.mxu0 %v7403
        %7436 = vmatpush1.bf16.msra.mxu0 %v7400
        %7437 = vmatprep.subr.bf16.mxu0 0
        %7438 = vmatpush1.bf16.msra.mxu0 0
        %7439 = vmatprep.subr.bf16.mxu0 0
        %7440 = vmatpush1.bf16.msra.mxu0 0
        %7441 = vmatprep.subr.bf16.mxu0 0
        %7442 = vmatpush1.bf16.msra.mxu0 0
        %7443 = vmatprep.mubr.bf16.mxu0 %v7397
        %7444 = vmatmul.mubr.bf16.gmra.mrb[0].mxu0 %v7093
        %v7445 = vpop.f32.mrb[0].mxu0
        %v7446 = vadd.f32 0.0, %v7445
        %v7447 = vpop.f32.mrb[0].mxu0
        %v7448 = vadd.f32 0.0, %v7447
        %v7449 = vpop.f32.mrb[0].mxu0
        %v7450 = vpop.f32.mrb[0].mxu0
        %7451 = vdwg.mxu0
        %7452 = vmatprep.subr.bf16.mxu0 %v7299
        %7453 = vmatpush1.bf16.msra.mxu0 %v7298
        %7454 = vmatprep.subr.bf16.mxu0 %v7303
        %7455 = vmatpush1.bf16.msra.mxu0 %v7302
        %7456 = vmatprep.subr.bf16.mxu0 %v7307
        %7457 = vmatpush1.bf16.msra.mxu0 %v7306
        %7458 = vmatprep.subr.bf16.mxu0 %v7311
        %7459 = vmatpush1.bf16.msra.mxu0 %v7310
        %7460 = vmatprep.subr.bf16.mxu0 %v7315
        %7461 = vmatpush1.bf16.msra.mxu0 %v7314
        %7462 = vmatprep.subr.bf16.mxu0 %v7319
        %7463 = vmatpush1.bf16.msra.mxu0 %v7318
        %7464 = vmatprep.subr.bf16.mxu0 %v7323
        %7465 = vmatpush1.bf16.msra.mxu0 %v7322
        %7466 = vmatprep.subr.bf16.mxu0 %v7327
        %7467 = vmatpush1.bf16.msra.mxu0 %v7326
        %7468 = vmatprep.subr.bf16.mxu0 %v7331
        %7469 = vmatpush1.bf16.msra.mxu0 %v7330
        %7470 = vmatprep.subr.bf16.mxu0 %v7335
        %7471 = vmatpush1.bf16.msra.mxu0 %v7334
        %7472 = vmatprep.subr.bf16.mxu0 %v7339
        %7473 = vmatpush1.bf16.msra.mxu0 %v7338
        %7474 = vmatprep.subr.bf16.mxu0 %v7343
        %7475 = vmatpush1.bf16.msra.mxu0 %v7342
        %7476 = vmatprep.subr.bf16.mxu0 %v7409
        %7477 = vmatpush1.bf16.msra.mxu0 %v7406
        %7478 = vmatprep.subr.bf16.mxu0 0
        %7479 = vmatpush1.bf16.msra.mxu0 0
        %7480 = vmatprep.subr.bf16.mxu0 0
        %7481 = vmatpush1.bf16.msra.mxu0 0
        %7482 = vmatprep.subr.bf16.mxu0 0
        %7483 = vmatpush1.bf16.msra.mxu0 0
        %7484 = vmatprep.mubr.bf16.mxu0 %v7397
        %7485 = vmatmul.mubr.bf16.gmra.mrb[0].mxu0 %v7093
        %v7486 = vpop.f32.mrb[0].mxu0
        %v7487 = vadd.f32 0.0, %v7486
        %v7488 = vpop.f32.mrb[0].mxu0
        %v7489 = vadd.f32 0.0, %v7488
        %v7490 = vpop.f32.mrb[0].mxu0
        %v7491 = vpop.f32.mrb[0].mxu0
        %7492 = vdwg.mxu0
        %v7493 = vadd.f32 %v7046, %v7446
        %v7494 = vadd.f32 %v7048, %v7448
        %v7495 = vadd.f32 %v7087, %v7487
        %v7496 = vadd.f32 %v7089, %v7489
        %v7497 = vpack.c.bf16 %v6289, %v6289
        %v7498 = vpack.c.bf16 %v6292, %v6292
        %s7499 = scalar_lea.vmem %s5, 1200
        %v7500 = vld [vmem:[%s7499] sm:$0xff]
        %v7501 = vld [vmem:[%s7499 + $0x8] sm:$0xff]
        %v7502 = vld [vmem:[%s7499 + $0x10] sm:$0xff]
        %v7503 = vld [vmem:[%s7499 + $0x18] sm:$0xff]
        %v7504 = vld [vmem:[%s7499 + $0x20] sm:$0xff]
        %v7505 = vld [vmem:[%s7499 + $0x28] sm:$0xff]
        %v7506 = vld [vmem:[%s7499 + $0x30] sm:$0xff]
        %v7507 = vld [vmem:[%s7499 + $0x38] sm:$0xff]
        %v7508 = vld [vmem:[%s7499 + $0x40] sm:$0xff]
        %v7509 = vld [vmem:[%s7499 + $0x48] sm:$0xff]
        %v7510 = vld [vmem:[%s7499 + $0x50] sm:$0xff]
        %v7511 = vld [vmem:[%s7499 + $0x58] sm:$0xff]
        %v7512 = vld [vmem:[%s7499 + $0x60] sm:$0xff]
        %v7513 = vld [vmem:[%s7499 + $0x68] sm:$0xff]
        %v7514 = vld [vmem:[%s7499 + $0x70] sm:$0xff]
        %v7515 = vld [vmem:[%s7499 + $0x78] sm:$0xff]
        %v7516 = vld [vmem:[%s7499 + $0x80] sm:$0xff]
        %v7517 = vld [vmem:[%s7499 + $0x88] sm:$0xff]
        %v7518 = vld [vmem:[%s7499 + $0x90] sm:$0xff]
        %v7519 = vld [vmem:[%s7499 + $0x98] sm:$0xff]
        %v7520 = vld [vmem:[%s7499 + $0xa0] sm:$0xff]
        %v7521 = vld [vmem:[%s7499 + $0xa8] sm:$0xff]
        %v7522 = vld [vmem:[%s7499 + $0xb0] sm:$0xff]
        %v7523 = vld [vmem:[%s7499 + $0xb8] sm:$0xff]
        %v7524 = vld [vmem:[%s7499 + $0xc0] sm:$0xff]
        %v7525 = vld [vmem:[%s7499 + $0xc8] sm:$0xff]
        %v7526 = vld [vmem:[%s7499 + $0xd0] sm:$0xff]
        %v7527 = vld [vmem:[%s7499 + $0xd8] sm:$0xff]
        %v7528 = vld [vmem:[%s7499 + $0xe0] sm:$0xff]
        %v7529 = vld [vmem:[%s7499 + $0xe8] sm:$0xff]
        %v7530 = vld [vmem:[%s7499 + $0xf0] sm:$0xff]
        %v7531 = vld [vmem:[%s7499 + $0xf8] sm:$0xff]
        %v7532 = vld [vmem:[%s7499 + $0x100] sm:$0xff]
        %v7533 = vld [vmem:[%s7499 + $0x108] sm:$0xff]
        %v7534 = vld [vmem:[%s7499 + $0x110] sm:$0xff]
        %v7535 = vld [vmem:[%s7499 + $0x118] sm:$0xff]
        %v7536 = vld [vmem:[%s7499 + $0x120] sm:$0xff]
        %v7537 = vld [vmem:[%s7499 + $0x128] sm:$0xff]
        %v7538 = vld [vmem:[%s7499 + $0x130] sm:$0xff]
        %v7539 = vld [vmem:[%s7499 + $0x138] sm:$0xff]
        %v7540 = vld [vmem:[%s7499 + $0x140] sm:$0xff]
        %v7541 = vld [vmem:[%s7499 + $0x148] sm:$0xff]
        %v7542 = vld [vmem:[%s7499 + $0x150] sm:$0xff]
        %v7543 = vld [vmem:[%s7499 + $0x158] sm:$0xff]
        %v7544 = vld [vmem:[%s7499 + $0x160] sm:$0xff]
        %v7545 = vld [vmem:[%s7499 + $0x168] sm:$0xff]
        %v7546 = vld [vmem:[%s7499 + $0x170] sm:$0xff]
        %v7547 = vld [vmem:[%s7499 + $0x178] sm:$0xff]
        %v7548 = vld [vmem:[%s7499 + $0x180] sm:$0xff]
        %v7549 = vld [vmem:[%s7499 + $0x188] sm:$0xff]
        %v7600 = vunpack.c.l.b16 %v7500
        %v7601 = vunpack.c.h.b16 %v7500
        %v7602 = vunpack.c.l.b16 %v7501
        %v7603 = vunpack.c.h.b16 %v7501
        %v7604 = vunpack.c.l.b16 %v7502
        %v7605 = vunpack.c.h.b16 %v7502
        %v7606 = vunpack.c.l.b16 %v7503
        %v7607 = vunpack.c.h.b16 %v7503
        %v7608 = vunpack.c.l.b16 %v7504
        %v7609 = vunpack.c.h.b16 %v7504
        %v7610 = vunpack.c.l.b16 %v7505
        %v7611 = vunpack.c.h.b16 %v7505
        %v7612 = vunpack.c.l.b16 %v7506
        %v7613 = vunpack.c.h.b16 %v7506
        %v7614 = vunpack.c.l.b16 %v7507
        %v7615 = vunpack.c.h.b16 %v7507
        %v7616 = vunpack.c.l.b16 %v7508
        %v7617 = vunpack.c.h.b16 %v7508
        %v7618 = vunpack.c.l.b16 %v7509
        %v7619 = vunpack.c.h.b16 %v7509
        %v7620 = vunpack.c.l.b16 %v7510
        %v7621 = vunpack.c.h.b16 %v7510
        %v7622 = vunpack.c.l.b16 %v7511
        %v7623 = vunpack.c.h.b16 %v7511
        %v7624 = vunpack.c.l.b16 %v7512
        %v7625 = vunpack.c.h.b16 %v7512
        %v7626 = vunpack.c.l.b16 %v7513
        %v7627 = vunpack.c.h.b16 %v7513
        %v7628 = vunpack.c.l.b16 %v7514
        %v7629 = vunpack.c.h.b16 %v7514
        %v7630 = vunpack.c.l.b16 %v7515
        %v7631 = vunpack.c.h.b16 %v7515
        %v7632 = vunpack.c.l.b16 %v7516
        %v7633 = vunpack.c.h.b16 %v7516
        %v7634 = vunpack.c.l.b16 %v7517
        %v7635 = vunpack.c.h.b16 %v7517
        %v7636 = vunpack.c.l.b16 %v7518
        %v7637 = vunpack.c.h.b16 %v7518
        %v7638 = vunpack.c.l.b16 %v7519
        %v7639 = vunpack.c.h.b16 %v7519
        %v7640 = vunpack.c.l.b16 %v7520
        %v7641 = vunpack.c.h.b16 %v7520
        %v7642 = vunpack.c.l.b16 %v7521
        %v7643 = vunpack.c.h.b16 %v7521
        %v7644 = vunpack.c.l.b16 %v7522
        %v7645 = vunpack.c.h.b16 %v7522
        %v7646 = vunpack.c.l.b16 %v7523
        %v7647 = vunpack.c.h.b16 %v7523
        %v7648 = vunpack.c.l.b16 %v7524
        %v7649 = vunpack.c.h.b16 %v7524
        %v7650 = vunpack.c.l.b16 %v7525
        %v7651 = vunpack.c.h.b16 %v7525
        %v7652 = vunpack.c.l.b16 %v7526
        %v7653 = vunpack.c.h.b16 %v7526
        %v7654 = vunpack.c.l.b16 %v7527
        %v7655 = vunpack.c.h.b16 %v7527
        %v7656 = vunpack.c.l.b16 %v7528
        %v7657 = vunpack.c.h.b16 %v7528
        %v7658 = vunpack.c.l.b16 %v7529
        %v7659 = vunpack.c.h.b16 %v7529
        %v7660 = vunpack.c.l.b16 %v7530
        %v7661 = vunpack.c.h.b16 %v7530
        %v7662 = vunpack.c.l.b16 %v7531
        %v7663 = vunpack.c.h.b16 %v7531
        %v7664 = vunpack.c.l.b16 %v7532
        %v7665 = vunpack.c.h.b16 %v7532
        %v7666 = vunpack.c.l.b16 %v7533
        %v7667 = vunpack.c.h.b16 %v7533
        %v7668 = vunpack.c.l.b16 %v7534
        %v7669 = vunpack.c.h.b16 %v7534
        %v7670 = vunpack.c.l.b16 %v7535
        %v7671 = vunpack.c.h.b16 %v7535
        %v7672 = vunpack.c.l.b16 %v7536
        %v7673 = vunpack.c.h.b16 %v7536
        %v7674 = vunpack.c.l.b16 %v7537
        %v7675 = vunpack.c.h.b16 %v7537
        %v7676 = vunpack.c.l.b16 %v7538
        %v7677 = vunpack.c.h.b16 %v7538
        %v7678 = vunpack.c.l.b16 %v7539
        %v7679 = vunpack.c.h.b16 %v7539
        %v7680 = vunpack.c.l.b16 %v7540
        %v7681 = vunpack.c.h.b16 %v7540
        %v7682 = vunpack.c.l.b16 %v7541
        %v7683 = vunpack.c.h.b16 %v7541
        %v7684 = vunpack.c.l.b16 %v7542
        %v7685 = vunpack.c.h.b16 %v7542
        %v7686 = vunpack.c.l.b16 %v7543
        %v7687 = vunpack.c.h.b16 %v7543
        %v7688 = vunpack.c.l.b16 %v7544
        %v7689 = vunpack.c.h.b16 %v7544
        %v7690 = vunpack.c.l.b16 %v7545
        %v7691 = vunpack.c.h.b16 %v7545
        %v7692 = vunpack.c.l.b16 %v7546
        %v7693 = vunpack.c.h.b16 %v7546
        %v7694 = vunpack.c.l.b16 %v7547
        %v7695 = vunpack.c.h.b16 %v7547
        %v7696 = vunpack.c.l.b16 %v7548
        %v7697 = vunpack.c.h.b16 %v7548
        %v7698 = vunpack.c.l.b16 %v7549
        %v7699 = vunpack.c.h.b16 %v7549
        %v7700 = vpack.c.b16 %v7604, %v7600
        %v7701 = vpack.c.b16 %v7605, %v7601
        %v7702 = vpack.c.b16 %v7606, %v7602
        %v7703 = vpack.c.b16 %v7607, %v7603
        %v7704 = vpack.c.b16 %v7612, %v7608
        %v7705 = vpack.c.b16 %v7613, %v7609
        %v7706 = vpack.c.b16 %v7614, %v7610
        %v7707 = vpack.c.b16 %v7615, %v7611
        %v7708 = vpack.c.b16 %v7620, %v7616
        %v7709 = vpack.c.b16 %v7621, %v7617
        %v7710 = vpack.c.b16 %v7622, %v7618
        %v7711 = vpack.c.b16 %v7623, %v7619
        %v7712 = vpack.c.b16 %v7628, %v7624
        %v7713 = vpack.c.b16 %v7629, %v7625
        %v7714 = vpack.c.b16 %v7630, %v7626
        %v7715 = vpack.c.b16 %v7631, %v7627
        %v7716 = vpack.c.b16 %v7636, %v7632
        %v7717 = vpack.c.b16 %v7637, %v7633
        %v7718 = vpack.c.b16 %v7638, %v7634
        %v7719 = vpack.c.b16 %v7639, %v7635
        %v7720 = vpack.c.b16 %v7644, %v7640
        %v7721 = vpack.c.b16 %v7645, %v7641
        %v7722 = vpack.c.b16 %v7646, %v7642
        %v7723 = vpack.c.b16 %v7647, %v7643
        %v7724 = vpack.c.b16 %v7652, %v7648
        %v7725 = vpack.c.b16 %v7653, %v7649
        %v7726 = vpack.c.b16 %v7654, %v7650
        %v7727 = vpack.c.b16 %v7655, %v7651
        %v7728 = vpack.c.b16 %v7660, %v7656
        %v7729 = vpack.c.b16 %v7661, %v7657
        %v7730 = vpack.c.b16 %v7662, %v7658
        %v7731 = vpack.c.b16 %v7663, %v7659
        %v7732 = vpack.c.b16 %v7668, %v7664
        %v7733 = vpack.c.b16 %v7669, %v7665
        %v7734 = vpack.c.b16 %v7670, %v7666
        %v7735 = vpack.c.b16 %v7671, %v7667
        %v7736 = vpack.c.b16 %v7676, %v7672
        %v7737 = vpack.c.b16 %v7677, %v7673
        %v7738 = vpack.c.b16 %v7678, %v7674
        %v7739 = vpack.c.b16 %v7679, %v7675
        %v7740 = vpack.c.b16 %v7684, %v7680
        %v7741 = vpack.c.b16 %v7685, %v7681
        %v7742 = vpack.c.b16 %v7686, %v7682
        %v7743 = vpack.c.b16 %v7687, %v7683
        %v7744 = vpack.c.b16 %v7692, %v7688
        %v7745 = vpack.c.b16 %v7693, %v7689
        %v7746 = vpack.c.b16 %v7694, %v7690
        %v7747 = vpack.c.b16 %v7695, %v7691
        %v7748 = vpack.c.b16 %v7696, %v7696
        %v7749 = vpack.c.b16 %v7697, %v7697
        %v7750 = vpack.c.b16 %v7698, %v7698
        %v7751 = vpack.c.b16 %v7699, %v7699
        %v7801 = vsel %vm6277, %v7498, 0
        %v7804 = vsel %vm6651, %v7748, 0
        %v7807 = vsel %vm6651, %v7749, 0
        %v7810 = vsel %vm6651, %v7750, 0
        %v7813 = vsel %vm6651, %v7751, 0
        %7815 = vmatprep.subr.bf16.mxu0 %v7701
        %7816 = vmatpush1.bf16.msra.mxu0 %v7700
        %7817 = vmatprep.subr.bf16.mxu0 %v7705
        %7818 = vmatpush1.bf16.msra.mxu0 %v7704
        %7819 = vmatprep.subr.bf16.mxu0 %v7709
        %7820 = vmatpush1.bf16.msra.mxu0 %v7708
        %7821 = vmatprep.subr.bf16.mxu0 %v7713
        %7822 = vmatpush1.bf16.msra.mxu0 %v7712
        %7823 = vmatprep.subr.bf16.mxu0 %v7717
        %7824 = vmatpush1.bf16.msra.mxu0 %v7716
        %7825 = vmatprep.subr.bf16.mxu0 %v7721
        %7826 = vmatpush1.bf16.msra.mxu0 %v7720
        %7827 = vmatprep.subr.bf16.mxu0 %v7725
        %7828 = vmatpush1.bf16.msra.mxu0 %v7724
        %7829 = vmatprep.subr.bf16.mxu0 %v7729
        %7830 = vmatpush1.bf16.msra.mxu0 %v7728
        %7831 = vmatprep.subr.bf16.mxu0 %v7733
        %7832 = vmatpush1.bf16.msra.mxu0 %v7732
        %7833 = vmatprep.subr.bf16.mxu0 %v7737
        %7834 = vmatpush1.bf16.msra.mxu0 %v7736
        %7835 = vmatprep.subr.bf16.mxu0 %v7741
        %7836 = vmatpush1.bf16.msra.mxu0 %v7740
        %7837 = vmatprep.subr.bf16.mxu0 %v7745
        %7838 = vmatpush1.bf16.msra.mxu0 %v7744
        %7839 = vmatprep.subr.bf16.mxu0 %v7807
        %7840 = vmatpush1.bf16.msra.mxu0 %v7804
        %7841 = vmatprep.subr.bf16.mxu0 0
        %7842 = vmatpush1.bf16.msra.mxu0 0
        %7843 = vmatprep.subr.bf16.mxu0 0
        %7844 = vmatpush1.bf16.msra.mxu0 0
        %7845 = vmatprep.subr.bf16.mxu0 0
        %7846 = vmatpush1.bf16.msra.mxu0 0
        %7847 = vmatprep.mubr.bf16.mxu0 %v7801
        %7848 = vmatmul.mubr.bf16.gmra.mrb[0].mxu0 %v7497
        %v7849 = vpop.f32.mrb[0].mxu0
        %v7850 = vadd.f32 0.0, %v7849
        %v7851 = vpop.f32.mrb[0].mxu0
        %v7852 = vadd.f32 0.0, %v7851
        %v7853 = vpop.f32.mrb[0].mxu0
        %v7854 = vpop.f32.mrb[0].mxu0
        %7855 = vdwg.mxu0
        %7856 = vmatprep.subr.bf16.mxu0 %v7703
        %7857 = vmatpush1.bf16.msra.mxu0 %v7702
        %7858 = vmatprep.subr.bf16.mxu0 %v7707
        %7859 = vmatpush1.bf16.msra.mxu0 %v7706
        %7860 = vmatprep.subr.bf16.mxu0 %v7711
        %7861 = vmatpush1.bf16.msra.mxu0 %v7710
        %7862 = vmatprep.subr.bf16.mxu0 %v7715
        %7863 = vmatpush1.bf16.msra.mxu0 %v7714
        %7864 = vmatprep.subr.bf16.mxu0 %v7719
        %7865 = vmatpush1.bf16.msra.mxu0 %v7718
        %7866 = vmatprep.subr.bf16.mxu0 %v7723
        %7867 = vmatpush1.bf16.msra.mxu0 %v7722
        %7868 = vmatprep.subr.bf16.mxu0 %v7727
        %7869 = vmatpush1.bf16.msra.mxu0 %v7726
        %7870 = vmatprep.subr.bf16.mxu0 %v7731
        %7871 = vmatpush1.bf16.msra.mxu0 %v7730
        %7872 = vmatprep.subr.bf16.mxu0 %v7735
        %7873 = vmatpush1.bf16.msra.mxu0 %v7734
        %7874 = vmatprep.subr.bf16.mxu0 %v7739
        %7875 = vmatpush1.bf16.msra.mxu0 %v7738
        %7876 = vmatprep.subr.bf16.mxu0 %v7743
        %7877 = vmatpush1.bf16.msra.mxu0 %v7742
        %7878 = vmatprep.subr.bf16.mxu0 %v7747
        %7879 = vmatpush1.bf16.msra.mxu0 %v7746
        %7880 = vmatprep.subr.bf16.mxu0 %v7813
        %7881 = vmatpush1.bf16.msra.mxu0 %v7810
        %7882 = vmatprep.subr.bf16.mxu0 0
        %7883 = vmatpush1.bf16.msra.mxu0 0
        %7884 = vmatprep.subr.bf16.mxu0 0
        %7885 = vmatpush1.bf16.msra.mxu0 0
        %7886 = vmatprep.subr.bf16.mxu0 0
        %7887 = vmatpush1.bf16.msra.mxu0 0
        %7888 = vmatprep.mubr.bf16.mxu0 %v7801
        %7889 = vmatmul.mubr.bf16.gmra.mrb[0].mxu0 %v7497
        %v7890 = vpop.f32.mrb[0].mxu0
        %v7891 = vadd.f32 0.0, %v7890
        %v7892 = vpop.f32.mrb[0].mxu0
        %v7893 = vadd.f32 0.0, %v7892
        %v7894 = vpop.f32.mrb[0].mxu0
        %v7895 = vpop.f32.mrb[0].mxu0
        %7896 = vdwg.mxu0
        %v7897 = vadd.f32 %v7493, %v7850
        %v7898 = vadd.f32 %v7494, %v7852
        %v7899 = vadd.f32 %v7495, %v7891
        %v7900 = vadd.f32 %v7496, %v7893
        %v7901 = vld [vmem:[%s6] ss:$2 sm:$0xf]
        %v7903 = vlaneseq
        %v7904 = vshrl.u32 %v7903, 7
        %v7905 = vsub.s32 0, %v7904
        %v7906 = vrot.slane %v7901, %v7905
        %v7907 = vlaneseq
        %v7908 = vshrl.u32 %v7907, 7
        %v7909 = vsub.s32 1, %v7908
        %v7910 = vrot.slane %v7901, %v7909
        %v7911 = vlaneseq
        %v7912 = vshrl.u32 %v7911, 7
        %v7913 = vsub.s32 2, %v7912
        %v7914 = vrot.slane %v7901, %v7913
        %v7915 = vlaneseq
        %v7916 = vshrl.u32 %v7915, 7
        %v7917 = vsub.s32 3, %v7916
        %v7918 = vrot.slane %v7901, %v7917
        %v7923 = vmul.f32 %v7897, %v7906
        %v7924 = vmul.f32 %v7898, %v7910
        %v7925 = vmul.f32 %v7899, %v7914
        %v7926 = vmul.f32 %v7900, %v7918
        %s7927 = scalar_lea.vmem %s6, 1
        %v7928 = vld [vmem:[%s7927] ss:$2 sm:$0xf]
        %v7930 = vlaneseq
        %v7931 = vshrl.u32 %v7930, 7
        %v7932 = vsub.s32 0, %v7931
        %v7933 = vrot.slane %v7928, %v7932
        %v7934 = vlaneseq
        %v7935 = vshrl.u32 %v7934, 7
        %v7936 = vsub.s32 1, %v7935
        %v7937 = vrot.slane %v7928, %v7936
        %v7938 = vlaneseq
        %v7939 = vshrl.u32 %v7938, 7
        %v7940 = vsub.s32 2, %v7939
        %v7941 = vrot.slane %v7928, %v7940
        %v7942 = vlaneseq
        %v7943 = vshrl.u32 %v7942, 7
        %v7944 = vsub.s32 3, %v7943
        %v7945 = vrot.slane %v7928, %v7944
        %v7950 = vadd.f32 %v7923, %v7933
        %v7951 = vadd.f32 %v7924, %v7937
        %v7952 = vadd.f32 %v7925, %v7941
        %v7953 = vadd.f32 %v7926, %v7945
        %v7954 = vmax.f32 %v7950, 0.0
        %v7955 = vmax.f32 %v7951, 0.0
        %v7956 = vmax.f32 %v7952, 0.0
        %v7957 = vmax.f32 %v7953, 0.0
        %v7958 = vpack.c.bf16 %v7954, %v7954
        %v7959 = vpack.c.bf16 %v7955, %v7955
        %v7960 = vpack.c.bf16 %v7956, %v7956
        %v7961 = vpack.c.bf16 %v7957, %v7957
        %v7962 = vld [vmem:[%s7] sm:$0xf]
        %v7963 = vld [vmem:[%s7 + $0x4] sm:$0xf]
        %v7964 = vld [vmem:[%s7 + $0x8] sm:$0xf]
        %v7965 = vld [vmem:[%s7 + $0xc] sm:$0xf]
        %v7966 = vld [vmem:[%s7 + $0x10] sm:$0xf]
        %v7967 = vld [vmem:[%s7 + $0x14] sm:$0xf]
        %v7968 = vld [vmem:[%s7 + $0x18] sm:$0xf]
        %v7969 = vld [vmem:[%s7 + $0x1c] sm:$0xf]
        %v7970 = vld [vmem:[%s7 + $0x20] sm:$0xf]
        %v7971 = vld [vmem:[%s7 + $0x24] sm:$0xf]
        %v7972 = vld [vmem:[%s7 + $0x28] sm:$0xf]
        %v7973 = vld [vmem:[%s7 + $0x2c] sm:$0xf]
        %v7974 = vld [vmem:[%s7 + $0x30] sm:$0xf]
        %v7975 = vld [vmem:[%s7 + $0x34] sm:$0xf]
        %v7976 = vld [vmem:[%s7 + $0x38] sm:$0xf]
        %v7977 = vld [vmem:[%s7 + $0x3c] sm:$0xf]
        %v7978 = vld [vmem:[%s7 + $0x40] sm:$0xf]
        %v7979 = vld [vmem:[%s7 + $0x44] sm:$0xf]
        %v7980 = vld [vmem:[%s7 + $0x48] sm:$0xf]
        %v7981 = vld [vmem:[%s7 + $0x4c] sm:$0xf]
        %v7982 = vld [vmem:[%s7 + $0x50] sm:$0xf]
        %v7983 = vld [vmem:[%s7 + $0x54] sm:$0xf]
        %v7984 = vld [vmem:[%s7 + $0x58] sm:$0xf]
        %v7985 = vld [vmem:[%s7 + $0x5c] sm:$0xf]
        %v7986 = vld [vmem:[%s7 + $0x60] sm:$0xf]
        %v7987 = vld [vmem:[%s7 + $0x64] sm:$0xf]
        %v7988 = vld [vmem:[%s7 + $0x68] sm:$0xf]
        %v7989 = vld [vmem:[%s7 + $0x6c] sm:$0xf]
        %v7990 = vld [vmem:[%s7 + $0x70] sm:$0xf]
        %v7991 = vld [vmem:[%s7 + $0x74] sm:$0xf]
        %v7992 = vld [vmem:[%s7 + $0x78] sm:$0xf]
        %v7993 = vld [vmem:[%s7 + $0x7c] sm:$0xf]
        %v7994 = vld [vmem:[%s7 + $0x80] sm:$0xf]
        %v7995 = vld [vmem:[%s7 + $0x84] sm:$0xf]
        %v7996 = vld [vmem:[%s7 + $0x88] sm:$0xf]
        %v7997 = vld [vmem:[%s7 + $0x8c] sm:$0xf]
        %v7998 = vld [vmem:[%s7 + $0x90] sm:$0xf]
        %v7999 = vld [vmem:[%s7 + $0x94] sm:$0xf]
        %v8000 = vld [vmem:[%s7 + $0x98] sm:$0xf]
        %v8001 = vld [vmem:[%s7 + $0x9c] sm:$0xf]
        %v8002 = vld [vmem:[%s7 + $0xa0] sm:$0xf]
        %v8003 = vld [vmem:[%s7 + $0xa4] sm:$0xf]
        %v8004 = vld [vmem:[%s7 + $0xa8] sm:$0xf]
        %v8005 = vld [vmem:[%s7 + $0xac] sm:$0xf]
        %v8006 = vld [vmem:[%s7 + $0xb0] sm:$0xf]
        %v8007 = vld [vmem:[%s7 + $0xb4] sm:$0xf]
        %v8008 = vld [vmem:[%s7 + $0xb8] sm:$0xf]
        %v8009 = vld [vmem:[%s7 + $0xbc] sm:$0xf]
        %v8010 = vld [vmem:[%s7 + $0xc0] sm:$0xf]
        %v8011 = vld [vmem:[%s7 + $0xc4] sm:$0xf]
        %v8012 = vld [vmem:[%s7 + $0xc8] sm:$0xf]
        %v8013 = vld [vmem:[%s7 + $0xcc] sm:$0xf]
        %v8014 = vld [vmem:[%s7 + $0xd0] sm:$0xf]
        %v8015 = vld [vmem:[%s7 + $0xd4] sm:$0xf]
        %v8016 = vld [vmem:[%s7 + $0xd8] sm:$0xf]
        %v8017 = vld [vmem:[%s7 + $0xdc] sm:$0xf]
        %v8018 = vld [vmem:[%s7 + $0xe0] sm:$0xf]
        %v8019 = vld [vmem:[%s7 + $0xe4] sm:$0xf]
        %v8020 = vld [vmem:[%s7 + $0xe8] sm:$0xf]
        %v8021 = vld [vmem:[%s7 + $0xec] sm:$0xf]
        %v8022 = vld [vmem:[%s7 + $0xf0] sm:$0xf]
        %v8023 = vld [vmem:[%s7 + $0xf4] sm:$0xf]
        %v8024 = vld [vmem:[%s7 + $0xf8] sm:$0x3]
        %v8025 = vld [vmem:[%s8] sm:$0x1]
        %v8027 = vlaneseq
        %v8028 = vshrl.u32 %v8027, 7
        %v8029 = vsub.s32 0, %v8028
        %v8030 = vrot.slane %v8025, %v8029
        %v8095 = vunpack.c.l.b16 %v7962
        %v8096 = vunpack.c.l.b16 %v7963
        %v8097 = vunpack.c.l.b16 %v7964
        %v8098 = vunpack.c.l.b16 %v7965
        %v8099 = vunpack.c.l.b16 %v7966
        %v8100 = vunpack.c.l.b16 %v7967
        %v8101 = vunpack.c.l.b16 %v7968
        %v8102 = vunpack.c.l.b16 %v7969
        %v8103 = vunpack.c.l.b16 %v7970
        %v8104 = vunpack.c.l.b16 %v7971
        %v8105 = vunpack.c.l.b16 %v7972
        %v8106 = vunpack.c.l.b16 %v7973
        %v8107 = vunpack.c.l.b16 %v7974
        %v8108 = vunpack.c.l.b16 %v7975
        %v8109 = vunpack.c.l.b16 %v7976
        %v8110 = vunpack.c.l.b16 %v7977
        %v8111 = vunpack.c.l.b16 %v7978
        %v8112 = vunpack.c.l.b16 %v7979
        %v8113 = vunpack.c.l.b16 %v7980
        %v8114 = vunpack.c.l.b16 %v7981
        %v8115 = vunpack.c.l.b16 %v7982
        %v8116 = vunpack.c.l.b16 %v7983
        %v8117 = vunpack.c.l.b16 %v7984
        %v8118 = vunpack.c.l.b16 %v7985
        %v8119 = vunpack.c.l.b16 %v7986
        %v8120 = vunpack.c.l.b16 %v7987
        %v8121 = vunpack.c.l.b16 %v7988
        %v8122 = vunpack.c.l.b16 %v7989
        %v8123 = vunpack.c.l.b16 %v7990
        %v8124 = vunpack.c.l.b16 %v7991
        %v8125 = vunpack.c.l.b16 %v7992
        %v8126 = vunpack.c.l.b16 %v7993
        %v8127 = vunpack.c.l.b16 %v7994
        %v8128 = vunpack.c.l.b16 %v7995
        %v8129 = vunpack.c.l.b16 %v7996
        %v8130 = vunpack.c.l.b16 %v7997
        %v8131 = vunpack.c.l.b16 %v7998
        %v8132 = vunpack.c.l.b16 %v7999
        %v8133 = vunpack.c.l.b16 %v8000
        %v8134 = vunpack.c.l.b16 %v8001
        %v8135 = vunpack.c.l.b16 %v8002
        %v8136 = vunpack.c.l.b16 %v8003
        %v8137 = vunpack.c.l.b16 %v8004
        %v8138 = vunpack.c.l.b16 %v8005
        %v8139 = vunpack.c.l.b16 %v8006
        %v8140 = vunpack.c.l.b16 %v8007
        %v8141 = vunpack.c.l.b16 %v8008
        %v8142 = vunpack.c.l.b16 %v8009
        %v8143 = vunpack.c.l.b16 %v8010
        %v8144 = vunpack.c.l.b16 %v8011
        %v8145 = vunpack.c.l.b16 %v8012
        %v8146 = vunpack.c.l.b16 %v8013
        %v8147 = vunpack.c.l.b16 %v8014
        %v8148 = vunpack.c.l.b16 %v8015
        %v8149 = vunpack.c.l.b16 %v8016
        %v8150 = vunpack.c.l.b16 %v8017
        %v8151 = vunpack.c.l.b16 %v8018
        %v8152 = vunpack.c.l.b16 %v8019
        %v8153 = vunpack.c.l.b16 %v8020
        %v8154 = vunpack.c.l.b16 %v8021
        %v8155 = vunpack.c.l.b16 %v8022
        %v8156 = vunpack.c.l.b16 %v8023
        %v8157 = vunpack.c.l.b16 %v8024
        %v8158 = vpack.c.b16 %v8096, %v8095
        %v8159 = vpack.c.b16 %v8098, %v8097
        %v8160 = vpack.c.b16 %v8100, %v8099
        %v8161 = vpack.c.b16 %v8102, %v8101
        %v8162 = vpack.c.b16 %v8104, %v8103
        %v8163 = vpack.c.b16 %v8106, %v8105
        %v8164 = vpack.c.b16 %v8108, %v8107
        %v8165 = vpack.c.b16 %v8110, %v8109
        %v8166 = vpack.c.b16 %v8112, %v8111
        %v8167 = vpack.c.b16 %v8114, %v8113
        %v8168 = vpack.c.b16 %v8116, %v8115
        %v8169 = vpack.c.b16 %v8118, %v8117
        %v8170 = vpack.c.b16 %v8120, %v8119
        %v8171 = vpack.c.b16 %v8122, %v8121
        %v8172 = vpack.c.b16 %v8124, %v8123
        %v8173 = vpack.c.b16 %v8126, %v8125
        %v8174 = vpack.c.b16 %v8128, %v8127
        %v8175 = vpack.c.b16 %v8130, %v8129
        %v8176 = vpack.c.b16 %v8132, %v8131
        %v8177 = vpack.c.b16 %v8134, %v8133
        %v8178 = vpack.c.b16 %v8136, %v8135
        %v8179 = vpack.c.b16 %v8138, %v8137
        %v8180 = vpack.c.b16 %v8140, %v8139
        %v8181 = vpack.c.b16 %v8142, %v8141
        %v8182 = vpack.c.b16 %v8144, %v8143
        %v8183 = vpack.c.b16 %v8146, %v8145
        %v8184 = vpack.c.b16 %v8148, %v8147
        %v8185 = vpack.c.b16 %v8150, %v8149
        %v8186 = vpack.c.b16 %v8152, %v8151
        %v8187 = vpack.c.b16 %v8154, %v8153
        %v8188 = vpack.c.b16 %v8156, %v8155
        %v8189 = vpack.c.b16 %v8157, %v8157
        %vm8221 = vcmask 949248
        %v8223 = vsel %vm8221, %v7961, 0
        %vm8225 = vcmask 1041408
        %v8227 = vsel %vm8225, %v8189, 0
        %8229 = vmatprep.subr.bf16.mxu0 0
        %8230 = vmatpush1.bf16.msra.mxu0 %v8158
        %8231 = vmatprep.subr.bf16.mxu0 0
        %8232 = vmatpush1.bf16.msra.mxu0 %v8159
        %8233 = vmatprep.subr.bf16.mxu0 0
        %8234 = vmatpush1.bf16.msra.mxu0 %v8160
        %8235 = vmatprep.subr.bf16.mxu0 0
        %8236 = vmatpush1.bf16.msra.mxu0 %v8161
        %8237 = vmatprep.subr.bf16.mxu0 0
        %8238 = vmatpush1.bf16.msra.mxu0 %v8162
        %8239 = vmatprep.subr.bf16.mxu0 0
        %8240 = vmatpush1.bf16.msra.mxu0 %v8163
        %8241 = vmatprep.subr.bf16.mxu0 0
        %8242 = vmatpush1.bf16.msra.mxu0 %v8164
        %8243 = vmatprep.subr.bf16.mxu0 0
        %8244 = vmatpush1.bf16.msra.mxu0 %v8165
        %8245 = vmatprep.subr.bf16.mxu0 0
        %8246 = vmatpush1.bf16.msra.mxu0 %v8166
        %8247 = vmatprep.subr.bf16.mxu0 0
        %8248 = vmatpush1.bf16.msra.mxu0 %v8167
        %8249 = vmatprep.subr.bf16.mxu0 0
        %8250 = vmatpush1.bf16.msra.mxu0 %v8168
        %8251 = vmatprep.subr.bf16.mxu0 0
        %8252 = vmatpush1.bf16.msra.mxu0 %v8169
        %8253 = vmatprep.subr.bf16.mxu0 0
        %8254 = vmatpush1.bf16.msra.mxu0 %v8170
        %8255 = vmatprep.subr.bf16.mxu0 0
        %8256 = vmatpush1.bf16.msra.mxu0 %v8171
        %8257 = vmatprep.subr.bf16.mxu0 0
        %8258 = vmatpush1.bf16.msra.mxu0 %v8172
        %8259 = vmatprep.subr.bf16.mxu0 0
        %8260 = vmatpush1.bf16.msra.mxu0 %v8173
        %8261 = vmatprep.mubr.bf16.mxu0 %v7959
        %8262 = vmatmul.mubr.bf16.gmra.mrb[0].mxu0 %v7958
        %v8263 = vpop.f32.mrb[0].mxu0
        %v8264 = vadd.f32 %v8030, %v8263
        %v8265 = vpop.f32.mrb[0].mxu0
        %v8266 = vpop.f32.mrb[0].mxu0
        %v8267 = vpop.f32.mrb[0].mxu0
        %8268 = vdwg.mxu0
        %8269 = vmatprep.subr.bf16.mxu0 0
        %8270 = vmatpush1.bf16.msra.mxu0 %v8174
        %8271 = vmatprep.subr.bf16.mxu0 0
        %8272 = vmatpush1.bf16.msra.mxu0 %v8175
        %8273 = vmatprep.subr.bf16.mxu0 0
        %8274 = vmatpush1.bf16.msra.mxu0 %v8176
        %8275 = vmatprep.subr.bf16.mxu0 0
        %8276 = vmatpush1.bf16.msra.mxu0 %v8177
        %8277 = vmatprep.subr.bf16.mxu0 0
        %8278 = vmatpush1.bf16.msra.mxu0 %v8178
        %8279 = vmatprep.subr.bf16.mxu0 0
        %8280 = vmatpush1.bf16.msra.mxu0 %v8179
        %8281 = vmatprep.subr.bf16.mxu0 0
        %8282 = vmatpush1.bf16.msra.mxu0 %v8180
        %8283 = vmatprep.subr.bf16.mxu0 0
        %8284 = vmatpush1.bf16.msra.mxu0 %v8181
        %8285 = vmatprep.subr.bf16.mxu0 0
        %8286 = vmatpush1.bf16.msra.mxu0 %v8182
        %8287 = vmatprep.subr.bf16.mxu0 0
        %8288 = vmatpush1.bf16.msra.mxu0 %v8183
        %8289 = vmatprep.subr.bf16.mxu0 0
        %8290 = vmatpush1.bf16.msra.mxu0 %v8184
        %8291 = vmatprep.subr.bf16.mxu0 0
        %8292 = vmatpush1.bf16.msra.mxu0 %v8185
        %8293 = vmatprep.subr.bf16.mxu0 0
        %8294 = vmatpush1.bf16.msra.mxu0 %v8186
        %8295 = vmatprep.subr.bf16.mxu0 0
        %8296 = vmatpush1.bf16.msra.mxu0 %v8187
        %8297 = vmatprep.subr.bf16.mxu0 0
        %8298 = vmatpush1.bf16.msra.mxu0 %v8188
        %8299 = vmatprep.subr.bf16.mxu0 0
        %8300 = vmatpush1.bf16.msra.mxu0 %v8227
        %8301 = vmatprep.mubr.bf16.mxu0 %v8223
        %8302 = vmatmul.mubr.bf16.gmra.mrb[0].mxu0 %v7960
        %v8303 = vpop.f32.mrb[0].mxu0
        %v8304 = vadd.f32 %v8264, %v8303
        %v8305 = vpop.f32.mrb[0].mxu0
        %v8306 = vpop.f32.mrb[0].mxu0
        %v8307 = vpop.f32.mrb[0].mxu0
        %8308 = vdwg.mxu0
        %v8309 = vlaneseq
        %v8310 = vand.u32 %v8309, 127
        %vm8311 = vcmp.lt.s32.totalorder %v8310, 10
        %v8312 = vsel %vm8311, %v8304, -1e+30
        %8313 = vmax.xlane.f32.xlu0 %v8312
        %v8314 = vpop.xlane.xlu0 %8313
        %v8315 = vsub.f32 %v8312, %v8314
        %v8316 = vmul.f32 %v8315, 1.442695
        %v8317 = vpow.pop %v8316
        %8318 = vadd.xlane.f32.xlu0 %v8317
        %v8319 = vpop.xlane.xlu0 %8318
        %v8320 = vrcp.pop %v8319
        %v8321 = vmul.f32 %v8317, %v8320
        %8322 = vst [vmem:[%s472] sm:$0xff] %v8321
        %p8323 = scmp.lt.s32.totalorder %s20, 1
        %s8324 = scalar_select %p8323, %s20, 1
        %s8325 = smul.addr %s8324, 8
        %s8326 = scalar_lea.vmem %s9, %s8325
        // Predicated region
        $region95: #{bn_drop_forward.1} parent=89 // pred_check
          %p8327 = pneg %p232
        $region96: #{bn_drop_forward.1} parent=89 // pred_check_branch
          %8329 = sbr.rel (%p8327) target = $region98
        $region97: #{bn_drop_forward.1} parent=89 // pred_region
          _
        $region98: #{bn_drop_forward.1} parent=89 // pred_fallthru
          _
      $region90: #{bn_drop_forward.1} parent=5 // pred_fallthru
        _
      %p8330 = scmp.le.s32.totalorder 2, %s15
      // Predicated region
      $region99: #{bn_drop_forward.1} parent=5 // pred_check
        %p8331 = pneg %p8330
      $region100: #{bn_drop_forward.1} parent=5 // pred_check_branch
        %8333 = sbr.rel (%p8331) target = $region102
      $region101: #{bn_drop_forward.1} parent=5 // pred_region
        %s8334 = ssub.s32 %s15, 2
        // Predicated region
        $region103: #{bn_drop_forward.1} parent=101 // pred_check
          %p8335 = pneg %p238
        $region104: #{bn_drop_forward.1} parent=101 // pred_check_branch
          %8337 = sbr.rel (%p8335) target = $region106
        $region105: #{bn_drop_forward.1} parent=101 // pred_region
          %p8338 = scmp.lt.s32.totalorder %s21, 1
          %s8339 = scalar_select %p8338, %s21, 1
          %s8340 = smul.addr %s8339, 8
          %s8341 = scalar_lea.vmem %s9, %s8340
        $region106: #{bn_drop_forward.1} parent=101 // pred_fallthru
          _
      $region102: #{bn_drop_forward.1} parent=5 // pred_fallthru
        _
    $region6: #{bn_drop_forward.1} parent=1 // loop_footer
      %s19 = sadd.s32 1, %s15
    $region7: #{bn_drop_forward.1} parent=1 // loop_footer_branch
      %14 = sbr.rel target = $region3
    $region8: #{bn_drop_forward.1} parent=1 // loop_exit
      _

</llo_original>
